<compile_context>
chip_gen: v5e
topology: v5e:2x2
jax: 0.10.0
libtpu: 0.0.40
codegen_flags: <defaults>
</compile_context>

<pallas_src>
import functools
import math

import jax
import jax.numpy as jnp
from jax import lax
from jax.experimental import pallas as pl
from jax.experimental.pallas import tpu as pltpu

# ----------------------------- problem sizes (small) -----------------------------
NY, NX = 32, 32            # interior model grid (init_v shape)
PML = 8
NYP, NXP = NY + 2 * PML, NX + 2 * PML      # 48 x 48 padded grid
NT = 32
DT = 1.0e-3
DX = DY = 10.0
SRC_N = 2
RCV_N = 16
VMIN, VMAX = 1500.0, 4500.0
DVMIN, DVMAX = -0.5, 0.5                   # self.dvmin / self.dvmax ('dv' generator)
ZERO_ROWS = 12                             # dv[:12] = 0
LEAKY_SLOPE = 0.2                          # TODO(synk): original CNN class not given; 0.2 assumed
LANE = 128                                 # lane-dense conv output padding


# ============================== CNN path (Pallas matmuls) ==============================

def _dense_act_kernel(x_ref, w_ref, b_ref, o_ref, *, act, lo, hi):
    """(M, K) @ (K, N) + b with fused activation.  bf16 MXU inputs, f32 accumulation."""
    y = jnp.dot(x_ref[...], w_ref[...], preferred_element_type=jnp.float32) + b_ref[...]
    if act == "leaky_relu":
        y = jnp.where(y > 0.0, y, LEAKY_SLOPE * y)
    elif act == "sigmoid_range":
        s = 1.0 / (1.0 + jnp.exp(-y))
        y = lo + (hi - lo) * s
    o_ref[...] = y


def dense_act(x, w, b2d, act="none", lo=0.0, hi=1.0):
    m = x.shape[0]
    n = w.shape[1]
    return pl.pallas_call(
        functools.partial(_dense_act_kernel, act=act, lo=lo, hi=hi),
        out_shape=jax.ShapeDtypeStruct((m, n), jnp.float32),
    )(x, w, b2d)


def im2col3x3(x_hwc):
    """(H, W, C) -> (H*W, 9*C) with implicit zero padding of 1 (XLA glue).

    # TODO(synk): fusing all conv layers + im2col into one pallas_call needs an in-kernel
    # (H, W, C)->(H*W, C) relayout that Mosaic does not lower robustly for these shapes.
    """
    h, w, c = x_hwc.shape
    xp = jnp.pad(x_hwc, ((1, 1), (1, 1), (0, 0)))
    cols = []
    for ky in range(3):
        for kx in range(3):
            cols.append(xp[ky:ky + h, kx:kx + w, :])
    return jnp.concatenate(cols, axis=-1).reshape(h * w, 9 * c)


def conv3x3(x_hwc, w, b, act, lo=0.0, hi=1.0):
    """3x3 'same' conv via im2col (glue) + Pallas matmul.  w: (3,3,Cin,Cout)."""
    h, ww, cin = x_hwc.shape
    cout = w.shape[-1]
    patches = im2col3x3(x_hwc)                            # (H*W, 9*Cin) f32
    m = patches.shape[0]
    mpad = ((m + 7) // 8) * 8                             # sublane-align M
    patches = jnp.pad(patches, ((0, mpad - m), (0, 0))).astype(jnp.bfloat16)
    wm = jnp.pad(w.reshape(9 * cin, cout), ((0, 0), (0, LANE - cout))).astype(jnp.bfloat16)
    bm = jnp.pad(b, (0, LANE - cout)).reshape(1, LANE).astype(jnp.float32)
    y = dense_act(patches, wm, bm, act=act, lo=lo, hi=hi)  # (mpad, 128) f32, lane-dense stores
    return y[:m, :cout].reshape(h, ww, cout)


def upsample2(x_hwc):
    x = jnp.repeat(x_hwc, 2, axis=0)
    return jnp.repeat(x, 2, axis=1)


def cnn_generate_dv(z, params):
    """DIP-style generator: latent (9,9,8) -> dv image (36,36) in [DVMIN, DVMAX]."""
    x = upsample2(z)                                                    # (18,18,8)
    x = conv3x3(x, params["w1"], params["b1"], act="leaky_relu")        # (18,18,16)
    x = upsample2(x)                                                    # (36,36,16)
    x = conv3x3(x, params["w2"], params["b2"], act="leaky_relu")        # (36,36,16)
    x = conv3x3(x, params["w3"], params["b3"], act="sigmoid_range",
                lo=DVMIN, hi=DVMAX)                                     # (36,36,1)
    return x[:, :, 0]


# ============================== FD propagation (single-invocation time loop) ==============================

def _fd_kernel(stf_ref, dv_ref, v0_ref, damp_ref, srcm_ref, rxh_ref, ryh_ref,
               csg_ref, forw_ref,
               a_ref, b_ref, c_ref, sa_ref, pp_ref, pc_ref,
               *, nt, dt, dx, dy, pml, vmin, vmax, zero_rows):
    """Whole time loop of the 2nd-order damped acoustic wave equation for one shot.

    grid = (SRC_N,) with "parallel" semantics (one shot per TensorCore on v7x).
    csg/forw output blocks stay VMEM-resident for the full loop; written in final layout.
    """
    s = pl.program_id(0)
    nyp, nxp = damp_ref.shape

    # -------- prologue: dv[:12]=0 (on padded rows < pml+12), v = clip(v0+dv), coefficients.
    row = lax.broadcasted_iota(jnp.int32, (nyp, nxp), 0)
    dv = jnp.where(row < pml + zero_rows, 0.0, dv_ref[...])
    v = jnp.clip(v0_ref[...] + dv, vmin, vmax)
    # rho = v**0.25 * 310 intentionally not computed: constant-density FM2 never uses it.

    alpha = damp_ref[...] * dt
    inv = 1.0 / (1.0 + alpha)
    c_lap = (dt * dt) * (v * v) * inv
    a_ref[...] = (2.0 - alpha * alpha) * inv
    b_ref[...] = (1.0 - alpha) * inv
    c_ref[...] = c_lap
    sa_ref[...] = c_lap * srcm_ref[...]            # per-shot scaled source-injection field
    pp_ref[...] = jnp.zeros_like(pp_ref)
    pc_ref[...] = jnp.zeros_like(pc_ref)

    inv_dy2 = 1.0 / (dy * dy)
    inv_dx2 = 1.0 / (dx * dx)

    # -------- time loop, entirely inside one kernel invocation.
    @pl.loop(0, nt)
    def _time_step(t):
        p_prev = pp_ref[...]
        p = pc_ref[...]

        # 5-point Laplacian; zero contribution on the outermost rows / columns.
        d2y = (p[2:, :] - 2.0 * p[1:-1, :] + p[:-2, :]) * inv_dy2
        d2x = (p[:, 2:] - 2.0 * p[:, 1:-1] + p[:, :-2]) * inv_dx2
        lap = jnp.pad(d2y, ((1, 1), (0, 0))) + jnp.pad(d2x, ((0, 0), (1, 1)))

        amp = stf_ref[s * nt + t]                  # scalar source amplitude from SMEM
        p_new = (a_ref[...] * p - b_ref[...] * p_prev
                 + c_ref[...] * lap + sa_ref[...] * amp)

        # Receiver sampling: exact point picks via separable one-hots.
        #   tcol[y, r] = p_new[y, rcv_x[r]]   (MXU)
        #   rec[r]     = tcol[rcv_y[r], r]    (elementwise * + sublane reduce)
        tcol = jnp.dot(p_new, rxh_ref[...], preferred_element_type=jnp.float32)   # (nyp, rcv_n)
        rec = jnp.sum(tcol * ryh_ref[...], axis=0, keepdims=True)                 # (1, rcv_n)

        csg_ref[pl.ds(t, 1), :] = rec
        forw_ref[pl.ds(t, 1), :, :] = p_new[None, :, :]
        pp_ref[...] = p
        pc_ref[...] = p_new


def fd_propagate(stf_flat, dv_pml, v0_pml, damp, src_mask, rx_hot, ry_hot):
    csg, forw = pl.pallas_call(
        functools.partial(_fd_kernel, nt=NT, dt=DT, dx=DX, dy=DY, pml=PML,
                          vmin=VMIN, vmax=VMAX, zero_rows=ZERO_ROWS),
        out_shape=(jax.ShapeDtypeStruct((SRC_N, NT, RCV_N), jnp.float32),
                   jax.ShapeDtypeStruct((SRC_N, NT, NYP, NXP), jnp.float32)),
        grid_spec=pltpu.PrefetchScalarGridSpec(
            num_scalar_prefetch=0,
            grid=(SRC_N,),
            in_specs=[
                pl.BlockSpec(memory_space=pltpu.MemorySpace.SMEM),      # stf (src_n*nt,) scalars
                pl.BlockSpec((NYP, NXP), lambda s: (0, 0)),             # dv on padded grid
                pl.BlockSpec((NYP, NXP), lambda s: (0, 0)),             # init_v on padded grid
                pl.BlockSpec((NYP, NXP), lambda s: (0, 0)),             # PML damping profile
                pl.BlockSpec((None, NYP, NXP), lambda s: (s, 0, 0)),    # per-shot source one-hot
                pl.BlockSpec((NXP, RCV_N), lambda s: (0, 0)),           # receiver x one-hot
                pl.BlockSpec((NYP, RCV_N), lambda s: (0, 0)),           # receiver y one-hot
            ],
            out_specs=[
                pl.BlockSpec((None, NT, RCV_N), lambda s: (s, 0, 0)),           # csg (final layout)
                pl.BlockSpec((None, NT, NYP, NXP), lambda s: (s, 0, 0, 0)),     # forw (final layout)
            ],
            scratch_shapes=[pltpu.VMEM((NYP, NXP), jnp.float32)] * 6,  # a, b, c, src, p_prev, p_cur
        ),
        compiler_params=pltpu.CompilerParams(dimension_semantics=("parallel",)),
    )(stf_flat, dv_pml, v0_pml, damp, src_mask, rx_hot, ry_hot)
    return csg, forw


@jax.jit
def acoustic_simulation_nn_forward(z, params, init_v_pml, damp, src_mask, rx_hot, ry_hot,
                                   stf_flat):
    # --- generator ('dv' mode) ---
    dv_full = cnn_generate_dv(z, params)                          # (36, 36)
    hy = (dv_full.shape[0] - NY) // 2
    wx = (dv_full.shape[1] - NX) // 2
    dv = dv_full[hy:hy + NY, wx:wx + NX]                          # get_v crop (static slice)
    # Edge-replicate dv into the PML zone (tiny XLA glue); zero-rows/clip/coefficients are
    # fused into the FD kernel prologue (equivalent to zero->clip->pad on the interior grid).
    dv_pml = jnp.pad(dv, PML, mode="edge")
    return fd_propagate(stf_flat, dv_pml, init_v_pml, damp, src_mask, rx_hot, ry_hot)


# ============================== deterministic setup ==============================

def build_inputs(key):
    ks = jax.random.split(key, 4)

    # CNN parameters (PyTorch shapes (Cout,Cin,3,3) stored here already transposed to (3,3,Cin,Cout)).
    def conv_w(k, cin, cout):
        std = math.sqrt(2.0 / (9 * cin))
        return (std * jax.random.normal(k, (3, 3, cin, cout))).astype(jnp.float32)

    params = dict(
        w1=conv_w(ks[1], 8, 16), b1=jnp.zeros((16,), jnp.float32),
        w2=conv_w(ks[2], 16, 16), b2=jnp.zeros((16,), jnp.float32),
        w3=conv_w(ks[3], 16, 1), b3=jnp.zeros((1,), jnp.float32),
    )
    z = jax.random.normal(ks[0], (9, 9, 8), jnp.float32)    # fixed latent input

    # init velocity model (ny, nx), m/s, linear gradient with depth; edge-padded once.
    depth = jnp.arange(NY, dtype=jnp.float32)
    init_v = jnp.clip(2000.0 + 40.0 * depth, VMIN, VMAX)
    init_v = jnp.tile(init_v[:, None], (1, NX)).astype(jnp.float32)
    init_v_pml = jnp.pad(init_v, PML, mode="edge")

    # PML damping profile on the padded grid.
    def prof(i, n):
        lo = jnp.maximum(PML - i, 0) / PML
        hi = jnp.maximum(i - (n - 1 - PML), 0) / PML
        return jnp.maximum(lo, hi)
    coef = 3.0 * VMAX / (2.0 * PML * DX) * math.log(1.0 / 1e-3)
    dy_prof = coef * prof(jnp.arange(NYP), NYP) ** 2
    dx_prof = coef * prof(jnp.arange(NXP), NXP) ** 2
    damp = jnp.maximum(dy_prof[:, None], dx_prof[None, :]).astype(jnp.float32)

    # Sources (one-hot per shot) / receivers (separable one-hot bases) on the padded grid.
    src_x = jnp.array([PML + 8, PML + 24], dtype=jnp.int32)
    src_y = jnp.full((SRC_N,), PML + 2, dtype=jnp.int32)
    rcv_x = (PML + 2 * jnp.arange(RCV_N)).astype(jnp.int32)
    rcv_y = jnp.full((RCV_N,), PML + 3, dtype=jnp.int32)
    src_mask = jnp.zeros((SRC_N, NYP, NXP), jnp.float32).at[
        jnp.arange(SRC_N), src_y, src_x].set(1.0)
    rx_hot = jnp.zeros((NXP, RCV_N), jnp.float32).at[rcv_x, jnp.arange(RCV_N)].set(1.0)
    ry_hot = jnp.zeros((NYP, RCV_N), jnp.float32).at[rcv_y, jnp.arange(RCV_N)].set(1.0)

    # Ricker source time function, stf_val shape (src_n, nt); flattened shot-major for SMEM.
    t_ax = jnp.arange(NT, dtype=jnp.float32) * DT
    f0 = 60.0
    t0 = 1.2 / f0
    arg = (jnp.pi * f0 * (t_ax - t0)) ** 2
    ricker = (1.0 - 2.0 * arg) * jnp.exp(-arg)
    stf_val = jnp.tile(ricker[None, :], (SRC_N, 1)).astype(jnp.float32)
    stf_flat = stf_val.reshape(SRC_N * NT)

    return z, params, init_v_pml, damp, src_mask, rx_hot, ry_hot, stf_flat


if __name__ == "__main__":
    key = jax.random.PRNGKey(0)
    (z, params, init_v_pml, damp, src_mask,
     rx_hot, ry_hot, stf_flat) = build_inputs(key)

    csg, forw = acoustic_simulation_nn_forward(
        z, params, init_v_pml, damp, src_mask, rx_hot, ry_hot, stf_flat)
    jax.block_until_ready((csg, forw))

    assert csg.shape == (SRC_N, NT, RCV_N)
    assert forw.shape == (SRC_N, NT, NYP, NXP)
    assert bool(jnp.all(jnp.isfinite(csg))) and bool(jnp.all(jnp.isfinite(forw)))
    print("KERNEL_OK")
</pallas_src>

<mosaic_0001>
module attributes {stable_mosaic.version = 11 : i64} {
  func.func @_dense_act_kernel(%arg0: memref<328x72xbf16, #tpu.memory_space<vmem>>, %arg1: memref<72x128xbf16, #tpu.memory_space<vmem>>, %arg2: memref<1x128xf32, #tpu.memory_space<vmem>>, %arg3: memref<328x128xf32, #tpu.memory_space<vmem>>) attributes {dimension_semantics = [], scalar_prefetch = 0 : i64, scratch_operands = 0 : i64, tpu.core_type = #tpu.core_type<tc>} {
    %c0 = arith.constant 0 : index
    %c0_0 = arith.constant 0 : index
    %0 = vector.load %arg0[%c0, %c0_0] : memref<328x72xbf16, #tpu.memory_space<vmem>>, vector<328x72xbf16>
    %c0_1 = arith.constant 0 : index
    %c0_2 = arith.constant 0 : index
    %1 = vector.load %arg1[%c0_1, %c0_2] : memref<72x128xbf16, #tpu.memory_space<vmem>>, vector<72x128xbf16>
    %cst = arith.constant dense<0.000000e+00> : vector<328x128xf32>
    %2 = tpu.matmul %0, %1, %cst {dimension_numbers = #tpu.dot_dimension_numbers<[1], [0], [0], [1], [0, 0, 1, 1], [], []>} : vector<328x72xbf16>, vector<72x128xbf16>, vector<328x128xf32> -> vector<328x128xf32>
    %c0_3 = arith.constant 0 : index
    %c0_4 = arith.constant 0 : index
    %3 = vector.load %arg2[%c0_3, %c0_4] : memref<1x128xf32, #tpu.memory_space<vmem>>, vector<1x128xf32>
    %4 = vector.broadcast %3 : vector<1x128xf32> to vector<328x128xf32>
    %5 = arith.addf %2, %4 : vector<328x128xf32>
    %cst_5 = arith.constant 0.000000e+00 : f32
    %6 = vector.broadcast %cst_5 : f32 to vector<328x128xf32>
    %7 = arith.cmpf ogt, %5, %6 : vector<328x128xf32>
    %cst_6 = arith.constant 2.000000e-01 : f32
    %8 = vector.broadcast %cst_6 : f32 to vector<328x128xf32>
    %9 = arith.mulf %8, %5 : vector<328x128xf32>
    %10 = arith.select %7, %5, %9 : vector<328x128xi1>, vector<328x128xf32>
    %c0_7 = arith.constant 0 : index
    %c0_8 = arith.constant 0 : index
    %11 = vector.load %arg3[%c0_7, %c0_8] : memref<328x128xf32, #tpu.memory_space<vmem>>, vector<328x128xf32>
    tpu.vector_store %arg3[%c0_7, %c0_8], %10 {strides = array<i32>} : memref<328x128xf32, #tpu.memory_space<vmem>>, vector<328x128xf32>,
    return
  }
}

module attributes {stable_mosaic.version = 11 : i64} {
  func.func @_dense_act_kernel(%arg0: memref<1296x144xbf16, #tpu.memory_space<vmem>>, %arg1: memref<144x128xbf16, #tpu.memory_space<vmem>>, %arg2: memref<1x128xf32, #tpu.memory_space<vmem>>, %arg3: memref<1296x128xf32, #tpu.memory_space<vmem>>) attributes {dimension_semantics = [], scalar_prefetch = 0 : i64, scratch_operands = 0 : i64, tpu.core_type = #tpu.core_type<tc>} {
    %c0 = arith.constant 0 : index
    %c0_0 = arith.constant 0 : index
    %0 = vector.load %arg0[%c0, %c0_0] : memref<1296x144xbf16, #tpu.memory_space<vmem>>, vector<1296x144xbf16>
    %c0_1 = arith.constant 0 : index
    %c0_2 = arith.constant 0 : index
    %1 = vector.load %arg1[%c0_1, %c0_2] : memref<144x128xbf16, #tpu.memory_space<vmem>>, vector<144x128xbf16>
    %cst = arith.constant dense<0.000000e+00> : vector<1296x128xf32>
    %2 = tpu.matmul %0, %1, %cst {dimension_numbers = #tpu.dot_dimension_numbers<[1], [0], [0], [1], [0, 0, 1, 1], [], []>} : vector<1296x144xbf16>, vector<144x128xbf16>, vector<1296x128xf32> -> vector<1296x128xf32>
    %c0_3 = arith.constant 0 : index
    %c0_4 = arith.constant 0 : index
    %3 = vector.load %arg2[%c0_3, %c0_4] : memref<1x128xf32, #tpu.memory_space<vmem>>, vector<1x128xf32>
    %4 = vector.broadcast %3 : vector<1x128xf32> to vector<1296x128xf32>
    %5 = arith.addf %2, %4 : vector<1296x128xf32>
    %cst_5 = arith.constant 0.000000e+00 : f32
    %6 = vector.broadcast %cst_5 : f32 to vector<1296x128xf32>
    %7 = arith.cmpf ogt, %5, %6 : vector<1296x128xf32>
    %cst_6 = arith.constant 2.000000e-01 : f32
    %8 = vector.broadcast %cst_6 : f32 to vector<1296x128xf32>
    %9 = arith.mulf %8, %5 : vector<1296x128xf32>
    %10 = arith.select %7, %5, %9 : vector<1296x128xi1>, vector<1296x128xf32>
    %c0_7 = arith.constant 0 : index
    %c0_8 = arith.constant 0 : index
    %11 = vector.load %arg3[%c0_7, %c0_8] : memref<1296x128xf32, #tpu.memory_space<vmem>>, vector<1296x128xf32>
    tpu.vector_store %arg3[%c0_7, %c0_8], %10 {strides = array<i32>} : memref<1296x128xf32, #tpu.memory_space<vmem>>, vector<1296x128xf32>,
    return
  }
}

module attributes {stable_mosaic.version = 11 : i64} {
  func.func @_dense_act_kernel(%arg0: memref<1296x144xbf16, #tpu.memory_space<vmem>>, %arg1: memref<144x128xbf16, #tpu.memory_space<vmem>>, %arg2: memref<1x128xf32, #tpu.memory_space<vmem>>, %arg3: memref<1296x128xf32, #tpu.memory_space<vmem>>) attributes {dimension_semantics = [], scalar_prefetch = 0 : i64, scratch_operands = 0 : i64, tpu.core_type = #tpu.core_type<tc>} {
    %c0 = arith.constant 0 : index
    %c0_0 = arith.constant 0 : index
    %0 = vector.load %arg0[%c0, %c0_0] : memref<1296x144xbf16, #tpu.memory_space<vmem>>, vector<1296x144xbf16>
    %c0_1 = arith.constant 0 : index
    %c0_2 = arith.constant 0 : index
    %1 = vector.load %arg1[%c0_1, %c0_2] : memref<144x128xbf16, #tpu.memory_space<vmem>>, vector<144x128xbf16>
    %cst = arith.constant dense<0.000000e+00> : vector<1296x128xf32>
    %2 = tpu.matmul %0, %1, %cst {dimension_numbers = #tpu.dot_dimension_numbers<[1], [0], [0], [1], [0, 0, 1, 1], [], []>} : vector<1296x144xbf16>, vector<144x128xbf16>, vector<1296x128xf32> -> vector<1296x128xf32>
    %c0_3 = arith.constant 0 : index
    %c0_4 = arith.constant 0 : index
    %3 = vector.load %arg2[%c0_3, %c0_4] : memref<1x128xf32, #tpu.memory_space<vmem>>, vector<1x128xf32>
    %4 = vector.broadcast %3 : vector<1x128xf32> to vector<1296x128xf32>
    %5 = arith.addf %2, %4 : vector<1296x128xf32>
    %cst_5 = arith.constant 0.000000e+00 : f32
    %6 = vector.broadcast %cst_5 : f32 to vector<1296x128xf32>
    %7 = arith.subf %6, %5 : vector<1296x128xf32>
    %8 = math.exp %7 : vector<1296x128xf32>
    %cst_6 = arith.constant 1.000000e+00 : f32
    %9 = vector.broadcast %cst_6 : f32 to vector<1296x128xf32>
    %10 = arith.addf %9, %8 : vector<1296x128xf32>
    %cst_7 = arith.constant 1.000000e+00 : f32
    %11 = vector.broadcast %cst_7 : f32 to vector<1296x128xf32>
    %12 = arith.divf %11, %10 : vector<1296x128xf32>
    %cst_8 = arith.constant 1.000000e+00 : f32
    %13 = vector.broadcast %cst_8 : f32 to vector<1296x128xf32>
    %14 = arith.mulf %13, %12 : vector<1296x128xf32>
    %cst_9 = arith.constant -5.000000e-01 : f32
    %15 = vector.broadcast %cst_9 : f32 to vector<1296x128xf32>
    %16 = arith.addf %15, %14 : vector<1296x128xf32>
    %c0_10 = arith.constant 0 : index
    %c0_11 = arith.constant 0 : index
    %17 = vector.load %arg3[%c0_10, %c0_11] : memref<1296x128xf32, #tpu.memory_space<vmem>>, vector<1296x128xf32>
    tpu.vector_store %arg3[%c0_10, %c0_11], %16 {strides = array<i32>} : memref<1296x128xf32, #tpu.memory_space<vmem>>, vector<1296x128xf32>,
    return
  }
}

module attributes {stable_mosaic.version = 11 : i64} {
  func.func @_fd_kernel(%arg0: i32, %arg1: memref<64xf32, #tpu.memory_space<smem>>, %arg2: memref<48x48xf32, #tpu.memory_space<vmem>>, %arg3: memref<48x48xf32, #tpu.memory_space<vmem>>, %arg4: memref<48x48xf32, #tpu.memory_space<vmem>>, %arg5: memref<1x48x48xf32, #tpu.memory_space<vmem>>, %arg6: memref<48x16xf32, #tpu.memory_space<vmem>>, %arg7: memref<48x16xf32, #tpu.memory_space<vmem>>, %arg8: memref<1x32x16xf32, #tpu.memory_space<vmem>>, %arg9: memref<1x32x48x48xf32, #tpu.memory_space<vmem>>, %arg10: memref<48x48xf32, #tpu.memory_space<vmem>>, %arg11: memref<48x48xf32, #tpu.memory_space<vmem>>, %arg12: memref<48x48xf32, #tpu.memory_space<vmem>>, %arg13: memref<48x48xf32, #tpu.memory_space<vmem>>, %arg14: memref<48x48xf32, #tpu.memory_space<vmem>>, %arg15: memref<48x48xf32, #tpu.memory_space<vmem>>) attributes {dimension_semantics = [#tpu.dimension_semantics<parallel>], iteration_bounds = array<i64: 2>, scalar_prefetch = 0 : i64, scratch_operands = 6 : i64, tpu.core_type = #tpu.core_type<tc>, window_params = [{transform_indices = @transform_0, window_bounds = array<i64: 64>}, {pipeline_mode = #tpu.pipeline_mode<synchronous>, transform_indices = @transform_1, window_bounds = array<i64: 48, 48>}, {pipeline_mode = #tpu.pipeline_mode<synchronous>, transform_indices = @transform_2, window_bounds = array<i64: 48, 48>}, {pipeline_mode = #tpu.pipeline_mode<synchronous>, transform_indices = @transform_3, window_bounds = array<i64: 48, 48>}, {transform_indices = @transform_4, window_bounds = array<i64: 1, 48, 48>}, {pipeline_mode = #tpu.pipeline_mode<synchronous>, transform_indices = @transform_5, window_bounds = array<i64: 48, 16>}, {pipeline_mode = #tpu.pipeline_mode<synchronous>, transform_indices = @transform_6, window_bounds = array<i64: 48, 16>}, {transform_indices = @transform_7, window_bounds = array<i64: 1, 32, 16>}, {transform_indices = @transform_8, window_bounds = array<i64: 1, 32, 48, 48>}]} {
    %0 = tpu.iota {dimensions = array<i32: 0>} : vector<48x48xi32>
    %c20_i32 = arith.constant 20 : i32
    %1 = vector.broadcast %c20_i32 : i32 to vector<48x48xi32>
    %2 = arith.cmpi slt, %0, %1 : vector<48x48xi32>
    %c0 = arith.constant 0 : index
    %c0_0 = arith.constant 0 : index
    %3 = vector.load %arg2[%c0, %c0_0] : memref<48x48xf32, #tpu.memory_space<vmem>>, vector<48x48xf32>
    %cst = arith.constant 0.000000e+00 : f32
    %4 = vector.broadcast %cst : f32 to vector<48x48xf32>
    %5 = arith.select %2, %4, %3 : vector<48x48xi1>, vector<48x48xf32>
    %c0_1 = arith.constant 0 : index
    %c0_2 = arith.constant 0 : index
    %6 = vector.load %arg3[%c0_1, %c0_2] : memref<48x48xf32, #tpu.memory_space<vmem>>, vector<48x48xf32>
    %7 = arith.addf %6, %5 : vector<48x48xf32>
    %cst_3 = arith.constant 1.500000e+03 : f32
    %cst_4 = arith.constant 4.500000e+03 : f32
    %8 = vector.broadcast %cst_3 : f32 to vector<48x48xf32>
    %9 = arith.maximumf %8, %7 : vector<48x48xf32>
    %10 = vector.broadcast %cst_4 : f32 to vector<48x48xf32>
    %11 = arith.minimumf %10, %9 : vector<48x48xf32>
    %c0_5 = arith.constant 0 : index
    %c0_6 = arith.constant 0 : index
    %12 = vector.load %arg4[%c0_5, %c0_6] : memref<48x48xf32, #tpu.memory_space<vmem>>, vector<48x48xf32>
    %cst_7 = arith.constant 1.000000e-03 : f32
    %13 = vector.broadcast %cst_7 : f32 to vector<48x48xf32>
    %14 = arith.mulf %12, %13 : vector<48x48xf32>
    %cst_8 = arith.constant 1.000000e+00 : f32
    %15 = vector.broadcast %cst_8 : f32 to vector<48x48xf32>
    %16 = arith.addf %15, %14 : vector<48x48xf32>
    %cst_9 = arith.constant 1.000000e+00 : f32
    %17 = vector.broadcast %cst_9 : f32 to vector<48x48xf32>
    %18 = arith.divf %17, %16 : vector<48x48xf32>
    %19 = arith.mulf %11, %11 : vector<48x48xf32>
    %cst_10 = arith.constant 9.99999997E-7 : f32
    %20 = vector.broadcast %cst_10 : f32 to vector<48x48xf32>
    %21 = arith.mulf %20, %19 : vector<48x48xf32>
    %22 = arith.mulf %21, %18 : vector<48x48xf32>
    %23 = arith.mulf %14, %14 : vector<48x48xf32>
    %cst_11 = arith.constant 2.000000e+00 : f32
    %24 = vector.broadcast %cst_11 : f32 to vector<48x48xf32>
    %25 = arith.subf %24, %23 : vector<48x48xf32>
    %26 = arith.mulf %25, %18 : vector<48x48xf32>
    %c0_12 = arith.constant 0 : index
    %c0_13 = arith.constant 0 : index
    %27 = vector.load %arg10[%c0_12, %c0_13] : memref<48x48xf32, #tpu.memory_space<vmem>>, vector<48x48xf32>
    tpu.vector_store %arg10[%c0_12, %c0_13], %26 {strides = array<i32>} : memref<48x48xf32, #tpu.memory_space<vmem>>, vector<48x48xf32>,
    %cst_14 = arith.constant 1.000000e+00 : f32
    %28 = vector.broadcast %cst_14 : f32 to vector<48x48xf32>
    %29 = arith.subf %28, %14 : vector<48x48xf32>
    %30 = arith.mulf %29, %18 : vector<48x48xf32>
    %c0_15 = arith.constant 0 : index
    %c0_16 = arith.constant 0 : index
    %31 = vector.load %arg11[%c0_15, %c0_16] : memref<48x48xf32, #tpu.memory_space<vmem>>, vector<48x48xf32>
    tpu.vector_store %arg11[%c0_15, %c0_16], %30 {strides = array<i32>} : memref<48x48xf32, #tpu.memory_space<vmem>>, vector<48x48xf32>,
    %c0_17 = arith.constant 0 : index
    %c0_18 = arith.constant 0 : index
    %32 = vector.load %arg12[%c0_17, %c0_18] : memref<48x48xf32, #tpu.memory_space<vmem>>, vector<48x48xf32>
    tpu.vector_store %arg12[%c0_17, %c0_18], %22 {strides = array<i32>} : memref<48x48xf32, #tpu.memory_space<vmem>>, vector<48x48xf32>,
    %c0_19 = arith.constant 0 : index
    %c0_20 = arith.constant 0 : index
    %c0_21 = arith.constant 0 : index
    %33 = vector.load %arg5[%c0_19, %c0_20, %c0_21] : memref<1x48x48xf32, #tpu.memory_space<vmem>>, vector<1x48x48xf32>
    %34 = vector.shape_cast %33 : vector<1x48x48xf32> to vector<48x48xf32>
    %35 = arith.mulf %22, %34 : vector<48x48xf32>
    %c0_22 = arith.constant 0 : index
    %c0_23 = arith.constant 0 : index
    %36 = vector.load %arg13[%c0_22, %c0_23] : memref<48x48xf32, #tpu.memory_space<vmem>>, vector<48x48xf32>
    tpu.vector_store %arg13[%c0_22, %c0_23], %35 {strides = array<i32>} : memref<48x48xf32, #tpu.memory_space<vmem>>, vector<48x48xf32>,
    %cst_24 = arith.constant 0.000000e+00 : f32
    %37 = vector.broadcast %cst_24 : f32 to vector<48x48xf32>
    %c0_25 = arith.constant 0 : index
    %c0_26 = arith.constant 0 : index
    %38 = vector.load %arg14[%c0_25, %c0_26] : memref<48x48xf32, #tpu.memory_space<vmem>>, vector<48x48xf32>
    tpu.vector_store %arg14[%c0_25, %c0_26], %37 {strides = array<i32>} : memref<48x48xf32, #tpu.memory_space<vmem>>, vector<48x48xf32>,
    %cst_27 = arith.constant 0.000000e+00 : f32
    %39 = vector.broadcast %cst_27 : f32 to vector<48x48xf32>
    %c0_28 = arith.constant 0 : index
    %c0_29 = arith.constant 0 : index
    %40 = vector.load %arg15[%c0_28, %c0_29] : memref<48x48xf32, #tpu.memory_space<vmem>>, vector<48x48xf32>
    tpu.vector_store %arg15[%c0_28, %c0_29], %39 {strides = array<i32>} : memref<48x48xf32, #tpu.memory_space<vmem>>, vector<48x48xf32>,
    %c0_i32 = arith.constant 0 : i32
    %c32_i32 = arith.constant 32 : i32
    %41 = arith.addi %c0_i32, %c32_i32 : i32
    %c1_i32 = arith.constant 1 : i32
    scf.for %arg16 = %c0_i32 to %41 step %c1_i32  : i32 {
      %c1_i32_31 = arith.constant 1 : i32
      %42 = arith.muli %arg16, %c1_i32_31 : i32
      %c0_i32_32 = arith.constant 0 : i32
      %43 = arith.addi %c0_i32_32, %42 : i32
      %c0_33 = arith.constant 0 : index
      %c0_34 = arith.constant 0 : index
      %44 = vector.load %arg14[%c0_33, %c0_34] : memref<48x48xf32, #tpu.memory_space<vmem>>, vector<48x48xf32>
      %c0_35 = arith.constant 0 : index
      %c0_36 = arith.constant 0 : index
      %45 = vector.load %arg15[%c0_35, %c0_36] : memref<48x48xf32, #tpu.memory_space<vmem>>, vector<48x48xf32>
      %46 = vector.extract_strided_slice %45 {offsets = [2, 0], sizes = [46, 48], strides = [1, 1]} : vector<48x48xf32> to vector<46x48xf32>
      %47 = vector.extract_strided_slice %45 {offsets = [1, 0], sizes = [46, 48], strides = [1, 1]} : vector<48x48xf32> to vector<46x48xf32>
      %cst_37 = arith.constant 2.000000e+00 : f32
      %48 = vector.broadcast %cst_37 : f32 to vector<46x48xf32>
      %49 = arith.mulf %48, %47 : vector<46x48xf32>
      %50 = arith.subf %46, %49 : vector<46x48xf32>
      %51 = vector.extract_strided_slice %45 {offsets = [0, 0], sizes = [46, 48], strides = [1, 1]} : vector<48x48xf32> to vector<46x48xf32>
      %52 = arith.addf %50, %51 : vector<46x48xf32>
      %cst_38 = arith.constant 0.00999999977 : f32
      %53 = vector.broadcast %cst_38 : f32 to vector<46x48xf32>
      %54 = arith.mulf %52, %53 : vector<46x48xf32>
      %55 = vector.extract_strided_slice %45 {offsets = [0, 2], sizes = [48, 46], strides = [1, 1]} : vector<48x48xf32> to vector<48x46xf32>
      %56 = vector.extract_strided_slice %45 {offsets = [0, 1], sizes = [48, 46], strides = [1, 1]} : vector<48x48xf32> to vector<48x46xf32>
      %cst_39 = arith.constant 2.000000e+00 : f32
      %57 = vector.broadcast %cst_39 : f32 to vector<48x46xf32>
      %58 = arith.mulf %57, %56 : vector<48x46xf32>
      %59 = arith.subf %55, %58 : vector<48x46xf32>
      %60 = vector.extract_strided_slice %45 {offsets = [0, 0], sizes = [48, 46], strides = [1, 1]} : vector<48x48xf32> to vector<48x46xf32>
      %61 = arith.addf %59, %60 : vector<48x46xf32>
      %cst_40 = arith.constant 0.00999999977 : f32
      %62 = vector.broadcast %cst_40 : f32 to vector<48x46xf32>
      %63 = arith.mulf %61, %62 : vector<48x46xf32>
      %c0_i32_41 = arith.constant 0 : i32
      %64 = arith.sitofp %c0_i32_41 : i32 to f32
      %65 = vector.broadcast %64 : f32 to vector<1x48xf32>
      %66 = tpu.concatenate %65, %54 in 0 : vector<1x48xf32>, vector<46x48xf32> -> vector<47x48xf32>
      %67 = vector.broadcast %64 : f32 to vector<1x48xf32>
      %68 = tpu.concatenate %66, %67 in 0 : vector<47x48xf32>, vector<1x48xf32> -> vector<48x48xf32>
      %c0_i32_42 = arith.constant 0 : i32
      %69 = arith.sitofp %c0_i32_42 : i32 to f32
      %70 = vector.broadcast %69 : f32 to vector<48x1xf32>
      %71 = tpu.concatenate %70, %63 in 1 : vector<48x1xf32>, vector<48x46xf32> -> vector<48x47xf32>
      %72 = vector.broadcast %69 : f32 to vector<48x1xf32>
      %73 = tpu.concatenate %71, %72 in 1 : vector<48x47xf32>, vector<48x1xf32> -> vector<48x48xf32>
      %74 = arith.addf %68, %73 : vector<48x48xf32>
      %c32_i32_43 = arith.constant 32 : i32
      %75 = arith.muli %arg0, %c32_i32_43 : i32
      %76 = arith.addi %75, %43 : i32
      %77 = arith.index_cast %76 : i32 to index
      %78 = memref.load %arg1[%77] : memref<64xf32, #tpu.memory_space<smem>>
      %c0_44 = arith.constant 0 : index
      %c0_45 = arith.constant 0 : index
      %79 = vector.load %arg10[%c0_44, %c0_45] : memref<48x48xf32, #tpu.memory_space<vmem>>, vector<48x48xf32>
      %80 = arith.mulf %79, %45 : vector<48x48xf32>
      %c0_46 = arith.constant 0 : index
      %c0_47 = arith.constant 0 : index
      %81 = vector.load %arg11[%c0_46, %c0_47] : memref<48x48xf32, #tpu.memory_space<vmem>>, vector<48x48xf32>
      %82 = arith.mulf %81, %44 : vector<48x48xf32>
      %83 = arith.subf %80, %82 : vector<48x48xf32>
      %c0_48 = arith.constant 0 : index
      %c0_49 = arith.constant 0 : index
      %84 = vector.load %arg12[%c0_48, %c0_49] : memref<48x48xf32, #tpu.memory_space<vmem>>, vector<48x48xf32>
      %85 = arith.mulf %84, %74 : vector<48x48xf32>
      %86 = arith.addf %83, %85 : vector<48x48xf32>
      %c0_50 = arith.constant 0 : index
      %c0_51 = arith.constant 0 : index
      %87 = vector.load %arg13[%c0_50, %c0_51] : memref<48x48xf32, #tpu.memory_space<vmem>>, vector<48x48xf32>
      %88 = vector.broadcast %78 : f32 to vector<48x48xf32>
      %89 = arith.mulf %87, %88 : vector<48x48xf32>
      %90 = arith.addf %86, %89 : vector<48x48xf32>
      %c0_52 = arith.constant 0 : index
      %c0_53 = arith.constant 0 : index
      %91 = vector.load %arg6[%c0_52, %c0_53] : memref<48x16xf32, #tpu.memory_space<vmem>>, vector<48x16xf32>
      %cst_54 = arith.constant dense<0.000000e+00> : vector<48x16xf32>
      %92 = tpu.matmul %90, %91, %cst_54 {dimension_numbers = #tpu.dot_dimension_numbers<[1], [0], [0], [1], [0, 0, 1, 1], [], []>} : vector<48x48xf32>, vector<48x16xf32>, vector<48x16xf32> -> vector<48x16xf32>
      %c0_55 = arith.constant 0 : index
      %c0_56 = arith.constant 0 : index
      %93 = vector.load %arg7[%c0_55, %c0_56] : memref<48x16xf32, #tpu.memory_space<vmem>>, vector<48x16xf32>
      %94 = arith.mulf %92, %93 : vector<48x16xf32>
      %cst_57 = arith.constant dense<0.000000e+00> : vector<16xf32>
      %95 = vector.multi_reduction <add>, %94, %cst_57 [0] : vector<48x16xf32> to vector<16xf32>
      %96 = vector.shape_cast %95 : vector<16xf32> to vector<1x16xf32>
      %c0_58 = arith.constant 0 : index
      %97 = arith.index_cast %43 : i32 to index
      %c0_59 = arith.constant 0 : index
      %98 = vector.load %arg8[%c0_58, %97, %c0_59] : memref<1x32x16xf32, #tpu.memory_space<vmem>>, vector<1x1x16xf32>
      %99 = vector.shape_cast %98 : vector<1x1x16xf32> to vector<1x16xf32>
      %100 = vector.shape_cast %96 : vector<1x16xf32> to vector<1x1x16xf32>
      tpu.vector_store %arg8[%c0_58, %97, %c0_59], %100 {strides = array<i32>} : memref<1x32x16xf32, #tpu.memory_space<vmem>>, vector<1x1x16xf32>,
      %101 = vector.shape_cast %90 : vector<48x48xf32> to vector<1x48x48xf32>
      %c0_60 = arith.constant 0 : index
      %102 = arith.index_cast %43 : i32 to index
      %c0_61 = arith.constant 0 : index
      %c0_62 = arith.constant 0 : index
      %103 = vector.load %arg9[%c0_60, %102, %c0_61, %c0_62] : memref<1x32x48x48xf32, #tpu.memory_space<vmem>>, vector<1x1x48x48xf32>
      %104 = vector.shape_cast %103 : vector<1x1x48x48xf32> to vector<1x48x48xf32>
      %105 = vector.shape_cast %101 : vector<1x48x48xf32> to vector<1x1x48x48xf32>
      tpu.vector_store %arg9[%c0_60, %102, %c0_61, %c0_62], %105 {strides = array<i32>} : memref<1x32x48x48xf32, #tpu.memory_space<vmem>>, vector<1x1x48x48xf32>,
      %c0_63 = arith.constant 0 : index
      %c0_64 = arith.constant 0 : index
      %106 = vector.load %arg14[%c0_63, %c0_64] : memref<48x48xf32, #tpu.memory_space<vmem>>, vector<48x48xf32>
      tpu.vector_store %arg14[%c0_63, %c0_64], %45 {strides = array<i32>} : memref<48x48xf32, #tpu.memory_space<vmem>>, vector<48x48xf32>,
      %c0_65 = arith.constant 0 : index
      %c0_66 = arith.constant 0 : index
      %107 = vector.load %arg15[%c0_65, %c0_66] : memref<48x48xf32, #tpu.memory_space<vmem>>, vector<48x48xf32>
      tpu.vector_store %arg15[%c0_65, %c0_66], %90 {strides = array<i32>} : memref<48x48xf32, #tpu.memory_space<vmem>>, vector<48x48xf32>,
    }
    %c32_i32_30 = arith.constant 32 : i32
    return
  }
  func.func @transform_0(%arg0: i32) -> i32 {
    %c0_i32 = arith.constant 0 : i32
    %c0_i32_0 = arith.constant 0 : i32
    return %c0_i32 : i32
  }
  func.func @transform_1(%arg0: i32) -> (i32, i32) {
    %c0_i32 = arith.constant 0 : i32
    %c0_i32_0 = arith.constant 0 : i32
    %c0_i32_1 = arith.constant 0 : i32
    return %c0_i32, %c0_i32_0 : i32, i32
  }
  func.func @transform_2(%arg0: i32) -> (i32, i32) {
    %c0_i32 = arith.constant 0 : i32
    %c0_i32_0 = arith.constant 0 : i32
    %c0_i32_1 = arith.constant 0 : i32
    return %c0_i32, %c0_i32_0 : i32, i32
  }
  func.func @transform_3(%arg0: i32) -> (i32, i32) {
    %c0_i32 = arith.constant 0 : i32
    %c0_i32_0 = arith.constant 0 : i32
    %c0_i32_1 = arith.constant 0 : i32
    return %c0_i32, %c0_i32_0 : i32, i32
  }
  func.func @transform_4(%arg0: i32) -> (i32, i32, i32) {
    %c0_i32 = arith.constant 0 : i32
    %c0_i32_0 = arith.constant 0 : i32
    %c0_i32_1 = arith.constant 0 : i32
    return %arg0, %c0_i32, %c0_i32_0 : i32, i32, i32
  }
  func.func @transform_5(%arg0: i32) -> (i32, i32) {
    %c0_i32 = arith.constant 0 : i32
    %c0_i32_0 = arith.constant 0 : i32
    %c0_i32_1 = arith.constant 0 : i32
    return %c0_i32, %c0_i32_0 : i32, i32
  }
  func.func @transform_6(%arg0: i32) -> (i32, i32) {
    %c0_i32 = arith.constant 0 : i32
    %c0_i32_0 = arith.constant 0 : i32
    %c0_i32_1 = arith.constant 0 : i32
    return %c0_i32, %c0_i32_0 : i32, i32
  }
  func.func @transform_7(%arg0: i32) -> (i32, i32, i32) {
    %c0_i32 = arith.constant 0 : i32
    %c0_i32_0 = arith.constant 0 : i32
    %c0_i32_1 = arith.constant 0 : i32
    return %arg0, %c0_i32, %c0_i32_0 : i32, i32, i32
  }
  func.func @transform_8(%arg0: i32) -> (i32, i32, i32, i32) {
    %c0_i32 = arith.constant 0 : i32
    %c0_i32_0 = arith.constant 0 : i32
    %c0_i32_1 = arith.constant 0 : i32
    %c0_i32_2 = arith.constant 0 : i32
    return %arg0, %c0_i32, %c0_i32_0, %c0_i32_1 : i32, i32, i32, i32
  }
}

</mosaic_0001>

<llo_original>
// kernel: acoustic_simulation_nn_forward.4
$region0: #{acoustic_simulation_nn_forward.4}
  #allocation0 [shape = 'u32[]', space=smem, size = 0x4, offset = 0x4, fixed_abs, tag = 'smem constant byte address 0x4 - core index']
  #allocation1 [shape = 'u32[72,128]{1,0:T(1,128)}', space=vmem, size = 0x9000, scoped, tag = 'internal scratch']
  %s0 = inlined_call_operand.vmem [shape: bf16[328,72], index: 0, kind: input, shape index: {}]
  %s1 = inlined_call_operand.vmem [shape: bf16[72,128], index: 1, kind: input, shape index: {}]
  %s2 = inlined_call_operand.vmem [shape: f32[1,128], index: 2, kind: input, shape index: {}]
  %s3 = inlined_call_operand.vmem [shape: f32[328,128], index: 3, kind: output, shape index: {}]
  %s4 = sld [smem:[#allocation0]]
  $region22: #{acoustic_simulation_nn_forward.4} parent=0
    _
  %s6 = ssub.s32 1, %s4
  %s7 = scalar_select 0, %s6, %s4
  // Predicated region
  $region2: #{acoustic_simulation_nn_forward.4} parent=0 // pred_check
    _
  $region3: #{acoustic_simulation_nn_forward.4} parent=0 // pred_check_branch
    %9 = sbr.rel (0) target = $region5
  $region4: #{acoustic_simulation_nn_forward.4} parent=0 // pred_region
    _
  $region5: #{acoustic_simulation_nn_forward.4} parent=0 // pred_fallthru
    _
  // Predicated region
  $region6: #{acoustic_simulation_nn_forward.4} parent=0 // pred_check
    _
  $region7: #{acoustic_simulation_nn_forward.4} parent=0 // pred_check_branch
    %11 = sbr.rel (0) target = $region9
  $region8: #{acoustic_simulation_nn_forward.4} parent=0 // pred_region
    _
  $region9: #{acoustic_simulation_nn_forward.4} parent=0 // pred_fallthru
    _
  // Predicated region
  $region10: #{acoustic_simulation_nn_forward.4} parent=0 // pred_check
    _
  $region11: #{acoustic_simulation_nn_forward.4} parent=0 // pred_check_branch
    %13 = sbr.rel (0) target = $region13
  $region12: #{acoustic_simulation_nn_forward.4} parent=0 // pred_region
    _
  $region13: #{acoustic_simulation_nn_forward.4} parent=0 // pred_fallthru
    _
  %v15 = vld [vmem:[%s0] sm:$0xf]
  %v16 = vld [vmem:[%s0 + $0x4] sm:$0xf]
  %v17 = vld [vmem:[%s0 + $0x8] sm:$0xf]
  %v18 = vld [vmem:[%s0 + $0xc] sm:$0xf]
  %v19 = vld [vmem:[%s0 + $0x10] sm:$0xf]
  %v20 = vld [vmem:[%s0 + $0x14] sm:$0xf]
  %v21 = vld [vmem:[%s0 + $0x18] sm:$0xf]
  %v22 = vld [vmem:[%s0 + $0x1c] sm:$0xf]
  %v23 = vld [vmem:[%s0 + $0x20] sm:$0xf]
  %v24 = vld [vmem:[%s0 + $0x24] sm:$0xf]
  %v25 = vld [vmem:[%s0 + $0x28] sm:$0xf]
  %v26 = vld [vmem:[%s0 + $0x2c] sm:$0xf]
  %v27 = vld [vmem:[%s0 + $0x30] sm:$0xf]
  %v28 = vld [vmem:[%s0 + $0x34] sm:$0xf]
  %v29 = vld [vmem:[%s0 + $0x38] sm:$0xf]
  %v30 = vld [vmem:[%s0 + $0x3c] sm:$0xf]
  %v31 = vld [vmem:[%s0 + $0x40] sm:$0xf]
  %v32 = vld [vmem:[%s0 + $0x44] sm:$0xf]
  %v33 = vld [vmem:[%s0 + $0x48] sm:$0xf]
  %v34 = vld [vmem:[%s0 + $0x4c] sm:$0xf]
  %v35 = vld [vmem:[%s0 + $0x50] sm:$0xf]
  %v36 = vld [vmem:[%s0 + $0x54] sm:$0xf]
  %v37 = vld [vmem:[%s0 + $0x58] sm:$0xf]
  %v38 = vld [vmem:[%s0 + $0x5c] sm:$0xf]
  %v39 = vld [vmem:[%s0 + $0x60] sm:$0xf]
  %v40 = vld [vmem:[%s0 + $0x64] sm:$0xf]
  %v41 = vld [vmem:[%s0 + $0x68] sm:$0xf]
  %v42 = vld [vmem:[%s0 + $0x6c] sm:$0xf]
  %v43 = vld [vmem:[%s0 + $0x70] sm:$0xf]
  %v44 = vld [vmem:[%s0 + $0x74] sm:$0xf]
  %v45 = vld [vmem:[%s0 + $0x78] sm:$0xf]
  %v46 = vld [vmem:[%s0 + $0x7c] sm:$0xf]
  %v47 = vld [vmem:[%s0 + $0x80] sm:$0xf]
  %v48 = vld [vmem:[%s0 + $0x84] sm:$0xf]
  %v49 = vld [vmem:[%s0 + $0x88] sm:$0xf]
  %v50 = vld [vmem:[%s0 + $0x8c] sm:$0xf]
  %v51 = vld [vmem:[%s0 + $0x90] sm:$0xf]
  %v52 = vld [vmem:[%s0 + $0x94] sm:$0xf]
  %v53 = vld [vmem:[%s0 + $0x98] sm:$0xf]
  %v54 = vld [vmem:[%s0 + $0x9c] sm:$0xf]
  %v55 = vld [vmem:[%s0 + $0xa0] sm:$0xf]
  %v56 = vld [vmem:[%s1] sm:$0xf]
  %v57 = vld [vmem:[%s1 + $0x4] sm:$0xf]
  %v58 = vld [vmem:[%s1 + $0x8] sm:$0xf]
  %v59 = vld [vmem:[%s1 + $0xc] sm:$0xf]
  %v60 = vld [vmem:[%s1 + $0x10] sm:$0xf]
  %v61 = vld [vmem:[%s1 + $0x14] sm:$0xf]
  %v62 = vld [vmem:[%s1 + $0x18] sm:$0xf]
  %v63 = vld [vmem:[%s1 + $0x1c] sm:$0xf]
  %v64 = vld [vmem:[%s1 + $0x20] sm:$0xf]
  %v65 = vld [vmem:[%s2] sm:$0x1]
  %v67 = vperm.slane %v65, 0
  %v110 = vunpack.c.l.b16 %v15
  %v111 = vunpack.c.l.b16 %v16
  %v112 = vunpack.c.l.b16 %v17
  %v113 = vunpack.c.l.b16 %v18
  %v114 = vunpack.c.l.b16 %v19
  %v115 = vunpack.c.l.b16 %v20
  %v116 = vunpack.c.l.b16 %v21
  %v117 = vunpack.c.l.b16 %v22
  %v118 = vunpack.c.l.b16 %v23
  %v119 = vunpack.c.l.b16 %v24
  %v120 = vunpack.c.l.b16 %v25
  %v121 = vunpack.c.l.b16 %v26
  %v122 = vunpack.c.l.b16 %v27
  %v123 = vunpack.c.l.b16 %v28
  %v124 = vunpack.c.l.b16 %v29
  %v125 = vunpack.c.l.b16 %v30
  %v126 = vunpack.c.l.b16 %v31
  %v127 = vunpack.c.l.b16 %v32
  %v128 = vunpack.c.l.b16 %v33
  %v129 = vunpack.c.l.b16 %v34
  %v130 = vunpack.c.l.b16 %v35
  %v131 = vunpack.c.l.b16 %v36
  %v132 = vunpack.c.l.b16 %v37
  %v133 = vunpack.c.l.b16 %v38
  %v134 = vunpack.c.l.b16 %v39
  %v135 = vunpack.c.l.b16 %v40
  %v136 = vunpack.c.l.b16 %v41
  %v137 = vunpack.c.l.b16 %v42
  %v138 = vunpack.c.l.b16 %v43
  %v139 = vunpack.c.l.b16 %v44
  %v140 = vunpack.c.l.b16 %v45
  %v141 = vunpack.c.l.b16 %v46
  %v142 = vunpack.c.l.b16 %v47
  %v143 = vunpack.c.l.b16 %v48
  %v144 = vunpack.c.l.b16 %v49
  %v145 = vunpack.c.l.b16 %v50
  %v146 = vunpack.c.l.b16 %v51
  %v147 = vunpack.c.l.b16 %v52
  %v148 = vunpack.c.l.b16 %v53
  %v149 = vunpack.c.l.b16 %v54
  %v150 = vunpack.c.l.b16 %v55
  %v151 = vpack.c.b16 %v111, %v110
  %v152 = vpack.c.b16 %v113, %v112
  %v153 = vpack.c.b16 %v115, %v114
  %v154 = vpack.c.b16 %v117, %v116
  %v155 = vpack.c.b16 %v119, %v118
  %v156 = vpack.c.b16 %v121, %v120
  %v157 = vpack.c.b16 %v123, %v122
  %v158 = vpack.c.b16 %v125, %v124
  %v159 = vpack.c.b16 %v127, %v126
  %v160 = vpack.c.b16 %v129, %v128
  %v161 = vpack.c.b16 %v131, %v130
  %v162 = vpack.c.b16 %v133, %v132
  %v163 = vpack.c.b16 %v135, %v134
  %v164 = vpack.c.b16 %v137, %v136
  %v165 = vpack.c.b16 %v139, %v138
  %v166 = vpack.c.b16 %v141, %v140
  %v167 = vpack.c.b16 %v143, %v142
  %v168 = vpack.c.b16 %v145, %v144
  %v169 = vpack.c.b16 %v147, %v146
  %v170 = vpack.c.b16 %v149, %v148
  %v171 = vpack.c.b16 %v150, %v150
  %v181 = vunpack.c.l.b16 %v56
  %v182 = vunpack.c.l.b16 %v57
  %v183 = vunpack.c.l.b16 %v58
  %v184 = vunpack.c.l.b16 %v59
  %v185 = vunpack.c.l.b16 %v60
  %v186 = vunpack.c.l.b16 %v61
  %v187 = vunpack.c.l.b16 %v62
  %v188 = vunpack.c.l.b16 %v63
  %v189 = vunpack.c.l.b16 %v64
  %v190 = vpack.c.b16 %v182, %v181
  %v191 = vpack.c.b16 %v184, %v183
  %v192 = vpack.c.b16 %v186, %v185
  %v193 = vpack.c.b16 %v188, %v187
  %v194 = vpack.c.b16 %v189, %v189
  %vm199 = vcmask 588800
  %v201 = vsel %vm199, %v151, 0
  %v204 = vsel %vm199, %v152, 0
  %v207 = vsel %vm199, %v153, 0
  %v210 = vsel %vm199, %v154, 0
  %v213 = vsel %vm199, %v155, 0
  %v216 = vsel %vm199, %v156, 0
  %v219 = vsel %vm199, %v157, 0
  %v222 = vsel %vm199, %v158, 0
  %v225 = vsel %vm199, %v159, 0
  %v228 = vsel %vm199, %v160, 0
  %v231 = vsel %vm199, %v161, 0
  %v234 = vsel %vm199, %v162, 0
  %v237 = vsel %vm199, %v163, 0
  %v240 = vsel %vm199, %v164, 0
  %v243 = vsel %vm199, %v165, 0
  %v246 = vsel %vm199, %v166, 0
  %v249 = vsel %vm199, %v167, 0
  %v252 = vsel %vm199, %v168, 0
  %v255 = vsel %vm199, %v169, 0
  %v258 = vsel %vm199, %v170, 0
  %v261 = vsel %vm199, %v171, 0
  %vm263 = vcmask 1043456
  %v265 = vsel %vm263, %v194, 0
  %267 = vmatpush.bf16.msra.mxu0 0
  %268 = vmatpush.bf16.msra.mxu0 0
  %269 = vmatpush.bf16.msra.mxu0 0
  %270 = vmatpush.bf16.msra.mxu0 %v265
  %271 = vmatpush.bf16.msra.mxu0 %v193
  %272 = vmatpush.bf16.msra.mxu0 %v192
  %273 = vmatpush.bf16.msra.mxu0 %v191
  %274 = vmatpush.bf16.msra.mxu0 %v190
  %275 = vmatmul.bf16.gmra.mxu0 %v201
  %v276 = vpop.f32.mrf.mxu0
  %v277 = vadd.f32 %v67, %v276
  %v278 = vpop.f32.mrf.mxu0
  %v279 = vadd.f32 %v67, %v278
  %280 = vmatmul.bf16.gmra.mxu0 %v204
  %v281 = vpop.f32.mrf.mxu0
  %v282 = vadd.f32 %v67, %v281
  %v283 = vpop.f32.mrf.mxu0
  %v284 = vadd.f32 %v67, %v283
  %285 = vmatmul.bf16.gmra.mxu0 %v207
  %v286 = vpop.f32.mrf.mxu0
  %v287 = vadd.f32 %v67, %v286
  %v288 = vpop.f32.mrf.mxu0
  %v289 = vadd.f32 %v67, %v288
  %290 = vmatmul.bf16.gmra.mxu0 %v210
  %v291 = vpop.f32.mrf.mxu0
  %v292 = vadd.f32 %v67, %v291
  %v293 = vpop.f32.mrf.mxu0
  %v294 = vadd.f32 %v67, %v293
  %295 = vmatmul.bf16.gmra.mxu0 %v213
  %v296 = vpop.f32.mrf.mxu0
  %v297 = vadd.f32 %v67, %v296
  %v298 = vpop.f32.mrf.mxu0
  %v299 = vadd.f32 %v67, %v298
  %300 = vmatmul.bf16.gmra.mxu0 %v216
  %v301 = vpop.f32.mrf.mxu0
  %v302 = vadd.f32 %v67, %v301
  %v303 = vpop.f32.mrf.mxu0
  %v304 = vadd.f32 %v67, %v303
  %305 = vmatmul.bf16.gmra.mxu0 %v219
  %v306 = vpop.f32.mrf.mxu0
  %v307 = vadd.f32 %v67, %v306
  %v308 = vpop.f32.mrf.mxu0
  %v309 = vadd.f32 %v67, %v308
  %310 = vmatmul.bf16.gmra.mxu0 %v222
  %v311 = vpop.f32.mrf.mxu0
  %v312 = vadd.f32 %v67, %v311
  %v313 = vpop.f32.mrf.mxu0
  %v314 = vadd.f32 %v67, %v313
  %315 = vmatmul.bf16.gmra.mxu0 %v225
  %v316 = vpop.f32.mrf.mxu0
  %v317 = vadd.f32 %v67, %v316
  %v318 = vpop.f32.mrf.mxu0
  %v319 = vadd.f32 %v67, %v318
  %320 = vmatmul.bf16.gmra.mxu0 %v228
  %v321 = vpop.f32.mrf.mxu0
  %v322 = vadd.f32 %v67, %v321
  %v323 = vpop.f32.mrf.mxu0
  %v324 = vadd.f32 %v67, %v323
  %325 = vmatmul.bf16.gmra.mxu0 %v231
  %v326 = vpop.f32.mrf.mxu0
  %v327 = vadd.f32 %v67, %v326
  %v328 = vpop.f32.mrf.mxu0
  %v329 = vadd.f32 %v67, %v328
  %330 = vmatmul.bf16.gmra.mxu0 %v234
  %v331 = vpop.f32.mrf.mxu0
  %v332 = vadd.f32 %v67, %v331
  %v333 = vpop.f32.mrf.mxu0
  %v334 = vadd.f32 %v67, %v333
  %335 = vmatmul.bf16.gmra.mxu0 %v237
  %v336 = vpop.f32.mrf.mxu0
  %v337 = vadd.f32 %v67, %v336
  %v338 = vpop.f32.mrf.mxu0
  %v339 = vadd.f32 %v67, %v338
  %340 = vmatmul.bf16.gmra.mxu0 %v240
  %v341 = vpop.f32.mrf.mxu0
  %v342 = vadd.f32 %v67, %v341
  %v343 = vpop.f32.mrf.mxu0
  %v344 = vadd.f32 %v67, %v343
  %345 = vmatmul.bf16.gmra.mxu0 %v243
  %v346 = vpop.f32.mrf.mxu0
  %v347 = vadd.f32 %v67, %v346
  %v348 = vpop.f32.mrf.mxu0
  %v349 = vadd.f32 %v67, %v348
  %350 = vmatmul.bf16.gmra.mxu0 %v246
  %v351 = vpop.f32.mrf.mxu0
  %v352 = vadd.f32 %v67, %v351
  %v353 = vpop.f32.mrf.mxu0
  %v354 = vadd.f32 %v67, %v353
  %355 = vmatmul.bf16.gmra.mxu0 %v249
  %v356 = vpop.f32.mrf.mxu0
  %v357 = vadd.f32 %v67, %v356
  %v358 = vpop.f32.mrf.mxu0
  %v359 = vadd.f32 %v67, %v358
  %360 = vmatmul.bf16.gmra.mxu0 %v252
  %v361 = vpop.f32.mrf.mxu0
  %v362 = vadd.f32 %v67, %v361
  %v363 = vpop.f32.mrf.mxu0
  %v364 = vadd.f32 %v67, %v363
  %365 = vmatmul.bf16.gmra.mxu0 %v255
  %v366 = vpop.f32.mrf.mxu0
  %v367 = vadd.f32 %v67, %v366
  %v368 = vpop.f32.mrf.mxu0
  %v369 = vadd.f32 %v67, %v368
  %370 = vmatmul.bf16.gmra.mxu0 %v258
  %v371 = vpop.f32.mrf.mxu0
  %v372 = vadd.f32 %v67, %v371
  %v373 = vpop.f32.mrf.mxu0
  %v374 = vadd.f32 %v67, %v373
  %375 = vmatmul.bf16.gmra.mxu0 %v261
  %v376 = vpop.f32.mrf.mxu0
  %v377 = vadd.f32 %v67, %v376
  %v378 = vpop.f32.mrf.mxu0
  %379 = vdwg.mxu0
  %vm380 = vcmp.gt.f32.partialorder %v277, 0.0
  %vm381 = vcmp.gt.f32.partialorder %v279, 0.0
  %vm382 = vcmp.gt.f32.partialorder %v282, 0.0
  %vm383 = vcmp.gt.f32.partialorder %v284, 0.0
  %vm384 = vcmp.gt.f32.partialorder %v287, 0.0
  %vm385 = vcmp.gt.f32.partialorder %v289, 0.0
  %vm386 = vcmp.gt.f32.partialorder %v292, 0.0
  %vm387 = vcmp.gt.f32.partialorder %v294, 0.0
  %vm388 = vcmp.gt.f32.partialorder %v297, 0.0
  %vm389 = vcmp.gt.f32.partialorder %v299, 0.0
  %vm390 = vcmp.gt.f32.partialorder %v302, 0.0
  %vm391 = vcmp.gt.f32.partialorder %v304, 0.0
  %vm392 = vcmp.gt.f32.partialorder %v307, 0.0
  %vm393 = vcmp.gt.f32.partialorder %v309, 0.0
  %vm394 = vcmp.gt.f32.partialorder %v312, 0.0
  %vm395 = vcmp.gt.f32.partialorder %v314, 0.0
  %vm396 = vcmp.gt.f32.partialorder %v317, 0.0
  %vm397 = vcmp.gt.f32.partialorder %v319, 0.0
  %vm398 = vcmp.gt.f32.partialorder %v322, 0.0
  %vm399 = vcmp.gt.f32.partialorder %v324, 0.0
  %vm400 = vcmp.gt.f32.partialorder %v327, 0.0
  %vm401 = vcmp.gt.f32.partialorder %v329, 0.0
  %vm402 = vcmp.gt.f32.partialorder %v332, 0.0
  %vm403 = vcmp.gt.f32.partialorder %v334, 0.0
  %vm404 = vcmp.gt.f32.partialorder %v337, 0.0
  %vm405 = vcmp.gt.f32.partialorder %v339, 0.0
  %vm406 = vcmp.gt.f32.partialorder %v342, 0.0
  %vm407 = vcmp.gt.f32.partialorder %v344, 0.0
  %vm408 = vcmp.gt.f32.partialorder %v347, 0.0
  %vm409 = vcmp.gt.f32.partialorder %v349, 0.0
  %vm410 = vcmp.gt.f32.partialorder %v352, 0.0
  %vm411 = vcmp.gt.f32.partialorder %v354, 0.0
  %vm412 = vcmp.gt.f32.partialorder %v357, 0.0
  %vm413 = vcmp.gt.f32.partialorder %v359, 0.0
  %vm414 = vcmp.gt.f32.partialorder %v362, 0.0
  %vm415 = vcmp.gt.f32.partialorder %v364, 0.0
  %vm416 = vcmp.gt.f32.partialorder %v367, 0.0
  %vm417 = vcmp.gt.f32.partialorder %v369, 0.0
  %vm418 = vcmp.gt.f32.partialorder %v372, 0.0
  %vm419 = vcmp.gt.f32.partialorder %v374, 0.0
  %vm420 = vcmp.gt.f32.partialorder %v377, 0.0
  %v421 = vmul.f32 %v277, 0.2
  %v422 = vmul.f32 %v279, 0.2
  %v423 = vmul.f32 %v282, 0.2
  %v424 = vmul.f32 %v284, 0.2
  %v425 = vmul.f32 %v287, 0.2
  %v426 = vmul.f32 %v289, 0.2
  %v427 = vmul.f32 %v292, 0.2
  %v428 = vmul.f32 %v294, 0.2
  %v429 = vmul.f32 %v297, 0.2
  %v430 = vmul.f32 %v299, 0.2
  %v431 = vmul.f32 %v302, 0.2
  %v432 = vmul.f32 %v304, 0.2
  %v433 = vmul.f32 %v307, 0.2
  %v434 = vmul.f32 %v309, 0.2
  %v435 = vmul.f32 %v312, 0.2
  %v436 = vmul.f32 %v314, 0.2
  %v437 = vmul.f32 %v317, 0.2
  %v438 = vmul.f32 %v319, 0.2
  %v439 = vmul.f32 %v322, 0.2
  %v440 = vmul.f32 %v324, 0.2
  %v441 = vmul.f32 %v327, 0.2
  %v442 = vmul.f32 %v329, 0.2
  %v443 = vmul.f32 %v332, 0.2
  %v444 = vmul.f32 %v334, 0.2
  %v445 = vmul.f32 %v337, 0.2
  %v446 = vmul.f32 %v339, 0.2
  %v447 = vmul.f32 %v342, 0.2
  %v448 = vmul.f32 %v344, 0.2
  %v449 = vmul.f32 %v347, 0.2
  %v450 = vmul.f32 %v349, 0.2
  %v451 = vmul.f32 %v352, 0.2
  %v452 = vmul.f32 %v354, 0.2
  %v453 = vmul.f32 %v357, 0.2
  %v454 = vmul.f32 %v359, 0.2
  %v455 = vmul.f32 %v362, 0.2
  %v456 = vmul.f32 %v364, 0.2
  %v457 = vmul.f32 %v367, 0.2
  %v458 = vmul.f32 %v369, 0.2
  %v459 = vmul.f32 %v372, 0.2
  %v460 = vmul.f32 %v374, 0.2
  %v461 = vmul.f32 %v377, 0.2
  %v462 = vsel %vm380, %v277, %v421
  %v463 = vsel %vm381, %v279, %v422
  %v464 = vsel %vm382, %v282, %v423
  %v465 = vsel %vm383, %v284, %v424
  %v466 = vsel %vm384, %v287, %v425
  %v467 = vsel %vm385, %v289, %v426
  %v468 = vsel %vm386, %v292, %v427
  %v469 = vsel %vm387, %v294, %v428
  %v470 = vsel %vm388, %v297, %v429
  %v471 = vsel %vm389, %v299, %v430
  %v472 = vsel %vm390, %v302, %v431
  %v473 = vsel %vm391, %v304, %v432
  %v474 = vsel %vm392, %v307, %v433
  %v475 = vsel %vm393, %v309, %v434
  %v476 = vsel %vm394, %v312, %v435
  %v477 = vsel %vm395, %v314, %v436
  %v478 = vsel %vm396, %v317, %v437
  %v479 = vsel %vm397, %v319, %v438
  %v480 = vsel %vm398, %v322, %v439
  %v481 = vsel %vm399, %v324, %v440
  %v482 = vsel %vm400, %v327, %v441
  %v483 = vsel %vm401, %v329, %v442
  %v484 = vsel %vm402, %v332, %v443
  %v485 = vsel %vm403, %v334, %v444
  %v486 = vsel %vm404, %v337, %v445
  %v487 = vsel %vm405, %v339, %v446
  %v488 = vsel %vm406, %v342, %v447
  %v489 = vsel %vm407, %v344, %v448
  %v490 = vsel %vm408, %v347, %v449
  %v491 = vsel %vm409, %v349, %v450
  %v492 = vsel %vm410, %v352, %v451
  %v493 = vsel %vm411, %v354, %v452
  %v494 = vsel %vm412, %v357, %v453
  %v495 = vsel %vm413, %v359, %v454
  %v496 = vsel %vm414, %v362, %v455
  %v497 = vsel %vm415, %v364, %v456
  %v498 = vsel %vm416, %v367, %v457
  %v499 = vsel %vm417, %v369, %v458
  %v500 = vsel %vm418, %v372, %v459
  %v501 = vsel %vm419, %v374, %v460
  %v502 = vsel %vm420, %v377, %v461
  %503 = vst [vmem:[%s3] sm:$0xff] %v462
  %504 = vst [vmem:[%s3 + $0x8] sm:$0xff] %v463
  %505 = vst [vmem:[%s3 + $0x10] sm:$0xff] %v464
  %506 = vst [vmem:[%s3 + $0x18] sm:$0xff] %v465
  %507 = vst [vmem:[%s3 + $0x20] sm:$0xff] %v466
  %508 = vst [vmem:[%s3 + $0x28] sm:$0xff] %v467
  %509 = vst [vmem:[%s3 + $0x30] sm:$0xff] %v468
  %510 = vst [vmem:[%s3 + $0x38] sm:$0xff] %v469
  %511 = vst [vmem:[%s3 + $0x40] sm:$0xff] %v470
  %512 = vst [vmem:[%s3 + $0x48] sm:$0xff] %v471
  %513 = vst [vmem:[%s3 + $0x50] sm:$0xff] %v472
  %514 = vst [vmem:[%s3 + $0x58] sm:$0xff] %v473
  %515 = vst [vmem:[%s3 + $0x60] sm:$0xff] %v474
  %516 = vst [vmem:[%s3 + $0x68] sm:$0xff] %v475
  %517 = vst [vmem:[%s3 + $0x70] sm:$0xff] %v476
  %518 = vst [vmem:[%s3 + $0x78] sm:$0xff] %v477
  %519 = vst [vmem:[%s3 + $0x80] sm:$0xff] %v478
  %520 = vst [vmem:[%s3 + $0x88] sm:$0xff] %v479
  %521 = vst [vmem:[%s3 + $0x90] sm:$0xff] %v480
  %522 = vst [vmem:[%s3 + $0x98] sm:$0xff] %v481
  %523 = vst [vmem:[%s3 + $0xa0] sm:$0xff] %v482
  %524 = vst [vmem:[%s3 + $0xa8] sm:$0xff] %v483
  %525 = vst [vmem:[%s3 + $0xb0] sm:$0xff] %v484
  %526 = vst [vmem:[%s3 + $0xb8] sm:$0xff] %v485
  %527 = vst [vmem:[%s3 + $0xc0] sm:$0xff] %v486
  %528 = vst [vmem:[%s3 + $0xc8] sm:$0xff] %v487
  %529 = vst [vmem:[%s3 + $0xd0] sm:$0xff] %v488
  %530 = vst [vmem:[%s3 + $0xd8] sm:$0xff] %v489
  %531 = vst [vmem:[%s3 + $0xe0] sm:$0xff] %v490
  %532 = vst [vmem:[%s3 + $0xe8] sm:$0xff] %v491
  %533 = vst [vmem:[%s3 + $0xf0] sm:$0xff] %v492
  %534 = vst [vmem:[%s3 + $0xf8] sm:$0xff] %v493
  %535 = vst [vmem:[%s3 + $0x100] sm:$0xff] %v494
  %536 = vst [vmem:[%s3 + $0x108] sm:$0xff] %v495
  %537 = vst [vmem:[%s3 + $0x110] sm:$0xff] %v496
  %538 = vst [vmem:[%s3 + $0x118] sm:$0xff] %v497
  %539 = vst [vmem:[%s3 + $0x120] sm:$0xff] %v498
  %540 = vst [vmem:[%s3 + $0x128] sm:$0xff] %v499
  %541 = vst [vmem:[%s3 + $0x130] sm:$0xff] %v500
  %542 = vst [vmem:[%s3 + $0x138] sm:$0xff] %v501
  %543 = vst [vmem:[%s3 + $0x140] sm:$0xff] %v502
  // Predicated region
  $region14: #{acoustic_simulation_nn_forward.4} parent=0 // pred_check
    _
  $region15: #{acoustic_simulation_nn_forward.4} parent=0 // pred_check_branch
    %545 = sbr.rel (0) target = $region17
  $region16: #{acoustic_simulation_nn_forward.4} parent=0 // pred_region
    _
  $region17: #{acoustic_simulation_nn_forward.4} parent=0 // pred_fallthru
    _
  // Predicated region
  $region18: #{acoustic_simulation_nn_forward.4} parent=0 // pred_check
    _
  $region19: #{acoustic_simulation_nn_forward.4} parent=0 // pred_check_branch
    %547 = sbr.rel (0) target = $region21
  $region20: #{acoustic_simulation_nn_forward.4} parent=0 // pred_region
    _
  $region21: #{acoustic_simulation_nn_forward.4} parent=0 // pred_fallthru
    _

// kernel: acoustic_simulation_nn_forward.5
$region0: #{acoustic_simulation_nn_forward.5}
  #allocation0 [shape = 'u32[]', space=smem, size = 0x4, offset = 0x4, fixed_abs, tag = 'smem constant byte address 0x4 - core index']
  #allocation1 [shape = 'u32[72,128]{1,0:T(1,128)}', space=vmem, size = 0x9000, scoped, tag = 'internal scratch']
  %s0 = inlined_call_operand.vmem [shape: bf16[1296,144], index: 0, kind: input, shape index: {}]
  %s1 = inlined_call_operand.vmem [shape: bf16[144,128], index: 1, kind: input, shape index: {}]
  %s2 = inlined_call_operand.vmem [shape: f32[1,128], index: 2, kind: input, shape index: {}]
  %s3 = inlined_call_operand.vmem [shape: f32[1296,128], index: 3, kind: output, shape index: {}]
  %s4 = sld [smem:[#allocation0]]
  $region22: #{acoustic_simulation_nn_forward.5} parent=0
    _
  %s6 = ssub.s32 1, %s4
  %s7 = scalar_select 0, %s6, %s4
  // Predicated region
  $region2: #{acoustic_simulation_nn_forward.5} parent=0 // pred_check
    _
  $region3: #{acoustic_simulation_nn_forward.5} parent=0 // pred_check_branch
    %9 = sbr.rel (0) target = $region5
  $region4: #{acoustic_simulation_nn_forward.5} parent=0 // pred_region
    _
  $region5: #{acoustic_simulation_nn_forward.5} parent=0 // pred_fallthru
    _
  // Predicated region
  $region6: #{acoustic_simulation_nn_forward.5} parent=0 // pred_check
    _
  $region7: #{acoustic_simulation_nn_forward.5} parent=0 // pred_check_branch
    %11 = sbr.rel (0) target = $region9
  $region8: #{acoustic_simulation_nn_forward.5} parent=0 // pred_region
    _
  $region9: #{acoustic_simulation_nn_forward.5} parent=0 // pred_fallthru
    _
  // Predicated region
  $region10: #{acoustic_simulation_nn_forward.5} parent=0 // pred_check
    _
  $region11: #{acoustic_simulation_nn_forward.5} parent=0 // pred_check_branch
    %13 = sbr.rel (0) target = $region13
  $region12: #{acoustic_simulation_nn_forward.5} parent=0 // pred_region
    _
  $region13: #{acoustic_simulation_nn_forward.5} parent=0 // pred_fallthru
    _
  %v15 = vld [vmem:[%s0] sm:$0xff]
  %v16 = vld [vmem:[%s0 + $0x8] sm:$0xff]
  %v17 = vld [vmem:[%s0 + $0x10] sm:$0xff]
  %v18 = vld [vmem:[%s0 + $0x18] sm:$0xff]
  %v19 = vld [vmem:[%s0 + $0x20] sm:$0xff]
  %v20 = vld [vmem:[%s0 + $0x28] sm:$0xff]
  %v21 = vld [vmem:[%s0 + $0x30] sm:$0xff]
  %v22 = vld [vmem:[%s0 + $0x38] sm:$0xff]
  %v23 = vld [vmem:[%s0 + $0x40] sm:$0xff]
  %v24 = vld [vmem:[%s0 + $0x48] sm:$0xff]
  %v25 = vld [vmem:[%s0 + $0x50] sm:$0xff]
  %v26 = vld [vmem:[%s0 + $0x58] sm:$0xff]
  %v27 = vld [vmem:[%s0 + $0x60] sm:$0xff]
  %v28 = vld [vmem:[%s0 + $0x68] sm:$0xff]
  %v29 = vld [vmem:[%s0 + $0x70] sm:$0xff]
  %v30 = vld [vmem:[%s0 + $0x78] sm:$0xff]
  %v31 = vld [vmem:[%s0 + $0x80] sm:$0xff]
  %v32 = vld [vmem:[%s0 + $0x88] sm:$0xff]
  %v33 = vld [vmem:[%s0 + $0x90] sm:$0xff]
  %v34 = vld [vmem:[%s0 + $0x98] sm:$0xff]
  %v35 = vld [vmem:[%s0 + $0xa0] sm:$0xff]
  %v36 = vld [vmem:[%s0 + $0xa8] sm:$0xff]
  %v37 = vld [vmem:[%s0 + $0xb0] sm:$0xff]
  %v38 = vld [vmem:[%s0 + $0xb8] sm:$0xff]
  %v39 = vld [vmem:[%s0 + $0xc0] sm:$0xff]
  %v40 = vld [vmem:[%s0 + $0xc8] sm:$0xff]
  %v41 = vld [vmem:[%s0 + $0xd0] sm:$0xff]
  %v42 = vld [vmem:[%s0 + $0xd8] sm:$0xff]
  %v43 = vld [vmem:[%s0 + $0xe0] sm:$0xff]
  %v44 = vld [vmem:[%s0 + $0xe8] sm:$0xff]
  %v45 = vld [vmem:[%s0 + $0xf0] sm:$0xff]
  %v46 = vld [vmem:[%s0 + $0xf8] sm:$0xff]
  %v47 = vld [vmem:[%s0 + $0x100] sm:$0xff]
  %v48 = vld [vmem:[%s0 + $0x108] sm:$0xff]
  %v49 = vld [vmem:[%s0 + $0x110] sm:$0xff]
  %v50 = vld [vmem:[%s0 + $0x118] sm:$0xff]
  %v51 = vld [vmem:[%s0 + $0x120] sm:$0xff]
  %v52 = vld [vmem:[%s0 + $0x128] sm:$0xff]
  %v53 = vld [vmem:[%s0 + $0x130] sm:$0xff]
  %v54 = vld [vmem:[%s0 + $0x138] sm:$0xff]
  %v55 = vld [vmem:[%s0 + $0x140] sm:$0xff]
  %v56 = vld [vmem:[%s0 + $0x148] sm:$0xff]
  %v57 = vld [vmem:[%s0 + $0x150] sm:$0xff]
  %v58 = vld [vmem:[%s0 + $0x158] sm:$0xff]
  %v59 = vld [vmem:[%s0 + $0x160] sm:$0xff]
  %v60 = vld [vmem:[%s0 + $0x168] sm:$0xff]
  %v61 = vld [vmem:[%s0 + $0x170] sm:$0xff]
  %v62 = vld [vmem:[%s0 + $0x178] sm:$0xff]
  %v63 = vld [vmem:[%s0 + $0x180] sm:$0xff]
  %v64 = vld [vmem:[%s0 + $0x188] sm:$0xff]
  %v65 = vld [vmem:[%s0 + $0x190] sm:$0xff]
  %v66 = vld [vmem:[%s0 + $0x198] sm:$0xff]
  %v67 = vld [vmem:[%s0 + $0x1a0] sm:$0xff]
  %v68 = vld [vmem:[%s0 + $0x1a8] sm:$0xff]
  %v69 = vld [vmem:[%s0 + $0x1b0] sm:$0xff]
  %v70 = vld [vmem:[%s0 + $0x1b8] sm:$0xff]
  %v71 = vld [vmem:[%s0 + $0x1c0] sm:$0xff]
  %v72 = vld [vmem:[%s0 + $0x1c8] sm:$0xff]
  %v73 = vld [vmem:[%s0 + $0x1d0] sm:$0xff]
  %v74 = vld [vmem:[%s0 + $0x1d8] sm:$0xff]
  %v75 = vld [vmem:[%s0 + $0x1e0] sm:$0xff]
  %v76 = vld [vmem:[%s0 + $0x1e8] sm:$0xff]
  %v77 = vld [vmem:[%s0 + $0x1f0] sm:$0xff]
  %v78 = vld [vmem:[%s0 + $0x1f8] sm:$0xff]
  %v79 = vld [vmem:[%s0 + $0x200] sm:$0xff]
  %v80 = vld [vmem:[%s0 + $0x208] sm:$0xff]
  %v81 = vld [vmem:[%s0 + $0x210] sm:$0xff]
  %v82 = vld [vmem:[%s0 + $0x218] sm:$0xff]
  %v83 = vld [vmem:[%s0 + $0x220] sm:$0xff]
  %v84 = vld [vmem:[%s0 + $0x228] sm:$0xff]
  %v85 = vld [vmem:[%s0 + $0x230] sm:$0xff]
  %v86 = vld [vmem:[%s0 + $0x238] sm:$0xff]
  %v87 = vld [vmem:[%s0 + $0x240] sm:$0xff]
  %v88 = vld [vmem:[%s0 + $0x248] sm:$0xff]
  %v89 = vld [vmem:[%s0 + $0x250] sm:$0xff]
  %v90 = vld [vmem:[%s0 + $0x258] sm:$0xff]
  %v91 = vld [vmem:[%s0 + $0x260] sm:$0xff]
  %v92 = vld [vmem:[%s0 + $0x268] sm:$0xff]
  %v93 = vld [vmem:[%s0 + $0x270] sm:$0xff]
  %v94 = vld [vmem:[%s0 + $0x278] sm:$0xff]
  %v95 = vld [vmem:[%s0 + $0x280] sm:$0xff]
  %v96 = vld [vmem:[%s0 + $0x288] sm:$0xff]
  %v97 = vld [vmem:[%s0 + $0x290] sm:$0xff]
  %v98 = vld [vmem:[%s0 + $0x298] sm:$0xff]
  %v99 = vld [vmem:[%s0 + $0x2a0] sm:$0xff]
  %v100 = vld [vmem:[%s0 + $0x2a8] sm:$0xff]
  %v101 = vld [vmem:[%s0 + $0x2b0] sm:$0xff]
  %v102 = vld [vmem:[%s0 + $0x2b8] sm:$0xff]
  %v103 = vld [vmem:[%s0 + $0x2c0] sm:$0xff]
  %v104 = vld [vmem:[%s0 + $0x2c8] sm:$0xff]
  %v105 = vld [vmem:[%s0 + $0x2d0] sm:$0xff]
  %v106 = vld [vmem:[%s0 + $0x2d8] sm:$0xff]
  %v107 = vld [vmem:[%s0 + $0x2e0] sm:$0xff]
  %v108 = vld [vmem:[%s0 + $0x2e8] sm:$0xff]
  %v109 = vld [vmem:[%s0 + $0x2f0] sm:$0xff]
  %v110 = vld [vmem:[%s0 + $0x2f8] sm:$0xff]
  %v111 = vld [vmem:[%s0 + $0x300] sm:$0xff]
  %v112 = vld [vmem:[%s0 + $0x308] sm:$0xff]
  %v113 = vld [vmem:[%s0 + $0x310] sm:$0xff]
  %v114 = vld [vmem:[%s0 + $0x318] sm:$0xff]
  %v115 = vld [vmem:[%s0 + $0x320] sm:$0xff]
  %v116 = vld [vmem:[%s0 + $0x328] sm:$0xff]
  %v117 = vld [vmem:[%s0 + $0x330] sm:$0xff]
  %v118 = vld [vmem:[%s0 + $0x338] sm:$0xff]
  %v119 = vld [vmem:[%s0 + $0x340] sm:$0xff]
  %v120 = vld [vmem:[%s0 + $0x348] sm:$0xff]
  %v121 = vld [vmem:[%s0 + $0x350] sm:$0xff]
  %v122 = vld [vmem:[%s0 + $0x358] sm:$0xff]
  %v123 = vld [vmem:[%s0 + $0x360] sm:$0xff]
  %v124 = vld [vmem:[%s0 + $0x368] sm:$0xff]
  %v125 = vld [vmem:[%s0 + $0x370] sm:$0xff]
  %v126 = vld [vmem:[%s0 + $0x378] sm:$0xff]
  %v127 = vld [vmem:[%s0 + $0x380] sm:$0xff]
  %v128 = vld [vmem:[%s0 + $0x388] sm:$0xff]
  %v129 = vld [vmem:[%s0 + $0x390] sm:$0xff]
  %v130 = vld [vmem:[%s0 + $0x398] sm:$0xff]
  %v131 = vld [vmem:[%s0 + $0x3a0] sm:$0xff]
  %v132 = vld [vmem:[%s0 + $0x3a8] sm:$0xff]
  %v133 = vld [vmem:[%s0 + $0x3b0] sm:$0xff]
  %v134 = vld [vmem:[%s0 + $0x3b8] sm:$0xff]
  %v135 = vld [vmem:[%s0 + $0x3c0] sm:$0xff]
  %v136 = vld [vmem:[%s0 + $0x3c8] sm:$0xff]
  %v137 = vld [vmem:[%s0 + $0x3d0] sm:$0xff]
  %v138 = vld [vmem:[%s0 + $0x3d8] sm:$0xff]
  %v139 = vld [vmem:[%s0 + $0x3e0] sm:$0xff]
  %v140 = vld [vmem:[%s0 + $0x3e8] sm:$0xff]
  %v141 = vld [vmem:[%s0 + $0x3f0] sm:$0xff]
  %v142 = vld [vmem:[%s0 + $0x3f8] sm:$0xff]
  %v143 = vld [vmem:[%s0 + $0x400] sm:$0xff]
  %v144 = vld [vmem:[%s0 + $0x408] sm:$0xff]
  %v145 = vld [vmem:[%s0 + $0x410] sm:$0xff]
  %v146 = vld [vmem:[%s0 + $0x418] sm:$0xff]
  %v147 = vld [vmem:[%s0 + $0x420] sm:$0xff]
  %v148 = vld [vmem:[%s0 + $0x428] sm:$0xff]
  %v149 = vld [vmem:[%s0 + $0x430] sm:$0xff]
  %v150 = vld [vmem:[%s0 + $0x438] sm:$0xff]
  %v151 = vld [vmem:[%s0 + $0x440] sm:$0xff]
  %v152 = vld [vmem:[%s0 + $0x448] sm:$0xff]
  %v153 = vld [vmem:[%s0 + $0x450] sm:$0xff]
  %v154 = vld [vmem:[%s0 + $0x458] sm:$0xff]
  %v155 = vld [vmem:[%s0 + $0x460] sm:$0xff]
  %v156 = vld [vmem:[%s0 + $0x468] sm:$0xff]
  %v157 = vld [vmem:[%s0 + $0x470] sm:$0xff]
  %v158 = vld [vmem:[%s0 + $0x478] sm:$0xff]
  %v159 = vld [vmem:[%s0 + $0x480] sm:$0xff]
  %v160 = vld [vmem:[%s0 + $0x488] sm:$0xff]
  %v161 = vld [vmem:[%s0 + $0x490] sm:$0xff]
  %v162 = vld [vmem:[%s0 + $0x498] sm:$0xff]
  %v163 = vld [vmem:[%s0 + $0x4a0] sm:$0xff]
  %v164 = vld [vmem:[%s0 + $0x4a8] sm:$0xff]
  %v165 = vld [vmem:[%s0 + $0x4b0] sm:$0xff]
  %v166 = vld [vmem:[%s0 + $0x4b8] sm:$0xff]
  %v167 = vld [vmem:[%s0 + $0x4c0] sm:$0xff]
  %v168 = vld [vmem:[%s0 + $0x4c8] sm:$0xff]
  %v169 = vld [vmem:[%s0 + $0x4d0] sm:$0xff]
  %v170 = vld [vmem:[%s0 + $0x4d8] sm:$0xff]
  %v171 = vld [vmem:[%s0 + $0x4e0] sm:$0xff]
  %v172 = vld [vmem:[%s0 + $0x4e8] sm:$0xff]
  %v173 = vld [vmem:[%s0 + $0x4f0] sm:$0xff]
  %v174 = vld [vmem:[%s0 + $0x4f8] sm:$0xff]
  %v175 = vld [vmem:[%s0 + $0x500] sm:$0xff]
  %v176 = vld [vmem:[%s0 + $0x508] sm:$0xff]
  %v177 = vld [vmem:[%s1] sm:$0xf]
  %v178 = vld [vmem:[%s1 + $0x4] sm:$0xf]
  %v179 = vld [vmem:[%s1 + $0x8] sm:$0xf]
  %v180 = vld [vmem:[%s1 + $0xc] sm:$0xf]
  %v181 = vld [vmem:[%s1 + $0x10] sm:$0xf]
  %v182 = vld [vmem:[%s1 + $0x14] sm:$0xf]
  %v183 = vld [vmem:[%s1 + $0x18] sm:$0xf]
  %v184 = vld [vmem:[%s1 + $0x1c] sm:$0xf]
  %v185 = vld [vmem:[%s1 + $0x20] sm:$0xf]
  %v186 = vld [vmem:[%s1 + $0x24] sm:$0xf]
  %v187 = vld [vmem:[%s1 + $0x28] sm:$0xf]
  %v188 = vld [vmem:[%s1 + $0x2c] sm:$0xf]
  %v189 = vld [vmem:[%s1 + $0x30] sm:$0xf]
  %v190 = vld [vmem:[%s1 + $0x34] sm:$0xf]
  %v191 = vld [vmem:[%s1 + $0x38] sm:$0xf]
  %v192 = vld [vmem:[%s1 + $0x3c] sm:$0xf]
  %v193 = vld [vmem:[%s1 + $0x40] sm:$0xf]
  %v194 = vld [vmem:[%s1 + $0x44] sm:$0xf]
  %v195 = vld [vmem:[%s2] sm:$0x1]
  %v197 = vperm.slane %v195, 0
  %v361 = vunpack.c.l.b16 %v15
  %v362 = vunpack.c.h.b16 %v15
  %v363 = vunpack.c.l.b16 %v16
  %v364 = vunpack.c.h.b16 %v16
  %v365 = vunpack.c.l.b16 %v17
  %v366 = vunpack.c.h.b16 %v17
  %v367 = vunpack.c.l.b16 %v18
  %v368 = vunpack.c.h.b16 %v18
  %v369 = vunpack.c.l.b16 %v19
  %v370 = vunpack.c.h.b16 %v19
  %v371 = vunpack.c.l.b16 %v20
  %v372 = vunpack.c.h.b16 %v20
  %v373 = vunpack.c.l.b16 %v21
  %v374 = vunpack.c.h.b16 %v21
  %v375 = vunpack.c.l.b16 %v22
  %v376 = vunpack.c.h.b16 %v22
  %v377 = vunpack.c.l.b16 %v23
  %v378 = vunpack.c.h.b16 %v23
  %v379 = vunpack.c.l.b16 %v24
  %v380 = vunpack.c.h.b16 %v24
  %v381 = vunpack.c.l.b16 %v25
  %v382 = vunpack.c.h.b16 %v25
  %v383 = vunpack.c.l.b16 %v26
  %v384 = vunpack.c.h.b16 %v26
  %v385 = vunpack.c.l.b16 %v27
  %v386 = vunpack.c.h.b16 %v27
  %v387 = vunpack.c.l.b16 %v28
  %v388 = vunpack.c.h.b16 %v28
  %v389 = vunpack.c.l.b16 %v29
  %v390 = vunpack.c.h.b16 %v29
  %v391 = vunpack.c.l.b16 %v30
  %v392 = vunpack.c.h.b16 %v30
  %v393 = vunpack.c.l.b16 %v31
  %v394 = vunpack.c.h.b16 %v31
  %v395 = vunpack.c.l.b16 %v32
  %v396 = vunpack.c.h.b16 %v32
  %v397 = vunpack.c.l.b16 %v33
  %v398 = vunpack.c.h.b16 %v33
  %v399 = vunpack.c.l.b16 %v34
  %v400 = vunpack.c.h.b16 %v34
  %v401 = vunpack.c.l.b16 %v35
  %v402 = vunpack.c.h.b16 %v35
  %v403 = vunpack.c.l.b16 %v36
  %v404 = vunpack.c.h.b16 %v36
  %v405 = vunpack.c.l.b16 %v37
  %v406 = vunpack.c.h.b16 %v37
  %v407 = vunpack.c.l.b16 %v38
  %v408 = vunpack.c.h.b16 %v38
  %v409 = vunpack.c.l.b16 %v39
  %v410 = vunpack.c.h.b16 %v39
  %v411 = vunpack.c.l.b16 %v40
  %v412 = vunpack.c.h.b16 %v40
  %v413 = vunpack.c.l.b16 %v41
  %v414 = vunpack.c.h.b16 %v41
  %v415 = vunpack.c.l.b16 %v42
  %v416 = vunpack.c.h.b16 %v42
  %v417 = vunpack.c.l.b16 %v43
  %v418 = vunpack.c.h.b16 %v43
  %v419 = vunpack.c.l.b16 %v44
  %v420 = vunpack.c.h.b16 %v44
  %v421 = vunpack.c.l.b16 %v45
  %v422 = vunpack.c.h.b16 %v45
  %v423 = vunpack.c.l.b16 %v46
  %v424 = vunpack.c.h.b16 %v46
  %v425 = vunpack.c.l.b16 %v47
  %v426 = vunpack.c.h.b16 %v47
  %v427 = vunpack.c.l.b16 %v48
  %v428 = vunpack.c.h.b16 %v48
  %v429 = vunpack.c.l.b16 %v49
  %v430 = vunpack.c.h.b16 %v49
  %v431 = vunpack.c.l.b16 %v50
  %v432 = vunpack.c.h.b16 %v50
  %v433 = vunpack.c.l.b16 %v51
  %v434 = vunpack.c.h.b16 %v51
  %v435 = vunpack.c.l.b16 %v52
  %v436 = vunpack.c.h.b16 %v52
  %v437 = vunpack.c.l.b16 %v53
  %v438 = vunpack.c.h.b16 %v53
  %v439 = vunpack.c.l.b16 %v54
  %v440 = vunpack.c.h.b16 %v54
  %v441 = vunpack.c.l.b16 %v55
  %v442 = vunpack.c.h.b16 %v55
  %v443 = vunpack.c.l.b16 %v56
  %v444 = vunpack.c.h.b16 %v56
  %v445 = vunpack.c.l.b16 %v57
  %v446 = vunpack.c.h.b16 %v57
  %v447 = vunpack.c.l.b16 %v58
  %v448 = vunpack.c.h.b16 %v58
  %v449 = vunpack.c.l.b16 %v59
  %v450 = vunpack.c.h.b16 %v59
  %v451 = vunpack.c.l.b16 %v60
  %v452 = vunpack.c.h.b16 %v60
  %v453 = vunpack.c.l.b16 %v61
  %v454 = vunpack.c.h.b16 %v61
  %v455 = vunpack.c.l.b16 %v62
  %v456 = vunpack.c.h.b16 %v62
  %v457 = vunpack.c.l.b16 %v63
  %v458 = vunpack.c.h.b16 %v63
  %v459 = vunpack.c.l.b16 %v64
  %v460 = vunpack.c.h.b16 %v64
  %v461 = vunpack.c.l.b16 %v65
  %v462 = vunpack.c.h.b16 %v65
  %v463 = vunpack.c.l.b16 %v66
  %v464 = vunpack.c.h.b16 %v66
  %v465 = vunpack.c.l.b16 %v67
  %v466 = vunpack.c.h.b16 %v67
  %v467 = vunpack.c.l.b16 %v68
  %v468 = vunpack.c.h.b16 %v68
  %v469 = vunpack.c.l.b16 %v69
  %v470 = vunpack.c.h.b16 %v69
  %v471 = vunpack.c.l.b16 %v70
  %v472 = vunpack.c.h.b16 %v70
  %v473 = vunpack.c.l.b16 %v71
  %v474 = vunpack.c.h.b16 %v71
  %v475 = vunpack.c.l.b16 %v72
  %v476 = vunpack.c.h.b16 %v72
  %v477 = vunpack.c.l.b16 %v73
  %v478 = vunpack.c.h.b16 %v73
  %v479 = vunpack.c.l.b16 %v74
  %v480 = vunpack.c.h.b16 %v74
  %v481 = vunpack.c.l.b16 %v75
  %v482 = vunpack.c.h.b16 %v75
  %v483 = vunpack.c.l.b16 %v76
  %v484 = vunpack.c.h.b16 %v76
  %v485 = vunpack.c.l.b16 %v77
  %v486 = vunpack.c.h.b16 %v77
  %v487 = vunpack.c.l.b16 %v78
  %v488 = vunpack.c.h.b16 %v78
  %v489 = vunpack.c.l.b16 %v79
  %v490 = vunpack.c.h.b16 %v79
  %v491 = vunpack.c.l.b16 %v80
  %v492 = vunpack.c.h.b16 %v80
  %v493 = vunpack.c.l.b16 %v81
  %v494 = vunpack.c.h.b16 %v81
  %v495 = vunpack.c.l.b16 %v82
  %v496 = vunpack.c.h.b16 %v82
  %v497 = vunpack.c.l.b16 %v83
  %v498 = vunpack.c.h.b16 %v83
  %v499 = vunpack.c.l.b16 %v84
  %v500 = vunpack.c.h.b16 %v84
  %v501 = vunpack.c.l.b16 %v85
  %v502 = vunpack.c.h.b16 %v85
  %v503 = vunpack.c.l.b16 %v86
  %v504 = vunpack.c.h.b16 %v86
  %v505 = vunpack.c.l.b16 %v87
  %v506 = vunpack.c.h.b16 %v87
  %v507 = vunpack.c.l.b16 %v88
  %v508 = vunpack.c.h.b16 %v88
  %v509 = vunpack.c.l.b16 %v89
  %v510 = vunpack.c.h.b16 %v89
  %v511 = vunpack.c.l.b16 %v90
  %v512 = vunpack.c.h.b16 %v90
  %v513 = vunpack.c.l.b16 %v91
  %v514 = vunpack.c.h.b16 %v91
  %v515 = vunpack.c.l.b16 %v92
  %v516 = vunpack.c.h.b16 %v92
  %v517 = vunpack.c.l.b16 %v93
  %v518 = vunpack.c.h.b16 %v93
  %v519 = vunpack.c.l.b16 %v94
  %v520 = vunpack.c.h.b16 %v94
  %v521 = vunpack.c.l.b16 %v95
  %v522 = vunpack.c.h.b16 %v95
  %v523 = vunpack.c.l.b16 %v96
  %v524 = vunpack.c.h.b16 %v96
  %v525 = vunpack.c.l.b16 %v97
  %v526 = vunpack.c.h.b16 %v97
  %v527 = vunpack.c.l.b16 %v98
  %v528 = vunpack.c.h.b16 %v98
  %v529 = vunpack.c.l.b16 %v99
  %v530 = vunpack.c.h.b16 %v99
  %v531 = vunpack.c.l.b16 %v100
  %v532 = vunpack.c.h.b16 %v100
  %v533 = vunpack.c.l.b16 %v101
  %v534 = vunpack.c.h.b16 %v101
  %v535 = vunpack.c.l.b16 %v102
  %v536 = vunpack.c.h.b16 %v102
  %v537 = vunpack.c.l.b16 %v103
  %v538 = vunpack.c.h.b16 %v103
  %v539 = vunpack.c.l.b16 %v104
  %v540 = vunpack.c.h.b16 %v104
  %v541 = vunpack.c.l.b16 %v105
  %v542 = vunpack.c.h.b16 %v105
  %v543 = vunpack.c.l.b16 %v106
  %v544 = vunpack.c.h.b16 %v106
  %v545 = vunpack.c.l.b16 %v107
  %v546 = vunpack.c.h.b16 %v107
  %v547 = vunpack.c.l.b16 %v108
  %v548 = vunpack.c.h.b16 %v108
  %v549 = vunpack.c.l.b16 %v109
  %v550 = vunpack.c.h.b16 %v109
  %v551 = vunpack.c.l.b16 %v110
  %v552 = vunpack.c.h.b16 %v110
  %v553 = vunpack.c.l.b16 %v111
  %v554 = vunpack.c.h.b16 %v111
  %v555 = vunpack.c.l.b16 %v112
  %v556 = vunpack.c.h.b16 %v112
  %v557 = vunpack.c.l.b16 %v113
  %v558 = vunpack.c.h.b16 %v113
  %v559 = vunpack.c.l.b16 %v114
  %v560 = vunpack.c.h.b16 %v114
  %v561 = vunpack.c.l.b16 %v115
  %v562 = vunpack.c.h.b16 %v115
  %v563 = vunpack.c.l.b16 %v116
  %v564 = vunpack.c.h.b16 %v116
  %v565 = vunpack.c.l.b16 %v117
  %v566 = vunpack.c.h.b16 %v117
  %v567 = vunpack.c.l.b16 %v118
  %v568 = vunpack.c.h.b16 %v118
  %v569 = vunpack.c.l.b16 %v119
  %v570 = vunpack.c.h.b16 %v119
  %v571 = vunpack.c.l.b16 %v120
  %v572 = vunpack.c.h.b16 %v120
  %v573 = vunpack.c.l.b16 %v121
  %v574 = vunpack.c.h.b16 %v121
  %v575 = vunpack.c.l.b16 %v122
  %v576 = vunpack.c.h.b16 %v122
  %v577 = vunpack.c.l.b16 %v123
  %v578 = vunpack.c.h.b16 %v123
  %v579 = vunpack.c.l.b16 %v124
  %v580 = vunpack.c.h.b16 %v124
  %v581 = vunpack.c.l.b16 %v125
  %v582 = vunpack.c.h.b16 %v125
  %v583 = vunpack.c.l.b16 %v126
  %v584 = vunpack.c.h.b16 %v126
  %v585 = vunpack.c.l.b16 %v127
  %v586 = vunpack.c.h.b16 %v127
  %v587 = vunpack.c.l.b16 %v128
  %v588 = vunpack.c.h.b16 %v128
  %v589 = vunpack.c.l.b16 %v129
  %v590 = vunpack.c.h.b16 %v129
  %v591 = vunpack.c.l.b16 %v130
  %v592 = vunpack.c.h.b16 %v130
  %v593 = vunpack.c.l.b16 %v131
  %v594 = vunpack.c.h.b16 %v131
  %v595 = vunpack.c.l.b16 %v132
  %v596 = vunpack.c.h.b16 %v132
  %v597 = vunpack.c.l.b16 %v133
  %v598 = vunpack.c.h.b16 %v133
  %v599 = vunpack.c.l.b16 %v134
  %v600 = vunpack.c.h.b16 %v134
  %v601 = vunpack.c.l.b16 %v135
  %v602 = vunpack.c.h.b16 %v135
  %v603 = vunpack.c.l.b16 %v136
  %v604 = vunpack.c.h.b16 %v136
  %v605 = vunpack.c.l.b16 %v137
  %v606 = vunpack.c.h.b16 %v137
  %v607 = vunpack.c.l.b16 %v138
  %v608 = vunpack.c.h.b16 %v138
  %v609 = vunpack.c.l.b16 %v139
  %v610 = vunpack.c.h.b16 %v139
  %v611 = vunpack.c.l.b16 %v140
  %v612 = vunpack.c.h.b16 %v140
  %v613 = vunpack.c.l.b16 %v141
  %v614 = vunpack.c.h.b16 %v141
  %v615 = vunpack.c.l.b16 %v142
  %v616 = vunpack.c.h.b16 %v142
  %v617 = vunpack.c.l.b16 %v143
  %v618 = vunpack.c.h.b16 %v143
  %v619 = vunpack.c.l.b16 %v144
  %v620 = vunpack.c.h.b16 %v144
  %v621 = vunpack.c.l.b16 %v145
  %v622 = vunpack.c.h.b16 %v145
  %v623 = vunpack.c.l.b16 %v146
  %v624 = vunpack.c.h.b16 %v146
  %v625 = vunpack.c.l.b16 %v147
  %v626 = vunpack.c.h.b16 %v147
  %v627 = vunpack.c.l.b16 %v148
  %v628 = vunpack.c.h.b16 %v148
  %v629 = vunpack.c.l.b16 %v149
  %v630 = vunpack.c.h.b16 %v149
  %v631 = vunpack.c.l.b16 %v150
  %v632 = vunpack.c.h.b16 %v150
  %v633 = vunpack.c.l.b16 %v151
  %v634 = vunpack.c.h.b16 %v151
  %v635 = vunpack.c.l.b16 %v152
  %v636 = vunpack.c.h.b16 %v152
  %v637 = vunpack.c.l.b16 %v153
  %v638 = vunpack.c.h.b16 %v153
  %v639 = vunpack.c.l.b16 %v154
  %v640 = vunpack.c.h.b16 %v154
  %v641 = vunpack.c.l.b16 %v155
  %v642 = vunpack.c.h.b16 %v155
  %v643 = vunpack.c.l.b16 %v156
  %v644 = vunpack.c.h.b16 %v156
  %v645 = vunpack.c.l.b16 %v157
  %v646 = vunpack.c.h.b16 %v157
  %v647 = vunpack.c.l.b16 %v158
  %v648 = vunpack.c.h.b16 %v158
  %v649 = vunpack.c.l.b16 %v159
  %v650 = vunpack.c.h.b16 %v159
  %v651 = vunpack.c.l.b16 %v160
  %v652 = vunpack.c.h.b16 %v160
  %v653 = vunpack.c.l.b16 %v161
  %v654 = vunpack.c.h.b16 %v161
  %v655 = vunpack.c.l.b16 %v162
  %v656 = vunpack.c.h.b16 %v162
  %v657 = vunpack.c.l.b16 %v163
  %v658 = vunpack.c.h.b16 %v163
  %v659 = vunpack.c.l.b16 %v164
  %v660 = vunpack.c.h.b16 %v164
  %v661 = vunpack.c.l.b16 %v165
  %v662 = vunpack.c.h.b16 %v165
  %v663 = vunpack.c.l.b16 %v166
  %v664 = vunpack.c.h.b16 %v166
  %v665 = vunpack.c.l.b16 %v167
  %v666 = vunpack.c.h.b16 %v167
  %v667 = vunpack.c.l.b16 %v168
  %v668 = vunpack.c.h.b16 %v168
  %v669 = vunpack.c.l.b16 %v169
  %v670 = vunpack.c.h.b16 %v169
  %v671 = vunpack.c.l.b16 %v170
  %v672 = vunpack.c.h.b16 %v170
  %v673 = vunpack.c.l.b16 %v171
  %v674 = vunpack.c.h.b16 %v171
  %v675 = vunpack.c.l.b16 %v172
  %v676 = vunpack.c.h.b16 %v172
  %v677 = vunpack.c.l.b16 %v173
  %v678 = vunpack.c.h.b16 %v173
  %v679 = vunpack.c.l.b16 %v174
  %v680 = vunpack.c.h.b16 %v174
  %v681 = vunpack.c.l.b16 %v175
  %v682 = vunpack.c.h.b16 %v175
  %v683 = vunpack.c.l.b16 %v176
  %v684 = vunpack.c.h.b16 %v176
  %v685 = vpack.c.b16 %v363, %v361
  %v686 = vpack.c.b16 %v364, %v362
  %v687 = vpack.c.b16 %v367, %v365
  %v688 = vpack.c.b16 %v368, %v366
  %v689 = vpack.c.b16 %v371, %v369
  %v690 = vpack.c.b16 %v372, %v370
  %v691 = vpack.c.b16 %v375, %v373
  %v692 = vpack.c.b16 %v376, %v374
  %v693 = vpack.c.b16 %v379, %v377
  %v694 = vpack.c.b16 %v380, %v378
  %v695 = vpack.c.b16 %v383, %v381
  %v696 = vpack.c.b16 %v384, %v382
  %v697 = vpack.c.b16 %v387, %v385
  %v698 = vpack.c.b16 %v388, %v386
  %v699 = vpack.c.b16 %v391, %v389
  %v700 = vpack.c.b16 %v392, %v390
  %v701 = vpack.c.b16 %v395, %v393
  %v702 = vpack.c.b16 %v396, %v394
  %v703 = vpack.c.b16 %v399, %v397
  %v704 = vpack.c.b16 %v400, %v398
  %v705 = vpack.c.b16 %v403, %v401
  %v706 = vpack.c.b16 %v404, %v402
  %v707 = vpack.c.b16 %v407, %v405
  %v708 = vpack.c.b16 %v408, %v406
  %v709 = vpack.c.b16 %v411, %v409
  %v710 = vpack.c.b16 %v412, %v410
  %v711 = vpack.c.b16 %v415, %v413
  %v712 = vpack.c.b16 %v416, %v414
  %v713 = vpack.c.b16 %v419, %v417
  %v714 = vpack.c.b16 %v420, %v418
  %v715 = vpack.c.b16 %v423, %v421
  %v716 = vpack.c.b16 %v424, %v422
  %v717 = vpack.c.b16 %v427, %v425
  %v718 = vpack.c.b16 %v428, %v426
  %v719 = vpack.c.b16 %v431, %v429
  %v720 = vpack.c.b16 %v432, %v430
  %v721 = vpack.c.b16 %v435, %v433
  %v722 = vpack.c.b16 %v436, %v434
  %v723 = vpack.c.b16 %v439, %v437
  %v724 = vpack.c.b16 %v440, %v438
  %v725 = vpack.c.b16 %v443, %v441
  %v726 = vpack.c.b16 %v444, %v442
  %v727 = vpack.c.b16 %v447, %v445
  %v728 = vpack.c.b16 %v448, %v446
  %v729 = vpack.c.b16 %v451, %v449
  %v730 = vpack.c.b16 %v452, %v450
  %v731 = vpack.c.b16 %v455, %v453
  %v732 = vpack.c.b16 %v456, %v454
  %v733 = vpack.c.b16 %v459, %v457
  %v734 = vpack.c.b16 %v460, %v458
  %v735 = vpack.c.b16 %v463, %v461
  %v736 = vpack.c.b16 %v464, %v462
  %v737 = vpack.c.b16 %v467, %v465
  %v738 = vpack.c.b16 %v468, %v466
  %v739 = vpack.c.b16 %v471, %v469
  %v740 = vpack.c.b16 %v472, %v470
  %v741 = vpack.c.b16 %v475, %v473
  %v742 = vpack.c.b16 %v476, %v474
  %v743 = vpack.c.b16 %v479, %v477
  %v744 = vpack.c.b16 %v480, %v478
  %v745 = vpack.c.b16 %v483, %v481
  %v746 = vpack.c.b16 %v484, %v482
  %v747 = vpack.c.b16 %v487, %v485
  %v748 = vpack.c.b16 %v488, %v486
  %v749 = vpack.c.b16 %v491, %v489
  %v750 = vpack.c.b16 %v492, %v490
  %v751 = vpack.c.b16 %v495, %v493
  %v752 = vpack.c.b16 %v496, %v494
  %v753 = vpack.c.b16 %v499, %v497
  %v754 = vpack.c.b16 %v500, %v498
  %v755 = vpack.c.b16 %v503, %v501
  %v756 = vpack.c.b16 %v504, %v502
  %v757 = vpack.c.b16 %v507, %v505
  %v758 = vpack.c.b16 %v508, %v506
  %v759 = vpack.c.b16 %v511, %v509
  %v760 = vpack.c.b16 %v512, %v510
  %v761 = vpack.c.b16 %v515, %v513
  %v762 = vpack.c.b16 %v516, %v514
  %v763 = vpack.c.b16 %v519, %v517
  %v764 = vpack.c.b16 %v520, %v518
  %v765 = vpack.c.b16 %v523, %v521
  %v766 = vpack.c.b16 %v524, %v522
  %v767 = vpack.c.b16 %v527, %v525
  %v768 = vpack.c.b16 %v528, %v526
  %v769 = vpack.c.b16 %v531, %v529
  %v770 = vpack.c.b16 %v532, %v530
  %v771 = vpack.c.b16 %v535, %v533
  %v772 = vpack.c.b16 %v536, %v534
  %v773 = vpack.c.b16 %v539, %v537
  %v774 = vpack.c.b16 %v540, %v538
  %v775 = vpack.c.b16 %v543, %v541
  %v776 = vpack.c.b16 %v544, %v542
  %v777 = vpack.c.b16 %v547, %v545
  %v778 = vpack.c.b16 %v548, %v546
  %v779 = vpack.c.b16 %v551, %v549
  %v780 = vpack.c.b16 %v552, %v550
  %v781 = vpack.c.b16 %v555, %v553
  %v782 = vpack.c.b16 %v556, %v554
  %v783 = vpack.c.b16 %v559, %v557
  %v784 = vpack.c.b16 %v560, %v558
  %v785 = vpack.c.b16 %v563, %v561
  %v786 = vpack.c.b16 %v564, %v562
  %v787 = vpack.c.b16 %v567, %v565
  %v788 = vpack.c.b16 %v568, %v566
  %v789 = vpack.c.b16 %v571, %v569
  %v790 = vpack.c.b16 %v572, %v570
  %v791 = vpack.c.b16 %v575, %v573
  %v792 = vpack.c.b16 %v576, %v574
  %v793 = vpack.c.b16 %v579, %v577
  %v794 = vpack.c.b16 %v580, %v578
  %v795 = vpack.c.b16 %v583, %v581
  %v796 = vpack.c.b16 %v584, %v582
  %v797 = vpack.c.b16 %v587, %v585
  %v798 = vpack.c.b16 %v588, %v586
  %v799 = vpack.c.b16 %v591, %v589
  %v800 = vpack.c.b16 %v592, %v590
  %v801 = vpack.c.b16 %v595, %v593
  %v802 = vpack.c.b16 %v596, %v594
  %v803 = vpack.c.b16 %v599, %v597
  %v804 = vpack.c.b16 %v600, %v598
  %v805 = vpack.c.b16 %v603, %v601
  %v806 = vpack.c.b16 %v604, %v602
  %v807 = vpack.c.b16 %v607, %v605
  %v808 = vpack.c.b16 %v608, %v606
  %v809 = vpack.c.b16 %v611, %v609
  %v810 = vpack.c.b16 %v612, %v610
  %v811 = vpack.c.b16 %v615, %v613
  %v812 = vpack.c.b16 %v616, %v614
  %v813 = vpack.c.b16 %v619, %v617
  %v814 = vpack.c.b16 %v620, %v618
  %v815 = vpack.c.b16 %v623, %v621
  %v816 = vpack.c.b16 %v624, %v622
  %v817 = vpack.c.b16 %v627, %v625
  %v818 = vpack.c.b16 %v628, %v626
  %v819 = vpack.c.b16 %v631, %v629
  %v820 = vpack.c.b16 %v632, %v630
  %v821 = vpack.c.b16 %v635, %v633
  %v822 = vpack.c.b16 %v636, %v634
  %v823 = vpack.c.b16 %v639, %v637
  %v824 = vpack.c.b16 %v640, %v638
  %v825 = vpack.c.b16 %v643, %v641
  %v826 = vpack.c.b16 %v644, %v642
  %v827 = vpack.c.b16 %v647, %v645
  %v828 = vpack.c.b16 %v648, %v646
  %v829 = vpack.c.b16 %v651, %v649
  %v830 = vpack.c.b16 %v652, %v650
  %v831 = vpack.c.b16 %v655, %v653
  %v832 = vpack.c.b16 %v656, %v654
  %v833 = vpack.c.b16 %v659, %v657
  %v834 = vpack.c.b16 %v660, %v658
  %v835 = vpack.c.b16 %v663, %v661
  %v836 = vpack.c.b16 %v664, %v662
  %v837 = vpack.c.b16 %v667, %v665
  %v838 = vpack.c.b16 %v668, %v666
  %v839 = vpack.c.b16 %v671, %v669
  %v840 = vpack.c.b16 %v672, %v670
  %v841 = vpack.c.b16 %v675, %v673
  %v842 = vpack.c.b16 %v676, %v674
  %v843 = vpack.c.b16 %v679, %v677
  %v844 = vpack.c.b16 %v680, %v678
  %v845 = vpack.c.b16 %v683, %v681
  %v846 = vpack.c.b16 %v684, %v682
  %v946 = vunpack.c.l.b16 %v177
  %v947 = vunpack.c.l.b16 %v178
  %v948 = vunpack.c.l.b16 %v179
  %v949 = vunpack.c.l.b16 %v180
  %v950 = vunpack.c.l.b16 %v181
  %v951 = vunpack.c.l.b16 %v182
  %v952 = vunpack.c.l.b16 %v183
  %v953 = vunpack.c.l.b16 %v184
  %v954 = vunpack.c.l.b16 %v185
  %v955 = vunpack.c.l.b16 %v186
  %v956 = vunpack.c.l.b16 %v187
  %v957 = vunpack.c.l.b16 %v188
  %v958 = vunpack.c.l.b16 %v189
  %v959 = vunpack.c.l.b16 %v190
  %v960 = vunpack.c.l.b16 %v191
  %v961 = vunpack.c.l.b16 %v192
  %v962 = vunpack.c.l.b16 %v193
  %v963 = vunpack.c.l.b16 %v194
  %v964 = vpack.c.b16 %v947, %v946
  %v965 = vpack.c.b16 %v949, %v948
  %v966 = vpack.c.b16 %v951, %v950
  %v967 = vpack.c.b16 %v953, %v952
  %v968 = vpack.c.b16 %v955, %v954
  %v969 = vpack.c.b16 %v957, %v956
  %v970 = vpack.c.b16 %v959, %v958
  %v971 = vpack.c.b16 %v961, %v960
  %v972 = vpack.c.b16 %v963, %v962
  %vm982 = vcmask 130048
  %v984 = vsel %vm982, %v686, 0
  %v987 = vsel %vm982, %v688, 0
  %v990 = vsel %vm982, %v690, 0
  %v993 = vsel %vm982, %v692, 0
  %v996 = vsel %vm982, %v694, 0
  %v999 = vsel %vm982, %v696, 0
  %v1002 = vsel %vm982, %v698, 0
  %v1005 = vsel %vm982, %v700, 0
  %v1008 = vsel %vm982, %v702, 0
  %v1011 = vsel %vm982, %v704, 0
  %v1014 = vsel %vm982, %v706, 0
  %v1017 = vsel %vm982, %v708, 0
  %v1020 = vsel %vm982, %v710, 0
  %v1023 = vsel %vm982, %v712, 0
  %v1026 = vsel %vm982, %v714, 0
  %v1029 = vsel %vm982, %v716, 0
  %v1032 = vsel %vm982, %v718, 0
  %v1035 = vsel %vm982, %v720, 0
  %v1038 = vsel %vm982, %v722, 0
  %v1041 = vsel %vm982, %v724, 0
  %v1044 = vsel %vm982, %v726, 0
  %v1047 = vsel %vm982, %v728, 0
  %v1050 = vsel %vm982, %v730, 0
  %v1053 = vsel %vm982, %v732, 0
  %v1056 = vsel %vm982, %v734, 0
  %v1059 = vsel %vm982, %v736, 0
  %v1062 = vsel %vm982, %v738, 0
  %v1065 = vsel %vm982, %v740, 0
  %v1068 = vsel %vm982, %v742, 0
  %v1071 = vsel %vm982, %v744, 0
  %v1074 = vsel %vm982, %v746, 0
  %v1077 = vsel %vm982, %v748, 0
  %v1080 = vsel %vm982, %v750, 0
  %v1083 = vsel %vm982, %v752, 0
  %v1086 = vsel %vm982, %v754, 0
  %v1089 = vsel %vm982, %v756, 0
  %v1092 = vsel %vm982, %v758, 0
  %v1095 = vsel %vm982, %v760, 0
  %v1098 = vsel %vm982, %v762, 0
  %v1101 = vsel %vm982, %v764, 0
  %v1104 = vsel %vm982, %v766, 0
  %v1107 = vsel %vm982, %v768, 0
  %v1110 = vsel %vm982, %v770, 0
  %v1113 = vsel %vm982, %v772, 0
  %v1116 = vsel %vm982, %v774, 0
  %v1119 = vsel %vm982, %v776, 0
  %v1122 = vsel %vm982, %v778, 0
  %v1125 = vsel %vm982, %v780, 0
  %v1128 = vsel %vm982, %v782, 0
  %v1131 = vsel %vm982, %v784, 0
  %v1134 = vsel %vm982, %v786, 0
  %v1137 = vsel %vm982, %v788, 0
  %v1140 = vsel %vm982, %v790, 0
  %v1143 = vsel %vm982, %v792, 0
  %v1146 = vsel %vm982, %v794, 0
  %v1149 = vsel %vm982, %v796, 0
  %v1152 = vsel %vm982, %v798, 0
  %v1155 = vsel %vm982, %v800, 0
  %v1158 = vsel %vm982, %v802, 0
  %v1161 = vsel %vm982, %v804, 0
  %v1164 = vsel %vm982, %v806, 0
  %v1167 = vsel %vm982, %v808, 0
  %v1170 = vsel %vm982, %v810, 0
  %v1173 = vsel %vm982, %v812, 0
  %v1176 = vsel %vm982, %v814, 0
  %v1179 = vsel %vm982, %v816, 0
  %v1182 = vsel %vm982, %v818, 0
  %v1185 = vsel %vm982, %v820, 0
  %v1188 = vsel %vm982, %v822, 0
  %v1191 = vsel %vm982, %v824, 0
  %v1194 = vsel %vm982, %v826, 0
  %v1197 = vsel %vm982, %v828, 0
  %v1200 = vsel %vm982, %v830, 0
  %v1203 = vsel %vm982, %v832, 0
  %v1206 = vsel %vm982, %v834, 0
  %v1209 = vsel %vm982, %v836, 0
  %v1212 = vsel %vm982, %v838, 0
  %v1215 = vsel %vm982, %v840, 0
  %v1218 = vsel %vm982, %v842, 0
  %v1221 = vsel %vm982, %v844, 0
  %v1224 = vsel %vm982, %v846, 0
  %1226 = vmatpush.bf16.msra.mxu0 %v971
  %1227 = vmatpush.bf16.msra.mxu0 %v970
  %1228 = vmatpush.bf16.msra.mxu0 %v969
  %1229 = vmatpush.bf16.msra.mxu0 %v968
  %1230 = vmatpush.bf16.msra.mxu0 %v967
  %1231 = vmatpush.bf16.msra.mxu0 %v966
  %1232 = vmatpush.bf16.msra.mxu0 %v965
  %1233 = vmatpush.bf16.msra.mxu0 %v964
  %1234 = vmatmul.bf16.gmra.mxu0 %v685
  %v1235 = vpop.f32.mrf.mxu0
  %v1236 = vadd.f32 %v197, %v1235
  %v1237 = vpop.f32.mrf.mxu0
  %v1238 = vadd.f32 %v197, %v1237
  %1239 = vmatmul.bf16.gmra.mxu0 %v687
  %v1240 = vpop.f32.mrf.mxu0
  %v1241 = vadd.f32 %v197, %v1240
  %v1242 = vpop.f32.mrf.mxu0
  %v1243 = vadd.f32 %v197, %v1242
  %1244 = vmatmul.bf16.gmra.mxu0 %v689
  %v1245 = vpop.f32.mrf.mxu0
  %v1246 = vadd.f32 %v197, %v1245
  %v1247 = vpop.f32.mrf.mxu0
  %v1248 = vadd.f32 %v197, %v1247
  %1249 = vmatmul.bf16.gmra.mxu0 %v691
  %v1250 = vpop.f32.mrf.mxu0
  %v1251 = vadd.f32 %v197, %v1250
  %v1252 = vpop.f32.mrf.mxu0
  %v1253 = vadd.f32 %v197, %v1252
  %1254 = vmatmul.bf16.gmra.mxu0 %v693
  %v1255 = vpop.f32.mrf.mxu0
  %v1256 = vadd.f32 %v197, %v1255
  %v1257 = vpop.f32.mrf.mxu0
  %v1258 = vadd.f32 %v197, %v1257
  %1259 = vmatmul.bf16.gmra.mxu0 %v695
  %v1260 = vpop.f32.mrf.mxu0
  %v1261 = vadd.f32 %v197, %v1260
  %v1262 = vpop.f32.mrf.mxu0
  %v1263 = vadd.f32 %v197, %v1262
  %1264 = vmatmul.bf16.gmra.mxu0 %v697
  %v1265 = vpop.f32.mrf.mxu0
  %v1266 = vadd.f32 %v197, %v1265
  %v1267 = vpop.f32.mrf.mxu0
  %v1268 = vadd.f32 %v197, %v1267
  %1269 = vmatmul.bf16.gmra.mxu0 %v699
  %v1270 = vpop.f32.mrf.mxu0
  %v1271 = vadd.f32 %v197, %v1270
  %v1272 = vpop.f32.mrf.mxu0
  %v1273 = vadd.f32 %v197, %v1272
  %1274 = vmatmul.bf16.gmra.mxu0 %v701
  %v1275 = vpop.f32.mrf.mxu0
  %v1276 = vadd.f32 %v197, %v1275
  %v1277 = vpop.f32.mrf.mxu0
  %v1278 = vadd.f32 %v197, %v1277
  %1279 = vmatmul.bf16.gmra.mxu0 %v703
  %v1280 = vpop.f32.mrf.mxu0
  %v1281 = vadd.f32 %v197, %v1280
  %v1282 = vpop.f32.mrf.mxu0
  %v1283 = vadd.f32 %v197, %v1282
  %1284 = vmatmul.bf16.gmra.mxu0 %v705
  %v1285 = vpop.f32.mrf.mxu0
  %v1286 = vadd.f32 %v197, %v1285
  %v1287 = vpop.f32.mrf.mxu0
  %v1288 = vadd.f32 %v197, %v1287
  %1289 = vmatmul.bf16.gmra.mxu0 %v707
  %v1290 = vpop.f32.mrf.mxu0
  %v1291 = vadd.f32 %v197, %v1290
  %v1292 = vpop.f32.mrf.mxu0
  %v1293 = vadd.f32 %v197, %v1292
  %1294 = vmatmul.bf16.gmra.mxu0 %v709
  %v1295 = vpop.f32.mrf.mxu0
  %v1296 = vadd.f32 %v197, %v1295
  %v1297 = vpop.f32.mrf.mxu0
  %v1298 = vadd.f32 %v197, %v1297
  %1299 = vmatmul.bf16.gmra.mxu0 %v711
  %v1300 = vpop.f32.mrf.mxu0
  %v1301 = vadd.f32 %v197, %v1300
  %v1302 = vpop.f32.mrf.mxu0
  %v1303 = vadd.f32 %v197, %v1302
  %1304 = vmatmul.bf16.gmra.mxu0 %v713
  %v1305 = vpop.f32.mrf.mxu0
  %v1306 = vadd.f32 %v197, %v1305
  %v1307 = vpop.f32.mrf.mxu0
  %v1308 = vadd.f32 %v197, %v1307
  %1309 = vmatmul.bf16.gmra.mxu0 %v715
  %v1310 = vpop.f32.mrf.mxu0
  %v1311 = vadd.f32 %v197, %v1310
  %v1312 = vpop.f32.mrf.mxu0
  %v1313 = vadd.f32 %v197, %v1312
  %1314 = vmatmul.bf16.gmra.mxu0 %v717
  %v1315 = vpop.f32.mrf.mxu0
  %v1316 = vadd.f32 %v197, %v1315
  %v1317 = vpop.f32.mrf.mxu0
  %v1318 = vadd.f32 %v197, %v1317
  %1319 = vmatmul.bf16.gmra.mxu0 %v719
  %v1320 = vpop.f32.mrf.mxu0
  %v1321 = vadd.f32 %v197, %v1320
  %v1322 = vpop.f32.mrf.mxu0
  %v1323 = vadd.f32 %v197, %v1322
  %1324 = vmatmul.bf16.gmra.mxu0 %v721
  %v1325 = vpop.f32.mrf.mxu0
  %v1326 = vadd.f32 %v197, %v1325
  %v1327 = vpop.f32.mrf.mxu0
  %v1328 = vadd.f32 %v197, %v1327
  %1329 = vmatmul.bf16.gmra.mxu0 %v723
  %v1330 = vpop.f32.mrf.mxu0
  %v1331 = vadd.f32 %v197, %v1330
  %v1332 = vpop.f32.mrf.mxu0
  %v1333 = vadd.f32 %v197, %v1332
  %1334 = vmatmul.bf16.gmra.mxu0 %v725
  %v1335 = vpop.f32.mrf.mxu0
  %v1336 = vadd.f32 %v197, %v1335
  %v1337 = vpop.f32.mrf.mxu0
  %v1338 = vadd.f32 %v197, %v1337
  %1339 = vmatmul.bf16.gmra.mxu0 %v727
  %v1340 = vpop.f32.mrf.mxu0
  %v1341 = vadd.f32 %v197, %v1340
  %v1342 = vpop.f32.mrf.mxu0
  %v1343 = vadd.f32 %v197, %v1342
  %1344 = vmatmul.bf16.gmra.mxu0 %v729
  %v1345 = vpop.f32.mrf.mxu0
  %v1346 = vadd.f32 %v197, %v1345
  %v1347 = vpop.f32.mrf.mxu0
  %v1348 = vadd.f32 %v197, %v1347
  %1349 = vmatmul.bf16.gmra.mxu0 %v731
  %v1350 = vpop.f32.mrf.mxu0
  %v1351 = vadd.f32 %v197, %v1350
  %v1352 = vpop.f32.mrf.mxu0
  %v1353 = vadd.f32 %v197, %v1352
  %1354 = vmatmul.bf16.gmra.mxu0 %v733
  %v1355 = vpop.f32.mrf.mxu0
  %v1356 = vadd.f32 %v197, %v1355
  %v1357 = vpop.f32.mrf.mxu0
  %v1358 = vadd.f32 %v197, %v1357
  %1359 = vmatmul.bf16.gmra.mxu0 %v735
  %v1360 = vpop.f32.mrf.mxu0
  %v1361 = vadd.f32 %v197, %v1360
  %v1362 = vpop.f32.mrf.mxu0
  %v1363 = vadd.f32 %v197, %v1362
  %1364 = vmatmul.bf16.gmra.mxu0 %v737
  %v1365 = vpop.f32.mrf.mxu0
  %v1366 = vadd.f32 %v197, %v1365
  %v1367 = vpop.f32.mrf.mxu0
  %v1368 = vadd.f32 %v197, %v1367
  %1369 = vmatmul.bf16.gmra.mxu0 %v739
  %v1370 = vpop.f32.mrf.mxu0
  %v1371 = vadd.f32 %v197, %v1370
  %v1372 = vpop.f32.mrf.mxu0
  %v1373 = vadd.f32 %v197, %v1372
  %1374 = vmatmul.bf16.gmra.mxu0 %v741
  %v1375 = vpop.f32.mrf.mxu0
  %v1376 = vadd.f32 %v197, %v1375
  %v1377 = vpop.f32.mrf.mxu0
  %v1378 = vadd.f32 %v197, %v1377
  %1379 = vmatmul.bf16.gmra.mxu0 %v743
  %v1380 = vpop.f32.mrf.mxu0
  %v1381 = vadd.f32 %v197, %v1380
  %v1382 = vpop.f32.mrf.mxu0
  %v1383 = vadd.f32 %v197, %v1382
  %1384 = vmatmul.bf16.gmra.mxu0 %v745
  %v1385 = vpop.f32.mrf.mxu0
  %v1386 = vadd.f32 %v197, %v1385
  %v1387 = vpop.f32.mrf.mxu0
  %v1388 = vadd.f32 %v197, %v1387
  %1389 = vmatmul.bf16.gmra.mxu0 %v747
  %v1390 = vpop.f32.mrf.mxu0
  %v1391 = vadd.f32 %v197, %v1390
  %v1392 = vpop.f32.mrf.mxu0
  %v1393 = vadd.f32 %v197, %v1392
  %1394 = vmatmul.bf16.gmra.mxu0 %v749
  %v1395 = vpop.f32.mrf.mxu0
  %v1396 = vadd.f32 %v197, %v1395
  %v1397 = vpop.f32.mrf.mxu0
  %v1398 = vadd.f32 %v197, %v1397
  %1399 = vmatmul.bf16.gmra.mxu0 %v751
  %v1400 = vpop.f32.mrf.mxu0
  %v1401 = vadd.f32 %v197, %v1400
  %v1402 = vpop.f32.mrf.mxu0
  %v1403 = vadd.f32 %v197, %v1402
  %1404 = vmatmul.bf16.gmra.mxu0 %v753
  %v1405 = vpop.f32.mrf.mxu0
  %v1406 = vadd.f32 %v197, %v1405
  %v1407 = vpop.f32.mrf.mxu0
  %v1408 = vadd.f32 %v197, %v1407
  %1409 = vmatmul.bf16.gmra.mxu0 %v755
  %v1410 = vpop.f32.mrf.mxu0
  %v1411 = vadd.f32 %v197, %v1410
  %v1412 = vpop.f32.mrf.mxu0
  %v1413 = vadd.f32 %v197, %v1412
  %1414 = vmatmul.bf16.gmra.mxu0 %v757
  %v1415 = vpop.f32.mrf.mxu0
  %v1416 = vadd.f32 %v197, %v1415
  %v1417 = vpop.f32.mrf.mxu0
  %v1418 = vadd.f32 %v197, %v1417
  %1419 = vmatmul.bf16.gmra.mxu0 %v759
  %v1420 = vpop.f32.mrf.mxu0
  %v1421 = vadd.f32 %v197, %v1420
  %v1422 = vpop.f32.mrf.mxu0
  %v1423 = vadd.f32 %v197, %v1422
  %1424 = vmatmul.bf16.gmra.mxu0 %v761
  %v1425 = vpop.f32.mrf.mxu0
  %v1426 = vadd.f32 %v197, %v1425
  %v1427 = vpop.f32.mrf.mxu0
  %v1428 = vadd.f32 %v197, %v1427
  %1429 = vmatmul.bf16.gmra.mxu0 %v763
  %v1430 = vpop.f32.mrf.mxu0
  %v1431 = vadd.f32 %v197, %v1430
  %v1432 = vpop.f32.mrf.mxu0
  %v1433 = vadd.f32 %v197, %v1432
  %1434 = vmatmul.bf16.gmra.mxu0 %v765
  %v1435 = vpop.f32.mrf.mxu0
  %v1436 = vadd.f32 %v197, %v1435
  %v1437 = vpop.f32.mrf.mxu0
  %v1438 = vadd.f32 %v197, %v1437
  %1439 = vmatmul.bf16.gmra.mxu0 %v767
  %v1440 = vpop.f32.mrf.mxu0
  %v1441 = vadd.f32 %v197, %v1440
  %v1442 = vpop.f32.mrf.mxu0
  %v1443 = vadd.f32 %v197, %v1442
  %1444 = vmatmul.bf16.gmra.mxu0 %v769
  %v1445 = vpop.f32.mrf.mxu0
  %v1446 = vadd.f32 %v197, %v1445
  %v1447 = vpop.f32.mrf.mxu0
  %v1448 = vadd.f32 %v197, %v1447
  %1449 = vmatmul.bf16.gmra.mxu0 %v771
  %v1450 = vpop.f32.mrf.mxu0
  %v1451 = vadd.f32 %v197, %v1450
  %v1452 = vpop.f32.mrf.mxu0
  %v1453 = vadd.f32 %v197, %v1452
  %1454 = vmatmul.bf16.gmra.mxu0 %v773
  %v1455 = vpop.f32.mrf.mxu0
  %v1456 = vadd.f32 %v197, %v1455
  %v1457 = vpop.f32.mrf.mxu0
  %v1458 = vadd.f32 %v197, %v1457
  %1459 = vmatmul.bf16.gmra.mxu0 %v775
  %v1460 = vpop.f32.mrf.mxu0
  %v1461 = vadd.f32 %v197, %v1460
  %v1462 = vpop.f32.mrf.mxu0
  %v1463 = vadd.f32 %v197, %v1462
  %1464 = vmatmul.bf16.gmra.mxu0 %v777
  %v1465 = vpop.f32.mrf.mxu0
  %v1466 = vadd.f32 %v197, %v1465
  %v1467 = vpop.f32.mrf.mxu0
  %v1468 = vadd.f32 %v197, %v1467
  %1469 = vmatmul.bf16.gmra.mxu0 %v779
  %v1470 = vpop.f32.mrf.mxu0
  %v1471 = vadd.f32 %v197, %v1470
  %v1472 = vpop.f32.mrf.mxu0
  %v1473 = vadd.f32 %v197, %v1472
  %1474 = vmatmul.bf16.gmra.mxu0 %v781
  %v1475 = vpop.f32.mrf.mxu0
  %v1476 = vadd.f32 %v197, %v1475
  %v1477 = vpop.f32.mrf.mxu0
  %v1478 = vadd.f32 %v197, %v1477
  %1479 = vmatmul.bf16.gmra.mxu0 %v783
  %v1480 = vpop.f32.mrf.mxu0
  %v1481 = vadd.f32 %v197, %v1480
  %v1482 = vpop.f32.mrf.mxu0
  %v1483 = vadd.f32 %v197, %v1482
  %1484 = vmatmul.bf16.gmra.mxu0 %v785
  %v1485 = vpop.f32.mrf.mxu0
  %v1486 = vadd.f32 %v197, %v1485
  %v1487 = vpop.f32.mrf.mxu0
  %v1488 = vadd.f32 %v197, %v1487
  %1489 = vmatmul.bf16.gmra.mxu0 %v787
  %v1490 = vpop.f32.mrf.mxu0
  %v1491 = vadd.f32 %v197, %v1490
  %v1492 = vpop.f32.mrf.mxu0
  %v1493 = vadd.f32 %v197, %v1492
  %1494 = vmatmul.bf16.gmra.mxu0 %v789
  %v1495 = vpop.f32.mrf.mxu0
  %v1496 = vadd.f32 %v197, %v1495
  %v1497 = vpop.f32.mrf.mxu0
  %v1498 = vadd.f32 %v197, %v1497
  %1499 = vmatmul.bf16.gmra.mxu0 %v791
  %v1500 = vpop.f32.mrf.mxu0
  %v1501 = vadd.f32 %v197, %v1500
  %v1502 = vpop.f32.mrf.mxu0
  %v1503 = vadd.f32 %v197, %v1502
  %1504 = vmatmul.bf16.gmra.mxu0 %v793
  %v1505 = vpop.f32.mrf.mxu0
  %v1506 = vadd.f32 %v197, %v1505
  %v1507 = vpop.f32.mrf.mxu0
  %v1508 = vadd.f32 %v197, %v1507
  %1509 = vmatmul.bf16.gmra.mxu0 %v795
  %v1510 = vpop.f32.mrf.mxu0
  %v1511 = vadd.f32 %v197, %v1510
  %v1512 = vpop.f32.mrf.mxu0
  %v1513 = vadd.f32 %v197, %v1512
  %1514 = vmatmul.bf16.gmra.mxu0 %v797
  %v1515 = vpop.f32.mrf.mxu0
  %v1516 = vadd.f32 %v197, %v1515
  %v1517 = vpop.f32.mrf.mxu0
  %v1518 = vadd.f32 %v197, %v1517
  %1519 = vmatmul.bf16.gmra.mxu0 %v799
  %v1520 = vpop.f32.mrf.mxu0
  %v1521 = vadd.f32 %v197, %v1520
  %v1522 = vpop.f32.mrf.mxu0
  %v1523 = vadd.f32 %v197, %v1522
  %1524 = vmatmul.bf16.gmra.mxu0 %v801
  %v1525 = vpop.f32.mrf.mxu0
  %v1526 = vadd.f32 %v197, %v1525
  %v1527 = vpop.f32.mrf.mxu0
  %v1528 = vadd.f32 %v197, %v1527
  %1529 = vmatmul.bf16.gmra.mxu0 %v803
  %v1530 = vpop.f32.mrf.mxu0
  %v1531 = vadd.f32 %v197, %v1530
  %v1532 = vpop.f32.mrf.mxu0
  %v1533 = vadd.f32 %v197, %v1532
  %1534 = vmatmul.bf16.gmra.mxu0 %v805
  %v1535 = vpop.f32.mrf.mxu0
  %v1536 = vadd.f32 %v197, %v1535
  %v1537 = vpop.f32.mrf.mxu0
  %v1538 = vadd.f32 %v197, %v1537
  %1539 = vmatmul.bf16.gmra.mxu0 %v807
  %v1540 = vpop.f32.mrf.mxu0
  %v1541 = vadd.f32 %v197, %v1540
  %v1542 = vpop.f32.mrf.mxu0
  %v1543 = vadd.f32 %v197, %v1542
  %1544 = vmatmul.bf16.gmra.mxu0 %v809
  %v1545 = vpop.f32.mrf.mxu0
  %v1546 = vadd.f32 %v197, %v1545
  %v1547 = vpop.f32.mrf.mxu0
  %v1548 = vadd.f32 %v197, %v1547
  %1549 = vmatmul.bf16.gmra.mxu0 %v811
  %v1550 = vpop.f32.mrf.mxu0
  %v1551 = vadd.f32 %v197, %v1550
  %v1552 = vpop.f32.mrf.mxu0
  %v1553 = vadd.f32 %v197, %v1552
  %1554 = vmatmul.bf16.gmra.mxu0 %v813
  %v1555 = vpop.f32.mrf.mxu0
  %v1556 = vadd.f32 %v197, %v1555
  %v1557 = vpop.f32.mrf.mxu0
  %v1558 = vadd.f32 %v197, %v1557
  %1559 = vmatmul.bf16.gmra.mxu0 %v815
  %v1560 = vpop.f32.mrf.mxu0
  %v1561 = vadd.f32 %v197, %v1560
  %v1562 = vpop.f32.mrf.mxu0
  %v1563 = vadd.f32 %v197, %v1562
  %1564 = vmatmul.bf16.gmra.mxu0 %v817
  %v1565 = vpop.f32.mrf.mxu0
  %v1566 = vadd.f32 %v197, %v1565
  %v1567 = vpop.f32.mrf.mxu0
  %v1568 = vadd.f32 %v197, %v1567
  %1569 = vmatmul.bf16.gmra.mxu0 %v819
  %v1570 = vpop.f32.mrf.mxu0
  %v1571 = vadd.f32 %v197, %v1570
  %v1572 = vpop.f32.mrf.mxu0
  %v1573 = vadd.f32 %v197, %v1572
  %1574 = vmatmul.bf16.gmra.mxu0 %v821
  %v1575 = vpop.f32.mrf.mxu0
  %v1576 = vadd.f32 %v197, %v1575
  %v1577 = vpop.f32.mrf.mxu0
  %v1578 = vadd.f32 %v197, %v1577
  %1579 = vmatmul.bf16.gmra.mxu0 %v823
  %v1580 = vpop.f32.mrf.mxu0
  %v1581 = vadd.f32 %v197, %v1580
  %v1582 = vpop.f32.mrf.mxu0
  %v1583 = vadd.f32 %v197, %v1582
  %1584 = vmatmul.bf16.gmra.mxu0 %v825
  %v1585 = vpop.f32.mrf.mxu0
  %v1586 = vadd.f32 %v197, %v1585
  %v1587 = vpop.f32.mrf.mxu0
  %v1588 = vadd.f32 %v197, %v1587
  %1589 = vmatmul.bf16.gmra.mxu0 %v827
  %v1590 = vpop.f32.mrf.mxu0
  %v1591 = vadd.f32 %v197, %v1590
  %v1592 = vpop.f32.mrf.mxu0
  %v1593 = vadd.f32 %v197, %v1592
  %1594 = vmatmul.bf16.gmra.mxu0 %v829
  %v1595 = vpop.f32.mrf.mxu0
  %v1596 = vadd.f32 %v197, %v1595
  %v1597 = vpop.f32.mrf.mxu0
  %v1598 = vadd.f32 %v197, %v1597
  %1599 = vmatmul.bf16.gmra.mxu0 %v831
  %v1600 = vpop.f32.mrf.mxu0
  %v1601 = vadd.f32 %v197, %v1600
  %v1602 = vpop.f32.mrf.mxu0
  %v1603 = vadd.f32 %v197, %v1602
  %1604 = vmatmul.bf16.gmra.mxu0 %v833
  %v1605 = vpop.f32.mrf.mxu0
  %v1606 = vadd.f32 %v197, %v1605
  %v1607 = vpop.f32.mrf.mxu0
  %v1608 = vadd.f32 %v197, %v1607
  %1609 = vmatmul.bf16.gmra.mxu0 %v835
  %v1610 = vpop.f32.mrf.mxu0
  %v1611 = vadd.f32 %v197, %v1610
  %v1612 = vpop.f32.mrf.mxu0
  %v1613 = vadd.f32 %v197, %v1612
  %1614 = vmatmul.bf16.gmra.mxu0 %v837
  %v1615 = vpop.f32.mrf.mxu0
  %v1616 = vadd.f32 %v197, %v1615
  %v1617 = vpop.f32.mrf.mxu0
  %v1618 = vadd.f32 %v197, %v1617
  %1619 = vmatmul.bf16.gmra.mxu0 %v839
  %v1620 = vpop.f32.mrf.mxu0
  %v1621 = vadd.f32 %v197, %v1620
  %v1622 = vpop.f32.mrf.mxu0
  %v1623 = vadd.f32 %v197, %v1622
  %1624 = vmatmul.bf16.gmra.mxu0 %v841
  %v1625 = vpop.f32.mrf.mxu0
  %v1626 = vadd.f32 %v197, %v1625
  %v1627 = vpop.f32.mrf.mxu0
  %v1628 = vadd.f32 %v197, %v1627
  %1629 = vmatmul.bf16.gmra.mxu0 %v843
  %v1630 = vpop.f32.mrf.mxu0
  %v1631 = vadd.f32 %v197, %v1630
  %v1632 = vpop.f32.mrf.mxu0
  %v1633 = vadd.f32 %v197, %v1632
  %1634 = vmatmul.bf16.gmra.mxu0 %v845
  %v1635 = vpop.f32.mrf.mxu0
  %v1636 = vadd.f32 %v197, %v1635
  %v1637 = vpop.f32.mrf.mxu0
  %v1638 = vadd.f32 %v197, %v1637
  %1639 = vdwg.mxu0
  %1640 = vmatpush.bf16.msra.mxu0 0
  %1641 = vmatpush.bf16.msra.mxu0 0
  %1642 = vmatpush.bf16.msra.mxu0 0
  %1643 = vmatpush.bf16.msra.mxu0 0
  %1644 = vmatpush.bf16.msra.mxu0 0
  %1645 = vmatpush.bf16.msra.mxu0 0
  %1646 = vmatpush.bf16.msra.mxu0 0
  %1647 = vmatpush.bf16.msra.mxu0 %v972
  %1648 = vmatmul.bf16.gmra.mxu0 %v984
  %v1649 = vpop.f32.mrf.mxu0
  %v1650 = vadd.f32 %v1236, %v1649
  %v1651 = vpop.f32.mrf.mxu0
  %v1652 = vadd.f32 %v1238, %v1651
  %1653 = vmatmul.bf16.gmra.mxu0 %v987
  %v1654 = vpop.f32.mrf.mxu0
  %v1655 = vadd.f32 %v1241, %v1654
  %v1656 = vpop.f32.mrf.mxu0
  %v1657 = vadd.f32 %v1243, %v1656
  %1658 = vmatmul.bf16.gmra.mxu0 %v990
  %v1659 = vpop.f32.mrf.mxu0
  %v1660 = vadd.f32 %v1246, %v1659
  %v1661 = vpop.f32.mrf.mxu0
  %v1662 = vadd.f32 %v1248, %v1661
  %1663 = vmatmul.bf16.gmra.mxu0 %v993
  %v1664 = vpop.f32.mrf.mxu0
  %v1665 = vadd.f32 %v1251, %v1664
  %v1666 = vpop.f32.mrf.mxu0
  %v1667 = vadd.f32 %v1253, %v1666
  %1668 = vmatmul.bf16.gmra.mxu0 %v996
  %v1669 = vpop.f32.mrf.mxu0
  %v1670 = vadd.f32 %v1256, %v1669
  %v1671 = vpop.f32.mrf.mxu0
  %v1672 = vadd.f32 %v1258, %v1671
  %1673 = vmatmul.bf16.gmra.mxu0 %v999
  %v1674 = vpop.f32.mrf.mxu0
  %v1675 = vadd.f32 %v1261, %v1674
  %v1676 = vpop.f32.mrf.mxu0
  %v1677 = vadd.f32 %v1263, %v1676
  %1678 = vmatmul.bf16.gmra.mxu0 %v1002
  %v1679 = vpop.f32.mrf.mxu0
  %v1680 = vadd.f32 %v1266, %v1679
  %v1681 = vpop.f32.mrf.mxu0
  %v1682 = vadd.f32 %v1268, %v1681
  %1683 = vmatmul.bf16.gmra.mxu0 %v1005
  %v1684 = vpop.f32.mrf.mxu0
  %v1685 = vadd.f32 %v1271, %v1684
  %v1686 = vpop.f32.mrf.mxu0
  %v1687 = vadd.f32 %v1273, %v1686
  %1688 = vmatmul.bf16.gmra.mxu0 %v1008
  %v1689 = vpop.f32.mrf.mxu0
  %v1690 = vadd.f32 %v1276, %v1689
  %v1691 = vpop.f32.mrf.mxu0
  %v1692 = vadd.f32 %v1278, %v1691
  %1693 = vmatmul.bf16.gmra.mxu0 %v1011
  %v1694 = vpop.f32.mrf.mxu0
  %v1695 = vadd.f32 %v1281, %v1694
  %v1696 = vpop.f32.mrf.mxu0
  %v1697 = vadd.f32 %v1283, %v1696
  %1698 = vmatmul.bf16.gmra.mxu0 %v1014
  %v1699 = vpop.f32.mrf.mxu0
  %v1700 = vadd.f32 %v1286, %v1699
  %v1701 = vpop.f32.mrf.mxu0
  %v1702 = vadd.f32 %v1288, %v1701
  %1703 = vmatmul.bf16.gmra.mxu0 %v1017
  %v1704 = vpop.f32.mrf.mxu0
  %v1705 = vadd.f32 %v1291, %v1704
  %v1706 = vpop.f32.mrf.mxu0
  %v1707 = vadd.f32 %v1293, %v1706
  %1708 = vmatmul.bf16.gmra.mxu0 %v1020
  %v1709 = vpop.f32.mrf.mxu0
  %v1710 = vadd.f32 %v1296, %v1709
  %v1711 = vpop.f32.mrf.mxu0
  %v1712 = vadd.f32 %v1298, %v1711
  %1713 = vmatmul.bf16.gmra.mxu0 %v1023
  %v1714 = vpop.f32.mrf.mxu0
  %v1715 = vadd.f32 %v1301, %v1714
  %v1716 = vpop.f32.mrf.mxu0
  %v1717 = vadd.f32 %v1303, %v1716
  %1718 = vmatmul.bf16.gmra.mxu0 %v1026
  %v1719 = vpop.f32.mrf.mxu0
  %v1720 = vadd.f32 %v1306, %v1719
  %v1721 = vpop.f32.mrf.mxu0
  %v1722 = vadd.f32 %v1308, %v1721
  %1723 = vmatmul.bf16.gmra.mxu0 %v1029
  %v1724 = vpop.f32.mrf.mxu0
  %v1725 = vadd.f32 %v1311, %v1724
  %v1726 = vpop.f32.mrf.mxu0
  %v1727 = vadd.f32 %v1313, %v1726
  %1728 = vmatmul.bf16.gmra.mxu0 %v1032
  %v1729 = vpop.f32.mrf.mxu0
  %v1730 = vadd.f32 %v1316, %v1729
  %v1731 = vpop.f32.mrf.mxu0
  %v1732 = vadd.f32 %v1318, %v1731
  %1733 = vmatmul.bf16.gmra.mxu0 %v1035
  %v1734 = vpop.f32.mrf.mxu0
  %v1735 = vadd.f32 %v1321, %v1734
  %v1736 = vpop.f32.mrf.mxu0
  %v1737 = vadd.f32 %v1323, %v1736
  %1738 = vmatmul.bf16.gmra.mxu0 %v1038
  %v1739 = vpop.f32.mrf.mxu0
  %v1740 = vadd.f32 %v1326, %v1739
  %v1741 = vpop.f32.mrf.mxu0
  %v1742 = vadd.f32 %v1328, %v1741
  %1743 = vmatmul.bf16.gmra.mxu0 %v1041
  %v1744 = vpop.f32.mrf.mxu0
  %v1745 = vadd.f32 %v1331, %v1744
  %v1746 = vpop.f32.mrf.mxu0
  %v1747 = vadd.f32 %v1333, %v1746
  %1748 = vmatmul.bf16.gmra.mxu0 %v1044
  %v1749 = vpop.f32.mrf.mxu0
  %v1750 = vadd.f32 %v1336, %v1749
  %v1751 = vpop.f32.mrf.mxu0
  %v1752 = vadd.f32 %v1338, %v1751
  %1753 = vmatmul.bf16.gmra.mxu0 %v1047
  %v1754 = vpop.f32.mrf.mxu0
  %v1755 = vadd.f32 %v1341, %v1754
  %v1756 = vpop.f32.mrf.mxu0
  %v1757 = vadd.f32 %v1343, %v1756
  %1758 = vmatmul.bf16.gmra.mxu0 %v1050
  %v1759 = vpop.f32.mrf.mxu0
  %v1760 = vadd.f32 %v1346, %v1759
  %v1761 = vpop.f32.mrf.mxu0
  %v1762 = vadd.f32 %v1348, %v1761
  %1763 = vmatmul.bf16.gmra.mxu0 %v1053
  %v1764 = vpop.f32.mrf.mxu0
  %v1765 = vadd.f32 %v1351, %v1764
  %v1766 = vpop.f32.mrf.mxu0
  %v1767 = vadd.f32 %v1353, %v1766
  %1768 = vmatmul.bf16.gmra.mxu0 %v1056
  %v1769 = vpop.f32.mrf.mxu0
  %v1770 = vadd.f32 %v1356, %v1769
  %v1771 = vpop.f32.mrf.mxu0
  %v1772 = vadd.f32 %v1358, %v1771
  %1773 = vmatmul.bf16.gmra.mxu0 %v1059
  %v1774 = vpop.f32.mrf.mxu0
  %v1775 = vadd.f32 %v1361, %v1774
  %v1776 = vpop.f32.mrf.mxu0
  %v1777 = vadd.f32 %v1363, %v1776
  %1778 = vmatmul.bf16.gmra.mxu0 %v1062
  %v1779 = vpop.f32.mrf.mxu0
  %v1780 = vadd.f32 %v1366, %v1779
  %v1781 = vpop.f32.mrf.mxu0
  %v1782 = vadd.f32 %v1368, %v1781
  %1783 = vmatmul.bf16.gmra.mxu0 %v1065
  %v1784 = vpop.f32.mrf.mxu0
  %v1785 = vadd.f32 %v1371, %v1784
  %v1786 = vpop.f32.mrf.mxu0
  %v1787 = vadd.f32 %v1373, %v1786
  %1788 = vmatmul.bf16.gmra.mxu0 %v1068
  %v1789 = vpop.f32.mrf.mxu0
  %v1790 = vadd.f32 %v1376, %v1789
  %v1791 = vpop.f32.mrf.mxu0
  %v1792 = vadd.f32 %v1378, %v1791
  %1793 = vmatmul.bf16.gmra.mxu0 %v1071
  %v1794 = vpop.f32.mrf.mxu0
  %v1795 = vadd.f32 %v1381, %v1794
  %v1796 = vpop.f32.mrf.mxu0
  %v1797 = vadd.f32 %v1383, %v1796
  %1798 = vmatmul.bf16.gmra.mxu0 %v1074
  %v1799 = vpop.f32.mrf.mxu0
  %v1800 = vadd.f32 %v1386, %v1799
  %v1801 = vpop.f32.mrf.mxu0
  %v1802 = vadd.f32 %v1388, %v1801
  %1803 = vmatmul.bf16.gmra.mxu0 %v1077
  %v1804 = vpop.f32.mrf.mxu0
  %v1805 = vadd.f32 %v1391, %v1804
  %v1806 = vpop.f32.mrf.mxu0
  %v1807 = vadd.f32 %v1393, %v1806
  %1808 = vmatmul.bf16.gmra.mxu0 %v1080
  %v1809 = vpop.f32.mrf.mxu0
  %v1810 = vadd.f32 %v1396, %v1809
  %v1811 = vpop.f32.mrf.mxu0
  %v1812 = vadd.f32 %v1398, %v1811
  %1813 = vmatmul.bf16.gmra.mxu0 %v1083
  %v1814 = vpop.f32.mrf.mxu0
  %v1815 = vadd.f32 %v1401, %v1814
  %v1816 = vpop.f32.mrf.mxu0
  %v1817 = vadd.f32 %v1403, %v1816
  %1818 = vmatmul.bf16.gmra.mxu0 %v1086
  %v1819 = vpop.f32.mrf.mxu0
  %v1820 = vadd.f32 %v1406, %v1819
  %v1821 = vpop.f32.mrf.mxu0
  %v1822 = vadd.f32 %v1408, %v1821
  %1823 = vmatmul.bf16.gmra.mxu0 %v1089
  %v1824 = vpop.f32.mrf.mxu0
  %v1825 = vadd.f32 %v1411, %v1824
  %v1826 = vpop.f32.mrf.mxu0
  %v1827 = vadd.f32 %v1413, %v1826
  %1828 = vmatmul.bf16.gmra.mxu0 %v1092
  %v1829 = vpop.f32.mrf.mxu0
  %v1830 = vadd.f32 %v1416, %v1829
  %v1831 = vpop.f32.mrf.mxu0
  %v1832 = vadd.f32 %v1418, %v1831
  %1833 = vmatmul.bf16.gmra.mxu0 %v1095
  %v1834 = vpop.f32.mrf.mxu0
  %v1835 = vadd.f32 %v1421, %v1834
  %v1836 = vpop.f32.mrf.mxu0
  %v1837 = vadd.f32 %v1423, %v1836
  %1838 = vmatmul.bf16.gmra.mxu0 %v1098
  %v1839 = vpop.f32.mrf.mxu0
  %v1840 = vadd.f32 %v1426, %v1839
  %v1841 = vpop.f32.mrf.mxu0
  %v1842 = vadd.f32 %v1428, %v1841
  %1843 = vmatmul.bf16.gmra.mxu0 %v1101
  %v1844 = vpop.f32.mrf.mxu0
  %v1845 = vadd.f32 %v1431, %v1844
  %v1846 = vpop.f32.mrf.mxu0
  %v1847 = vadd.f32 %v1433, %v1846
  %1848 = vmatmul.bf16.gmra.mxu0 %v1104
  %v1849 = vpop.f32.mrf.mxu0
  %v1850 = vadd.f32 %v1436, %v1849
  %v1851 = vpop.f32.mrf.mxu0
  %v1852 = vadd.f32 %v1438, %v1851
  %1853 = vmatmul.bf16.gmra.mxu0 %v1107
  %v1854 = vpop.f32.mrf.mxu0
  %v1855 = vadd.f32 %v1441, %v1854
  %v1856 = vpop.f32.mrf.mxu0
  %v1857 = vadd.f32 %v1443, %v1856
  %1858 = vmatmul.bf16.gmra.mxu0 %v1110
  %v1859 = vpop.f32.mrf.mxu0
  %v1860 = vadd.f32 %v1446, %v1859
  %v1861 = vpop.f32.mrf.mxu0
  %v1862 = vadd.f32 %v1448, %v1861
  %1863 = vmatmul.bf16.gmra.mxu0 %v1113
  %v1864 = vpop.f32.mrf.mxu0
  %v1865 = vadd.f32 %v1451, %v1864
  %v1866 = vpop.f32.mrf.mxu0
  %v1867 = vadd.f32 %v1453, %v1866
  %1868 = vmatmul.bf16.gmra.mxu0 %v1116
  %v1869 = vpop.f32.mrf.mxu0
  %v1870 = vadd.f32 %v1456, %v1869
  %v1871 = vpop.f32.mrf.mxu0
  %v1872 = vadd.f32 %v1458, %v1871
  %1873 = vmatmul.bf16.gmra.mxu0 %v1119
  %v1874 = vpop.f32.mrf.mxu0
  %v1875 = vadd.f32 %v1461, %v1874
  %v1876 = vpop.f32.mrf.mxu0
  %v1877 = vadd.f32 %v1463, %v1876
  %1878 = vmatmul.bf16.gmra.mxu0 %v1122
  %v1879 = vpop.f32.mrf.mxu0
  %v1880 = vadd.f32 %v1466, %v1879
  %v1881 = vpop.f32.mrf.mxu0
  %v1882 = vadd.f32 %v1468, %v1881
  %1883 = vmatmul.bf16.gmra.mxu0 %v1125
  %v1884 = vpop.f32.mrf.mxu0
  %v1885 = vadd.f32 %v1471, %v1884
  %v1886 = vpop.f32.mrf.mxu0
  %v1887 = vadd.f32 %v1473, %v1886
  %1888 = vmatmul.bf16.gmra.mxu0 %v1128
  %v1889 = vpop.f32.mrf.mxu0
  %v1890 = vadd.f32 %v1476, %v1889
  %v1891 = vpop.f32.mrf.mxu0
  %v1892 = vadd.f32 %v1478, %v1891
  %1893 = vmatmul.bf16.gmra.mxu0 %v1131
  %v1894 = vpop.f32.mrf.mxu0
  %v1895 = vadd.f32 %v1481, %v1894
  %v1896 = vpop.f32.mrf.mxu0
  %v1897 = vadd.f32 %v1483, %v1896
  %1898 = vmatmul.bf16.gmra.mxu0 %v1134
  %v1899 = vpop.f32.mrf.mxu0
  %v1900 = vadd.f32 %v1486, %v1899
  %v1901 = vpop.f32.mrf.mxu0
  %v1902 = vadd.f32 %v1488, %v1901
  %1903 = vmatmul.bf16.gmra.mxu0 %v1137
  %v1904 = vpop.f32.mrf.mxu0
  %v1905 = vadd.f32 %v1491, %v1904
  %v1906 = vpop.f32.mrf.mxu0
  %v1907 = vadd.f32 %v1493, %v1906
  %1908 = vmatmul.bf16.gmra.mxu0 %v1140
  %v1909 = vpop.f32.mrf.mxu0
  %v1910 = vadd.f32 %v1496, %v1909
  %v1911 = vpop.f32.mrf.mxu0
  %v1912 = vadd.f32 %v1498, %v1911
  %1913 = vmatmul.bf16.gmra.mxu0 %v1143
  %v1914 = vpop.f32.mrf.mxu0
  %v1915 = vadd.f32 %v1501, %v1914
  %v1916 = vpop.f32.mrf.mxu0
  %v1917 = vadd.f32 %v1503, %v1916
  %1918 = vmatmul.bf16.gmra.mxu0 %v1146
  %v1919 = vpop.f32.mrf.mxu0
  %v1920 = vadd.f32 %v1506, %v1919
  %v1921 = vpop.f32.mrf.mxu0
  %v1922 = vadd.f32 %v1508, %v1921
  %1923 = vmatmul.bf16.gmra.mxu0 %v1149
  %v1924 = vpop.f32.mrf.mxu0
  %v1925 = vadd.f32 %v1511, %v1924
  %v1926 = vpop.f32.mrf.mxu0
  %v1927 = vadd.f32 %v1513, %v1926
  %1928 = vmatmul.bf16.gmra.mxu0 %v1152
  %v1929 = vpop.f32.mrf.mxu0
  %v1930 = vadd.f32 %v1516, %v1929
  %v1931 = vpop.f32.mrf.mxu0
  %v1932 = vadd.f32 %v1518, %v1931
  %1933 = vmatmul.bf16.gmra.mxu0 %v1155
  %v1934 = vpop.f32.mrf.mxu0
  %v1935 = vadd.f32 %v1521, %v1934
  %v1936 = vpop.f32.mrf.mxu0
  %v1937 = vadd.f32 %v1523, %v1936
  %1938 = vmatmul.bf16.gmra.mxu0 %v1158
  %v1939 = vpop.f32.mrf.mxu0
  %v1940 = vadd.f32 %v1526, %v1939
  %v1941 = vpop.f32.mrf.mxu0
  %v1942 = vadd.f32 %v1528, %v1941
  %1943 = vmatmul.bf16.gmra.mxu0 %v1161
  %v1944 = vpop.f32.mrf.mxu0
  %v1945 = vadd.f32 %v1531, %v1944
  %v1946 = vpop.f32.mrf.mxu0
  %v1947 = vadd.f32 %v1533, %v1946
  %1948 = vmatmul.bf16.gmra.mxu0 %v1164
  %v1949 = vpop.f32.mrf.mxu0
  %v1950 = vadd.f32 %v1536, %v1949
  %v1951 = vpop.f32.mrf.mxu0
  %v1952 = vadd.f32 %v1538, %v1951
  %1953 = vmatmul.bf16.gmra.mxu0 %v1167
  %v1954 = vpop.f32.mrf.mxu0
  %v1955 = vadd.f32 %v1541, %v1954
  %v1956 = vpop.f32.mrf.mxu0
  %v1957 = vadd.f32 %v1543, %v1956
  %1958 = vmatmul.bf16.gmra.mxu0 %v1170
  %v1959 = vpop.f32.mrf.mxu0
  %v1960 = vadd.f32 %v1546, %v1959
  %v1961 = vpop.f32.mrf.mxu0
  %v1962 = vadd.f32 %v1548, %v1961
  %1963 = vmatmul.bf16.gmra.mxu0 %v1173
  %v1964 = vpop.f32.mrf.mxu0
  %v1965 = vadd.f32 %v1551, %v1964
  %v1966 = vpop.f32.mrf.mxu0
  %v1967 = vadd.f32 %v1553, %v1966
  %1968 = vmatmul.bf16.gmra.mxu0 %v1176
  %v1969 = vpop.f32.mrf.mxu0
  %v1970 = vadd.f32 %v1556, %v1969
  %v1971 = vpop.f32.mrf.mxu0
  %v1972 = vadd.f32 %v1558, %v1971
  %1973 = vmatmul.bf16.gmra.mxu0 %v1179
  %v1974 = vpop.f32.mrf.mxu0
  %v1975 = vadd.f32 %v1561, %v1974
  %v1976 = vpop.f32.mrf.mxu0
  %v1977 = vadd.f32 %v1563, %v1976
  %1978 = vmatmul.bf16.gmra.mxu0 %v1182
  %v1979 = vpop.f32.mrf.mxu0
  %v1980 = vadd.f32 %v1566, %v1979
  %v1981 = vpop.f32.mrf.mxu0
  %v1982 = vadd.f32 %v1568, %v1981
  %1983 = vmatmul.bf16.gmra.mxu0 %v1185
  %v1984 = vpop.f32.mrf.mxu0
  %v1985 = vadd.f32 %v1571, %v1984
  %v1986 = vpop.f32.mrf.mxu0
  %v1987 = vadd.f32 %v1573, %v1986
  %1988 = vmatmul.bf16.gmra.mxu0 %v1188
  %v1989 = vpop.f32.mrf.mxu0
  %v1990 = vadd.f32 %v1576, %v1989
  %v1991 = vpop.f32.mrf.mxu0
  %v1992 = vadd.f32 %v1578, %v1991
  %1993 = vmatmul.bf16.gmra.mxu0 %v1191
  %v1994 = vpop.f32.mrf.mxu0
  %v1995 = vadd.f32 %v1581, %v1994
  %v1996 = vpop.f32.mrf.mxu0
  %v1997 = vadd.f32 %v1583, %v1996
  %1998 = vmatmul.bf16.gmra.mxu0 %v1194
  %v1999 = vpop.f32.mrf.mxu0
  %v2000 = vadd.f32 %v1586, %v1999
  %v2001 = vpop.f32.mrf.mxu0
  %v2002 = vadd.f32 %v1588, %v2001
  %2003 = vmatmul.bf16.gmra.mxu0 %v1197
  %v2004 = vpop.f32.mrf.mxu0
  %v2005 = vadd.f32 %v1591, %v2004
  %v2006 = vpop.f32.mrf.mxu0
  %v2007 = vadd.f32 %v1593, %v2006
  %2008 = vmatmul.bf16.gmra.mxu0 %v1200
  %v2009 = vpop.f32.mrf.mxu0
  %v2010 = vadd.f32 %v1596, %v2009
  %v2011 = vpop.f32.mrf.mxu0
  %v2012 = vadd.f32 %v1598, %v2011
  %2013 = vmatmul.bf16.gmra.mxu0 %v1203
  %v2014 = vpop.f32.mrf.mxu0
  %v2015 = vadd.f32 %v1601, %v2014
  %v2016 = vpop.f32.mrf.mxu0
  %v2017 = vadd.f32 %v1603, %v2016
  %2018 = vmatmul.bf16.gmra.mxu0 %v1206
  %v2019 = vpop.f32.mrf.mxu0
  %v2020 = vadd.f32 %v1606, %v2019
  %v2021 = vpop.f32.mrf.mxu0
  %v2022 = vadd.f32 %v1608, %v2021
  %2023 = vmatmul.bf16.gmra.mxu0 %v1209
  %v2024 = vpop.f32.mrf.mxu0
  %v2025 = vadd.f32 %v1611, %v2024
  %v2026 = vpop.f32.mrf.mxu0
  %v2027 = vadd.f32 %v1613, %v2026
  %2028 = vmatmul.bf16.gmra.mxu0 %v1212
  %v2029 = vpop.f32.mrf.mxu0
  %v2030 = vadd.f32 %v1616, %v2029
  %v2031 = vpop.f32.mrf.mxu0
  %v2032 = vadd.f32 %v1618, %v2031
  %2033 = vmatmul.bf16.gmra.mxu0 %v1215
  %v2034 = vpop.f32.mrf.mxu0
  %v2035 = vadd.f32 %v1621, %v2034
  %v2036 = vpop.f32.mrf.mxu0
  %v2037 = vadd.f32 %v1623, %v2036
  %2038 = vmatmul.bf16.gmra.mxu0 %v1218
  %v2039 = vpop.f32.mrf.mxu0
  %v2040 = vadd.f32 %v1626, %v2039
  %v2041 = vpop.f32.mrf.mxu0
  %v2042 = vadd.f32 %v1628, %v2041
  %2043 = vmatmul.bf16.gmra.mxu0 %v1221
  %v2044 = vpop.f32.mrf.mxu0
  %v2045 = vadd.f32 %v1631, %v2044
  %v2046 = vpop.f32.mrf.mxu0
  %v2047 = vadd.f32 %v1633, %v2046
  %2048 = vmatmul.bf16.gmra.mxu0 %v1224
  %v2049 = vpop.f32.mrf.mxu0
  %v2050 = vadd.f32 %v1636, %v2049
  %v2051 = vpop.f32.mrf.mxu0
  %v2052 = vadd.f32 %v1638, %v2051
  %2053 = vdwg.mxu0
  %vm2054 = vcmp.gt.f32.partialorder %v1650, 0.0
  %vm2055 = vcmp.gt.f32.partialorder %v1652, 0.0
  %vm2056 = vcmp.gt.f32.partialorder %v1655, 0.0
  %vm2057 = vcmp.gt.f32.partialorder %v1657, 0.0
  %vm2058 = vcmp.gt.f32.partialorder %v1660, 0.0
  %vm2059 = vcmp.gt.f32.partialorder %v1662, 0.0
  %vm2060 = vcmp.gt.f32.partialorder %v1665, 0.0
  %vm2061 = vcmp.gt.f32.partialorder %v1667, 0.0
  %vm2062 = vcmp.gt.f32.partialorder %v1670, 0.0
  %vm2063 = vcmp.gt.f32.partialorder %v1672, 0.0
  %vm2064 = vcmp.gt.f32.partialorder %v1675, 0.0
  %vm2065 = vcmp.gt.f32.partialorder %v1677, 0.0
  %vm2066 = vcmp.gt.f32.partialorder %v1680, 0.0
  %vm2067 = vcmp.gt.f32.partialorder %v1682, 0.0
  %vm2068 = vcmp.gt.f32.partialorder %v1685, 0.0
  %vm2069 = vcmp.gt.f32.partialorder %v1687, 0.0
  %vm2070 = vcmp.gt.f32.partialorder %v1690, 0.0
  %vm2071 = vcmp.gt.f32.partialorder %v1692, 0.0
  %vm2072 = vcmp.gt.f32.partialorder %v1695, 0.0
  %vm2073 = vcmp.gt.f32.partialorder %v1697, 0.0
  %vm2074 = vcmp.gt.f32.partialorder %v1700, 0.0
  %vm2075 = vcmp.gt.f32.partialorder %v1702, 0.0
  %vm2076 = vcmp.gt.f32.partialorder %v1705, 0.0
  %vm2077 = vcmp.gt.f32.partialorder %v1707, 0.0
  %vm2078 = vcmp.gt.f32.partialorder %v1710, 0.0
  %vm2079 = vcmp.gt.f32.partialorder %v1712, 0.0
  %vm2080 = vcmp.gt.f32.partialorder %v1715, 0.0
  %vm2081 = vcmp.gt.f32.partialorder %v1717, 0.0
  %vm2082 = vcmp.gt.f32.partialorder %v1720, 0.0
  %vm2083 = vcmp.gt.f32.partialorder %v1722, 0.0
  %vm2084 = vcmp.gt.f32.partialorder %v1725, 0.0
  %vm2085 = vcmp.gt.f32.partialorder %v1727, 0.0
  %vm2086 = vcmp.gt.f32.partialorder %v1730, 0.0
  %vm2087 = vcmp.gt.f32.partialorder %v1732, 0.0
  %vm2088 = vcmp.gt.f32.partialorder %v1735, 0.0
  %vm2089 = vcmp.gt.f32.partialorder %v1737, 0.0
  %vm2090 = vcmp.gt.f32.partialorder %v1740, 0.0
  %vm2091 = vcmp.gt.f32.partialorder %v1742, 0.0
  %vm2092 = vcmp.gt.f32.partialorder %v1745, 0.0
  %vm2093 = vcmp.gt.f32.partialorder %v1747, 0.0
  %vm2094 = vcmp.gt.f32.partialorder %v1750, 0.0
  %vm2095 = vcmp.gt.f32.partialorder %v1752, 0.0
  %vm2096 = vcmp.gt.f32.partialorder %v1755, 0.0
  %vm2097 = vcmp.gt.f32.partialorder %v1757, 0.0
  %vm2098 = vcmp.gt.f32.partialorder %v1760, 0.0
  %vm2099 = vcmp.gt.f32.partialorder %v1762, 0.0
  %vm2100 = vcmp.gt.f32.partialorder %v1765, 0.0
  %vm2101 = vcmp.gt.f32.partialorder %v1767, 0.0
  %vm2102 = vcmp.gt.f32.partialorder %v1770, 0.0
  %vm2103 = vcmp.gt.f32.partialorder %v1772, 0.0
  %vm2104 = vcmp.gt.f32.partialorder %v1775, 0.0
  %vm2105 = vcmp.gt.f32.partialorder %v1777, 0.0
  %vm2106 = vcmp.gt.f32.partialorder %v1780, 0.0
  %vm2107 = vcmp.gt.f32.partialorder %v1782, 0.0
  %vm2108 = vcmp.gt.f32.partialorder %v1785, 0.0
  %vm2109 = vcmp.gt.f32.partialorder %v1787, 0.0
  %vm2110 = vcmp.gt.f32.partialorder %v1790, 0.0
  %vm2111 = vcmp.gt.f32.partialorder %v1792, 0.0
  %vm2112 = vcmp.gt.f32.partialorder %v1795, 0.0
  %vm2113 = vcmp.gt.f32.partialorder %v1797, 0.0
  %vm2114 = vcmp.gt.f32.partialorder %v1800, 0.0
  %vm2115 = vcmp.gt.f32.partialorder %v1802, 0.0
  %vm2116 = vcmp.gt.f32.partialorder %v1805, 0.0
  %vm2117 = vcmp.gt.f32.partialorder %v1807, 0.0
  %vm2118 = vcmp.gt.f32.partialorder %v1810, 0.0
  %vm2119 = vcmp.gt.f32.partialorder %v1812, 0.0
  %vm2120 = vcmp.gt.f32.partialorder %v1815, 0.0
  %vm2121 = vcmp.gt.f32.partialorder %v1817, 0.0
  %vm2122 = vcmp.gt.f32.partialorder %v1820, 0.0
  %vm2123 = vcmp.gt.f32.partialorder %v1822, 0.0
  %vm2124 = vcmp.gt.f32.partialorder %v1825, 0.0
  %vm2125 = vcmp.gt.f32.partialorder %v1827, 0.0
  %vm2126 = vcmp.gt.f32.partialorder %v1830, 0.0
  %vm2127 = vcmp.gt.f32.partialorder %v1832, 0.0
  %vm2128 = vcmp.gt.f32.partialorder %v1835, 0.0
  %vm2129 = vcmp.gt.f32.partialorder %v1837, 0.0
  %vm2130 = vcmp.gt.f32.partialorder %v1840, 0.0
  %vm2131 = vcmp.gt.f32.partialorder %v1842, 0.0
  %vm2132 = vcmp.gt.f32.partialorder %v1845, 0.0
  %vm2133 = vcmp.gt.f32.partialorder %v1847, 0.0
  %vm2134 = vcmp.gt.f32.partialorder %v1850, 0.0
  %vm2135 = vcmp.gt.f32.partialorder %v1852, 0.0
  %vm2136 = vcmp.gt.f32.partialorder %v1855, 0.0
  %vm2137 = vcmp.gt.f32.partialorder %v1857, 0.0
  %vm2138 = vcmp.gt.f32.partialorder %v1860, 0.0
  %vm2139 = vcmp.gt.f32.partialorder %v1862, 0.0
  %vm2140 = vcmp.gt.f32.partialorder %v1865, 0.0
  %vm2141 = vcmp.gt.f32.partialorder %v1867, 0.0
  %vm2142 = vcmp.gt.f32.partialorder %v1870, 0.0
  %vm2143 = vcmp.gt.f32.partialorder %v1872, 0.0
  %vm2144 = vcmp.gt.f32.partialorder %v1875, 0.0
  %vm2145 = vcmp.gt.f32.partialorder %v1877, 0.0
  %vm2146 = vcmp.gt.f32.partialorder %v1880, 0.0
  %vm2147 = vcmp.gt.f32.partialorder %v1882, 0.0
  %vm2148 = vcmp.gt.f32.partialorder %v1885, 0.0
  %vm2149 = vcmp.gt.f32.partialorder %v1887, 0.0
  %vm2150 = vcmp.gt.f32.partialorder %v1890, 0.0
  %vm2151 = vcmp.gt.f32.partialorder %v1892, 0.0
  %vm2152 = vcmp.gt.f32.partialorder %v1895, 0.0
  %vm2153 = vcmp.gt.f32.partialorder %v1897, 0.0
  %vm2154 = vcmp.gt.f32.partialorder %v1900, 0.0
  %vm2155 = vcmp.gt.f32.partialorder %v1902, 0.0
  %vm2156 = vcmp.gt.f32.partialorder %v1905, 0.0
  %vm2157 = vcmp.gt.f32.partialorder %v1907, 0.0
  %vm2158 = vcmp.gt.f32.partialorder %v1910, 0.0
  %vm2159 = vcmp.gt.f32.partialorder %v1912, 0.0
  %vm2160 = vcmp.gt.f32.partialorder %v1915, 0.0
  %vm2161 = vcmp.gt.f32.partialorder %v1917, 0.0
  %vm2162 = vcmp.gt.f32.partialorder %v1920, 0.0
  %vm2163 = vcmp.gt.f32.partialorder %v1922, 0.0
  %vm2164 = vcmp.gt.f32.partialorder %v1925, 0.0
  %vm2165 = vcmp.gt.f32.partialorder %v1927, 0.0
  %vm2166 = vcmp.gt.f32.partialorder %v1930, 0.0
  %vm2167 = vcmp.gt.f32.partialorder %v1932, 0.0
  %vm2168 = vcmp.gt.f32.partialorder %v1935, 0.0
  %vm2169 = vcmp.gt.f32.partialorder %v1937, 0.0
  %vm2170 = vcmp.gt.f32.partialorder %v1940, 0.0
  %vm2171 = vcmp.gt.f32.partialorder %v1942, 0.0
  %vm2172 = vcmp.gt.f32.partialorder %v1945, 0.0
  %vm2173 = vcmp.gt.f32.partialorder %v1947, 0.0
  %vm2174 = vcmp.gt.f32.partialorder %v1950, 0.0
  %vm2175 = vcmp.gt.f32.partialorder %v1952, 0.0
  %vm2176 = vcmp.gt.f32.partialorder %v1955, 0.0
  %vm2177 = vcmp.gt.f32.partialorder %v1957, 0.0
  %vm2178 = vcmp.gt.f32.partialorder %v1960, 0.0
  %vm2179 = vcmp.gt.f32.partialorder %v1962, 0.0
  %vm2180 = vcmp.gt.f32.partialorder %v1965, 0.0
  %vm2181 = vcmp.gt.f32.partialorder %v1967, 0.0
  %vm2182 = vcmp.gt.f32.partialorder %v1970, 0.0
  %vm2183 = vcmp.gt.f32.partialorder %v1972, 0.0
  %vm2184 = vcmp.gt.f32.partialorder %v1975, 0.0
  %vm2185 = vcmp.gt.f32.partialorder %v1977, 0.0
  %vm2186 = vcmp.gt.f32.partialorder %v1980, 0.0
  %vm2187 = vcmp.gt.f32.partialorder %v1982, 0.0
  %vm2188 = vcmp.gt.f32.partialorder %v1985, 0.0
  %vm2189 = vcmp.gt.f32.partialorder %v1987, 0.0
  %vm2190 = vcmp.gt.f32.partialorder %v1990, 0.0
  %vm2191 = vcmp.gt.f32.partialorder %v1992, 0.0
  %vm2192 = vcmp.gt.f32.partialorder %v1995, 0.0
  %vm2193 = vcmp.gt.f32.partialorder %v1997, 0.0
  %vm2194 = vcmp.gt.f32.partialorder %v2000, 0.0
  %vm2195 = vcmp.gt.f32.partialorder %v2002, 0.0
  %vm2196 = vcmp.gt.f32.partialorder %v2005, 0.0
  %vm2197 = vcmp.gt.f32.partialorder %v2007, 0.0
  %vm2198 = vcmp.gt.f32.partialorder %v2010, 0.0
  %vm2199 = vcmp.gt.f32.partialorder %v2012, 0.0
  %vm2200 = vcmp.gt.f32.partialorder %v2015, 0.0
  %vm2201 = vcmp.gt.f32.partialorder %v2017, 0.0
  %vm2202 = vcmp.gt.f32.partialorder %v2020, 0.0
  %vm2203 = vcmp.gt.f32.partialorder %v2022, 0.0
  %vm2204 = vcmp.gt.f32.partialorder %v2025, 0.0
  %vm2205 = vcmp.gt.f32.partialorder %v2027, 0.0
  %vm2206 = vcmp.gt.f32.partialorder %v2030, 0.0
  %vm2207 = vcmp.gt.f32.partialorder %v2032, 0.0
  %vm2208 = vcmp.gt.f32.partialorder %v2035, 0.0
  %vm2209 = vcmp.gt.f32.partialorder %v2037, 0.0
  %vm2210 = vcmp.gt.f32.partialorder %v2040, 0.0
  %vm2211 = vcmp.gt.f32.partialorder %v2042, 0.0
  %vm2212 = vcmp.gt.f32.partialorder %v2045, 0.0
  %vm2213 = vcmp.gt.f32.partialorder %v2047, 0.0
  %vm2214 = vcmp.gt.f32.partialorder %v2050, 0.0
  %vm2215 = vcmp.gt.f32.partialorder %v2052, 0.0
  %v2216 = vmul.f32 %v1650, 0.2
  %v2217 = vmul.f32 %v1652, 0.2
  %v2218 = vmul.f32 %v1655, 0.2
  %v2219 = vmul.f32 %v1657, 0.2
  %v2220 = vmul.f32 %v1660, 0.2
  %v2221 = vmul.f32 %v1662, 0.2
  %v2222 = vmul.f32 %v1665, 0.2
  %v2223 = vmul.f32 %v1667, 0.2
  %v2224 = vmul.f32 %v1670, 0.2
  %v2225 = vmul.f32 %v1672, 0.2
  %v2226 = vmul.f32 %v1675, 0.2
  %v2227 = vmul.f32 %v1677, 0.2
  %v2228 = vmul.f32 %v1680, 0.2
  %v2229 = vmul.f32 %v1682, 0.2
  %v2230 = vmul.f32 %v1685, 0.2
  %v2231 = vmul.f32 %v1687, 0.2
  %v2232 = vmul.f32 %v1690, 0.2
  %v2233 = vmul.f32 %v1692, 0.2
  %v2234 = vmul.f32 %v1695, 0.2
  %v2235 = vmul.f32 %v1697, 0.2
  %v2236 = vmul.f32 %v1700, 0.2
  %v2237 = vmul.f32 %v1702, 0.2
  %v2238 = vmul.f32 %v1705, 0.2
  %v2239 = vmul.f32 %v1707, 0.2
  %v2240 = vmul.f32 %v1710, 0.2
  %v2241 = vmul.f32 %v1712, 0.2
  %v2242 = vmul.f32 %v1715, 0.2
  %v2243 = vmul.f32 %v1717, 0.2
  %v2244 = vmul.f32 %v1720, 0.2
  %v2245 = vmul.f32 %v1722, 0.2
  %v2246 = vmul.f32 %v1725, 0.2
  %v2247 = vmul.f32 %v1727, 0.2
  %v2248 = vmul.f32 %v1730, 0.2
  %v2249 = vmul.f32 %v1732, 0.2
  %v2250 = vmul.f32 %v1735, 0.2
  %v2251 = vmul.f32 %v1737, 0.2
  %v2252 = vmul.f32 %v1740, 0.2
  %v2253 = vmul.f32 %v1742, 0.2
  %v2254 = vmul.f32 %v1745, 0.2
  %v2255 = vmul.f32 %v1747, 0.2
  %v2256 = vmul.f32 %v1750, 0.2
  %v2257 = vmul.f32 %v1752, 0.2
  %v2258 = vmul.f32 %v1755, 0.2
  %v2259 = vmul.f32 %v1757, 0.2
  %v2260 = vmul.f32 %v1760, 0.2
  %v2261 = vmul.f32 %v1762, 0.2
  %v2262 = vmul.f32 %v1765, 0.2
  %v2263 = vmul.f32 %v1767, 0.2
  %v2264 = vmul.f32 %v1770, 0.2
  %v2265 = vmul.f32 %v1772, 0.2
  %v2266 = vmul.f32 %v1775, 0.2
  %v2267 = vmul.f32 %v1777, 0.2
  %v2268 = vmul.f32 %v1780, 0.2
  %v2269 = vmul.f32 %v1782, 0.2
  %v2270 = vmul.f32 %v1785, 0.2
  %v2271 = vmul.f32 %v1787, 0.2
  %v2272 = vmul.f32 %v1790, 0.2
  %v2273 = vmul.f32 %v1792, 0.2
  %v2274 = vmul.f32 %v1795, 0.2
  %v2275 = vmul.f32 %v1797, 0.2
  %v2276 = vmul.f32 %v1800, 0.2
  %v2277 = vmul.f32 %v1802, 0.2
  %v2278 = vmul.f32 %v1805, 0.2
  %v2279 = vmul.f32 %v1807, 0.2
  %v2280 = vmul.f32 %v1810, 0.2
  %v2281 = vmul.f32 %v1812, 0.2
  %v2282 = vmul.f32 %v1815, 0.2
  %v2283 = vmul.f32 %v1817, 0.2
  %v2284 = vmul.f32 %v1820, 0.2
  %v2285 = vmul.f32 %v1822, 0.2
  %v2286 = vmul.f32 %v1825, 0.2
  %v2287 = vmul.f32 %v1827, 0.2
  %v2288 = vmul.f32 %v1830, 0.2
  %v2289 = vmul.f32 %v1832, 0.2
  %v2290 = vmul.f32 %v1835, 0.2
  %v2291 = vmul.f32 %v1837, 0.2
  %v2292 = vmul.f32 %v1840, 0.2
  %v2293 = vmul.f32 %v1842, 0.2
  %v2294 = vmul.f32 %v1845, 0.2
  %v2295 = vmul.f32 %v1847, 0.2
  %v2296 = vmul.f32 %v1850, 0.2
  %v2297 = vmul.f32 %v1852, 0.2
  %v2298 = vmul.f32 %v1855, 0.2
  %v2299 = vmul.f32 %v1857, 0.2
  %v2300 = vmul.f32 %v1860, 0.2
  %v2301 = vmul.f32 %v1862, 0.2
  %v2302 = vmul.f32 %v1865, 0.2
  %v2303 = vmul.f32 %v1867, 0.2
  %v2304 = vmul.f32 %v1870, 0.2
  %v2305 = vmul.f32 %v1872, 0.2
  %v2306 = vmul.f32 %v1875, 0.2
  %v2307 = vmul.f32 %v1877, 0.2
  %v2308 = vmul.f32 %v1880, 0.2
  %v2309 = vmul.f32 %v1882, 0.2
  %v2310 = vmul.f32 %v1885, 0.2
  %v2311 = vmul.f32 %v1887, 0.2
  %v2312 = vmul.f32 %v1890, 0.2
  %v2313 = vmul.f32 %v1892, 0.2
  %v2314 = vmul.f32 %v1895, 0.2
  %v2315 = vmul.f32 %v1897, 0.2
  %v2316 = vmul.f32 %v1900, 0.2
  %v2317 = vmul.f32 %v1902, 0.2
  %v2318 = vmul.f32 %v1905, 0.2
  %v2319 = vmul.f32 %v1907, 0.2
  %v2320 = vmul.f32 %v1910, 0.2
  %v2321 = vmul.f32 %v1912, 0.2
  %v2322 = vmul.f32 %v1915, 0.2
  %v2323 = vmul.f32 %v1917, 0.2
  %v2324 = vmul.f32 %v1920, 0.2
  %v2325 = vmul.f32 %v1922, 0.2
  %v2326 = vmul.f32 %v1925, 0.2
  %v2327 = vmul.f32 %v1927, 0.2
  %v2328 = vmul.f32 %v1930, 0.2
  %v2329 = vmul.f32 %v1932, 0.2
  %v2330 = vmul.f32 %v1935, 0.2
  %v2331 = vmul.f32 %v1937, 0.2
  %v2332 = vmul.f32 %v1940, 0.2
  %v2333 = vmul.f32 %v1942, 0.2
  %v2334 = vmul.f32 %v1945, 0.2
  %v2335 = vmul.f32 %v1947, 0.2
  %v2336 = vmul.f32 %v1950, 0.2
  %v2337 = vmul.f32 %v1952, 0.2
  %v2338 = vmul.f32 %v1955, 0.2
  %v2339 = vmul.f32 %v1957, 0.2
  %v2340 = vmul.f32 %v1960, 0.2
  %v2341 = vmul.f32 %v1962, 0.2
  %v2342 = vmul.f32 %v1965, 0.2
  %v2343 = vmul.f32 %v1967, 0.2
  %v2344 = vmul.f32 %v1970, 0.2
  %v2345 = vmul.f32 %v1972, 0.2
  %v2346 = vmul.f32 %v1975, 0.2
  %v2347 = vmul.f32 %v1977, 0.2
  %v2348 = vmul.f32 %v1980, 0.2
  %v2349 = vmul.f32 %v1982, 0.2
  %v2350 = vmul.f32 %v1985, 0.2
  %v2351 = vmul.f32 %v1987, 0.2
  %v2352 = vmul.f32 %v1990, 0.2
  %v2353 = vmul.f32 %v1992, 0.2
  %v2354 = vmul.f32 %v1995, 0.2
  %v2355 = vmul.f32 %v1997, 0.2
  %v2356 = vmul.f32 %v2000, 0.2
  %v2357 = vmul.f32 %v2002, 0.2
  %v2358 = vmul.f32 %v2005, 0.2
  %v2359 = vmul.f32 %v2007, 0.2
  %v2360 = vmul.f32 %v2010, 0.2
  %v2361 = vmul.f32 %v2012, 0.2
  %v2362 = vmul.f32 %v2015, 0.2
  %v2363 = vmul.f32 %v2017, 0.2
  %v2364 = vmul.f32 %v2020, 0.2
  %v2365 = vmul.f32 %v2022, 0.2
  %v2366 = vmul.f32 %v2025, 0.2
  %v2367 = vmul.f32 %v2027, 0.2
  %v2368 = vmul.f32 %v2030, 0.2
  %v2369 = vmul.f32 %v2032, 0.2
  %v2370 = vmul.f32 %v2035, 0.2
  %v2371 = vmul.f32 %v2037, 0.2
  %v2372 = vmul.f32 %v2040, 0.2
  %v2373 = vmul.f32 %v2042, 0.2
  %v2374 = vmul.f32 %v2045, 0.2
  %v2375 = vmul.f32 %v2047, 0.2
  %v2376 = vmul.f32 %v2050, 0.2
  %v2377 = vmul.f32 %v2052, 0.2
  %v2378 = vsel %vm2054, %v1650, %v2216
  %v2379 = vsel %vm2055, %v1652, %v2217
  %v2380 = vsel %vm2056, %v1655, %v2218
  %v2381 = vsel %vm2057, %v1657, %v2219
  %v2382 = vsel %vm2058, %v1660, %v2220
  %v2383 = vsel %vm2059, %v1662, %v2221
  %v2384 = vsel %vm2060, %v1665, %v2222
  %v2385 = vsel %vm2061, %v1667, %v2223
  %v2386 = vsel %vm2062, %v1670, %v2224
  %v2387 = vsel %vm2063, %v1672, %v2225
  %v2388 = vsel %vm2064, %v1675, %v2226
  %v2389 = vsel %vm2065, %v1677, %v2227
  %v2390 = vsel %vm2066, %v1680, %v2228
  %v2391 = vsel %vm2067, %v1682, %v2229
  %v2392 = vsel %vm2068, %v1685, %v2230
  %v2393 = vsel %vm2069, %v1687, %v2231
  %v2394 = vsel %vm2070, %v1690, %v2232
  %v2395 = vsel %vm2071, %v1692, %v2233
  %v2396 = vsel %vm2072, %v1695, %v2234
  %v2397 = vsel %vm2073, %v1697, %v2235
  %v2398 = vsel %vm2074, %v1700, %v2236
  %v2399 = vsel %vm2075, %v1702, %v2237
  %v2400 = vsel %vm2076, %v1705, %v2238
  %v2401 = vsel %vm2077, %v1707, %v2239
  %v2402 = vsel %vm2078, %v1710, %v2240
  %v2403 = vsel %vm2079, %v1712, %v2241
  %v2404 = vsel %vm2080, %v1715, %v2242
  %v2405 = vsel %vm2081, %v1717, %v2243
  %v2406 = vsel %vm2082, %v1720, %v2244
  %v2407 = vsel %vm2083, %v1722, %v2245
  %v2408 = vsel %vm2084, %v1725, %v2246
  %v2409 = vsel %vm2085, %v1727, %v2247
  %v2410 = vsel %vm2086, %v1730, %v2248
  %v2411 = vsel %vm2087, %v1732, %v2249
  %v2412 = vsel %vm2088, %v1735, %v2250
  %v2413 = vsel %vm2089, %v1737, %v2251
  %v2414 = vsel %vm2090, %v1740, %v2252
  %v2415 = vsel %vm2091, %v1742, %v2253
  %v2416 = vsel %vm2092, %v1745, %v2254
  %v2417 = vsel %vm2093, %v1747, %v2255
  %v2418 = vsel %vm2094, %v1750, %v2256
  %v2419 = vsel %vm2095, %v1752, %v2257
  %v2420 = vsel %vm2096, %v1755, %v2258
  %v2421 = vsel %vm2097, %v1757, %v2259
  %v2422 = vsel %vm2098, %v1760, %v2260
  %v2423 = vsel %vm2099, %v1762, %v2261
  %v2424 = vsel %vm2100, %v1765, %v2262
  %v2425 = vsel %vm2101, %v1767, %v2263
  %v2426 = vsel %vm2102, %v1770, %v2264
  %v2427 = vsel %vm2103, %v1772, %v2265
  %v2428 = vsel %vm2104, %v1775, %v2266
  %v2429 = vsel %vm2105, %v1777, %v2267
  %v2430 = vsel %vm2106, %v1780, %v2268
  %v2431 = vsel %vm2107, %v1782, %v2269
  %v2432 = vsel %vm2108, %v1785, %v2270
  %v2433 = vsel %vm2109, %v1787, %v2271
  %v2434 = vsel %vm2110, %v1790, %v2272
  %v2435 = vsel %vm2111, %v1792, %v2273
  %v2436 = vsel %vm2112, %v1795, %v2274
  %v2437 = vsel %vm2113, %v1797, %v2275
  %v2438 = vsel %vm2114, %v1800, %v2276
  %v2439 = vsel %vm2115, %v1802, %v2277
  %v2440 = vsel %vm2116, %v1805, %v2278
  %v2441 = vsel %vm2117, %v1807, %v2279
  %v2442 = vsel %vm2118, %v1810, %v2280
  %v2443 = vsel %vm2119, %v1812, %v2281
  %v2444 = vsel %vm2120, %v1815, %v2282
  %v2445 = vsel %vm2121, %v1817, %v2283
  %v2446 = vsel %vm2122, %v1820, %v2284
  %v2447 = vsel %vm2123, %v1822, %v2285
  %v2448 = vsel %vm2124, %v1825, %v2286
  %v2449 = vsel %vm2125, %v1827, %v2287
  %v2450 = vsel %vm2126, %v1830, %v2288
  %v2451 = vsel %vm2127, %v1832, %v2289
  %v2452 = vsel %vm2128, %v1835, %v2290
  %v2453 = vsel %vm2129, %v1837, %v2291
  %v2454 = vsel %vm2130, %v1840, %v2292
  %v2455 = vsel %vm2131, %v1842, %v2293
  %v2456 = vsel %vm2132, %v1845, %v2294
  %v2457 = vsel %vm2133, %v1847, %v2295
  %v2458 = vsel %vm2134, %v1850, %v2296
  %v2459 = vsel %vm2135, %v1852, %v2297
  %v2460 = vsel %vm2136, %v1855, %v2298
  %v2461 = vsel %vm2137, %v1857, %v2299
  %v2462 = vsel %vm2138, %v1860, %v2300
  %v2463 = vsel %vm2139, %v1862, %v2301
  %v2464 = vsel %vm2140, %v1865, %v2302
  %v2465 = vsel %vm2141, %v1867, %v2303
  %v2466 = vsel %vm2142, %v1870, %v2304
  %v2467 = vsel %vm2143, %v1872, %v2305
  %v2468 = vsel %vm2144, %v1875, %v2306
  %v2469 = vsel %vm2145, %v1877, %v2307
  %v2470 = vsel %vm2146, %v1880, %v2308
  %v2471 = vsel %vm2147, %v1882, %v2309
  %v2472 = vsel %vm2148, %v1885, %v2310
  %v2473 = vsel %vm2149, %v1887, %v2311
  %v2474 = vsel %vm2150, %v1890, %v2312
  %v2475 = vsel %vm2151, %v1892, %v2313
  %v2476 = vsel %vm2152, %v1895, %v2314
  %v2477 = vsel %vm2153, %v1897, %v2315
  %v2478 = vsel %vm2154, %v1900, %v2316
  %v2479 = vsel %vm2155, %v1902, %v2317
  %v2480 = vsel %vm2156, %v1905, %v2318
  %v2481 = vsel %vm2157, %v1907, %v2319
  %v2482 = vsel %vm2158, %v1910, %v2320
  %v2483 = vsel %vm2159, %v1912, %v2321
  %v2484 = vsel %vm2160, %v1915, %v2322
  %v2485 = vsel %vm2161, %v1917, %v2323
  %v2486 = vsel %vm2162, %v1920, %v2324
  %v2487 = vsel %vm2163, %v1922, %v2325
  %v2488 = vsel %vm2164, %v1925, %v2326
  %v2489 = vsel %vm2165, %v1927, %v2327
  %v2490 = vsel %vm2166, %v1930, %v2328
  %v2491 = vsel %vm2167, %v1932, %v2329
  %v2492 = vsel %vm2168, %v1935, %v2330
  %v2493 = vsel %vm2169, %v1937, %v2331
  %v2494 = vsel %vm2170, %v1940, %v2332
  %v2495 = vsel %vm2171, %v1942, %v2333
  %v2496 = vsel %vm2172, %v1945, %v2334
  %v2497 = vsel %vm2173, %v1947, %v2335
  %v2498 = vsel %vm2174, %v1950, %v2336
  %v2499 = vsel %vm2175, %v1952, %v2337
  %v2500 = vsel %vm2176, %v1955, %v2338
  %v2501 = vsel %vm2177, %v1957, %v2339
  %v2502 = vsel %vm2178, %v1960, %v2340
  %v2503 = vsel %vm2179, %v1962, %v2341
  %v2504 = vsel %vm2180, %v1965, %v2342
  %v2505 = vsel %vm2181, %v1967, %v2343
  %v2506 = vsel %vm2182, %v1970, %v2344
  %v2507 = vsel %vm2183, %v1972, %v2345
  %v2508 = vsel %vm2184, %v1975, %v2346
  %v2509 = vsel %vm2185, %v1977, %v2347
  %v2510 = vsel %vm2186, %v1980, %v2348
  %v2511 = vsel %vm2187, %v1982, %v2349
  %v2512 = vsel %vm2188, %v1985, %v2350
  %v2513 = vsel %vm2189, %v1987, %v2351
  %v2514 = vsel %vm2190, %v1990, %v2352
  %v2515 = vsel %vm2191, %v1992, %v2353
  %v2516 = vsel %vm2192, %v1995, %v2354
  %v2517 = vsel %vm2193, %v1997, %v2355
  %v2518 = vsel %vm2194, %v2000, %v2356
  %v2519 = vsel %vm2195, %v2002, %v2357
  %v2520 = vsel %vm2196, %v2005, %v2358
  %v2521 = vsel %vm2197, %v2007, %v2359
  %v2522 = vsel %vm2198, %v2010, %v2360
  %v2523 = vsel %vm2199, %v2012, %v2361
  %v2524 = vsel %vm2200, %v2015, %v2362
  %v2525 = vsel %vm2201, %v2017, %v2363
  %v2526 = vsel %vm2202, %v2020, %v2364
  %v2527 = vsel %vm2203, %v2022, %v2365
  %v2528 = vsel %vm2204, %v2025, %v2366
  %v2529 = vsel %vm2205, %v2027, %v2367
  %v2530 = vsel %vm2206, %v2030, %v2368
  %v2531 = vsel %vm2207, %v2032, %v2369
  %v2532 = vsel %vm2208, %v2035, %v2370
  %v2533 = vsel %vm2209, %v2037, %v2371
  %v2534 = vsel %vm2210, %v2040, %v2372
  %v2535 = vsel %vm2211, %v2042, %v2373
  %v2536 = vsel %vm2212, %v2045, %v2374
  %v2537 = vsel %vm2213, %v2047, %v2375
  %v2538 = vsel %vm2214, %v2050, %v2376
  %v2539 = vsel %vm2215, %v2052, %v2377
  %2540 = vst [vmem:[%s3] sm:$0xff] %v2378
  %2541 = vst [vmem:[%s3 + $0x8] sm:$0xff] %v2379
  %2542 = vst [vmem:[%s3 + $0x10] sm:$0xff] %v2380
  %2543 = vst [vmem:[%s3 + $0x18] sm:$0xff] %v2381
  %2544 = vst [vmem:[%s3 + $0x20] sm:$0xff] %v2382
  %2545 = vst [vmem:[%s3 + $0x28] sm:$0xff] %v2383
  %2546 = vst [vmem:[%s3 + $0x30] sm:$0xff] %v2384
  %2547 = vst [vmem:[%s3 + $0x38] sm:$0xff] %v2385
  %2548 = vst [vmem:[%s3 + $0x40] sm:$0xff] %v2386
  %2549 = vst [vmem:[%s3 + $0x48] sm:$0xff] %v2387
  %2550 = vst [vmem:[%s3 + $0x50] sm:$0xff] %v2388
  %2551 = vst [vmem:[%s3 + $0x58] sm:$0xff] %v2389
  %2552 = vst [vmem:[%s3 + $0x60] sm:$0xff] %v2390
  %2553 = vst [vmem:[%s3 + $0x68] sm:$0xff] %v2391
  %2554 = vst [vmem:[%s3 + $0x70] sm:$0xff] %v2392
  %2555 = vst [vmem:[%s3 + $0x78] sm:$0xff] %v2393
  %2556 = vst [vmem:[%s3 + $0x80] sm:$0xff] %v2394
  %2557 = vst [vmem:[%s3 + $0x88] sm:$0xff] %v2395
  %2558 = vst [vmem:[%s3 + $0x90] sm:$0xff] %v2396
  %2559 = vst [vmem:[%s3 + $0x98] sm:$0xff] %v2397
  %2560 = vst [vmem:[%s3 + $0xa0] sm:$0xff] %v2398
  %2561 = vst [vmem:[%s3 + $0xa8] sm:$0xff] %v2399
  %2562 = vst [vmem:[%s3 + $0xb0] sm:$0xff] %v2400
  %2563 = vst [vmem:[%s3 + $0xb8] sm:$0xff] %v2401
  %2564 = vst [vmem:[%s3 + $0xc0] sm:$0xff] %v2402
  %2565 = vst [vmem:[%s3 + $0xc8] sm:$0xff] %v2403
  %2566 = vst [vmem:[%s3 + $0xd0] sm:$0xff] %v2404
  %2567 = vst [vmem:[%s3 + $0xd8] sm:$0xff] %v2405
  %2568 = vst [vmem:[%s3 + $0xe0] sm:$0xff] %v2406
  %2569 = vst [vmem:[%s3 + $0xe8] sm:$0xff] %v2407
  %2570 = vst [vmem:[%s3 + $0xf0] sm:$0xff] %v2408
  %2571 = vst [vmem:[%s3 + $0xf8] sm:$0xff] %v2409
  %2572 = vst [vmem:[%s3 + $0x100] sm:$0xff] %v2410
  %2573 = vst [vmem:[%s3 + $0x108] sm:$0xff] %v2411
  %2574 = vst [vmem:[%s3 + $0x110] sm:$0xff] %v2412
  %2575 = vst [vmem:[%s3 + $0x118] sm:$0xff] %v2413
  %2576 = vst [vmem:[%s3 + $0x120] sm:$0xff] %v2414
  %2577 = vst [vmem:[%s3 + $0x128] sm:$0xff] %v2415
  %2578 = vst [vmem:[%s3 + $0x130] sm:$0xff] %v2416
  %2579 = vst [vmem:[%s3 + $0x138] sm:$0xff] %v2417
  %2580 = vst [vmem:[%s3 + $0x140] sm:$0xff] %v2418
  %2581 = vst [vmem:[%s3 + $0x148] sm:$0xff] %v2419
  %2582 = vst [vmem:[%s3 + $0x150] sm:$0xff] %v2420
  %2583 = vst [vmem:[%s3 + $0x158] sm:$0xff] %v2421
  %2584 = vst [vmem:[%s3 + $0x160] sm:$0xff] %v2422
  %2585 = vst [vmem:[%s3 + $0x168] sm:$0xff] %v2423
  %2586 = vst [vmem:[%s3 + $0x170] sm:$0xff] %v2424
  %2587 = vst [vmem:[%s3 + $0x178] sm:$0xff] %v2425
  %2588 = vst [vmem:[%s3 + $0x180] sm:$0xff] %v2426
  %2589 = vst [vmem:[%s3 + $0x188] sm:$0xff] %v2427
  %2590 = vst [vmem:[%s3 + $0x190] sm:$0xff] %v2428
  %2591 = vst [vmem:[%s3 + $0x198] sm:$0xff] %v2429
  %2592 = vst [vmem:[%s3 + $0x1a0] sm:$0xff] %v2430
  %2593 = vst [vmem:[%s3 + $0x1a8] sm:$0xff] %v2431
  %2594 = vst [vmem:[%s3 + $0x1b0] sm:$0xff] %v2432
  %2595 = vst [vmem:[%s3 + $0x1b8] sm:$0xff] %v2433
  %2596 = vst [vmem:[%s3 + $0x1c0] sm:$0xff] %v2434
  %2597 = vst [vmem:[%s3 + $0x1c8] sm:$0xff] %v2435
  %2598 = vst [vmem:[%s3 + $0x1d0] sm:$0xff] %v2436
  %2599 = vst [vmem:[%s3 + $0x1d8] sm:$0xff] %v2437
  %2600 = vst [vmem:[%s3 + $0x1e0] sm:$0xff] %v2438
  %2601 = vst [vmem:[%s3 + $0x1e8] sm:$0xff] %v2439
  %2602 = vst [vmem:[%s3 + $0x1f0] sm:$0xff] %v2440
  %2603 = vst [vmem:[%s3 + $0x1f8] sm:$0xff] %v2441
  %2604 = vst [vmem:[%s3 + $0x200] sm:$0xff] %v2442
  %2605 = vst [vmem:[%s3 + $0x208] sm:$0xff] %v2443
  %2606 = vst [vmem:[%s3 + $0x210] sm:$0xff] %v2444
  %2607 = vst [vmem:[%s3 + $0x218] sm:$0xff] %v2445
  %2608 = vst [vmem:[%s3 + $0x220] sm:$0xff] %v2446
  %2609 = vst [vmem:[%s3 + $0x228] sm:$0xff] %v2447
  %2610 = vst [vmem:[%s3 + $0x230] sm:$0xff] %v2448
  %2611 = vst [vmem:[%s3 + $0x238] sm:$0xff] %v2449
  %2612 = vst [vmem:[%s3 + $0x240] sm:$0xff] %v2450
  %2613 = vst [vmem:[%s3 + $0x248] sm:$0xff] %v2451
  %2614 = vst [vmem:[%s3 + $0x250] sm:$0xff] %v2452
  %2615 = vst [vmem:[%s3 + $0x258] sm:$0xff] %v2453
  %2616 = vst [vmem:[%s3 + $0x260] sm:$0xff] %v2454
  %2617 = vst [vmem:[%s3 + $0x268] sm:$0xff] %v2455
  %2618 = vst [vmem:[%s3 + $0x270] sm:$0xff] %v2456
  %2619 = vst [vmem:[%s3 + $0x278] sm:$0xff] %v2457
  %2620 = vst [vmem:[%s3 + $0x280] sm:$0xff] %v2458
  %2621 = vst [vmem:[%s3 + $0x288] sm:$0xff] %v2459
  %2622 = vst [vmem:[%s3 + $0x290] sm:$0xff] %v2460
  %2623 = vst [vmem:[%s3 + $0x298] sm:$0xff] %v2461
  %2624 = vst [vmem:[%s3 + $0x2a0] sm:$0xff] %v2462
  %2625 = vst [vmem:[%s3 + $0x2a8] sm:$0xff] %v2463
  %2626 = vst [vmem:[%s3 + $0x2b0] sm:$0xff] %v2464
  %2627 = vst [vmem:[%s3 + $0x2b8] sm:$0xff] %v2465
  %2628 = vst [vmem:[%s3 + $0x2c0] sm:$0xff] %v2466
  %2629 = vst [vmem:[%s3 + $0x2c8] sm:$0xff] %v2467
  %2630 = vst [vmem:[%s3 + $0x2d0] sm:$0xff] %v2468
  %2631 = vst [vmem:[%s3 + $0x2d8] sm:$0xff] %v2469
  %2632 = vst [vmem:[%s3 + $0x2e0] sm:$0xff] %v2470
  %2633 = vst [vmem:[%s3 + $0x2e8] sm:$0xff] %v2471
  %2634 = vst [vmem:[%s3 + $0x2f0] sm:$0xff] %v2472
  %2635 = vst [vmem:[%s3 + $0x2f8] sm:$0xff] %v2473
  %2636 = vst [vmem:[%s3 + $0x300] sm:$0xff] %v2474
  %2637 = vst [vmem:[%s3 + $0x308] sm:$0xff] %v2475
  %2638 = vst [vmem:[%s3 + $0x310] sm:$0xff] %v2476
  %2639 = vst [vmem:[%s3 + $0x318] sm:$0xff] %v2477
  %2640 = vst [vmem:[%s3 + $0x320] sm:$0xff] %v2478
  %2641 = vst [vmem:[%s3 + $0x328] sm:$0xff] %v2479
  %2642 = vst [vmem:[%s3 + $0x330] sm:$0xff] %v2480
  %2643 = vst [vmem:[%s3 + $0x338] sm:$0xff] %v2481
  %2644 = vst [vmem:[%s3 + $0x340] sm:$0xff] %v2482
  %2645 = vst [vmem:[%s3 + $0x348] sm:$0xff] %v2483
  %2646 = vst [vmem:[%s3 + $0x350] sm:$0xff] %v2484
  %2647 = vst [vmem:[%s3 + $0x358] sm:$0xff] %v2485
  %2648 = vst [vmem:[%s3 + $0x360] sm:$0xff] %v2486
  %2649 = vst [vmem:[%s3 + $0x368] sm:$0xff] %v2487
  %2650 = vst [vmem:[%s3 + $0x370] sm:$0xff] %v2488
  %2651 = vst [vmem:[%s3 + $0x378] sm:$0xff] %v2489
  %2652 = vst [vmem:[%s3 + $0x380] sm:$0xff] %v2490
  %2653 = vst [vmem:[%s3 + $0x388] sm:$0xff] %v2491
  %2654 = vst [vmem:[%s3 + $0x390] sm:$0xff] %v2492
  %2655 = vst [vmem:[%s3 + $0x398] sm:$0xff] %v2493
  %2656 = vst [vmem:[%s3 + $0x3a0] sm:$0xff] %v2494
  %2657 = vst [vmem:[%s3 + $0x3a8] sm:$0xff] %v2495
  %2658 = vst [vmem:[%s3 + $0x3b0] sm:$0xff] %v2496
  %2659 = vst [vmem:[%s3 + $0x3b8] sm:$0xff] %v2497
  %2660 = vst [vmem:[%s3 + $0x3c0] sm:$0xff] %v2498
  %2661 = vst [vmem:[%s3 + $0x3c8] sm:$0xff] %v2499
  %2662 = vst [vmem:[%s3 + $0x3d0] sm:$0xff] %v2500
  %2663 = vst [vmem:[%s3 + $0x3d8] sm:$0xff] %v2501
  %2664 = vst [vmem:[%s3 + $0x3e0] sm:$0xff] %v2502
  %2665 = vst [vmem:[%s3 + $0x3e8] sm:$0xff] %v2503
  %2666 = vst [vmem:[%s3 + $0x3f0] sm:$0xff] %v2504
  %2667 = vst [vmem:[%s3 + $0x3f8] sm:$0xff] %v2505
  %2668 = vst [vmem:[%s3 + $0x400] sm:$0xff] %v2506
  %2669 = vst [vmem:[%s3 + $0x408] sm:$0xff] %v2507
  %2670 = vst [vmem:[%s3 + $0x410] sm:$0xff] %v2508
  %2671 = vst [vmem:[%s3 + $0x418] sm:$0xff] %v2509
  %2672 = vst [vmem:[%s3 + $0x420] sm:$0xff] %v2510
  %2673 = vst [vmem:[%s3 + $0x428] sm:$0xff] %v2511
  %2674 = vst [vmem:[%s3 + $0x430] sm:$0xff] %v2512
  %2675 = vst [vmem:[%s3 + $0x438] sm:$0xff] %v2513
  %2676 = vst [vmem:[%s3 + $0x440] sm:$0xff] %v2514
  %2677 = vst [vmem:[%s3 + $0x448] sm:$0xff] %v2515
  %2678 = vst [vmem:[%s3 + $0x450] sm:$0xff] %v2516
  %2679 = vst [vmem:[%s3 + $0x458] sm:$0xff] %v2517
  %2680 = vst [vmem:[%s3 + $0x460] sm:$0xff] %v2518
  %2681 = vst [vmem:[%s3 + $0x468] sm:$0xff] %v2519
  %2682 = vst [vmem:[%s3 + $0x470] sm:$0xff] %v2520
  %2683 = vst [vmem:[%s3 + $0x478] sm:$0xff] %v2521
  %2684 = vst [vmem:[%s3 + $0x480] sm:$0xff] %v2522
  %2685 = vst [vmem:[%s3 + $0x488] sm:$0xff] %v2523
  %2686 = vst [vmem:[%s3 + $0x490] sm:$0xff] %v2524
  %2687 = vst [vmem:[%s3 + $0x498] sm:$0xff] %v2525
  %2688 = vst [vmem:[%s3 + $0x4a0] sm:$0xff] %v2526
  %2689 = vst [vmem:[%s3 + $0x4a8] sm:$0xff] %v2527
  %2690 = vst [vmem:[%s3 + $0x4b0] sm:$0xff] %v2528
  %2691 = vst [vmem:[%s3 + $0x4b8] sm:$0xff] %v2529
  %2692 = vst [vmem:[%s3 + $0x4c0] sm:$0xff] %v2530
  %2693 = vst [vmem:[%s3 + $0x4c8] sm:$0xff] %v2531
  %2694 = vst [vmem:[%s3 + $0x4d0] sm:$0xff] %v2532
  %2695 = vst [vmem:[%s3 + $0x4d8] sm:$0xff] %v2533
  %2696 = vst [vmem:[%s3 + $0x4e0] sm:$0xff] %v2534
  %2697 = vst [vmem:[%s3 + $0x4e8] sm:$0xff] %v2535
  %2698 = vst [vmem:[%s3 + $0x4f0] sm:$0xff] %v2536
  %2699 = vst [vmem:[%s3 + $0x4f8] sm:$0xff] %v2537
  %2700 = vst [vmem:[%s3 + $0x500] sm:$0xff] %v2538
  %2701 = vst [vmem:[%s3 + $0x508] sm:$0xff] %v2539
  // Predicated region
  $region14: #{acoustic_simulation_nn_forward.5} parent=0 // pred_check
    _
  $region15: #{acoustic_simulation_nn_forward.5} parent=0 // pred_check_branch
    %2703 = sbr.rel (0) target = $region17
  $region16: #{acoustic_simulation_nn_forward.5} parent=0 // pred_region
    _
  $region17: #{acoustic_simulation_nn_forward.5} parent=0 // pred_fallthru
    _
  // Predicated region
  $region18: #{acoustic_simulation_nn_forward.5} parent=0 // pred_check
    _
  $region19: #{acoustic_simulation_nn_forward.5} parent=0 // pred_check_branch
    %2705 = sbr.rel (0) target = $region21
  $region20: #{acoustic_simulation_nn_forward.5} parent=0 // pred_region
    _
  $region21: #{acoustic_simulation_nn_forward.5} parent=0 // pred_fallthru
    _

// kernel: acoustic_simulation_nn_forward.6
$region0: #{acoustic_simulation_nn_forward.6}
  #allocation0 [shape = 'u32[]', space=smem, size = 0x4, offset = 0x4, fixed_abs, tag = 'smem constant byte address 0x4 - core index']
  #allocation1 [shape = 'u32[72,128]{1,0:T(1,128)}', space=vmem, size = 0x9000, scoped, tag = 'internal scratch']
  %s0 = inlined_call_operand.vmem [shape: bf16[1296,144], index: 0, kind: input, shape index: {}]
  %s1 = inlined_call_operand.vmem [shape: bf16[144,128], index: 1, kind: input, shape index: {}]
  %s2 = inlined_call_operand.vmem [shape: f32[1,128], index: 2, kind: input, shape index: {}]
  %s3 = inlined_call_operand.vmem [shape: f32[1296,128], index: 3, kind: output, shape index: {}]
  %s4 = sld [smem:[#allocation0]]
  $region22: #{acoustic_simulation_nn_forward.6} parent=0
    _
  %s6 = ssub.s32 1, %s4
  %s7 = scalar_select 0, %s6, %s4
  // Predicated region
  $region2: #{acoustic_simulation_nn_forward.6} parent=0 // pred_check
    _
  $region3: #{acoustic_simulation_nn_forward.6} parent=0 // pred_check_branch
    %9 = sbr.rel (0) target = $region5
  $region4: #{acoustic_simulation_nn_forward.6} parent=0 // pred_region
    _
  $region5: #{acoustic_simulation_nn_forward.6} parent=0 // pred_fallthru
    _
  // Predicated region
  $region6: #{acoustic_simulation_nn_forward.6} parent=0 // pred_check
    _
  $region7: #{acoustic_simulation_nn_forward.6} parent=0 // pred_check_branch
    %11 = sbr.rel (0) target = $region9
  $region8: #{acoustic_simulation_nn_forward.6} parent=0 // pred_region
    _
  $region9: #{acoustic_simulation_nn_forward.6} parent=0 // pred_fallthru
    _
  // Predicated region
  $region10: #{acoustic_simulation_nn_forward.6} parent=0 // pred_check
    _
  $region11: #{acoustic_simulation_nn_forward.6} parent=0 // pred_check_branch
    %13 = sbr.rel (0) target = $region13
  $region12: #{acoustic_simulation_nn_forward.6} parent=0 // pred_region
    _
  $region13: #{acoustic_simulation_nn_forward.6} parent=0 // pred_fallthru
    _
  %v15 = vld [vmem:[%s0] sm:$0xff]
  %v16 = vld [vmem:[%s0 + $0x8] sm:$0xff]
  %v17 = vld [vmem:[%s0 + $0x10] sm:$0xff]
  %v18 = vld [vmem:[%s0 + $0x18] sm:$0xff]
  %v19 = vld [vmem:[%s0 + $0x20] sm:$0xff]
  %v20 = vld [vmem:[%s0 + $0x28] sm:$0xff]
  %v21 = vld [vmem:[%s0 + $0x30] sm:$0xff]
  %v22 = vld [vmem:[%s0 + $0x38] sm:$0xff]
  %v23 = vld [vmem:[%s0 + $0x40] sm:$0xff]
  %v24 = vld [vmem:[%s0 + $0x48] sm:$0xff]
  %v25 = vld [vmem:[%s0 + $0x50] sm:$0xff]
  %v26 = vld [vmem:[%s0 + $0x58] sm:$0xff]
  %v27 = vld [vmem:[%s0 + $0x60] sm:$0xff]
  %v28 = vld [vmem:[%s0 + $0x68] sm:$0xff]
  %v29 = vld [vmem:[%s0 + $0x70] sm:$0xff]
  %v30 = vld [vmem:[%s0 + $0x78] sm:$0xff]
  %v31 = vld [vmem:[%s0 + $0x80] sm:$0xff]
  %v32 = vld [vmem:[%s0 + $0x88] sm:$0xff]
  %v33 = vld [vmem:[%s0 + $0x90] sm:$0xff]
  %v34 = vld [vmem:[%s0 + $0x98] sm:$0xff]
  %v35 = vld [vmem:[%s0 + $0xa0] sm:$0xff]
  %v36 = vld [vmem:[%s0 + $0xa8] sm:$0xff]
  %v37 = vld [vmem:[%s0 + $0xb0] sm:$0xff]
  %v38 = vld [vmem:[%s0 + $0xb8] sm:$0xff]
  %v39 = vld [vmem:[%s0 + $0xc0] sm:$0xff]
  %v40 = vld [vmem:[%s0 + $0xc8] sm:$0xff]
  %v41 = vld [vmem:[%s0 + $0xd0] sm:$0xff]
  %v42 = vld [vmem:[%s0 + $0xd8] sm:$0xff]
  %v43 = vld [vmem:[%s0 + $0xe0] sm:$0xff]
  %v44 = vld [vmem:[%s0 + $0xe8] sm:$0xff]
  %v45 = vld [vmem:[%s0 + $0xf0] sm:$0xff]
  %v46 = vld [vmem:[%s0 + $0xf8] sm:$0xff]
  %v47 = vld [vmem:[%s0 + $0x100] sm:$0xff]
  %v48 = vld [vmem:[%s0 + $0x108] sm:$0xff]
  %v49 = vld [vmem:[%s0 + $0x110] sm:$0xff]
  %v50 = vld [vmem:[%s0 + $0x118] sm:$0xff]
  %v51 = vld [vmem:[%s0 + $0x120] sm:$0xff]
  %v52 = vld [vmem:[%s0 + $0x128] sm:$0xff]
  %v53 = vld [vmem:[%s0 + $0x130] sm:$0xff]
  %v54 = vld [vmem:[%s0 + $0x138] sm:$0xff]
  %v55 = vld [vmem:[%s0 + $0x140] sm:$0xff]
  %v56 = vld [vmem:[%s0 + $0x148] sm:$0xff]
  %v57 = vld [vmem:[%s0 + $0x150] sm:$0xff]
  %v58 = vld [vmem:[%s0 + $0x158] sm:$0xff]
  %v59 = vld [vmem:[%s0 + $0x160] sm:$0xff]
  %v60 = vld [vmem:[%s0 + $0x168] sm:$0xff]
  %v61 = vld [vmem:[%s0 + $0x170] sm:$0xff]
  %v62 = vld [vmem:[%s0 + $0x178] sm:$0xff]
  %v63 = vld [vmem:[%s0 + $0x180] sm:$0xff]
  %v64 = vld [vmem:[%s0 + $0x188] sm:$0xff]
  %v65 = vld [vmem:[%s0 + $0x190] sm:$0xff]
  %v66 = vld [vmem:[%s0 + $0x198] sm:$0xff]
  %v67 = vld [vmem:[%s0 + $0x1a0] sm:$0xff]
  %v68 = vld [vmem:[%s0 + $0x1a8] sm:$0xff]
  %v69 = vld [vmem:[%s0 + $0x1b0] sm:$0xff]
  %v70 = vld [vmem:[%s0 + $0x1b8] sm:$0xff]
  %v71 = vld [vmem:[%s0 + $0x1c0] sm:$0xff]
  %v72 = vld [vmem:[%s0 + $0x1c8] sm:$0xff]
  %v73 = vld [vmem:[%s0 + $0x1d0] sm:$0xff]
  %v74 = vld [vmem:[%s0 + $0x1d8] sm:$0xff]
  %v75 = vld [vmem:[%s0 + $0x1e0] sm:$0xff]
  %v76 = vld [vmem:[%s0 + $0x1e8] sm:$0xff]
  %v77 = vld [vmem:[%s0 + $0x1f0] sm:$0xff]
  %v78 = vld [vmem:[%s0 + $0x1f8] sm:$0xff]
  %v79 = vld [vmem:[%s0 + $0x200] sm:$0xff]
  %v80 = vld [vmem:[%s0 + $0x208] sm:$0xff]
  %v81 = vld [vmem:[%s0 + $0x210] sm:$0xff]
  %v82 = vld [vmem:[%s0 + $0x218] sm:$0xff]
  %v83 = vld [vmem:[%s0 + $0x220] sm:$0xff]
  %v84 = vld [vmem:[%s0 + $0x228] sm:$0xff]
  %v85 = vld [vmem:[%s0 + $0x230] sm:$0xff]
  %v86 = vld [vmem:[%s0 + $0x238] sm:$0xff]
  %v87 = vld [vmem:[%s0 + $0x240] sm:$0xff]
  %v88 = vld [vmem:[%s0 + $0x248] sm:$0xff]
  %v89 = vld [vmem:[%s0 + $0x250] sm:$0xff]
  %v90 = vld [vmem:[%s0 + $0x258] sm:$0xff]
  %v91 = vld [vmem:[%s0 + $0x260] sm:$0xff]
  %v92 = vld [vmem:[%s0 + $0x268] sm:$0xff]
  %v93 = vld [vmem:[%s0 + $0x270] sm:$0xff]
  %v94 = vld [vmem:[%s0 + $0x278] sm:$0xff]
  %v95 = vld [vmem:[%s0 + $0x280] sm:$0xff]
  %v96 = vld [vmem:[%s0 + $0x288] sm:$0xff]
  %v97 = vld [vmem:[%s0 + $0x290] sm:$0xff]
  %v98 = vld [vmem:[%s0 + $0x298] sm:$0xff]
  %v99 = vld [vmem:[%s0 + $0x2a0] sm:$0xff]
  %v100 = vld [vmem:[%s0 + $0x2a8] sm:$0xff]
  %v101 = vld [vmem:[%s0 + $0x2b0] sm:$0xff]
  %v102 = vld [vmem:[%s0 + $0x2b8] sm:$0xff]
  %v103 = vld [vmem:[%s0 + $0x2c0] sm:$0xff]
  %v104 = vld [vmem:[%s0 + $0x2c8] sm:$0xff]
  %v105 = vld [vmem:[%s0 + $0x2d0] sm:$0xff]
  %v106 = vld [vmem:[%s0 + $0x2d8] sm:$0xff]
  %v107 = vld [vmem:[%s0 + $0x2e0] sm:$0xff]
  %v108 = vld [vmem:[%s0 + $0x2e8] sm:$0xff]
  %v109 = vld [vmem:[%s0 + $0x2f0] sm:$0xff]
  %v110 = vld [vmem:[%s0 + $0x2f8] sm:$0xff]
  %v111 = vld [vmem:[%s0 + $0x300] sm:$0xff]
  %v112 = vld [vmem:[%s0 + $0x308] sm:$0xff]
  %v113 = vld [vmem:[%s0 + $0x310] sm:$0xff]
  %v114 = vld [vmem:[%s0 + $0x318] sm:$0xff]
  %v115 = vld [vmem:[%s0 + $0x320] sm:$0xff]
  %v116 = vld [vmem:[%s0 + $0x328] sm:$0xff]
  %v117 = vld [vmem:[%s0 + $0x330] sm:$0xff]
  %v118 = vld [vmem:[%s0 + $0x338] sm:$0xff]
  %v119 = vld [vmem:[%s0 + $0x340] sm:$0xff]
  %v120 = vld [vmem:[%s0 + $0x348] sm:$0xff]
  %v121 = vld [vmem:[%s0 + $0x350] sm:$0xff]
  %v122 = vld [vmem:[%s0 + $0x358] sm:$0xff]
  %v123 = vld [vmem:[%s0 + $0x360] sm:$0xff]
  %v124 = vld [vmem:[%s0 + $0x368] sm:$0xff]
  %v125 = vld [vmem:[%s0 + $0x370] sm:$0xff]
  %v126 = vld [vmem:[%s0 + $0x378] sm:$0xff]
  %v127 = vld [vmem:[%s0 + $0x380] sm:$0xff]
  %v128 = vld [vmem:[%s0 + $0x388] sm:$0xff]
  %v129 = vld [vmem:[%s0 + $0x390] sm:$0xff]
  %v130 = vld [vmem:[%s0 + $0x398] sm:$0xff]
  %v131 = vld [vmem:[%s0 + $0x3a0] sm:$0xff]
  %v132 = vld [vmem:[%s0 + $0x3a8] sm:$0xff]
  %v133 = vld [vmem:[%s0 + $0x3b0] sm:$0xff]
  %v134 = vld [vmem:[%s0 + $0x3b8] sm:$0xff]
  %v135 = vld [vmem:[%s0 + $0x3c0] sm:$0xff]
  %v136 = vld [vmem:[%s0 + $0x3c8] sm:$0xff]
  %v137 = vld [vmem:[%s0 + $0x3d0] sm:$0xff]
  %v138 = vld [vmem:[%s0 + $0x3d8] sm:$0xff]
  %v139 = vld [vmem:[%s0 + $0x3e0] sm:$0xff]
  %v140 = vld [vmem:[%s0 + $0x3e8] sm:$0xff]
  %v141 = vld [vmem:[%s0 + $0x3f0] sm:$0xff]
  %v142 = vld [vmem:[%s0 + $0x3f8] sm:$0xff]
  %v143 = vld [vmem:[%s0 + $0x400] sm:$0xff]
  %v144 = vld [vmem:[%s0 + $0x408] sm:$0xff]
  %v145 = vld [vmem:[%s0 + $0x410] sm:$0xff]
  %v146 = vld [vmem:[%s0 + $0x418] sm:$0xff]
  %v147 = vld [vmem:[%s0 + $0x420] sm:$0xff]
  %v148 = vld [vmem:[%s0 + $0x428] sm:$0xff]
  %v149 = vld [vmem:[%s0 + $0x430] sm:$0xff]
  %v150 = vld [vmem:[%s0 + $0x438] sm:$0xff]
  %v151 = vld [vmem:[%s0 + $0x440] sm:$0xff]
  %v152 = vld [vmem:[%s0 + $0x448] sm:$0xff]
  %v153 = vld [vmem:[%s0 + $0x450] sm:$0xff]
  %v154 = vld [vmem:[%s0 + $0x458] sm:$0xff]
  %v155 = vld [vmem:[%s0 + $0x460] sm:$0xff]
  %v156 = vld [vmem:[%s0 + $0x468] sm:$0xff]
  %v157 = vld [vmem:[%s0 + $0x470] sm:$0xff]
  %v158 = vld [vmem:[%s0 + $0x478] sm:$0xff]
  %v159 = vld [vmem:[%s0 + $0x480] sm:$0xff]
  %v160 = vld [vmem:[%s0 + $0x488] sm:$0xff]
  %v161 = vld [vmem:[%s0 + $0x490] sm:$0xff]
  %v162 = vld [vmem:[%s0 + $0x498] sm:$0xff]
  %v163 = vld [vmem:[%s0 + $0x4a0] sm:$0xff]
  %v164 = vld [vmem:[%s0 + $0x4a8] sm:$0xff]
  %v165 = vld [vmem:[%s0 + $0x4b0] sm:$0xff]
  %v166 = vld [vmem:[%s0 + $0x4b8] sm:$0xff]
  %v167 = vld [vmem:[%s0 + $0x4c0] sm:$0xff]
  %v168 = vld [vmem:[%s0 + $0x4c8] sm:$0xff]
  %v169 = vld [vmem:[%s0 + $0x4d0] sm:$0xff]
  %v170 = vld [vmem:[%s0 + $0x4d8] sm:$0xff]
  %v171 = vld [vmem:[%s0 + $0x4e0] sm:$0xff]
  %v172 = vld [vmem:[%s0 + $0x4e8] sm:$0xff]
  %v173 = vld [vmem:[%s0 + $0x4f0] sm:$0xff]
  %v174 = vld [vmem:[%s0 + $0x4f8] sm:$0xff]
  %v175 = vld [vmem:[%s0 + $0x500] sm:$0xff]
  %v176 = vld [vmem:[%s0 + $0x508] sm:$0xff]
  %v177 = vld [vmem:[%s1] sm:$0xf]
  %v178 = vld [vmem:[%s1 + $0x4] sm:$0xf]
  %v179 = vld [vmem:[%s1 + $0x8] sm:$0xf]
  %v180 = vld [vmem:[%s1 + $0xc] sm:$0xf]
  %v181 = vld [vmem:[%s1 + $0x10] sm:$0xf]
  %v182 = vld [vmem:[%s1 + $0x14] sm:$0xf]
  %v183 = vld [vmem:[%s1 + $0x18] sm:$0xf]
  %v184 = vld [vmem:[%s1 + $0x1c] sm:$0xf]
  %v185 = vld [vmem:[%s1 + $0x20] sm:$0xf]
  %v186 = vld [vmem:[%s1 + $0x24] sm:$0xf]
  %v187 = vld [vmem:[%s1 + $0x28] sm:$0xf]
  %v188 = vld [vmem:[%s1 + $0x2c] sm:$0xf]
  %v189 = vld [vmem:[%s1 + $0x30] sm:$0xf]
  %v190 = vld [vmem:[%s1 + $0x34] sm:$0xf]
  %v191 = vld [vmem:[%s1 + $0x38] sm:$0xf]
  %v192 = vld [vmem:[%s1 + $0x3c] sm:$0xf]
  %v193 = vld [vmem:[%s1 + $0x40] sm:$0xf]
  %v194 = vld [vmem:[%s1 + $0x44] sm:$0xf]
  %v195 = vld [vmem:[%s2] sm:$0x1]
  %v197 = vperm.slane %v195, 0
  %v361 = vunpack.c.l.b16 %v15
  %v362 = vunpack.c.h.b16 %v15
  %v363 = vunpack.c.l.b16 %v16
  %v364 = vunpack.c.h.b16 %v16
  %v365 = vunpack.c.l.b16 %v17
  %v366 = vunpack.c.h.b16 %v17
  %v367 = vunpack.c.l.b16 %v18
  %v368 = vunpack.c.h.b16 %v18
  %v369 = vunpack.c.l.b16 %v19
  %v370 = vunpack.c.h.b16 %v19
  %v371 = vunpack.c.l.b16 %v20
  %v372 = vunpack.c.h.b16 %v20
  %v373 = vunpack.c.l.b16 %v21
  %v374 = vunpack.c.h.b16 %v21
  %v375 = vunpack.c.l.b16 %v22
  %v376 = vunpack.c.h.b16 %v22
  %v377 = vunpack.c.l.b16 %v23
  %v378 = vunpack.c.h.b16 %v23
  %v379 = vunpack.c.l.b16 %v24
  %v380 = vunpack.c.h.b16 %v24
  %v381 = vunpack.c.l.b16 %v25
  %v382 = vunpack.c.h.b16 %v25
  %v383 = vunpack.c.l.b16 %v26
  %v384 = vunpack.c.h.b16 %v26
  %v385 = vunpack.c.l.b16 %v27
  %v386 = vunpack.c.h.b16 %v27
  %v387 = vunpack.c.l.b16 %v28
  %v388 = vunpack.c.h.b16 %v28
  %v389 = vunpack.c.l.b16 %v29
  %v390 = vunpack.c.h.b16 %v29
  %v391 = vunpack.c.l.b16 %v30
  %v392 = vunpack.c.h.b16 %v30
  %v393 = vunpack.c.l.b16 %v31
  %v394 = vunpack.c.h.b16 %v31
  %v395 = vunpack.c.l.b16 %v32
  %v396 = vunpack.c.h.b16 %v32
  %v397 = vunpack.c.l.b16 %v33
  %v398 = vunpack.c.h.b16 %v33
  %v399 = vunpack.c.l.b16 %v34
  %v400 = vunpack.c.h.b16 %v34
  %v401 = vunpack.c.l.b16 %v35
  %v402 = vunpack.c.h.b16 %v35
  %v403 = vunpack.c.l.b16 %v36
  %v404 = vunpack.c.h.b16 %v36
  %v405 = vunpack.c.l.b16 %v37
  %v406 = vunpack.c.h.b16 %v37
  %v407 = vunpack.c.l.b16 %v38
  %v408 = vunpack.c.h.b16 %v38
  %v409 = vunpack.c.l.b16 %v39
  %v410 = vunpack.c.h.b16 %v39
  %v411 = vunpack.c.l.b16 %v40
  %v412 = vunpack.c.h.b16 %v40
  %v413 = vunpack.c.l.b16 %v41
  %v414 = vunpack.c.h.b16 %v41
  %v415 = vunpack.c.l.b16 %v42
  %v416 = vunpack.c.h.b16 %v42
  %v417 = vunpack.c.l.b16 %v43
  %v418 = vunpack.c.h.b16 %v43
  %v419 = vunpack.c.l.b16 %v44
  %v420 = vunpack.c.h.b16 %v44
  %v421 = vunpack.c.l.b16 %v45
  %v422 = vunpack.c.h.b16 %v45
  %v423 = vunpack.c.l.b16 %v46
  %v424 = vunpack.c.h.b16 %v46
  %v425 = vunpack.c.l.b16 %v47
  %v426 = vunpack.c.h.b16 %v47
  %v427 = vunpack.c.l.b16 %v48
  %v428 = vunpack.c.h.b16 %v48
  %v429 = vunpack.c.l.b16 %v49
  %v430 = vunpack.c.h.b16 %v49
  %v431 = vunpack.c.l.b16 %v50
  %v432 = vunpack.c.h.b16 %v50
  %v433 = vunpack.c.l.b16 %v51
  %v434 = vunpack.c.h.b16 %v51
  %v435 = vunpack.c.l.b16 %v52
  %v436 = vunpack.c.h.b16 %v52
  %v437 = vunpack.c.l.b16 %v53
  %v438 = vunpack.c.h.b16 %v53
  %v439 = vunpack.c.l.b16 %v54
  %v440 = vunpack.c.h.b16 %v54
  %v441 = vunpack.c.l.b16 %v55
  %v442 = vunpack.c.h.b16 %v55
  %v443 = vunpack.c.l.b16 %v56
  %v444 = vunpack.c.h.b16 %v56
  %v445 = vunpack.c.l.b16 %v57
  %v446 = vunpack.c.h.b16 %v57
  %v447 = vunpack.c.l.b16 %v58
  %v448 = vunpack.c.h.b16 %v58
  %v449 = vunpack.c.l.b16 %v59
  %v450 = vunpack.c.h.b16 %v59
  %v451 = vunpack.c.l.b16 %v60
  %v452 = vunpack.c.h.b16 %v60
  %v453 = vunpack.c.l.b16 %v61
  %v454 = vunpack.c.h.b16 %v61
  %v455 = vunpack.c.l.b16 %v62
  %v456 = vunpack.c.h.b16 %v62
  %v457 = vunpack.c.l.b16 %v63
  %v458 = vunpack.c.h.b16 %v63
  %v459 = vunpack.c.l.b16 %v64
  %v460 = vunpack.c.h.b16 %v64
  %v461 = vunpack.c.l.b16 %v65
  %v462 = vunpack.c.h.b16 %v65
  %v463 = vunpack.c.l.b16 %v66
  %v464 = vunpack.c.h.b16 %v66
  %v465 = vunpack.c.l.b16 %v67
  %v466 = vunpack.c.h.b16 %v67
  %v467 = vunpack.c.l.b16 %v68
  %v468 = vunpack.c.h.b16 %v68
  %v469 = vunpack.c.l.b16 %v69
  %v470 = vunpack.c.h.b16 %v69
  %v471 = vunpack.c.l.b16 %v70
  %v472 = vunpack.c.h.b16 %v70
  %v473 = vunpack.c.l.b16 %v71
  %v474 = vunpack.c.h.b16 %v71
  %v475 = vunpack.c.l.b16 %v72
  %v476 = vunpack.c.h.b16 %v72
  %v477 = vunpack.c.l.b16 %v73
  %v478 = vunpack.c.h.b16 %v73
  %v479 = vunpack.c.l.b16 %v74
  %v480 = vunpack.c.h.b16 %v74
  %v481 = vunpack.c.l.b16 %v75
  %v482 = vunpack.c.h.b16 %v75
  %v483 = vunpack.c.l.b16 %v76
  %v484 = vunpack.c.h.b16 %v76
  %v485 = vunpack.c.l.b16 %v77
  %v486 = vunpack.c.h.b16 %v77
  %v487 = vunpack.c.l.b16 %v78
  %v488 = vunpack.c.h.b16 %v78
  %v489 = vunpack.c.l.b16 %v79
  %v490 = vunpack.c.h.b16 %v79
  %v491 = vunpack.c.l.b16 %v80
  %v492 = vunpack.c.h.b16 %v80
  %v493 = vunpack.c.l.b16 %v81
  %v494 = vunpack.c.h.b16 %v81
  %v495 = vunpack.c.l.b16 %v82
  %v496 = vunpack.c.h.b16 %v82
  %v497 = vunpack.c.l.b16 %v83
  %v498 = vunpack.c.h.b16 %v83
  %v499 = vunpack.c.l.b16 %v84
  %v500 = vunpack.c.h.b16 %v84
  %v501 = vunpack.c.l.b16 %v85
  %v502 = vunpack.c.h.b16 %v85
  %v503 = vunpack.c.l.b16 %v86
  %v504 = vunpack.c.h.b16 %v86
  %v505 = vunpack.c.l.b16 %v87
  %v506 = vunpack.c.h.b16 %v87
  %v507 = vunpack.c.l.b16 %v88
  %v508 = vunpack.c.h.b16 %v88
  %v509 = vunpack.c.l.b16 %v89
  %v510 = vunpack.c.h.b16 %v89
  %v511 = vunpack.c.l.b16 %v90
  %v512 = vunpack.c.h.b16 %v90
  %v513 = vunpack.c.l.b16 %v91
  %v514 = vunpack.c.h.b16 %v91
  %v515 = vunpack.c.l.b16 %v92
  %v516 = vunpack.c.h.b16 %v92
  %v517 = vunpack.c.l.b16 %v93
  %v518 = vunpack.c.h.b16 %v93
  %v519 = vunpack.c.l.b16 %v94
  %v520 = vunpack.c.h.b16 %v94
  %v521 = vunpack.c.l.b16 %v95
  %v522 = vunpack.c.h.b16 %v95
  %v523 = vunpack.c.l.b16 %v96
  %v524 = vunpack.c.h.b16 %v96
  %v525 = vunpack.c.l.b16 %v97
  %v526 = vunpack.c.h.b16 %v97
  %v527 = vunpack.c.l.b16 %v98
  %v528 = vunpack.c.h.b16 %v98
  %v529 = vunpack.c.l.b16 %v99
  %v530 = vunpack.c.h.b16 %v99
  %v531 = vunpack.c.l.b16 %v100
  %v532 = vunpack.c.h.b16 %v100
  %v533 = vunpack.c.l.b16 %v101
  %v534 = vunpack.c.h.b16 %v101
  %v535 = vunpack.c.l.b16 %v102
  %v536 = vunpack.c.h.b16 %v102
  %v537 = vunpack.c.l.b16 %v103
  %v538 = vunpack.c.h.b16 %v103
  %v539 = vunpack.c.l.b16 %v104
  %v540 = vunpack.c.h.b16 %v104
  %v541 = vunpack.c.l.b16 %v105
  %v542 = vunpack.c.h.b16 %v105
  %v543 = vunpack.c.l.b16 %v106
  %v544 = vunpack.c.h.b16 %v106
  %v545 = vunpack.c.l.b16 %v107
  %v546 = vunpack.c.h.b16 %v107
  %v547 = vunpack.c.l.b16 %v108
  %v548 = vunpack.c.h.b16 %v108
  %v549 = vunpack.c.l.b16 %v109
  %v550 = vunpack.c.h.b16 %v109
  %v551 = vunpack.c.l.b16 %v110
  %v552 = vunpack.c.h.b16 %v110
  %v553 = vunpack.c.l.b16 %v111
  %v554 = vunpack.c.h.b16 %v111
  %v555 = vunpack.c.l.b16 %v112
  %v556 = vunpack.c.h.b16 %v112
  %v557 = vunpack.c.l.b16 %v113
  %v558 = vunpack.c.h.b16 %v113
  %v559 = vunpack.c.l.b16 %v114
  %v560 = vunpack.c.h.b16 %v114
  %v561 = vunpack.c.l.b16 %v115
  %v562 = vunpack.c.h.b16 %v115
  %v563 = vunpack.c.l.b16 %v116
  %v564 = vunpack.c.h.b16 %v116
  %v565 = vunpack.c.l.b16 %v117
  %v566 = vunpack.c.h.b16 %v117
  %v567 = vunpack.c.l.b16 %v118
  %v568 = vunpack.c.h.b16 %v118
  %v569 = vunpack.c.l.b16 %v119
  %v570 = vunpack.c.h.b16 %v119
  %v571 = vunpack.c.l.b16 %v120
  %v572 = vunpack.c.h.b16 %v120
  %v573 = vunpack.c.l.b16 %v121
  %v574 = vunpack.c.h.b16 %v121
  %v575 = vunpack.c.l.b16 %v122
  %v576 = vunpack.c.h.b16 %v122
  %v577 = vunpack.c.l.b16 %v123
  %v578 = vunpack.c.h.b16 %v123
  %v579 = vunpack.c.l.b16 %v124
  %v580 = vunpack.c.h.b16 %v124
  %v581 = vunpack.c.l.b16 %v125
  %v582 = vunpack.c.h.b16 %v125
  %v583 = vunpack.c.l.b16 %v126
  %v584 = vunpack.c.h.b16 %v126
  %v585 = vunpack.c.l.b16 %v127
  %v586 = vunpack.c.h.b16 %v127
  %v587 = vunpack.c.l.b16 %v128
  %v588 = vunpack.c.h.b16 %v128
  %v589 = vunpack.c.l.b16 %v129
  %v590 = vunpack.c.h.b16 %v129
  %v591 = vunpack.c.l.b16 %v130
  %v592 = vunpack.c.h.b16 %v130
  %v593 = vunpack.c.l.b16 %v131
  %v594 = vunpack.c.h.b16 %v131
  %v595 = vunpack.c.l.b16 %v132
  %v596 = vunpack.c.h.b16 %v132
  %v597 = vunpack.c.l.b16 %v133
  %v598 = vunpack.c.h.b16 %v133
  %v599 = vunpack.c.l.b16 %v134
  %v600 = vunpack.c.h.b16 %v134
  %v601 = vunpack.c.l.b16 %v135
  %v602 = vunpack.c.h.b16 %v135
  %v603 = vunpack.c.l.b16 %v136
  %v604 = vunpack.c.h.b16 %v136
  %v605 = vunpack.c.l.b16 %v137
  %v606 = vunpack.c.h.b16 %v137
  %v607 = vunpack.c.l.b16 %v138
  %v608 = vunpack.c.h.b16 %v138
  %v609 = vunpack.c.l.b16 %v139
  %v610 = vunpack.c.h.b16 %v139
  %v611 = vunpack.c.l.b16 %v140
  %v612 = vunpack.c.h.b16 %v140
  %v613 = vunpack.c.l.b16 %v141
  %v614 = vunpack.c.h.b16 %v141
  %v615 = vunpack.c.l.b16 %v142
  %v616 = vunpack.c.h.b16 %v142
  %v617 = vunpack.c.l.b16 %v143
  %v618 = vunpack.c.h.b16 %v143
  %v619 = vunpack.c.l.b16 %v144
  %v620 = vunpack.c.h.b16 %v144
  %v621 = vunpack.c.l.b16 %v145
  %v622 = vunpack.c.h.b16 %v145
  %v623 = vunpack.c.l.b16 %v146
  %v624 = vunpack.c.h.b16 %v146
  %v625 = vunpack.c.l.b16 %v147
  %v626 = vunpack.c.h.b16 %v147
  %v627 = vunpack.c.l.b16 %v148
  %v628 = vunpack.c.h.b16 %v148
  %v629 = vunpack.c.l.b16 %v149
  %v630 = vunpack.c.h.b16 %v149
  %v631 = vunpack.c.l.b16 %v150
  %v632 = vunpack.c.h.b16 %v150
  %v633 = vunpack.c.l.b16 %v151
  %v634 = vunpack.c.h.b16 %v151
  %v635 = vunpack.c.l.b16 %v152
  %v636 = vunpack.c.h.b16 %v152
  %v637 = vunpack.c.l.b16 %v153
  %v638 = vunpack.c.h.b16 %v153
  %v639 = vunpack.c.l.b16 %v154
  %v640 = vunpack.c.h.b16 %v154
  %v641 = vunpack.c.l.b16 %v155
  %v642 = vunpack.c.h.b16 %v155
  %v643 = vunpack.c.l.b16 %v156
  %v644 = vunpack.c.h.b16 %v156
  %v645 = vunpack.c.l.b16 %v157
  %v646 = vunpack.c.h.b16 %v157
  %v647 = vunpack.c.l.b16 %v158
  %v648 = vunpack.c.h.b16 %v158
  %v649 = vunpack.c.l.b16 %v159
  %v650 = vunpack.c.h.b16 %v159
  %v651 = vunpack.c.l.b16 %v160
  %v652 = vunpack.c.h.b16 %v160
  %v653 = vunpack.c.l.b16 %v161
  %v654 = vunpack.c.h.b16 %v161
  %v655 = vunpack.c.l.b16 %v162
  %v656 = vunpack.c.h.b16 %v162
  %v657 = vunpack.c.l.b16 %v163
  %v658 = vunpack.c.h.b16 %v163
  %v659 = vunpack.c.l.b16 %v164
  %v660 = vunpack.c.h.b16 %v164
  %v661 = vunpack.c.l.b16 %v165
  %v662 = vunpack.c.h.b16 %v165
  %v663 = vunpack.c.l.b16 %v166
  %v664 = vunpack.c.h.b16 %v166
  %v665 = vunpack.c.l.b16 %v167
  %v666 = vunpack.c.h.b16 %v167
  %v667 = vunpack.c.l.b16 %v168
  %v668 = vunpack.c.h.b16 %v168
  %v669 = vunpack.c.l.b16 %v169
  %v670 = vunpack.c.h.b16 %v169
  %v671 = vunpack.c.l.b16 %v170
  %v672 = vunpack.c.h.b16 %v170
  %v673 = vunpack.c.l.b16 %v171
  %v674 = vunpack.c.h.b16 %v171
  %v675 = vunpack.c.l.b16 %v172
  %v676 = vunpack.c.h.b16 %v172
  %v677 = vunpack.c.l.b16 %v173
  %v678 = vunpack.c.h.b16 %v173
  %v679 = vunpack.c.l.b16 %v174
  %v680 = vunpack.c.h.b16 %v174
  %v681 = vunpack.c.l.b16 %v175
  %v682 = vunpack.c.h.b16 %v175
  %v683 = vunpack.c.l.b16 %v176
  %v684 = vunpack.c.h.b16 %v176
  %v685 = vpack.c.b16 %v363, %v361
  %v686 = vpack.c.b16 %v364, %v362
  %v687 = vpack.c.b16 %v367, %v365
  %v688 = vpack.c.b16 %v368, %v366
  %v689 = vpack.c.b16 %v371, %v369
  %v690 = vpack.c.b16 %v372, %v370
  %v691 = vpack.c.b16 %v375, %v373
  %v692 = vpack.c.b16 %v376, %v374
  %v693 = vpack.c.b16 %v379, %v377
  %v694 = vpack.c.b16 %v380, %v378
  %v695 = vpack.c.b16 %v383, %v381
  %v696 = vpack.c.b16 %v384, %v382
  %v697 = vpack.c.b16 %v387, %v385
  %v698 = vpack.c.b16 %v388, %v386
  %v699 = vpack.c.b16 %v391, %v389
  %v700 = vpack.c.b16 %v392, %v390
  %v701 = vpack.c.b16 %v395, %v393
  %v702 = vpack.c.b16 %v396, %v394
  %v703 = vpack.c.b16 %v399, %v397
  %v704 = vpack.c.b16 %v400, %v398
  %v705 = vpack.c.b16 %v403, %v401
  %v706 = vpack.c.b16 %v404, %v402
  %v707 = vpack.c.b16 %v407, %v405
  %v708 = vpack.c.b16 %v408, %v406
  %v709 = vpack.c.b16 %v411, %v409
  %v710 = vpack.c.b16 %v412, %v410
  %v711 = vpack.c.b16 %v415, %v413
  %v712 = vpack.c.b16 %v416, %v414
  %v713 = vpack.c.b16 %v419, %v417
  %v714 = vpack.c.b16 %v420, %v418
  %v715 = vpack.c.b16 %v423, %v421
  %v716 = vpack.c.b16 %v424, %v422
  %v717 = vpack.c.b16 %v427, %v425
  %v718 = vpack.c.b16 %v428, %v426
  %v719 = vpack.c.b16 %v431, %v429
  %v720 = vpack.c.b16 %v432, %v430
  %v721 = vpack.c.b16 %v435, %v433
  %v722 = vpack.c.b16 %v436, %v434
  %v723 = vpack.c.b16 %v439, %v437
  %v724 = vpack.c.b16 %v440, %v438
  %v725 = vpack.c.b16 %v443, %v441
  %v726 = vpack.c.b16 %v444, %v442
  %v727 = vpack.c.b16 %v447, %v445
  %v728 = vpack.c.b16 %v448, %v446
  %v729 = vpack.c.b16 %v451, %v449
  %v730 = vpack.c.b16 %v452, %v450
  %v731 = vpack.c.b16 %v455, %v453
  %v732 = vpack.c.b16 %v456, %v454
  %v733 = vpack.c.b16 %v459, %v457
  %v734 = vpack.c.b16 %v460, %v458
  %v735 = vpack.c.b16 %v463, %v461
  %v736 = vpack.c.b16 %v464, %v462
  %v737 = vpack.c.b16 %v467, %v465
  %v738 = vpack.c.b16 %v468, %v466
  %v739 = vpack.c.b16 %v471, %v469
  %v740 = vpack.c.b16 %v472, %v470
  %v741 = vpack.c.b16 %v475, %v473
  %v742 = vpack.c.b16 %v476, %v474
  %v743 = vpack.c.b16 %v479, %v477
  %v744 = vpack.c.b16 %v480, %v478
  %v745 = vpack.c.b16 %v483, %v481
  %v746 = vpack.c.b16 %v484, %v482
  %v747 = vpack.c.b16 %v487, %v485
  %v748 = vpack.c.b16 %v488, %v486
  %v749 = vpack.c.b16 %v491, %v489
  %v750 = vpack.c.b16 %v492, %v490
  %v751 = vpack.c.b16 %v495, %v493
  %v752 = vpack.c.b16 %v496, %v494
  %v753 = vpack.c.b16 %v499, %v497
  %v754 = vpack.c.b16 %v500, %v498
  %v755 = vpack.c.b16 %v503, %v501
  %v756 = vpack.c.b16 %v504, %v502
  %v757 = vpack.c.b16 %v507, %v505
  %v758 = vpack.c.b16 %v508, %v506
  %v759 = vpack.c.b16 %v511, %v509
  %v760 = vpack.c.b16 %v512, %v510
  %v761 = vpack.c.b16 %v515, %v513
  %v762 = vpack.c.b16 %v516, %v514
  %v763 = vpack.c.b16 %v519, %v517
  %v764 = vpack.c.b16 %v520, %v518
  %v765 = vpack.c.b16 %v523, %v521
  %v766 = vpack.c.b16 %v524, %v522
  %v767 = vpack.c.b16 %v527, %v525
  %v768 = vpack.c.b16 %v528, %v526
  %v769 = vpack.c.b16 %v531, %v529
  %v770 = vpack.c.b16 %v532, %v530
  %v771 = vpack.c.b16 %v535, %v533
  %v772 = vpack.c.b16 %v536, %v534
  %v773 = vpack.c.b16 %v539, %v537
  %v774 = vpack.c.b16 %v540, %v538
  %v775 = vpack.c.b16 %v543, %v541
  %v776 = vpack.c.b16 %v544, %v542
  %v777 = vpack.c.b16 %v547, %v545
  %v778 = vpack.c.b16 %v548, %v546
  %v779 = vpack.c.b16 %v551, %v549
  %v780 = vpack.c.b16 %v552, %v550
  %v781 = vpack.c.b16 %v555, %v553
  %v782 = vpack.c.b16 %v556, %v554
  %v783 = vpack.c.b16 %v559, %v557
  %v784 = vpack.c.b16 %v560, %v558
  %v785 = vpack.c.b16 %v563, %v561
  %v786 = vpack.c.b16 %v564, %v562
  %v787 = vpack.c.b16 %v567, %v565
  %v788 = vpack.c.b16 %v568, %v566
  %v789 = vpack.c.b16 %v571, %v569
  %v790 = vpack.c.b16 %v572, %v570
  %v791 = vpack.c.b16 %v575, %v573
  %v792 = vpack.c.b16 %v576, %v574
  %v793 = vpack.c.b16 %v579, %v577
  %v794 = vpack.c.b16 %v580, %v578
  %v795 = vpack.c.b16 %v583, %v581
  %v796 = vpack.c.b16 %v584, %v582
  %v797 = vpack.c.b16 %v587, %v585
  %v798 = vpack.c.b16 %v588, %v586
  %v799 = vpack.c.b16 %v591, %v589
  %v800 = vpack.c.b16 %v592, %v590
  %v801 = vpack.c.b16 %v595, %v593
  %v802 = vpack.c.b16 %v596, %v594
  %v803 = vpack.c.b16 %v599, %v597
  %v804 = vpack.c.b16 %v600, %v598
  %v805 = vpack.c.b16 %v603, %v601
  %v806 = vpack.c.b16 %v604, %v602
  %v807 = vpack.c.b16 %v607, %v605
  %v808 = vpack.c.b16 %v608, %v606
  %v809 = vpack.c.b16 %v611, %v609
  %v810 = vpack.c.b16 %v612, %v610
  %v811 = vpack.c.b16 %v615, %v613
  %v812 = vpack.c.b16 %v616, %v614
  %v813 = vpack.c.b16 %v619, %v617
  %v814 = vpack.c.b16 %v620, %v618
  %v815 = vpack.c.b16 %v623, %v621
  %v816 = vpack.c.b16 %v624, %v622
  %v817 = vpack.c.b16 %v627, %v625
  %v818 = vpack.c.b16 %v628, %v626
  %v819 = vpack.c.b16 %v631, %v629
  %v820 = vpack.c.b16 %v632, %v630
  %v821 = vpack.c.b16 %v635, %v633
  %v822 = vpack.c.b16 %v636, %v634
  %v823 = vpack.c.b16 %v639, %v637
  %v824 = vpack.c.b16 %v640, %v638
  %v825 = vpack.c.b16 %v643, %v641
  %v826 = vpack.c.b16 %v644, %v642
  %v827 = vpack.c.b16 %v647, %v645
  %v828 = vpack.c.b16 %v648, %v646
  %v829 = vpack.c.b16 %v651, %v649
  %v830 = vpack.c.b16 %v652, %v650
  %v831 = vpack.c.b16 %v655, %v653
  %v832 = vpack.c.b16 %v656, %v654
  %v833 = vpack.c.b16 %v659, %v657
  %v834 = vpack.c.b16 %v660, %v658
  %v835 = vpack.c.b16 %v663, %v661
  %v836 = vpack.c.b16 %v664, %v662
  %v837 = vpack.c.b16 %v667, %v665
  %v838 = vpack.c.b16 %v668, %v666
  %v839 = vpack.c.b16 %v671, %v669
  %v840 = vpack.c.b16 %v672, %v670
  %v841 = vpack.c.b16 %v675, %v673
  %v842 = vpack.c.b16 %v676, %v674
  %v843 = vpack.c.b16 %v679, %v677
  %v844 = vpack.c.b16 %v680, %v678
  %v845 = vpack.c.b16 %v683, %v681
  %v846 = vpack.c.b16 %v684, %v682
  %v946 = vunpack.c.l.b16 %v177
  %v947 = vunpack.c.l.b16 %v178
  %v948 = vunpack.c.l.b16 %v179
  %v949 = vunpack.c.l.b16 %v180
  %v950 = vunpack.c.l.b16 %v181
  %v951 = vunpack.c.l.b16 %v182
  %v952 = vunpack.c.l.b16 %v183
  %v953 = vunpack.c.l.b16 %v184
  %v954 = vunpack.c.l.b16 %v185
  %v955 = vunpack.c.l.b16 %v186
  %v956 = vunpack.c.l.b16 %v187
  %v957 = vunpack.c.l.b16 %v188
  %v958 = vunpack.c.l.b16 %v189
  %v959 = vunpack.c.l.b16 %v190
  %v960 = vunpack.c.l.b16 %v191
  %v961 = vunpack.c.l.b16 %v192
  %v962 = vunpack.c.l.b16 %v193
  %v963 = vunpack.c.l.b16 %v194
  %v964 = vpack.c.b16 %v947, %v946
  %v965 = vpack.c.b16 %v949, %v948
  %v966 = vpack.c.b16 %v951, %v950
  %v967 = vpack.c.b16 %v953, %v952
  %v968 = vpack.c.b16 %v955, %v954
  %v969 = vpack.c.b16 %v957, %v956
  %v970 = vpack.c.b16 %v959, %v958
  %v971 = vpack.c.b16 %v961, %v960
  %v972 = vpack.c.b16 %v963, %v962
  %vm982 = vcmask 130048
  %v984 = vsel %vm982, %v686, 0
  %v987 = vsel %vm982, %v688, 0
  %v990 = vsel %vm982, %v690, 0
  %v993 = vsel %vm982, %v692, 0
  %v996 = vsel %vm982, %v694, 0
  %v999 = vsel %vm982, %v696, 0
  %v1002 = vsel %vm982, %v698, 0
  %v1005 = vsel %vm982, %v700, 0
  %v1008 = vsel %vm982, %v702, 0
  %v1011 = vsel %vm982, %v704, 0
  %v1014 = vsel %vm982, %v706, 0
  %v1017 = vsel %vm982, %v708, 0
  %v1020 = vsel %vm982, %v710, 0
  %v1023 = vsel %vm982, %v712, 0
  %v1026 = vsel %vm982, %v714, 0
  %v1029 = vsel %vm982, %v716, 0
  %v1032 = vsel %vm982, %v718, 0
  %v1035 = vsel %vm982, %v720, 0
  %v1038 = vsel %vm982, %v722, 0
  %v1041 = vsel %vm982, %v724, 0
  %v1044 = vsel %vm982, %v726, 0
  %v1047 = vsel %vm982, %v728, 0
  %v1050 = vsel %vm982, %v730, 0
  %v1053 = vsel %vm982, %v732, 0
  %v1056 = vsel %vm982, %v734, 0
  %v1059 = vsel %vm982, %v736, 0
  %v1062 = vsel %vm982, %v738, 0
  %v1065 = vsel %vm982, %v740, 0
  %v1068 = vsel %vm982, %v742, 0
  %v1071 = vsel %vm982, %v744, 0
  %v1074 = vsel %vm982, %v746, 0
  %v1077 = vsel %vm982, %v748, 0
  %v1080 = vsel %vm982, %v750, 0
  %v1083 = vsel %vm982, %v752, 0
  %v1086 = vsel %vm982, %v754, 0
  %v1089 = vsel %vm982, %v756, 0
  %v1092 = vsel %vm982, %v758, 0
  %v1095 = vsel %vm982, %v760, 0
  %v1098 = vsel %vm982, %v762, 0
  %v1101 = vsel %vm982, %v764, 0
  %v1104 = vsel %vm982, %v766, 0
  %v1107 = vsel %vm982, %v768, 0
  %v1110 = vsel %vm982, %v770, 0
  %v1113 = vsel %vm982, %v772, 0
  %v1116 = vsel %vm982, %v774, 0
  %v1119 = vsel %vm982, %v776, 0
  %v1122 = vsel %vm982, %v778, 0
  %v1125 = vsel %vm982, %v780, 0
  %v1128 = vsel %vm982, %v782, 0
  %v1131 = vsel %vm982, %v784, 0
  %v1134 = vsel %vm982, %v786, 0
  %v1137 = vsel %vm982, %v788, 0
  %v1140 = vsel %vm982, %v790, 0
  %v1143 = vsel %vm982, %v792, 0
  %v1146 = vsel %vm982, %v794, 0
  %v1149 = vsel %vm982, %v796, 0
  %v1152 = vsel %vm982, %v798, 0
  %v1155 = vsel %vm982, %v800, 0
  %v1158 = vsel %vm982, %v802, 0
  %v1161 = vsel %vm982, %v804, 0
  %v1164 = vsel %vm982, %v806, 0
  %v1167 = vsel %vm982, %v808, 0
  %v1170 = vsel %vm982, %v810, 0
  %v1173 = vsel %vm982, %v812, 0
  %v1176 = vsel %vm982, %v814, 0
  %v1179 = vsel %vm982, %v816, 0
  %v1182 = vsel %vm982, %v818, 0
  %v1185 = vsel %vm982, %v820, 0
  %v1188 = vsel %vm982, %v822, 0
  %v1191 = vsel %vm982, %v824, 0
  %v1194 = vsel %vm982, %v826, 0
  %v1197 = vsel %vm982, %v828, 0
  %v1200 = vsel %vm982, %v830, 0
  %v1203 = vsel %vm982, %v832, 0
  %v1206 = vsel %vm982, %v834, 0
  %v1209 = vsel %vm982, %v836, 0
  %v1212 = vsel %vm982, %v838, 0
  %v1215 = vsel %vm982, %v840, 0
  %v1218 = vsel %vm982, %v842, 0
  %v1221 = vsel %vm982, %v844, 0
  %v1224 = vsel %vm982, %v846, 0
  %1226 = vmatpush.bf16.msra.mxu0 %v971
  %1227 = vmatpush.bf16.msra.mxu0 %v970
  %1228 = vmatpush.bf16.msra.mxu0 %v969
  %1229 = vmatpush.bf16.msra.mxu0 %v968
  %1230 = vmatpush.bf16.msra.mxu0 %v967
  %1231 = vmatpush.bf16.msra.mxu0 %v966
  %1232 = vmatpush.bf16.msra.mxu0 %v965
  %1233 = vmatpush.bf16.msra.mxu0 %v964
  %1234 = vmatmul.bf16.gmra.mxu0 %v685
  %v1235 = vpop.f32.mrf.mxu0
  %v1236 = vadd.f32 %v197, %v1235
  %v1237 = vpop.f32.mrf.mxu0
  %v1238 = vadd.f32 %v197, %v1237
  %1239 = vmatmul.bf16.gmra.mxu0 %v687
  %v1240 = vpop.f32.mrf.mxu0
  %v1241 = vadd.f32 %v197, %v1240
  %v1242 = vpop.f32.mrf.mxu0
  %v1243 = vadd.f32 %v197, %v1242
  %1244 = vmatmul.bf16.gmra.mxu0 %v689
  %v1245 = vpop.f32.mrf.mxu0
  %v1246 = vadd.f32 %v197, %v1245
  %v1247 = vpop.f32.mrf.mxu0
  %v1248 = vadd.f32 %v197, %v1247
  %1249 = vmatmul.bf16.gmra.mxu0 %v691
  %v1250 = vpop.f32.mrf.mxu0
  %v1251 = vadd.f32 %v197, %v1250
  %v1252 = vpop.f32.mrf.mxu0
  %v1253 = vadd.f32 %v197, %v1252
  %1254 = vmatmul.bf16.gmra.mxu0 %v693
  %v1255 = vpop.f32.mrf.mxu0
  %v1256 = vadd.f32 %v197, %v1255
  %v1257 = vpop.f32.mrf.mxu0
  %v1258 = vadd.f32 %v197, %v1257
  %1259 = vmatmul.bf16.gmra.mxu0 %v695
  %v1260 = vpop.f32.mrf.mxu0
  %v1261 = vadd.f32 %v197, %v1260
  %v1262 = vpop.f32.mrf.mxu0
  %v1263 = vadd.f32 %v197, %v1262
  %1264 = vmatmul.bf16.gmra.mxu0 %v697
  %v1265 = vpop.f32.mrf.mxu0
  %v1266 = vadd.f32 %v197, %v1265
  %v1267 = vpop.f32.mrf.mxu0
  %v1268 = vadd.f32 %v197, %v1267
  %1269 = vmatmul.bf16.gmra.mxu0 %v699
  %v1270 = vpop.f32.mrf.mxu0
  %v1271 = vadd.f32 %v197, %v1270
  %v1272 = vpop.f32.mrf.mxu0
  %v1273 = vadd.f32 %v197, %v1272
  %1274 = vmatmul.bf16.gmra.mxu0 %v701
  %v1275 = vpop.f32.mrf.mxu0
  %v1276 = vadd.f32 %v197, %v1275
  %v1277 = vpop.f32.mrf.mxu0
  %v1278 = vadd.f32 %v197, %v1277
  %1279 = vmatmul.bf16.gmra.mxu0 %v703
  %v1280 = vpop.f32.mrf.mxu0
  %v1281 = vadd.f32 %v197, %v1280
  %v1282 = vpop.f32.mrf.mxu0
  %v1283 = vadd.f32 %v197, %v1282
  %1284 = vmatmul.bf16.gmra.mxu0 %v705
  %v1285 = vpop.f32.mrf.mxu0
  %v1286 = vadd.f32 %v197, %v1285
  %v1287 = vpop.f32.mrf.mxu0
  %v1288 = vadd.f32 %v197, %v1287
  %1289 = vmatmul.bf16.gmra.mxu0 %v707
  %v1290 = vpop.f32.mrf.mxu0
  %v1291 = vadd.f32 %v197, %v1290
  %v1292 = vpop.f32.mrf.mxu0
  %v1293 = vadd.f32 %v197, %v1292
  %1294 = vmatmul.bf16.gmra.mxu0 %v709
  %v1295 = vpop.f32.mrf.mxu0
  %v1296 = vadd.f32 %v197, %v1295
  %v1297 = vpop.f32.mrf.mxu0
  %v1298 = vadd.f32 %v197, %v1297
  %1299 = vmatmul.bf16.gmra.mxu0 %v711
  %v1300 = vpop.f32.mrf.mxu0
  %v1301 = vadd.f32 %v197, %v1300
  %v1302 = vpop.f32.mrf.mxu0
  %v1303 = vadd.f32 %v197, %v1302
  %1304 = vmatmul.bf16.gmra.mxu0 %v713
  %v1305 = vpop.f32.mrf.mxu0
  %v1306 = vadd.f32 %v197, %v1305
  %v1307 = vpop.f32.mrf.mxu0
  %v1308 = vadd.f32 %v197, %v1307
  %1309 = vmatmul.bf16.gmra.mxu0 %v715
  %v1310 = vpop.f32.mrf.mxu0
  %v1311 = vadd.f32 %v197, %v1310
  %v1312 = vpop.f32.mrf.mxu0
  %v1313 = vadd.f32 %v197, %v1312
  %1314 = vmatmul.bf16.gmra.mxu0 %v717
  %v1315 = vpop.f32.mrf.mxu0
  %v1316 = vadd.f32 %v197, %v1315
  %v1317 = vpop.f32.mrf.mxu0
  %v1318 = vadd.f32 %v197, %v1317
  %1319 = vmatmul.bf16.gmra.mxu0 %v719
  %v1320 = vpop.f32.mrf.mxu0
  %v1321 = vadd.f32 %v197, %v1320
  %v1322 = vpop.f32.mrf.mxu0
  %v1323 = vadd.f32 %v197, %v1322
  %1324 = vmatmul.bf16.gmra.mxu0 %v721
  %v1325 = vpop.f32.mrf.mxu0
  %v1326 = vadd.f32 %v197, %v1325
  %v1327 = vpop.f32.mrf.mxu0
  %v1328 = vadd.f32 %v197, %v1327
  %1329 = vmatmul.bf16.gmra.mxu0 %v723
  %v1330 = vpop.f32.mrf.mxu0
  %v1331 = vadd.f32 %v197, %v1330
  %v1332 = vpop.f32.mrf.mxu0
  %v1333 = vadd.f32 %v197, %v1332
  %1334 = vmatmul.bf16.gmra.mxu0 %v725
  %v1335 = vpop.f32.mrf.mxu0
  %v1336 = vadd.f32 %v197, %v1335
  %v1337 = vpop.f32.mrf.mxu0
  %v1338 = vadd.f32 %v197, %v1337
  %1339 = vmatmul.bf16.gmra.mxu0 %v727
  %v1340 = vpop.f32.mrf.mxu0
  %v1341 = vadd.f32 %v197, %v1340
  %v1342 = vpop.f32.mrf.mxu0
  %v1343 = vadd.f32 %v197, %v1342
  %1344 = vmatmul.bf16.gmra.mxu0 %v729
  %v1345 = vpop.f32.mrf.mxu0
  %v1346 = vadd.f32 %v197, %v1345
  %v1347 = vpop.f32.mrf.mxu0
  %v1348 = vadd.f32 %v197, %v1347
  %1349 = vmatmul.bf16.gmra.mxu0 %v731
  %v1350 = vpop.f32.mrf.mxu0
  %v1351 = vadd.f32 %v197, %v1350
  %v1352 = vpop.f32.mrf.mxu0
  %v1353 = vadd.f32 %v197, %v1352
  %1354 = vmatmul.bf16.gmra.mxu0 %v733
  %v1355 = vpop.f32.mrf.mxu0
  %v1356 = vadd.f32 %v197, %v1355
  %v1357 = vpop.f32.mrf.mxu0
  %v1358 = vadd.f32 %v197, %v1357
  %1359 = vmatmul.bf16.gmra.mxu0 %v735
  %v1360 = vpop.f32.mrf.mxu0
  %v1361 = vadd.f32 %v197, %v1360
  %v1362 = vpop.f32.mrf.mxu0
  %v1363 = vadd.f32 %v197, %v1362
  %1364 = vmatmul.bf16.gmra.mxu0 %v737
  %v1365 = vpop.f32.mrf.mxu0
  %v1366 = vadd.f32 %v197, %v1365
  %v1367 = vpop.f32.mrf.mxu0
  %v1368 = vadd.f32 %v197, %v1367
  %1369 = vmatmul.bf16.gmra.mxu0 %v739
  %v1370 = vpop.f32.mrf.mxu0
  %v1371 = vadd.f32 %v197, %v1370
  %v1372 = vpop.f32.mrf.mxu0
  %v1373 = vadd.f32 %v197, %v1372
  %1374 = vmatmul.bf16.gmra.mxu0 %v741
  %v1375 = vpop.f32.mrf.mxu0
  %v1376 = vadd.f32 %v197, %v1375
  %v1377 = vpop.f32.mrf.mxu0
  %v1378 = vadd.f32 %v197, %v1377
  %1379 = vmatmul.bf16.gmra.mxu0 %v743
  %v1380 = vpop.f32.mrf.mxu0
  %v1381 = vadd.f32 %v197, %v1380
  %v1382 = vpop.f32.mrf.mxu0
  %v1383 = vadd.f32 %v197, %v1382
  %1384 = vmatmul.bf16.gmra.mxu0 %v745
  %v1385 = vpop.f32.mrf.mxu0
  %v1386 = vadd.f32 %v197, %v1385
  %v1387 = vpop.f32.mrf.mxu0
  %v1388 = vadd.f32 %v197, %v1387
  %1389 = vmatmul.bf16.gmra.mxu0 %v747
  %v1390 = vpop.f32.mrf.mxu0
  %v1391 = vadd.f32 %v197, %v1390
  %v1392 = vpop.f32.mrf.mxu0
  %v1393 = vadd.f32 %v197, %v1392
  %1394 = vmatmul.bf16.gmra.mxu0 %v749
  %v1395 = vpop.f32.mrf.mxu0
  %v1396 = vadd.f32 %v197, %v1395
  %v1397 = vpop.f32.mrf.mxu0
  %v1398 = vadd.f32 %v197, %v1397
  %1399 = vmatmul.bf16.gmra.mxu0 %v751
  %v1400 = vpop.f32.mrf.mxu0
  %v1401 = vadd.f32 %v197, %v1400
  %v1402 = vpop.f32.mrf.mxu0
  %v1403 = vadd.f32 %v197, %v1402
  %1404 = vmatmul.bf16.gmra.mxu0 %v753
  %v1405 = vpop.f32.mrf.mxu0
  %v1406 = vadd.f32 %v197, %v1405
  %v1407 = vpop.f32.mrf.mxu0
  %v1408 = vadd.f32 %v197, %v1407
  %1409 = vmatmul.bf16.gmra.mxu0 %v755
  %v1410 = vpop.f32.mrf.mxu0
  %v1411 = vadd.f32 %v197, %v1410
  %v1412 = vpop.f32.mrf.mxu0
  %v1413 = vadd.f32 %v197, %v1412
  %1414 = vmatmul.bf16.gmra.mxu0 %v757
  %v1415 = vpop.f32.mrf.mxu0
  %v1416 = vadd.f32 %v197, %v1415
  %v1417 = vpop.f32.mrf.mxu0
  %v1418 = vadd.f32 %v197, %v1417
  %1419 = vmatmul.bf16.gmra.mxu0 %v759
  %v1420 = vpop.f32.mrf.mxu0
  %v1421 = vadd.f32 %v197, %v1420
  %v1422 = vpop.f32.mrf.mxu0
  %v1423 = vadd.f32 %v197, %v1422
  %1424 = vmatmul.bf16.gmra.mxu0 %v761
  %v1425 = vpop.f32.mrf.mxu0
  %v1426 = vadd.f32 %v197, %v1425
  %v1427 = vpop.f32.mrf.mxu0
  %v1428 = vadd.f32 %v197, %v1427
  %1429 = vmatmul.bf16.gmra.mxu0 %v763
  %v1430 = vpop.f32.mrf.mxu0
  %v1431 = vadd.f32 %v197, %v1430
  %v1432 = vpop.f32.mrf.mxu0
  %v1433 = vadd.f32 %v197, %v1432
  %1434 = vmatmul.bf16.gmra.mxu0 %v765
  %v1435 = vpop.f32.mrf.mxu0
  %v1436 = vadd.f32 %v197, %v1435
  %v1437 = vpop.f32.mrf.mxu0
  %v1438 = vadd.f32 %v197, %v1437
  %1439 = vmatmul.bf16.gmra.mxu0 %v767
  %v1440 = vpop.f32.mrf.mxu0
  %v1441 = vadd.f32 %v197, %v1440
  %v1442 = vpop.f32.mrf.mxu0
  %v1443 = vadd.f32 %v197, %v1442
  %1444 = vmatmul.bf16.gmra.mxu0 %v769
  %v1445 = vpop.f32.mrf.mxu0
  %v1446 = vadd.f32 %v197, %v1445
  %v1447 = vpop.f32.mrf.mxu0
  %v1448 = vadd.f32 %v197, %v1447
  %1449 = vmatmul.bf16.gmra.mxu0 %v771
  %v1450 = vpop.f32.mrf.mxu0
  %v1451 = vadd.f32 %v197, %v1450
  %v1452 = vpop.f32.mrf.mxu0
  %v1453 = vadd.f32 %v197, %v1452
  %1454 = vmatmul.bf16.gmra.mxu0 %v773
  %v1455 = vpop.f32.mrf.mxu0
  %v1456 = vadd.f32 %v197, %v1455
  %v1457 = vpop.f32.mrf.mxu0
  %v1458 = vadd.f32 %v197, %v1457
  %1459 = vmatmul.bf16.gmra.mxu0 %v775
  %v1460 = vpop.f32.mrf.mxu0
  %v1461 = vadd.f32 %v197, %v1460
  %v1462 = vpop.f32.mrf.mxu0
  %v1463 = vadd.f32 %v197, %v1462
  %1464 = vmatmul.bf16.gmra.mxu0 %v777
  %v1465 = vpop.f32.mrf.mxu0
  %v1466 = vadd.f32 %v197, %v1465
  %v1467 = vpop.f32.mrf.mxu0
  %v1468 = vadd.f32 %v197, %v1467
  %1469 = vmatmul.bf16.gmra.mxu0 %v779
  %v1470 = vpop.f32.mrf.mxu0
  %v1471 = vadd.f32 %v197, %v1470
  %v1472 = vpop.f32.mrf.mxu0
  %v1473 = vadd.f32 %v197, %v1472
  %1474 = vmatmul.bf16.gmra.mxu0 %v781
  %v1475 = vpop.f32.mrf.mxu0
  %v1476 = vadd.f32 %v197, %v1475
  %v1477 = vpop.f32.mrf.mxu0
  %v1478 = vadd.f32 %v197, %v1477
  %1479 = vmatmul.bf16.gmra.mxu0 %v783
  %v1480 = vpop.f32.mrf.mxu0
  %v1481 = vadd.f32 %v197, %v1480
  %v1482 = vpop.f32.mrf.mxu0
  %v1483 = vadd.f32 %v197, %v1482
  %1484 = vmatmul.bf16.gmra.mxu0 %v785
  %v1485 = vpop.f32.mrf.mxu0
  %v1486 = vadd.f32 %v197, %v1485
  %v1487 = vpop.f32.mrf.mxu0
  %v1488 = vadd.f32 %v197, %v1487
  %1489 = vmatmul.bf16.gmra.mxu0 %v787
  %v1490 = vpop.f32.mrf.mxu0
  %v1491 = vadd.f32 %v197, %v1490
  %v1492 = vpop.f32.mrf.mxu0
  %v1493 = vadd.f32 %v197, %v1492
  %1494 = vmatmul.bf16.gmra.mxu0 %v789
  %v1495 = vpop.f32.mrf.mxu0
  %v1496 = vadd.f32 %v197, %v1495
  %v1497 = vpop.f32.mrf.mxu0
  %v1498 = vadd.f32 %v197, %v1497
  %1499 = vmatmul.bf16.gmra.mxu0 %v791
  %v1500 = vpop.f32.mrf.mxu0
  %v1501 = vadd.f32 %v197, %v1500
  %v1502 = vpop.f32.mrf.mxu0
  %v1503 = vadd.f32 %v197, %v1502
  %1504 = vmatmul.bf16.gmra.mxu0 %v793
  %v1505 = vpop.f32.mrf.mxu0
  %v1506 = vadd.f32 %v197, %v1505
  %v1507 = vpop.f32.mrf.mxu0
  %v1508 = vadd.f32 %v197, %v1507
  %1509 = vmatmul.bf16.gmra.mxu0 %v795
  %v1510 = vpop.f32.mrf.mxu0
  %v1511 = vadd.f32 %v197, %v1510
  %v1512 = vpop.f32.mrf.mxu0
  %v1513 = vadd.f32 %v197, %v1512
  %1514 = vmatmul.bf16.gmra.mxu0 %v797
  %v1515 = vpop.f32.mrf.mxu0
  %v1516 = vadd.f32 %v197, %v1515
  %v1517 = vpop.f32.mrf.mxu0
  %v1518 = vadd.f32 %v197, %v1517
  %1519 = vmatmul.bf16.gmra.mxu0 %v799
  %v1520 = vpop.f32.mrf.mxu0
  %v1521 = vadd.f32 %v197, %v1520
  %v1522 = vpop.f32.mrf.mxu0
  %v1523 = vadd.f32 %v197, %v1522
  %1524 = vmatmul.bf16.gmra.mxu0 %v801
  %v1525 = vpop.f32.mrf.mxu0
  %v1526 = vadd.f32 %v197, %v1525
  %v1527 = vpop.f32.mrf.mxu0
  %v1528 = vadd.f32 %v197, %v1527
  %1529 = vmatmul.bf16.gmra.mxu0 %v803
  %v1530 = vpop.f32.mrf.mxu0
  %v1531 = vadd.f32 %v197, %v1530
  %v1532 = vpop.f32.mrf.mxu0
  %v1533 = vadd.f32 %v197, %v1532
  %1534 = vmatmul.bf16.gmra.mxu0 %v805
  %v1535 = vpop.f32.mrf.mxu0
  %v1536 = vadd.f32 %v197, %v1535
  %v1537 = vpop.f32.mrf.mxu0
  %v1538 = vadd.f32 %v197, %v1537
  %1539 = vmatmul.bf16.gmra.mxu0 %v807
  %v1540 = vpop.f32.mrf.mxu0
  %v1541 = vadd.f32 %v197, %v1540
  %v1542 = vpop.f32.mrf.mxu0
  %v1543 = vadd.f32 %v197, %v1542
  %1544 = vmatmul.bf16.gmra.mxu0 %v809
  %v1545 = vpop.f32.mrf.mxu0
  %v1546 = vadd.f32 %v197, %v1545
  %v1547 = vpop.f32.mrf.mxu0
  %v1548 = vadd.f32 %v197, %v1547
  %1549 = vmatmul.bf16.gmra.mxu0 %v811
  %v1550 = vpop.f32.mrf.mxu0
  %v1551 = vadd.f32 %v197, %v1550
  %v1552 = vpop.f32.mrf.mxu0
  %v1553 = vadd.f32 %v197, %v1552
  %1554 = vmatmul.bf16.gmra.mxu0 %v813
  %v1555 = vpop.f32.mrf.mxu0
  %v1556 = vadd.f32 %v197, %v1555
  %v1557 = vpop.f32.mrf.mxu0
  %v1558 = vadd.f32 %v197, %v1557
  %1559 = vmatmul.bf16.gmra.mxu0 %v815
  %v1560 = vpop.f32.mrf.mxu0
  %v1561 = vadd.f32 %v197, %v1560
  %v1562 = vpop.f32.mrf.mxu0
  %v1563 = vadd.f32 %v197, %v1562
  %1564 = vmatmul.bf16.gmra.mxu0 %v817
  %v1565 = vpop.f32.mrf.mxu0
  %v1566 = vadd.f32 %v197, %v1565
  %v1567 = vpop.f32.mrf.mxu0
  %v1568 = vadd.f32 %v197, %v1567
  %1569 = vmatmul.bf16.gmra.mxu0 %v819
  %v1570 = vpop.f32.mrf.mxu0
  %v1571 = vadd.f32 %v197, %v1570
  %v1572 = vpop.f32.mrf.mxu0
  %v1573 = vadd.f32 %v197, %v1572
  %1574 = vmatmul.bf16.gmra.mxu0 %v821
  %v1575 = vpop.f32.mrf.mxu0
  %v1576 = vadd.f32 %v197, %v1575
  %v1577 = vpop.f32.mrf.mxu0
  %v1578 = vadd.f32 %v197, %v1577
  %1579 = vmatmul.bf16.gmra.mxu0 %v823
  %v1580 = vpop.f32.mrf.mxu0
  %v1581 = vadd.f32 %v197, %v1580
  %v1582 = vpop.f32.mrf.mxu0
  %v1583 = vadd.f32 %v197, %v1582
  %1584 = vmatmul.bf16.gmra.mxu0 %v825
  %v1585 = vpop.f32.mrf.mxu0
  %v1586 = vadd.f32 %v197, %v1585
  %v1587 = vpop.f32.mrf.mxu0
  %v1588 = vadd.f32 %v197, %v1587
  %1589 = vmatmul.bf16.gmra.mxu0 %v827
  %v1590 = vpop.f32.mrf.mxu0
  %v1591 = vadd.f32 %v197, %v1590
  %v1592 = vpop.f32.mrf.mxu0
  %v1593 = vadd.f32 %v197, %v1592
  %1594 = vmatmul.bf16.gmra.mxu0 %v829
  %v1595 = vpop.f32.mrf.mxu0
  %v1596 = vadd.f32 %v197, %v1595
  %v1597 = vpop.f32.mrf.mxu0
  %v1598 = vadd.f32 %v197, %v1597
  %1599 = vmatmul.bf16.gmra.mxu0 %v831
  %v1600 = vpop.f32.mrf.mxu0
  %v1601 = vadd.f32 %v197, %v1600
  %v1602 = vpop.f32.mrf.mxu0
  %v1603 = vadd.f32 %v197, %v1602
  %1604 = vmatmul.bf16.gmra.mxu0 %v833
  %v1605 = vpop.f32.mrf.mxu0
  %v1606 = vadd.f32 %v197, %v1605
  %v1607 = vpop.f32.mrf.mxu0
  %v1608 = vadd.f32 %v197, %v1607
  %1609 = vmatmul.bf16.gmra.mxu0 %v835
  %v1610 = vpop.f32.mrf.mxu0
  %v1611 = vadd.f32 %v197, %v1610
  %v1612 = vpop.f32.mrf.mxu0
  %v1613 = vadd.f32 %v197, %v1612
  %1614 = vmatmul.bf16.gmra.mxu0 %v837
  %v1615 = vpop.f32.mrf.mxu0
  %v1616 = vadd.f32 %v197, %v1615
  %v1617 = vpop.f32.mrf.mxu0
  %v1618 = vadd.f32 %v197, %v1617
  %1619 = vmatmul.bf16.gmra.mxu0 %v839
  %v1620 = vpop.f32.mrf.mxu0
  %v1621 = vadd.f32 %v197, %v1620
  %v1622 = vpop.f32.mrf.mxu0
  %v1623 = vadd.f32 %v197, %v1622
  %1624 = vmatmul.bf16.gmra.mxu0 %v841
  %v1625 = vpop.f32.mrf.mxu0
  %v1626 = vadd.f32 %v197, %v1625
  %v1627 = vpop.f32.mrf.mxu0
  %v1628 = vadd.f32 %v197, %v1627
  %1629 = vmatmul.bf16.gmra.mxu0 %v843
  %v1630 = vpop.f32.mrf.mxu0
  %v1631 = vadd.f32 %v197, %v1630
  %v1632 = vpop.f32.mrf.mxu0
  %v1633 = vadd.f32 %v197, %v1632
  %1634 = vmatmul.bf16.gmra.mxu0 %v845
  %v1635 = vpop.f32.mrf.mxu0
  %v1636 = vadd.f32 %v197, %v1635
  %v1637 = vpop.f32.mrf.mxu0
  %v1638 = vadd.f32 %v197, %v1637
  %1639 = vdwg.mxu0
  %1640 = vmatpush.bf16.msra.mxu0 0
  %1641 = vmatpush.bf16.msra.mxu0 0
  %1642 = vmatpush.bf16.msra.mxu0 0
  %1643 = vmatpush.bf16.msra.mxu0 0
  %1644 = vmatpush.bf16.msra.mxu0 0
  %1645 = vmatpush.bf16.msra.mxu0 0
  %1646 = vmatpush.bf16.msra.mxu0 0
  %1647 = vmatpush.bf16.msra.mxu0 %v972
  %1648 = vmatmul.bf16.gmra.mxu0 %v984
  %v1649 = vpop.f32.mrf.mxu0
  %v1650 = vadd.f32 %v1236, %v1649
  %v1651 = vpop.f32.mrf.mxu0
  %v1652 = vadd.f32 %v1238, %v1651
  %1653 = vmatmul.bf16.gmra.mxu0 %v987
  %v1654 = vpop.f32.mrf.mxu0
  %v1655 = vadd.f32 %v1241, %v1654
  %v1656 = vpop.f32.mrf.mxu0
  %v1657 = vadd.f32 %v1243, %v1656
  %1658 = vmatmul.bf16.gmra.mxu0 %v990
  %v1659 = vpop.f32.mrf.mxu0
  %v1660 = vadd.f32 %v1246, %v1659
  %v1661 = vpop.f32.mrf.mxu0
  %v1662 = vadd.f32 %v1248, %v1661
  %1663 = vmatmul.bf16.gmra.mxu0 %v993
  %v1664 = vpop.f32.mrf.mxu0
  %v1665 = vadd.f32 %v1251, %v1664
  %v1666 = vpop.f32.mrf.mxu0
  %v1667 = vadd.f32 %v1253, %v1666
  %1668 = vmatmul.bf16.gmra.mxu0 %v996
  %v1669 = vpop.f32.mrf.mxu0
  %v1670 = vadd.f32 %v1256, %v1669
  %v1671 = vpop.f32.mrf.mxu0
  %v1672 = vadd.f32 %v1258, %v1671
  %1673 = vmatmul.bf16.gmra.mxu0 %v999
  %v1674 = vpop.f32.mrf.mxu0
  %v1675 = vadd.f32 %v1261, %v1674
  %v1676 = vpop.f32.mrf.mxu0
  %v1677 = vadd.f32 %v1263, %v1676
  %1678 = vmatmul.bf16.gmra.mxu0 %v1002
  %v1679 = vpop.f32.mrf.mxu0
  %v1680 = vadd.f32 %v1266, %v1679
  %v1681 = vpop.f32.mrf.mxu0
  %v1682 = vadd.f32 %v1268, %v1681
  %1683 = vmatmul.bf16.gmra.mxu0 %v1005
  %v1684 = vpop.f32.mrf.mxu0
  %v1685 = vadd.f32 %v1271, %v1684
  %v1686 = vpop.f32.mrf.mxu0
  %v1687 = vadd.f32 %v1273, %v1686
  %1688 = vmatmul.bf16.gmra.mxu0 %v1008
  %v1689 = vpop.f32.mrf.mxu0
  %v1690 = vadd.f32 %v1276, %v1689
  %v1691 = vpop.f32.mrf.mxu0
  %v1692 = vadd.f32 %v1278, %v1691
  %1693 = vmatmul.bf16.gmra.mxu0 %v1011
  %v1694 = vpop.f32.mrf.mxu0
  %v1695 = vadd.f32 %v1281, %v1694
  %v1696 = vpop.f32.mrf.mxu0
  %v1697 = vadd.f32 %v1283, %v1696
  %1698 = vmatmul.bf16.gmra.mxu0 %v1014
  %v1699 = vpop.f32.mrf.mxu0
  %v1700 = vadd.f32 %v1286, %v1699
  %v1701 = vpop.f32.mrf.mxu0
  %v1702 = vadd.f32 %v1288, %v1701
  %1703 = vmatmul.bf16.gmra.mxu0 %v1017
  %v1704 = vpop.f32.mrf.mxu0
  %v1705 = vadd.f32 %v1291, %v1704
  %v1706 = vpop.f32.mrf.mxu0
  %v1707 = vadd.f32 %v1293, %v1706
  %1708 = vmatmul.bf16.gmra.mxu0 %v1020
  %v1709 = vpop.f32.mrf.mxu0
  %v1710 = vadd.f32 %v1296, %v1709
  %v1711 = vpop.f32.mrf.mxu0
  %v1712 = vadd.f32 %v1298, %v1711
  %1713 = vmatmul.bf16.gmra.mxu0 %v1023
  %v1714 = vpop.f32.mrf.mxu0
  %v1715 = vadd.f32 %v1301, %v1714
  %v1716 = vpop.f32.mrf.mxu0
  %v1717 = vadd.f32 %v1303, %v1716
  %1718 = vmatmul.bf16.gmra.mxu0 %v1026
  %v1719 = vpop.f32.mrf.mxu0
  %v1720 = vadd.f32 %v1306, %v1719
  %v1721 = vpop.f32.mrf.mxu0
  %v1722 = vadd.f32 %v1308, %v1721
  %1723 = vmatmul.bf16.gmra.mxu0 %v1029
  %v1724 = vpop.f32.mrf.mxu0
  %v1725 = vadd.f32 %v1311, %v1724
  %v1726 = vpop.f32.mrf.mxu0
  %v1727 = vadd.f32 %v1313, %v1726
  %1728 = vmatmul.bf16.gmra.mxu0 %v1032
  %v1729 = vpop.f32.mrf.mxu0
  %v1730 = vadd.f32 %v1316, %v1729
  %v1731 = vpop.f32.mrf.mxu0
  %v1732 = vadd.f32 %v1318, %v1731
  %1733 = vmatmul.bf16.gmra.mxu0 %v1035
  %v1734 = vpop.f32.mrf.mxu0
  %v1735 = vadd.f32 %v1321, %v1734
  %v1736 = vpop.f32.mrf.mxu0
  %v1737 = vadd.f32 %v1323, %v1736
  %1738 = vmatmul.bf16.gmra.mxu0 %v1038
  %v1739 = vpop.f32.mrf.mxu0
  %v1740 = vadd.f32 %v1326, %v1739
  %v1741 = vpop.f32.mrf.mxu0
  %v1742 = vadd.f32 %v1328, %v1741
  %1743 = vmatmul.bf16.gmra.mxu0 %v1041
  %v1744 = vpop.f32.mrf.mxu0
  %v1745 = vadd.f32 %v1331, %v1744
  %v1746 = vpop.f32.mrf.mxu0
  %v1747 = vadd.f32 %v1333, %v1746
  %1748 = vmatmul.bf16.gmra.mxu0 %v1044
  %v1749 = vpop.f32.mrf.mxu0
  %v1750 = vadd.f32 %v1336, %v1749
  %v1751 = vpop.f32.mrf.mxu0
  %v1752 = vadd.f32 %v1338, %v1751
  %1753 = vmatmul.bf16.gmra.mxu0 %v1047
  %v1754 = vpop.f32.mrf.mxu0
  %v1755 = vadd.f32 %v1341, %v1754
  %v1756 = vpop.f32.mrf.mxu0
  %v1757 = vadd.f32 %v1343, %v1756
  %1758 = vmatmul.bf16.gmra.mxu0 %v1050
  %v1759 = vpop.f32.mrf.mxu0
  %v1760 = vadd.f32 %v1346, %v1759
  %v1761 = vpop.f32.mrf.mxu0
  %v1762 = vadd.f32 %v1348, %v1761
  %1763 = vmatmul.bf16.gmra.mxu0 %v1053
  %v1764 = vpop.f32.mrf.mxu0
  %v1765 = vadd.f32 %v1351, %v1764
  %v1766 = vpop.f32.mrf.mxu0
  %v1767 = vadd.f32 %v1353, %v1766
  %1768 = vmatmul.bf16.gmra.mxu0 %v1056
  %v1769 = vpop.f32.mrf.mxu0
  %v1770 = vadd.f32 %v1356, %v1769
  %v1771 = vpop.f32.mrf.mxu0
  %v1772 = vadd.f32 %v1358, %v1771
  %1773 = vmatmul.bf16.gmra.mxu0 %v1059
  %v1774 = vpop.f32.mrf.mxu0
  %v1775 = vadd.f32 %v1361, %v1774
  %v1776 = vpop.f32.mrf.mxu0
  %v1777 = vadd.f32 %v1363, %v1776
  %1778 = vmatmul.bf16.gmra.mxu0 %v1062
  %v1779 = vpop.f32.mrf.mxu0
  %v1780 = vadd.f32 %v1366, %v1779
  %v1781 = vpop.f32.mrf.mxu0
  %v1782 = vadd.f32 %v1368, %v1781
  %1783 = vmatmul.bf16.gmra.mxu0 %v1065
  %v1784 = vpop.f32.mrf.mxu0
  %v1785 = vadd.f32 %v1371, %v1784
  %v1786 = vpop.f32.mrf.mxu0
  %v1787 = vadd.f32 %v1373, %v1786
  %1788 = vmatmul.bf16.gmra.mxu0 %v1068
  %v1789 = vpop.f32.mrf.mxu0
  %v1790 = vadd.f32 %v1376, %v1789
  %v1791 = vpop.f32.mrf.mxu0
  %v1792 = vadd.f32 %v1378, %v1791
  %1793 = vmatmul.bf16.gmra.mxu0 %v1071
  %v1794 = vpop.f32.mrf.mxu0
  %v1795 = vadd.f32 %v1381, %v1794
  %v1796 = vpop.f32.mrf.mxu0
  %v1797 = vadd.f32 %v1383, %v1796
  %1798 = vmatmul.bf16.gmra.mxu0 %v1074
  %v1799 = vpop.f32.mrf.mxu0
  %v1800 = vadd.f32 %v1386, %v1799
  %v1801 = vpop.f32.mrf.mxu0
  %v1802 = vadd.f32 %v1388, %v1801
  %1803 = vmatmul.bf16.gmra.mxu0 %v1077
  %v1804 = vpop.f32.mrf.mxu0
  %v1805 = vadd.f32 %v1391, %v1804
  %v1806 = vpop.f32.mrf.mxu0
  %v1807 = vadd.f32 %v1393, %v1806
  %1808 = vmatmul.bf16.gmra.mxu0 %v1080
  %v1809 = vpop.f32.mrf.mxu0
  %v1810 = vadd.f32 %v1396, %v1809
  %v1811 = vpop.f32.mrf.mxu0
  %v1812 = vadd.f32 %v1398, %v1811
  %1813 = vmatmul.bf16.gmra.mxu0 %v1083
  %v1814 = vpop.f32.mrf.mxu0
  %v1815 = vadd.f32 %v1401, %v1814
  %v1816 = vpop.f32.mrf.mxu0
  %v1817 = vadd.f32 %v1403, %v1816
  %1818 = vmatmul.bf16.gmra.mxu0 %v1086
  %v1819 = vpop.f32.mrf.mxu0
  %v1820 = vadd.f32 %v1406, %v1819
  %v1821 = vpop.f32.mrf.mxu0
  %v1822 = vadd.f32 %v1408, %v1821
  %1823 = vmatmul.bf16.gmra.mxu0 %v1089
  %v1824 = vpop.f32.mrf.mxu0
  %v1825 = vadd.f32 %v1411, %v1824
  %v1826 = vpop.f32.mrf.mxu0
  %v1827 = vadd.f32 %v1413, %v1826
  %1828 = vmatmul.bf16.gmra.mxu0 %v1092
  %v1829 = vpop.f32.mrf.mxu0
  %v1830 = vadd.f32 %v1416, %v1829
  %v1831 = vpop.f32.mrf.mxu0
  %v1832 = vadd.f32 %v1418, %v1831
  %1833 = vmatmul.bf16.gmra.mxu0 %v1095
  %v1834 = vpop.f32.mrf.mxu0
  %v1835 = vadd.f32 %v1421, %v1834
  %v1836 = vpop.f32.mrf.mxu0
  %v1837 = vadd.f32 %v1423, %v1836
  %1838 = vmatmul.bf16.gmra.mxu0 %v1098
  %v1839 = vpop.f32.mrf.mxu0
  %v1840 = vadd.f32 %v1426, %v1839
  %v1841 = vpop.f32.mrf.mxu0
  %v1842 = vadd.f32 %v1428, %v1841
  %1843 = vmatmul.bf16.gmra.mxu0 %v1101
  %v1844 = vpop.f32.mrf.mxu0
  %v1845 = vadd.f32 %v1431, %v1844
  %v1846 = vpop.f32.mrf.mxu0
  %v1847 = vadd.f32 %v1433, %v1846
  %1848 = vmatmul.bf16.gmra.mxu0 %v1104
  %v1849 = vpop.f32.mrf.mxu0
  %v1850 = vadd.f32 %v1436, %v1849
  %v1851 = vpop.f32.mrf.mxu0
  %v1852 = vadd.f32 %v1438, %v1851
  %1853 = vmatmul.bf16.gmra.mxu0 %v1107
  %v1854 = vpop.f32.mrf.mxu0
  %v1855 = vadd.f32 %v1441, %v1854
  %v1856 = vpop.f32.mrf.mxu0
  %v1857 = vadd.f32 %v1443, %v1856
  %1858 = vmatmul.bf16.gmra.mxu0 %v1110
  %v1859 = vpop.f32.mrf.mxu0
  %v1860 = vadd.f32 %v1446, %v1859
  %v1861 = vpop.f32.mrf.mxu0
  %v1862 = vadd.f32 %v1448, %v1861
  %1863 = vmatmul.bf16.gmra.mxu0 %v1113
  %v1864 = vpop.f32.mrf.mxu0
  %v1865 = vadd.f32 %v1451, %v1864
  %v1866 = vpop.f32.mrf.mxu0
  %v1867 = vadd.f32 %v1453, %v1866
  %1868 = vmatmul.bf16.gmra.mxu0 %v1116
  %v1869 = vpop.f32.mrf.mxu0
  %v1870 = vadd.f32 %v1456, %v1869
  %v1871 = vpop.f32.mrf.mxu0
  %v1872 = vadd.f32 %v1458, %v1871
  %1873 = vmatmul.bf16.gmra.mxu0 %v1119
  %v1874 = vpop.f32.mrf.mxu0
  %v1875 = vadd.f32 %v1461, %v1874
  %v1876 = vpop.f32.mrf.mxu0
  %v1877 = vadd.f32 %v1463, %v1876
  %1878 = vmatmul.bf16.gmra.mxu0 %v1122
  %v1879 = vpop.f32.mrf.mxu0
  %v1880 = vadd.f32 %v1466, %v1879
  %v1881 = vpop.f32.mrf.mxu0
  %v1882 = vadd.f32 %v1468, %v1881
  %1883 = vmatmul.bf16.gmra.mxu0 %v1125
  %v1884 = vpop.f32.mrf.mxu0
  %v1885 = vadd.f32 %v1471, %v1884
  %v1886 = vpop.f32.mrf.mxu0
  %v1887 = vadd.f32 %v1473, %v1886
  %1888 = vmatmul.bf16.gmra.mxu0 %v1128
  %v1889 = vpop.f32.mrf.mxu0
  %v1890 = vadd.f32 %v1476, %v1889
  %v1891 = vpop.f32.mrf.mxu0
  %v1892 = vadd.f32 %v1478, %v1891
  %1893 = vmatmul.bf16.gmra.mxu0 %v1131
  %v1894 = vpop.f32.mrf.mxu0
  %v1895 = vadd.f32 %v1481, %v1894
  %v1896 = vpop.f32.mrf.mxu0
  %v1897 = vadd.f32 %v1483, %v1896
  %1898 = vmatmul.bf16.gmra.mxu0 %v1134
  %v1899 = vpop.f32.mrf.mxu0
  %v1900 = vadd.f32 %v1486, %v1899
  %v1901 = vpop.f32.mrf.mxu0
  %v1902 = vadd.f32 %v1488, %v1901
  %1903 = vmatmul.bf16.gmra.mxu0 %v1137
  %v1904 = vpop.f32.mrf.mxu0
  %v1905 = vadd.f32 %v1491, %v1904
  %v1906 = vpop.f32.mrf.mxu0
  %v1907 = vadd.f32 %v1493, %v1906
  %1908 = vmatmul.bf16.gmra.mxu0 %v1140
  %v1909 = vpop.f32.mrf.mxu0
  %v1910 = vadd.f32 %v1496, %v1909
  %v1911 = vpop.f32.mrf.mxu0
  %v1912 = vadd.f32 %v1498, %v1911
  %1913 = vmatmul.bf16.gmra.mxu0 %v1143
  %v1914 = vpop.f32.mrf.mxu0
  %v1915 = vadd.f32 %v1501, %v1914
  %v1916 = vpop.f32.mrf.mxu0
  %v1917 = vadd.f32 %v1503, %v1916
  %1918 = vmatmul.bf16.gmra.mxu0 %v1146
  %v1919 = vpop.f32.mrf.mxu0
  %v1920 = vadd.f32 %v1506, %v1919
  %v1921 = vpop.f32.mrf.mxu0
  %v1922 = vadd.f32 %v1508, %v1921
  %1923 = vmatmul.bf16.gmra.mxu0 %v1149
  %v1924 = vpop.f32.mrf.mxu0
  %v1925 = vadd.f32 %v1511, %v1924
  %v1926 = vpop.f32.mrf.mxu0
  %v1927 = vadd.f32 %v1513, %v1926
  %1928 = vmatmul.bf16.gmra.mxu0 %v1152
  %v1929 = vpop.f32.mrf.mxu0
  %v1930 = vadd.f32 %v1516, %v1929
  %v1931 = vpop.f32.mrf.mxu0
  %v1932 = vadd.f32 %v1518, %v1931
  %1933 = vmatmul.bf16.gmra.mxu0 %v1155
  %v1934 = vpop.f32.mrf.mxu0
  %v1935 = vadd.f32 %v1521, %v1934
  %v1936 = vpop.f32.mrf.mxu0
  %v1937 = vadd.f32 %v1523, %v1936
  %1938 = vmatmul.bf16.gmra.mxu0 %v1158
  %v1939 = vpop.f32.mrf.mxu0
  %v1940 = vadd.f32 %v1526, %v1939
  %v1941 = vpop.f32.mrf.mxu0
  %v1942 = vadd.f32 %v1528, %v1941
  %1943 = vmatmul.bf16.gmra.mxu0 %v1161
  %v1944 = vpop.f32.mrf.mxu0
  %v1945 = vadd.f32 %v1531, %v1944
  %v1946 = vpop.f32.mrf.mxu0
  %v1947 = vadd.f32 %v1533, %v1946
  %1948 = vmatmul.bf16.gmra.mxu0 %v1164
  %v1949 = vpop.f32.mrf.mxu0
  %v1950 = vadd.f32 %v1536, %v1949
  %v1951 = vpop.f32.mrf.mxu0
  %v1952 = vadd.f32 %v1538, %v1951
  %1953 = vmatmul.bf16.gmra.mxu0 %v1167
  %v1954 = vpop.f32.mrf.mxu0
  %v1955 = vadd.f32 %v1541, %v1954
  %v1956 = vpop.f32.mrf.mxu0
  %v1957 = vadd.f32 %v1543, %v1956
  %1958 = vmatmul.bf16.gmra.mxu0 %v1170
  %v1959 = vpop.f32.mrf.mxu0
  %v1960 = vadd.f32 %v1546, %v1959
  %v1961 = vpop.f32.mrf.mxu0
  %v1962 = vadd.f32 %v1548, %v1961
  %1963 = vmatmul.bf16.gmra.mxu0 %v1173
  %v1964 = vpop.f32.mrf.mxu0
  %v1965 = vadd.f32 %v1551, %v1964
  %v1966 = vpop.f32.mrf.mxu0
  %v1967 = vadd.f32 %v1553, %v1966
  %1968 = vmatmul.bf16.gmra.mxu0 %v1176
  %v1969 = vpop.f32.mrf.mxu0
  %v1970 = vadd.f32 %v1556, %v1969
  %v1971 = vpop.f32.mrf.mxu0
  %v1972 = vadd.f32 %v1558, %v1971
  %1973 = vmatmul.bf16.gmra.mxu0 %v1179
  %v1974 = vpop.f32.mrf.mxu0
  %v1975 = vadd.f32 %v1561, %v1974
  %v1976 = vpop.f32.mrf.mxu0
  %v1977 = vadd.f32 %v1563, %v1976
  %1978 = vmatmul.bf16.gmra.mxu0 %v1182
  %v1979 = vpop.f32.mrf.mxu0
  %v1980 = vadd.f32 %v1566, %v1979
  %v1981 = vpop.f32.mrf.mxu0
  %v1982 = vadd.f32 %v1568, %v1981
  %1983 = vmatmul.bf16.gmra.mxu0 %v1185
  %v1984 = vpop.f32.mrf.mxu0
  %v1985 = vadd.f32 %v1571, %v1984
  %v1986 = vpop.f32.mrf.mxu0
  %v1987 = vadd.f32 %v1573, %v1986
  %1988 = vmatmul.bf16.gmra.mxu0 %v1188
  %v1989 = vpop.f32.mrf.mxu0
  %v1990 = vadd.f32 %v1576, %v1989
  %v1991 = vpop.f32.mrf.mxu0
  %v1992 = vadd.f32 %v1578, %v1991
  %1993 = vmatmul.bf16.gmra.mxu0 %v1191
  %v1994 = vpop.f32.mrf.mxu0
  %v1995 = vadd.f32 %v1581, %v1994
  %v1996 = vpop.f32.mrf.mxu0
  %v1997 = vadd.f32 %v1583, %v1996
  %1998 = vmatmul.bf16.gmra.mxu0 %v1194
  %v1999 = vpop.f32.mrf.mxu0
  %v2000 = vadd.f32 %v1586, %v1999
  %v2001 = vpop.f32.mrf.mxu0
  %v2002 = vadd.f32 %v1588, %v2001
  %2003 = vmatmul.bf16.gmra.mxu0 %v1197
  %v2004 = vpop.f32.mrf.mxu0
  %v2005 = vadd.f32 %v1591, %v2004
  %v2006 = vpop.f32.mrf.mxu0
  %v2007 = vadd.f32 %v1593, %v2006
  %2008 = vmatmul.bf16.gmra.mxu0 %v1200
  %v2009 = vpop.f32.mrf.mxu0
  %v2010 = vadd.f32 %v1596, %v2009
  %v2011 = vpop.f32.mrf.mxu0
  %v2012 = vadd.f32 %v1598, %v2011
  %2013 = vmatmul.bf16.gmra.mxu0 %v1203
  %v2014 = vpop.f32.mrf.mxu0
  %v2015 = vadd.f32 %v1601, %v2014
  %v2016 = vpop.f32.mrf.mxu0
  %v2017 = vadd.f32 %v1603, %v2016
  %2018 = vmatmul.bf16.gmra.mxu0 %v1206
  %v2019 = vpop.f32.mrf.mxu0
  %v2020 = vadd.f32 %v1606, %v2019
  %v2021 = vpop.f32.mrf.mxu0
  %v2022 = vadd.f32 %v1608, %v2021
  %2023 = vmatmul.bf16.gmra.mxu0 %v1209
  %v2024 = vpop.f32.mrf.mxu0
  %v2025 = vadd.f32 %v1611, %v2024
  %v2026 = vpop.f32.mrf.mxu0
  %v2027 = vadd.f32 %v1613, %v2026
  %2028 = vmatmul.bf16.gmra.mxu0 %v1212
  %v2029 = vpop.f32.mrf.mxu0
  %v2030 = vadd.f32 %v1616, %v2029
  %v2031 = vpop.f32.mrf.mxu0
  %v2032 = vadd.f32 %v1618, %v2031
  %2033 = vmatmul.bf16.gmra.mxu0 %v1215
  %v2034 = vpop.f32.mrf.mxu0
  %v2035 = vadd.f32 %v1621, %v2034
  %v2036 = vpop.f32.mrf.mxu0
  %v2037 = vadd.f32 %v1623, %v2036
  %2038 = vmatmul.bf16.gmra.mxu0 %v1218
  %v2039 = vpop.f32.mrf.mxu0
  %v2040 = vadd.f32 %v1626, %v2039
  %v2041 = vpop.f32.mrf.mxu0
  %v2042 = vadd.f32 %v1628, %v2041
  %2043 = vmatmul.bf16.gmra.mxu0 %v1221
  %v2044 = vpop.f32.mrf.mxu0
  %v2045 = vadd.f32 %v1631, %v2044
  %v2046 = vpop.f32.mrf.mxu0
  %v2047 = vadd.f32 %v1633, %v2046
  %2048 = vmatmul.bf16.gmra.mxu0 %v1224
  %v2049 = vpop.f32.mrf.mxu0
  %v2050 = vadd.f32 %v1636, %v2049
  %v2051 = vpop.f32.mrf.mxu0
  %v2052 = vadd.f32 %v1638, %v2051
  %2053 = vdwg.mxu0
  %v2054 = vsub.f32 0.0, %v1650
  %v2055 = vsub.f32 0.0, %v1652
  %v2056 = vsub.f32 0.0, %v1655
  %v2057 = vsub.f32 0.0, %v1657
  %v2058 = vsub.f32 0.0, %v1660
  %v2059 = vsub.f32 0.0, %v1662
  %v2060 = vsub.f32 0.0, %v1665
  %v2061 = vsub.f32 0.0, %v1667
  %v2062 = vsub.f32 0.0, %v1670
  %v2063 = vsub.f32 0.0, %v1672
  %v2064 = vsub.f32 0.0, %v1675
  %v2065 = vsub.f32 0.0, %v1677
  %v2066 = vsub.f32 0.0, %v1680
  %v2067 = vsub.f32 0.0, %v1682
  %v2068 = vsub.f32 0.0, %v1685
  %v2069 = vsub.f32 0.0, %v1687
  %v2070 = vsub.f32 0.0, %v1690
  %v2071 = vsub.f32 0.0, %v1692
  %v2072 = vsub.f32 0.0, %v1695
  %v2073 = vsub.f32 0.0, %v1697
  %v2074 = vsub.f32 0.0, %v1700
  %v2075 = vsub.f32 0.0, %v1702
  %v2076 = vsub.f32 0.0, %v1705
  %v2077 = vsub.f32 0.0, %v1707
  %v2078 = vsub.f32 0.0, %v1710
  %v2079 = vsub.f32 0.0, %v1712
  %v2080 = vsub.f32 0.0, %v1715
  %v2081 = vsub.f32 0.0, %v1717
  %v2082 = vsub.f32 0.0, %v1720
  %v2083 = vsub.f32 0.0, %v1722
  %v2084 = vsub.f32 0.0, %v1725
  %v2085 = vsub.f32 0.0, %v1727
  %v2086 = vsub.f32 0.0, %v1730
  %v2087 = vsub.f32 0.0, %v1732
  %v2088 = vsub.f32 0.0, %v1735
  %v2089 = vsub.f32 0.0, %v1737
  %v2090 = vsub.f32 0.0, %v1740
  %v2091 = vsub.f32 0.0, %v1742
  %v2092 = vsub.f32 0.0, %v1745
  %v2093 = vsub.f32 0.0, %v1747
  %v2094 = vsub.f32 0.0, %v1750
  %v2095 = vsub.f32 0.0, %v1752
  %v2096 = vsub.f32 0.0, %v1755
  %v2097 = vsub.f32 0.0, %v1757
  %v2098 = vsub.f32 0.0, %v1760
  %v2099 = vsub.f32 0.0, %v1762
  %v2100 = vsub.f32 0.0, %v1765
  %v2101 = vsub.f32 0.0, %v1767
  %v2102 = vsub.f32 0.0, %v1770
  %v2103 = vsub.f32 0.0, %v1772
  %v2104 = vsub.f32 0.0, %v1775
  %v2105 = vsub.f32 0.0, %v1777
  %v2106 = vsub.f32 0.0, %v1780
  %v2107 = vsub.f32 0.0, %v1782
  %v2108 = vsub.f32 0.0, %v1785
  %v2109 = vsub.f32 0.0, %v1787
  %v2110 = vsub.f32 0.0, %v1790
  %v2111 = vsub.f32 0.0, %v1792
  %v2112 = vsub.f32 0.0, %v1795
  %v2113 = vsub.f32 0.0, %v1797
  %v2114 = vsub.f32 0.0, %v1800
  %v2115 = vsub.f32 0.0, %v1802
  %v2116 = vsub.f32 0.0, %v1805
  %v2117 = vsub.f32 0.0, %v1807
  %v2118 = vsub.f32 0.0, %v1810
  %v2119 = vsub.f32 0.0, %v1812
  %v2120 = vsub.f32 0.0, %v1815
  %v2121 = vsub.f32 0.0, %v1817
  %v2122 = vsub.f32 0.0, %v1820
  %v2123 = vsub.f32 0.0, %v1822
  %v2124 = vsub.f32 0.0, %v1825
  %v2125 = vsub.f32 0.0, %v1827
  %v2126 = vsub.f32 0.0, %v1830
  %v2127 = vsub.f32 0.0, %v1832
  %v2128 = vsub.f32 0.0, %v1835
  %v2129 = vsub.f32 0.0, %v1837
  %v2130 = vsub.f32 0.0, %v1840
  %v2131 = vsub.f32 0.0, %v1842
  %v2132 = vsub.f32 0.0, %v1845
  %v2133 = vsub.f32 0.0, %v1847
  %v2134 = vsub.f32 0.0, %v1850
  %v2135 = vsub.f32 0.0, %v1852
  %v2136 = vsub.f32 0.0, %v1855
  %v2137 = vsub.f32 0.0, %v1857
  %v2138 = vsub.f32 0.0, %v1860
  %v2139 = vsub.f32 0.0, %v1862
  %v2140 = vsub.f32 0.0, %v1865
  %v2141 = vsub.f32 0.0, %v1867
  %v2142 = vsub.f32 0.0, %v1870
  %v2143 = vsub.f32 0.0, %v1872
  %v2144 = vsub.f32 0.0, %v1875
  %v2145 = vsub.f32 0.0, %v1877
  %v2146 = vsub.f32 0.0, %v1880
  %v2147 = vsub.f32 0.0, %v1882
  %v2148 = vsub.f32 0.0, %v1885
  %v2149 = vsub.f32 0.0, %v1887
  %v2150 = vsub.f32 0.0, %v1890
  %v2151 = vsub.f32 0.0, %v1892
  %v2152 = vsub.f32 0.0, %v1895
  %v2153 = vsub.f32 0.0, %v1897
  %v2154 = vsub.f32 0.0, %v1900
  %v2155 = vsub.f32 0.0, %v1902
  %v2156 = vsub.f32 0.0, %v1905
  %v2157 = vsub.f32 0.0, %v1907
  %v2158 = vsub.f32 0.0, %v1910
  %v2159 = vsub.f32 0.0, %v1912
  %v2160 = vsub.f32 0.0, %v1915
  %v2161 = vsub.f32 0.0, %v1917
  %v2162 = vsub.f32 0.0, %v1920
  %v2163 = vsub.f32 0.0, %v1922
  %v2164 = vsub.f32 0.0, %v1925
  %v2165 = vsub.f32 0.0, %v1927
  %v2166 = vsub.f32 0.0, %v1930
  %v2167 = vsub.f32 0.0, %v1932
  %v2168 = vsub.f32 0.0, %v1935
  %v2169 = vsub.f32 0.0, %v1937
  %v2170 = vsub.f32 0.0, %v1940
  %v2171 = vsub.f32 0.0, %v1942
  %v2172 = vsub.f32 0.0, %v1945
  %v2173 = vsub.f32 0.0, %v1947
  %v2174 = vsub.f32 0.0, %v1950
  %v2175 = vsub.f32 0.0, %v1952
  %v2176 = vsub.f32 0.0, %v1955
  %v2177 = vsub.f32 0.0, %v1957
  %v2178 = vsub.f32 0.0, %v1960
  %v2179 = vsub.f32 0.0, %v1962
  %v2180 = vsub.f32 0.0, %v1965
  %v2181 = vsub.f32 0.0, %v1967
  %v2182 = vsub.f32 0.0, %v1970
  %v2183 = vsub.f32 0.0, %v1972
  %v2184 = vsub.f32 0.0, %v1975
  %v2185 = vsub.f32 0.0, %v1977
  %v2186 = vsub.f32 0.0, %v1980
  %v2187 = vsub.f32 0.0, %v1982
  %v2188 = vsub.f32 0.0, %v1985
  %v2189 = vsub.f32 0.0, %v1987
  %v2190 = vsub.f32 0.0, %v1990
  %v2191 = vsub.f32 0.0, %v1992
  %v2192 = vsub.f32 0.0, %v1995
  %v2193 = vsub.f32 0.0, %v1997
  %v2194 = vsub.f32 0.0, %v2000
  %v2195 = vsub.f32 0.0, %v2002
  %v2196 = vsub.f32 0.0, %v2005
  %v2197 = vsub.f32 0.0, %v2007
  %v2198 = vsub.f32 0.0, %v2010
  %v2199 = vsub.f32 0.0, %v2012
  %v2200 = vsub.f32 0.0, %v2015
  %v2201 = vsub.f32 0.0, %v2017
  %v2202 = vsub.f32 0.0, %v2020
  %v2203 = vsub.f32 0.0, %v2022
  %v2204 = vsub.f32 0.0, %v2025
  %v2205 = vsub.f32 0.0, %v2027
  %v2206 = vsub.f32 0.0, %v2030
  %v2207 = vsub.f32 0.0, %v2032
  %v2208 = vsub.f32 0.0, %v2035
  %v2209 = vsub.f32 0.0, %v2037
  %v2210 = vsub.f32 0.0, %v2040
  %v2211 = vsub.f32 0.0, %v2042
  %v2212 = vsub.f32 0.0, %v2045
  %v2213 = vsub.f32 0.0, %v2047
  %v2214 = vsub.f32 0.0, %v2050
  %v2215 = vsub.f32 0.0, %v2052
  %v2216 = vmul.f32 %v2054, 1.442695
  %v2217 = vpow.pop %v2216
  %v2218 = vmul.f32 %v2055, 1.442695
  %v2219 = vpow.pop %v2218
  %v2220 = vmul.f32 %v2056, 1.442695
  %v2221 = vpow.pop %v2220
  %v2222 = vmul.f32 %v2057, 1.442695
  %v2223 = vpow.pop %v2222
  %v2224 = vmul.f32 %v2058, 1.442695
  %v2225 = vpow.pop %v2224
  %v2226 = vmul.f32 %v2059, 1.442695
  %v2227 = vpow.pop %v2226
  %v2228 = vmul.f32 %v2060, 1.442695
  %v2229 = vpow.pop %v2228
  %v2230 = vmul.f32 %v2061, 1.442695
  %v2231 = vpow.pop %v2230
  %v2232 = vmul.f32 %v2062, 1.442695
  %v2233 = vpow.pop %v2232
  %v2234 = vmul.f32 %v2063, 1.442695
  %v2235 = vpow.pop %v2234
  %v2236 = vmul.f32 %v2064, 1.442695
  %v2237 = vpow.pop %v2236
  %v2238 = vmul.f32 %v2065, 1.442695
  %v2239 = vpow.pop %v2238
  %v2240 = vmul.f32 %v2066, 1.442695
  %v2241 = vpow.pop %v2240
  %v2242 = vmul.f32 %v2067, 1.442695
  %v2243 = vpow.pop %v2242
  %v2244 = vmul.f32 %v2068, 1.442695
  %v2245 = vpow.pop %v2244
  %v2246 = vmul.f32 %v2069, 1.442695
  %v2247 = vpow.pop %v2246
  %v2248 = vmul.f32 %v2070, 1.442695
  %v2249 = vpow.pop %v2248
  %v2250 = vmul.f32 %v2071, 1.442695
  %v2251 = vpow.pop %v2250
  %v2252 = vmul.f32 %v2072, 1.442695
  %v2253 = vpow.pop %v2252
  %v2254 = vmul.f32 %v2073, 1.442695
  %v2255 = vpow.pop %v2254
  %v2256 = vmul.f32 %v2074, 1.442695
  %v2257 = vpow.pop %v2256
  %v2258 = vmul.f32 %v2075, 1.442695
  %v2259 = vpow.pop %v2258
  %v2260 = vmul.f32 %v2076, 1.442695
  %v2261 = vpow.pop %v2260
  %v2262 = vmul.f32 %v2077, 1.442695
  %v2263 = vpow.pop %v2262
  %v2264 = vmul.f32 %v2078, 1.442695
  %v2265 = vpow.pop %v2264
  %v2266 = vmul.f32 %v2079, 1.442695
  %v2267 = vpow.pop %v2266
  %v2268 = vmul.f32 %v2080, 1.442695
  %v2269 = vpow.pop %v2268
  %v2270 = vmul.f32 %v2081, 1.442695
  %v2271 = vpow.pop %v2270
  %v2272 = vmul.f32 %v2082, 1.442695
  %v2273 = vpow.pop %v2272
  %v2274 = vmul.f32 %v2083, 1.442695
  %v2275 = vpow.pop %v2274
  %v2276 = vmul.f32 %v2084, 1.442695
  %v2277 = vpow.pop %v2276
  %v2278 = vmul.f32 %v2085, 1.442695
  %v2279 = vpow.pop %v2278
  %v2280 = vmul.f32 %v2086, 1.442695
  %v2281 = vpow.pop %v2280
  %v2282 = vmul.f32 %v2087, 1.442695
  %v2283 = vpow.pop %v2282
  %v2284 = vmul.f32 %v2088, 1.442695
  %v2285 = vpow.pop %v2284
  %v2286 = vmul.f32 %v2089, 1.442695
  %v2287 = vpow.pop %v2286
  %v2288 = vmul.f32 %v2090, 1.442695
  %v2289 = vpow.pop %v2288
  %v2290 = vmul.f32 %v2091, 1.442695
  %v2291 = vpow.pop %v2290
  %v2292 = vmul.f32 %v2092, 1.442695
  %v2293 = vpow.pop %v2292
  %v2294 = vmul.f32 %v2093, 1.442695
  %v2295 = vpow.pop %v2294
  %v2296 = vmul.f32 %v2094, 1.442695
  %v2297 = vpow.pop %v2296
  %v2298 = vmul.f32 %v2095, 1.442695
  %v2299 = vpow.pop %v2298
  %v2300 = vmul.f32 %v2096, 1.442695
  %v2301 = vpow.pop %v2300
  %v2302 = vmul.f32 %v2097, 1.442695
  %v2303 = vpow.pop %v2302
  %v2304 = vmul.f32 %v2098, 1.442695
  %v2305 = vpow.pop %v2304
  %v2306 = vmul.f32 %v2099, 1.442695
  %v2307 = vpow.pop %v2306
  %v2308 = vmul.f32 %v2100, 1.442695
  %v2309 = vpow.pop %v2308
  %v2310 = vmul.f32 %v2101, 1.442695
  %v2311 = vpow.pop %v2310
  %v2312 = vmul.f32 %v2102, 1.442695
  %v2313 = vpow.pop %v2312
  %v2314 = vmul.f32 %v2103, 1.442695
  %v2315 = vpow.pop %v2314
  %v2316 = vmul.f32 %v2104, 1.442695
  %v2317 = vpow.pop %v2316
  %v2318 = vmul.f32 %v2105, 1.442695
  %v2319 = vpow.pop %v2318
  %v2320 = vmul.f32 %v2106, 1.442695
  %v2321 = vpow.pop %v2320
  %v2322 = vmul.f32 %v2107, 1.442695
  %v2323 = vpow.pop %v2322
  %v2324 = vmul.f32 %v2108, 1.442695
  %v2325 = vpow.pop %v2324
  %v2326 = vmul.f32 %v2109, 1.442695
  %v2327 = vpow.pop %v2326
  %v2328 = vmul.f32 %v2110, 1.442695
  %v2329 = vpow.pop %v2328
  %v2330 = vmul.f32 %v2111, 1.442695
  %v2331 = vpow.pop %v2330
  %v2332 = vmul.f32 %v2112, 1.442695
  %v2333 = vpow.pop %v2332
  %v2334 = vmul.f32 %v2113, 1.442695
  %v2335 = vpow.pop %v2334
  %v2336 = vmul.f32 %v2114, 1.442695
  %v2337 = vpow.pop %v2336
  %v2338 = vmul.f32 %v2115, 1.442695
  %v2339 = vpow.pop %v2338
  %v2340 = vmul.f32 %v2116, 1.442695
  %v2341 = vpow.pop %v2340
  %v2342 = vmul.f32 %v2117, 1.442695
  %v2343 = vpow.pop %v2342
  %v2344 = vmul.f32 %v2118, 1.442695
  %v2345 = vpow.pop %v2344
  %v2346 = vmul.f32 %v2119, 1.442695
  %v2347 = vpow.pop %v2346
  %v2348 = vmul.f32 %v2120, 1.442695
  %v2349 = vpow.pop %v2348
  %v2350 = vmul.f32 %v2121, 1.442695
  %v2351 = vpow.pop %v2350
  %v2352 = vmul.f32 %v2122, 1.442695
  %v2353 = vpow.pop %v2352
  %v2354 = vmul.f32 %v2123, 1.442695
  %v2355 = vpow.pop %v2354
  %v2356 = vmul.f32 %v2124, 1.442695
  %v2357 = vpow.pop %v2356
  %v2358 = vmul.f32 %v2125, 1.442695
  %v2359 = vpow.pop %v2358
  %v2360 = vmul.f32 %v2126, 1.442695
  %v2361 = vpow.pop %v2360
  %v2362 = vmul.f32 %v2127, 1.442695
  %v2363 = vpow.pop %v2362
  %v2364 = vmul.f32 %v2128, 1.442695
  %v2365 = vpow.pop %v2364
  %v2366 = vmul.f32 %v2129, 1.442695
  %v2367 = vpow.pop %v2366
  %v2368 = vmul.f32 %v2130, 1.442695
  %v2369 = vpow.pop %v2368
  %v2370 = vmul.f32 %v2131, 1.442695
  %v2371 = vpow.pop %v2370
  %v2372 = vmul.f32 %v2132, 1.442695
  %v2373 = vpow.pop %v2372
  %v2374 = vmul.f32 %v2133, 1.442695
  %v2375 = vpow.pop %v2374
  %v2376 = vmul.f32 %v2134, 1.442695
  %v2377 = vpow.pop %v2376
  %v2378 = vmul.f32 %v2135, 1.442695
  %v2379 = vpow.pop %v2378
  %v2380 = vmul.f32 %v2136, 1.442695
  %v2381 = vpow.pop %v2380
  %v2382 = vmul.f32 %v2137, 1.442695
  %v2383 = vpow.pop %v2382
  %v2384 = vmul.f32 %v2138, 1.442695
  %v2385 = vpow.pop %v2384
  %v2386 = vmul.f32 %v2139, 1.442695
  %v2387 = vpow.pop %v2386
  %v2388 = vmul.f32 %v2140, 1.442695
  %v2389 = vpow.pop %v2388
  %v2390 = vmul.f32 %v2141, 1.442695
  %v2391 = vpow.pop %v2390
  %v2392 = vmul.f32 %v2142, 1.442695
  %v2393 = vpow.pop %v2392
  %v2394 = vmul.f32 %v2143, 1.442695
  %v2395 = vpow.pop %v2394
  %v2396 = vmul.f32 %v2144, 1.442695
  %v2397 = vpow.pop %v2396
  %v2398 = vmul.f32 %v2145, 1.442695
  %v2399 = vpow.pop %v2398
  %v2400 = vmul.f32 %v2146, 1.442695
  %v2401 = vpow.pop %v2400
  %v2402 = vmul.f32 %v2147, 1.442695
  %v2403 = vpow.pop %v2402
  %v2404 = vmul.f32 %v2148, 1.442695
  %v2405 = vpow.pop %v2404
  %v2406 = vmul.f32 %v2149, 1.442695
  %v2407 = vpow.pop %v2406
  %v2408 = vmul.f32 %v2150, 1.442695
  %v2409 = vpow.pop %v2408
  %v2410 = vmul.f32 %v2151, 1.442695
  %v2411 = vpow.pop %v2410
  %v2412 = vmul.f32 %v2152, 1.442695
  %v2413 = vpow.pop %v2412
  %v2414 = vmul.f32 %v2153, 1.442695
  %v2415 = vpow.pop %v2414
  %v2416 = vmul.f32 %v2154, 1.442695
  %v2417 = vpow.pop %v2416
  %v2418 = vmul.f32 %v2155, 1.442695
  %v2419 = vpow.pop %v2418
  %v2420 = vmul.f32 %v2156, 1.442695
  %v2421 = vpow.pop %v2420
  %v2422 = vmul.f32 %v2157, 1.442695
  %v2423 = vpow.pop %v2422
  %v2424 = vmul.f32 %v2158, 1.442695
  %v2425 = vpow.pop %v2424
  %v2426 = vmul.f32 %v2159, 1.442695
  %v2427 = vpow.pop %v2426
  %v2428 = vmul.f32 %v2160, 1.442695
  %v2429 = vpow.pop %v2428
  %v2430 = vmul.f32 %v2161, 1.442695
  %v2431 = vpow.pop %v2430
  %v2432 = vmul.f32 %v2162, 1.442695
  %v2433 = vpow.pop %v2432
  %v2434 = vmul.f32 %v2163, 1.442695
  %v2435 = vpow.pop %v2434
  %v2436 = vmul.f32 %v2164, 1.442695
  %v2437 = vpow.pop %v2436
  %v2438 = vmul.f32 %v2165, 1.442695
  %v2439 = vpow.pop %v2438
  %v2440 = vmul.f32 %v2166, 1.442695
  %v2441 = vpow.pop %v2440
  %v2442 = vmul.f32 %v2167, 1.442695
  %v2443 = vpow.pop %v2442
  %v2444 = vmul.f32 %v2168, 1.442695
  %v2445 = vpow.pop %v2444
  %v2446 = vmul.f32 %v2169, 1.442695
  %v2447 = vpow.pop %v2446
  %v2448 = vmul.f32 %v2170, 1.442695
  %v2449 = vpow.pop %v2448
  %v2450 = vmul.f32 %v2171, 1.442695
  %v2451 = vpow.pop %v2450
  %v2452 = vmul.f32 %v2172, 1.442695
  %v2453 = vpow.pop %v2452
  %v2454 = vmul.f32 %v2173, 1.442695
  %v2455 = vpow.pop %v2454
  %v2456 = vmul.f32 %v2174, 1.442695
  %v2457 = vpow.pop %v2456
  %v2458 = vmul.f32 %v2175, 1.442695
  %v2459 = vpow.pop %v2458
  %v2460 = vmul.f32 %v2176, 1.442695
  %v2461 = vpow.pop %v2460
  %v2462 = vmul.f32 %v2177, 1.442695
  %v2463 = vpow.pop %v2462
  %v2464 = vmul.f32 %v2178, 1.442695
  %v2465 = vpow.pop %v2464
  %v2466 = vmul.f32 %v2179, 1.442695
  %v2467 = vpow.pop %v2466
  %v2468 = vmul.f32 %v2180, 1.442695
  %v2469 = vpow.pop %v2468
  %v2470 = vmul.f32 %v2181, 1.442695
  %v2471 = vpow.pop %v2470
  %v2472 = vmul.f32 %v2182, 1.442695
  %v2473 = vpow.pop %v2472
  %v2474 = vmul.f32 %v2183, 1.442695
  %v2475 = vpow.pop %v2474
  %v2476 = vmul.f32 %v2184, 1.442695
  %v2477 = vpow.pop %v2476
  %v2478 = vmul.f32 %v2185, 1.442695
  %v2479 = vpow.pop %v2478
  %v2480 = vmul.f32 %v2186, 1.442695
  %v2481 = vpow.pop %v2480
  %v2482 = vmul.f32 %v2187, 1.442695
  %v2483 = vpow.pop %v2482
  %v2484 = vmul.f32 %v2188, 1.442695
  %v2485 = vpow.pop %v2484
  %v2486 = vmul.f32 %v2189, 1.442695
  %v2487 = vpow.pop %v2486
  %v2488 = vmul.f32 %v2190, 1.442695
  %v2489 = vpow.pop %v2488
  %v2490 = vmul.f32 %v2191, 1.442695
  %v2491 = vpow.pop %v2490
  %v2492 = vmul.f32 %v2192, 1.442695
  %v2493 = vpow.pop %v2492
  %v2494 = vmul.f32 %v2193, 1.442695
  %v2495 = vpow.pop %v2494
  %v2496 = vmul.f32 %v2194, 1.442695
  %v2497 = vpow.pop %v2496
  %v2498 = vmul.f32 %v2195, 1.442695
  %v2499 = vpow.pop %v2498
  %v2500 = vmul.f32 %v2196, 1.442695
  %v2501 = vpow.pop %v2500
  %v2502 = vmul.f32 %v2197, 1.442695
  %v2503 = vpow.pop %v2502
  %v2504 = vmul.f32 %v2198, 1.442695
  %v2505 = vpow.pop %v2504
  %v2506 = vmul.f32 %v2199, 1.442695
  %v2507 = vpow.pop %v2506
  %v2508 = vmul.f32 %v2200, 1.442695
  %v2509 = vpow.pop %v2508
  %v2510 = vmul.f32 %v2201, 1.442695
  %v2511 = vpow.pop %v2510
  %v2512 = vmul.f32 %v2202, 1.442695
  %v2513 = vpow.pop %v2512
  %v2514 = vmul.f32 %v2203, 1.442695
  %v2515 = vpow.pop %v2514
  %v2516 = vmul.f32 %v2204, 1.442695
  %v2517 = vpow.pop %v2516
  %v2518 = vmul.f32 %v2205, 1.442695
  %v2519 = vpow.pop %v2518
  %v2520 = vmul.f32 %v2206, 1.442695
  %v2521 = vpow.pop %v2520
  %v2522 = vmul.f32 %v2207, 1.442695
  %v2523 = vpow.pop %v2522
  %v2524 = vmul.f32 %v2208, 1.442695
  %v2525 = vpow.pop %v2524
  %v2526 = vmul.f32 %v2209, 1.442695
  %v2527 = vpow.pop %v2526
  %v2528 = vmul.f32 %v2210, 1.442695
  %v2529 = vpow.pop %v2528
  %v2530 = vmul.f32 %v2211, 1.442695
  %v2531 = vpow.pop %v2530
  %v2532 = vmul.f32 %v2212, 1.442695
  %v2533 = vpow.pop %v2532
  %v2534 = vmul.f32 %v2213, 1.442695
  %v2535 = vpow.pop %v2534
  %v2536 = vmul.f32 %v2214, 1.442695
  %v2537 = vpow.pop %v2536
  %v2538 = vmul.f32 %v2215, 1.442695
  %v2539 = vpow.pop %v2538
  %v2540 = vadd.f32 %v2217, 1.0
  %v2541 = vadd.f32 %v2219, 1.0
  %v2542 = vadd.f32 %v2221, 1.0
  %v2543 = vadd.f32 %v2223, 1.0
  %v2544 = vadd.f32 %v2225, 1.0
  %v2545 = vadd.f32 %v2227, 1.0
  %v2546 = vadd.f32 %v2229, 1.0
  %v2547 = vadd.f32 %v2231, 1.0
  %v2548 = vadd.f32 %v2233, 1.0
  %v2549 = vadd.f32 %v2235, 1.0
  %v2550 = vadd.f32 %v2237, 1.0
  %v2551 = vadd.f32 %v2239, 1.0
  %v2552 = vadd.f32 %v2241, 1.0
  %v2553 = vadd.f32 %v2243, 1.0
  %v2554 = vadd.f32 %v2245, 1.0
  %v2555 = vadd.f32 %v2247, 1.0
  %v2556 = vadd.f32 %v2249, 1.0
  %v2557 = vadd.f32 %v2251, 1.0
  %v2558 = vadd.f32 %v2253, 1.0
  %v2559 = vadd.f32 %v2255, 1.0
  %v2560 = vadd.f32 %v2257, 1.0
  %v2561 = vadd.f32 %v2259, 1.0
  %v2562 = vadd.f32 %v2261, 1.0
  %v2563 = vadd.f32 %v2263, 1.0
  %v2564 = vadd.f32 %v2265, 1.0
  %v2565 = vadd.f32 %v2267, 1.0
  %v2566 = vadd.f32 %v2269, 1.0
  %v2567 = vadd.f32 %v2271, 1.0
  %v2568 = vadd.f32 %v2273, 1.0
  %v2569 = vadd.f32 %v2275, 1.0
  %v2570 = vadd.f32 %v2277, 1.0
  %v2571 = vadd.f32 %v2279, 1.0
  %v2572 = vadd.f32 %v2281, 1.0
  %v2573 = vadd.f32 %v2283, 1.0
  %v2574 = vadd.f32 %v2285, 1.0
  %v2575 = vadd.f32 %v2287, 1.0
  %v2576 = vadd.f32 %v2289, 1.0
  %v2577 = vadd.f32 %v2291, 1.0
  %v2578 = vadd.f32 %v2293, 1.0
  %v2579 = vadd.f32 %v2295, 1.0
  %v2580 = vadd.f32 %v2297, 1.0
  %v2581 = vadd.f32 %v2299, 1.0
  %v2582 = vadd.f32 %v2301, 1.0
  %v2583 = vadd.f32 %v2303, 1.0
  %v2584 = vadd.f32 %v2305, 1.0
  %v2585 = vadd.f32 %v2307, 1.0
  %v2586 = vadd.f32 %v2309, 1.0
  %v2587 = vadd.f32 %v2311, 1.0
  %v2588 = vadd.f32 %v2313, 1.0
  %v2589 = vadd.f32 %v2315, 1.0
  %v2590 = vadd.f32 %v2317, 1.0
  %v2591 = vadd.f32 %v2319, 1.0
  %v2592 = vadd.f32 %v2321, 1.0
  %v2593 = vadd.f32 %v2323, 1.0
  %v2594 = vadd.f32 %v2325, 1.0
  %v2595 = vadd.f32 %v2327, 1.0
  %v2596 = vadd.f32 %v2329, 1.0
  %v2597 = vadd.f32 %v2331, 1.0
  %v2598 = vadd.f32 %v2333, 1.0
  %v2599 = vadd.f32 %v2335, 1.0
  %v2600 = vadd.f32 %v2337, 1.0
  %v2601 = vadd.f32 %v2339, 1.0
  %v2602 = vadd.f32 %v2341, 1.0
  %v2603 = vadd.f32 %v2343, 1.0
  %v2604 = vadd.f32 %v2345, 1.0
  %v2605 = vadd.f32 %v2347, 1.0
  %v2606 = vadd.f32 %v2349, 1.0
  %v2607 = vadd.f32 %v2351, 1.0
  %v2608 = vadd.f32 %v2353, 1.0
  %v2609 = vadd.f32 %v2355, 1.0
  %v2610 = vadd.f32 %v2357, 1.0
  %v2611 = vadd.f32 %v2359, 1.0
  %v2612 = vadd.f32 %v2361, 1.0
  %v2613 = vadd.f32 %v2363, 1.0
  %v2614 = vadd.f32 %v2365, 1.0
  %v2615 = vadd.f32 %v2367, 1.0
  %v2616 = vadd.f32 %v2369, 1.0
  %v2617 = vadd.f32 %v2371, 1.0
  %v2618 = vadd.f32 %v2373, 1.0
  %v2619 = vadd.f32 %v2375, 1.0
  %v2620 = vadd.f32 %v2377, 1.0
  %v2621 = vadd.f32 %v2379, 1.0
  %v2622 = vadd.f32 %v2381, 1.0
  %v2623 = vadd.f32 %v2383, 1.0
  %v2624 = vadd.f32 %v2385, 1.0
  %v2625 = vadd.f32 %v2387, 1.0
  %v2626 = vadd.f32 %v2389, 1.0
  %v2627 = vadd.f32 %v2391, 1.0
  %v2628 = vadd.f32 %v2393, 1.0
  %v2629 = vadd.f32 %v2395, 1.0
  %v2630 = vadd.f32 %v2397, 1.0
  %v2631 = vadd.f32 %v2399, 1.0
  %v2632 = vadd.f32 %v2401, 1.0
  %v2633 = vadd.f32 %v2403, 1.0
  %v2634 = vadd.f32 %v2405, 1.0
  %v2635 = vadd.f32 %v2407, 1.0
  %v2636 = vadd.f32 %v2409, 1.0
  %v2637 = vadd.f32 %v2411, 1.0
  %v2638 = vadd.f32 %v2413, 1.0
  %v2639 = vadd.f32 %v2415, 1.0
  %v2640 = vadd.f32 %v2417, 1.0
  %v2641 = vadd.f32 %v2419, 1.0
  %v2642 = vadd.f32 %v2421, 1.0
  %v2643 = vadd.f32 %v2423, 1.0
  %v2644 = vadd.f32 %v2425, 1.0
  %v2645 = vadd.f32 %v2427, 1.0
  %v2646 = vadd.f32 %v2429, 1.0
  %v2647 = vadd.f32 %v2431, 1.0
  %v2648 = vadd.f32 %v2433, 1.0
  %v2649 = vadd.f32 %v2435, 1.0
  %v2650 = vadd.f32 %v2437, 1.0
  %v2651 = vadd.f32 %v2439, 1.0
  %v2652 = vadd.f32 %v2441, 1.0
  %v2653 = vadd.f32 %v2443, 1.0
  %v2654 = vadd.f32 %v2445, 1.0
  %v2655 = vadd.f32 %v2447, 1.0
  %v2656 = vadd.f32 %v2449, 1.0
  %v2657 = vadd.f32 %v2451, 1.0
  %v2658 = vadd.f32 %v2453, 1.0
  %v2659 = vadd.f32 %v2455, 1.0
  %v2660 = vadd.f32 %v2457, 1.0
  %v2661 = vadd.f32 %v2459, 1.0
  %v2662 = vadd.f32 %v2461, 1.0
  %v2663 = vadd.f32 %v2463, 1.0
  %v2664 = vadd.f32 %v2465, 1.0
  %v2665 = vadd.f32 %v2467, 1.0
  %v2666 = vadd.f32 %v2469, 1.0
  %v2667 = vadd.f32 %v2471, 1.0
  %v2668 = vadd.f32 %v2473, 1.0
  %v2669 = vadd.f32 %v2475, 1.0
  %v2670 = vadd.f32 %v2477, 1.0
  %v2671 = vadd.f32 %v2479, 1.0
  %v2672 = vadd.f32 %v2481, 1.0
  %v2673 = vadd.f32 %v2483, 1.0
  %v2674 = vadd.f32 %v2485, 1.0
  %v2675 = vadd.f32 %v2487, 1.0
  %v2676 = vadd.f32 %v2489, 1.0
  %v2677 = vadd.f32 %v2491, 1.0
  %v2678 = vadd.f32 %v2493, 1.0
  %v2679 = vadd.f32 %v2495, 1.0
  %v2680 = vadd.f32 %v2497, 1.0
  %v2681 = vadd.f32 %v2499, 1.0
  %v2682 = vadd.f32 %v2501, 1.0
  %v2683 = vadd.f32 %v2503, 1.0
  %v2684 = vadd.f32 %v2505, 1.0
  %v2685 = vadd.f32 %v2507, 1.0
  %v2686 = vadd.f32 %v2509, 1.0
  %v2687 = vadd.f32 %v2511, 1.0
  %v2688 = vadd.f32 %v2513, 1.0
  %v2689 = vadd.f32 %v2515, 1.0
  %v2690 = vadd.f32 %v2517, 1.0
  %v2691 = vadd.f32 %v2519, 1.0
  %v2692 = vadd.f32 %v2521, 1.0
  %v2693 = vadd.f32 %v2523, 1.0
  %v2694 = vadd.f32 %v2525, 1.0
  %v2695 = vadd.f32 %v2527, 1.0
  %v2696 = vadd.f32 %v2529, 1.0
  %v2697 = vadd.f32 %v2531, 1.0
  %v2698 = vadd.f32 %v2533, 1.0
  %v2699 = vadd.f32 %v2535, 1.0
  %v2700 = vadd.f32 %v2537, 1.0
  %v2701 = vadd.f32 %v2539, 1.0
  %v2702 = vrcp.pop %v2540
  %v2703 = vmul.f32 %v2540, %v2702
  %v2704 = vsub.f32 1.0, %v2703
  %v2705 = vmul.f32 %v2702, %v2704
  %v2706 = vadd.f32 %v2702, %v2705
  %vm2707 = vweird.f32 %v2540
  %vm2708 = vweird.f32 %v2702
  %vm2709 = vmor %vm2707, %vm2708
  %v2710 = vsel %vm2709, %v2702, %v2706
  %v2711 = vand.u32 2147483647, %v2540
  %vm2712 = vcmp.eq.f32.partialorder %v2711, 8.507059e+37
  %v2713 = vand.u32 %v2540, 2147483648
  %v2714 = vor.u32 1.1754944e-38, %v2713
  %v2715 = vsel %vm2712, %v2714, %v2710
  %v2716 = vmul.f32 1.0, %v2715
  %v2717 = vrcp.pop %v2541
  %v2718 = vmul.f32 %v2541, %v2717
  %v2719 = vsub.f32 1.0, %v2718
  %v2720 = vmul.f32 %v2717, %v2719
  %v2721 = vadd.f32 %v2717, %v2720
  %vm2722 = vweird.f32 %v2541
  %vm2723 = vweird.f32 %v2717
  %vm2724 = vmor %vm2722, %vm2723
  %v2725 = vsel %vm2724, %v2717, %v2721
  %v2726 = vand.u32 2147483647, %v2541
  %vm2727 = vcmp.eq.f32.partialorder %v2726, 8.507059e+37
  %v2728 = vand.u32 %v2541, 2147483648
  %v2729 = vor.u32 1.1754944e-38, %v2728
  %v2730 = vsel %vm2727, %v2729, %v2725
  %v2731 = vmul.f32 1.0, %v2730
  %v2732 = vrcp.pop %v2542
  %v2733 = vmul.f32 %v2542, %v2732
  %v2734 = vsub.f32 1.0, %v2733
  %v2735 = vmul.f32 %v2732, %v2734
  %v2736 = vadd.f32 %v2732, %v2735
  %vm2737 = vweird.f32 %v2542
  %vm2738 = vweird.f32 %v2732
  %vm2739 = vmor %vm2737, %vm2738
  %v2740 = vsel %vm2739, %v2732, %v2736
  %v2741 = vand.u32 2147483647, %v2542
  %vm2742 = vcmp.eq.f32.partialorder %v2741, 8.507059e+37
  %v2743 = vand.u32 %v2542, 2147483648
  %v2744 = vor.u32 1.1754944e-38, %v2743
  %v2745 = vsel %vm2742, %v2744, %v2740
  %v2746 = vmul.f32 1.0, %v2745
  %v2747 = vrcp.pop %v2543
  %v2748 = vmul.f32 %v2543, %v2747
  %v2749 = vsub.f32 1.0, %v2748
  %v2750 = vmul.f32 %v2747, %v2749
  %v2751 = vadd.f32 %v2747, %v2750
  %vm2752 = vweird.f32 %v2543
  %vm2753 = vweird.f32 %v2747
  %vm2754 = vmor %vm2752, %vm2753
  %v2755 = vsel %vm2754, %v2747, %v2751
  %v2756 = vand.u32 2147483647, %v2543
  %vm2757 = vcmp.eq.f32.partialorder %v2756, 8.507059e+37
  %v2758 = vand.u32 %v2543, 2147483648
  %v2759 = vor.u32 1.1754944e-38, %v2758
  %v2760 = vsel %vm2757, %v2759, %v2755
  %v2761 = vmul.f32 1.0, %v2760
  %v2762 = vrcp.pop %v2544
  %v2763 = vmul.f32 %v2544, %v2762
  %v2764 = vsub.f32 1.0, %v2763
  %v2765 = vmul.f32 %v2762, %v2764
  %v2766 = vadd.f32 %v2762, %v2765
  %vm2767 = vweird.f32 %v2544
  %vm2768 = vweird.f32 %v2762
  %vm2769 = vmor %vm2767, %vm2768
  %v2770 = vsel %vm2769, %v2762, %v2766
  %v2771 = vand.u32 2147483647, %v2544
  %vm2772 = vcmp.eq.f32.partialorder %v2771, 8.507059e+37
  %v2773 = vand.u32 %v2544, 2147483648
  %v2774 = vor.u32 1.1754944e-38, %v2773
  %v2775 = vsel %vm2772, %v2774, %v2770
  %v2776 = vmul.f32 1.0, %v2775
  %v2777 = vrcp.pop %v2545
  %v2778 = vmul.f32 %v2545, %v2777
  %v2779 = vsub.f32 1.0, %v2778
  %v2780 = vmul.f32 %v2777, %v2779
  %v2781 = vadd.f32 %v2777, %v2780
  %vm2782 = vweird.f32 %v2545
  %vm2783 = vweird.f32 %v2777
  %vm2784 = vmor %vm2782, %vm2783
  %v2785 = vsel %vm2784, %v2777, %v2781
  %v2786 = vand.u32 2147483647, %v2545
  %vm2787 = vcmp.eq.f32.partialorder %v2786, 8.507059e+37
  %v2788 = vand.u32 %v2545, 2147483648
  %v2789 = vor.u32 1.1754944e-38, %v2788
  %v2790 = vsel %vm2787, %v2789, %v2785
  %v2791 = vmul.f32 1.0, %v2790
  %v2792 = vrcp.pop %v2546
  %v2793 = vmul.f32 %v2546, %v2792
  %v2794 = vsub.f32 1.0, %v2793
  %v2795 = vmul.f32 %v2792, %v2794
  %v2796 = vadd.f32 %v2792, %v2795
  %vm2797 = vweird.f32 %v2546
  %vm2798 = vweird.f32 %v2792
  %vm2799 = vmor %vm2797, %vm2798
  %v2800 = vsel %vm2799, %v2792, %v2796
  %v2801 = vand.u32 2147483647, %v2546
  %vm2802 = vcmp.eq.f32.partialorder %v2801, 8.507059e+37
  %v2803 = vand.u32 %v2546, 2147483648
  %v2804 = vor.u32 1.1754944e-38, %v2803
  %v2805 = vsel %vm2802, %v2804, %v2800
  %v2806 = vmul.f32 1.0, %v2805
  %v2807 = vrcp.pop %v2547
  %v2808 = vmul.f32 %v2547, %v2807
  %v2809 = vsub.f32 1.0, %v2808
  %v2810 = vmul.f32 %v2807, %v2809
  %v2811 = vadd.f32 %v2807, %v2810
  %vm2812 = vweird.f32 %v2547
  %vm2813 = vweird.f32 %v2807
  %vm2814 = vmor %vm2812, %vm2813
  %v2815 = vsel %vm2814, %v2807, %v2811
  %v2816 = vand.u32 2147483647, %v2547
  %vm2817 = vcmp.eq.f32.partialorder %v2816, 8.507059e+37
  %v2818 = vand.u32 %v2547, 2147483648
  %v2819 = vor.u32 1.1754944e-38, %v2818
  %v2820 = vsel %vm2817, %v2819, %v2815
  %v2821 = vmul.f32 1.0, %v2820
  %v2822 = vrcp.pop %v2548
  %v2823 = vmul.f32 %v2548, %v2822
  %v2824 = vsub.f32 1.0, %v2823
  %v2825 = vmul.f32 %v2822, %v2824
  %v2826 = vadd.f32 %v2822, %v2825
  %vm2827 = vweird.f32 %v2548
  %vm2828 = vweird.f32 %v2822
  %vm2829 = vmor %vm2827, %vm2828
  %v2830 = vsel %vm2829, %v2822, %v2826
  %v2831 = vand.u32 2147483647, %v2548
  %vm2832 = vcmp.eq.f32.partialorder %v2831, 8.507059e+37
  %v2833 = vand.u32 %v2548, 2147483648
  %v2834 = vor.u32 1.1754944e-38, %v2833
  %v2835 = vsel %vm2832, %v2834, %v2830
  %v2836 = vmul.f32 1.0, %v2835
  %v2837 = vrcp.pop %v2549
  %v2838 = vmul.f32 %v2549, %v2837
  %v2839 = vsub.f32 1.0, %v2838
  %v2840 = vmul.f32 %v2837, %v2839
  %v2841 = vadd.f32 %v2837, %v2840
  %vm2842 = vweird.f32 %v2549
  %vm2843 = vweird.f32 %v2837
  %vm2844 = vmor %vm2842, %vm2843
  %v2845 = vsel %vm2844, %v2837, %v2841
  %v2846 = vand.u32 2147483647, %v2549
  %vm2847 = vcmp.eq.f32.partialorder %v2846, 8.507059e+37
  %v2848 = vand.u32 %v2549, 2147483648
  %v2849 = vor.u32 1.1754944e-38, %v2848
  %v2850 = vsel %vm2847, %v2849, %v2845
  %v2851 = vmul.f32 1.0, %v2850
  %v2852 = vrcp.pop %v2550
  %v2853 = vmul.f32 %v2550, %v2852
  %v2854 = vsub.f32 1.0, %v2853
  %v2855 = vmul.f32 %v2852, %v2854
  %v2856 = vadd.f32 %v2852, %v2855
  %vm2857 = vweird.f32 %v2550
  %vm2858 = vweird.f32 %v2852
  %vm2859 = vmor %vm2857, %vm2858
  %v2860 = vsel %vm2859, %v2852, %v2856
  %v2861 = vand.u32 2147483647, %v2550
  %vm2862 = vcmp.eq.f32.partialorder %v2861, 8.507059e+37
  %v2863 = vand.u32 %v2550, 2147483648
  %v2864 = vor.u32 1.1754944e-38, %v2863
  %v2865 = vsel %vm2862, %v2864, %v2860
  %v2866 = vmul.f32 1.0, %v2865
  %v2867 = vrcp.pop %v2551
  %v2868 = vmul.f32 %v2551, %v2867
  %v2869 = vsub.f32 1.0, %v2868
  %v2870 = vmul.f32 %v2867, %v2869
  %v2871 = vadd.f32 %v2867, %v2870
  %vm2872 = vweird.f32 %v2551
  %vm2873 = vweird.f32 %v2867
  %vm2874 = vmor %vm2872, %vm2873
  %v2875 = vsel %vm2874, %v2867, %v2871
  %v2876 = vand.u32 2147483647, %v2551
  %vm2877 = vcmp.eq.f32.partialorder %v2876, 8.507059e+37
  %v2878 = vand.u32 %v2551, 2147483648
  %v2879 = vor.u32 1.1754944e-38, %v2878
  %v2880 = vsel %vm2877, %v2879, %v2875
  %v2881 = vmul.f32 1.0, %v2880
  %v2882 = vrcp.pop %v2552
  %v2883 = vmul.f32 %v2552, %v2882
  %v2884 = vsub.f32 1.0, %v2883
  %v2885 = vmul.f32 %v2882, %v2884
  %v2886 = vadd.f32 %v2882, %v2885
  %vm2887 = vweird.f32 %v2552
  %vm2888 = vweird.f32 %v2882
  %vm2889 = vmor %vm2887, %vm2888
  %v2890 = vsel %vm2889, %v2882, %v2886
  %v2891 = vand.u32 2147483647, %v2552
  %vm2892 = vcmp.eq.f32.partialorder %v2891, 8.507059e+37
  %v2893 = vand.u32 %v2552, 2147483648
  %v2894 = vor.u32 1.1754944e-38, %v2893
  %v2895 = vsel %vm2892, %v2894, %v2890
  %v2896 = vmul.f32 1.0, %v2895
  %v2897 = vrcp.pop %v2553
  %v2898 = vmul.f32 %v2553, %v2897
  %v2899 = vsub.f32 1.0, %v2898
  %v2900 = vmul.f32 %v2897, %v2899
  %v2901 = vadd.f32 %v2897, %v2900
  %vm2902 = vweird.f32 %v2553
  %vm2903 = vweird.f32 %v2897
  %vm2904 = vmor %vm2902, %vm2903
  %v2905 = vsel %vm2904, %v2897, %v2901
  %v2906 = vand.u32 2147483647, %v2553
  %vm2907 = vcmp.eq.f32.partialorder %v2906, 8.507059e+37
  %v2908 = vand.u32 %v2553, 2147483648
  %v2909 = vor.u32 1.1754944e-38, %v2908
  %v2910 = vsel %vm2907, %v2909, %v2905
  %v2911 = vmul.f32 1.0, %v2910
  %v2912 = vrcp.pop %v2554
  %v2913 = vmul.f32 %v2554, %v2912
  %v2914 = vsub.f32 1.0, %v2913
  %v2915 = vmul.f32 %v2912, %v2914
  %v2916 = vadd.f32 %v2912, %v2915
  %vm2917 = vweird.f32 %v2554
  %vm2918 = vweird.f32 %v2912
  %vm2919 = vmor %vm2917, %vm2918
  %v2920 = vsel %vm2919, %v2912, %v2916
  %v2921 = vand.u32 2147483647, %v2554
  %vm2922 = vcmp.eq.f32.partialorder %v2921, 8.507059e+37
  %v2923 = vand.u32 %v2554, 2147483648
  %v2924 = vor.u32 1.1754944e-38, %v2923
  %v2925 = vsel %vm2922, %v2924, %v2920
  %v2926 = vmul.f32 1.0, %v2925
  %v2927 = vrcp.pop %v2555
  %v2928 = vmul.f32 %v2555, %v2927
  %v2929 = vsub.f32 1.0, %v2928
  %v2930 = vmul.f32 %v2927, %v2929
  %v2931 = vadd.f32 %v2927, %v2930
  %vm2932 = vweird.f32 %v2555
  %vm2933 = vweird.f32 %v2927
  %vm2934 = vmor %vm2932, %vm2933
  %v2935 = vsel %vm2934, %v2927, %v2931
  %v2936 = vand.u32 2147483647, %v2555
  %vm2937 = vcmp.eq.f32.partialorder %v2936, 8.507059e+37
  %v2938 = vand.u32 %v2555, 2147483648
  %v2939 = vor.u32 1.1754944e-38, %v2938
  %v2940 = vsel %vm2937, %v2939, %v2935
  %v2941 = vmul.f32 1.0, %v2940
  %v2942 = vrcp.pop %v2556
  %v2943 = vmul.f32 %v2556, %v2942
  %v2944 = vsub.f32 1.0, %v2943
  %v2945 = vmul.f32 %v2942, %v2944
  %v2946 = vadd.f32 %v2942, %v2945
  %vm2947 = vweird.f32 %v2556
  %vm2948 = vweird.f32 %v2942
  %vm2949 = vmor %vm2947, %vm2948
  %v2950 = vsel %vm2949, %v2942, %v2946
  %v2951 = vand.u32 2147483647, %v2556
  %vm2952 = vcmp.eq.f32.partialorder %v2951, 8.507059e+37
  %v2953 = vand.u32 %v2556, 2147483648
  %v2954 = vor.u32 1.1754944e-38, %v2953
  %v2955 = vsel %vm2952, %v2954, %v2950
  %v2956 = vmul.f32 1.0, %v2955
  %v2957 = vrcp.pop %v2557
  %v2958 = vmul.f32 %v2557, %v2957
  %v2959 = vsub.f32 1.0, %v2958
  %v2960 = vmul.f32 %v2957, %v2959
  %v2961 = vadd.f32 %v2957, %v2960
  %vm2962 = vweird.f32 %v2557
  %vm2963 = vweird.f32 %v2957
  %vm2964 = vmor %vm2962, %vm2963
  %v2965 = vsel %vm2964, %v2957, %v2961
  %v2966 = vand.u32 2147483647, %v2557
  %vm2967 = vcmp.eq.f32.partialorder %v2966, 8.507059e+37
  %v2968 = vand.u32 %v2557, 2147483648
  %v2969 = vor.u32 1.1754944e-38, %v2968
  %v2970 = vsel %vm2967, %v2969, %v2965
  %v2971 = vmul.f32 1.0, %v2970
  %v2972 = vrcp.pop %v2558
  %v2973 = vmul.f32 %v2558, %v2972
  %v2974 = vsub.f32 1.0, %v2973
  %v2975 = vmul.f32 %v2972, %v2974
  %v2976 = vadd.f32 %v2972, %v2975
  %vm2977 = vweird.f32 %v2558
  %vm2978 = vweird.f32 %v2972
  %vm2979 = vmor %vm2977, %vm2978
  %v2980 = vsel %vm2979, %v2972, %v2976
  %v2981 = vand.u32 2147483647, %v2558
  %vm2982 = vcmp.eq.f32.partialorder %v2981, 8.507059e+37
  %v2983 = vand.u32 %v2558, 2147483648
  %v2984 = vor.u32 1.1754944e-38, %v2983
  %v2985 = vsel %vm2982, %v2984, %v2980
  %v2986 = vmul.f32 1.0, %v2985
  %v2987 = vrcp.pop %v2559
  %v2988 = vmul.f32 %v2559, %v2987
  %v2989 = vsub.f32 1.0, %v2988
  %v2990 = vmul.f32 %v2987, %v2989
  %v2991 = vadd.f32 %v2987, %v2990
  %vm2992 = vweird.f32 %v2559
  %vm2993 = vweird.f32 %v2987
  %vm2994 = vmor %vm2992, %vm2993
  %v2995 = vsel %vm2994, %v2987, %v2991
  %v2996 = vand.u32 2147483647, %v2559
  %vm2997 = vcmp.eq.f32.partialorder %v2996, 8.507059e+37
  %v2998 = vand.u32 %v2559, 2147483648
  %v2999 = vor.u32 1.1754944e-38, %v2998
  %v3000 = vsel %vm2997, %v2999, %v2995
  %v3001 = vmul.f32 1.0, %v3000
  %v3002 = vrcp.pop %v2560
  %v3003 = vmul.f32 %v2560, %v3002
  %v3004 = vsub.f32 1.0, %v3003
  %v3005 = vmul.f32 %v3002, %v3004
  %v3006 = vadd.f32 %v3002, %v3005
  %vm3007 = vweird.f32 %v2560
  %vm3008 = vweird.f32 %v3002
  %vm3009 = vmor %vm3007, %vm3008
  %v3010 = vsel %vm3009, %v3002, %v3006
  %v3011 = vand.u32 2147483647, %v2560
  %vm3012 = vcmp.eq.f32.partialorder %v3011, 8.507059e+37
  %v3013 = vand.u32 %v2560, 2147483648
  %v3014 = vor.u32 1.1754944e-38, %v3013
  %v3015 = vsel %vm3012, %v3014, %v3010
  %v3016 = vmul.f32 1.0, %v3015
  %v3017 = vrcp.pop %v2561
  %v3018 = vmul.f32 %v2561, %v3017
  %v3019 = vsub.f32 1.0, %v3018
  %v3020 = vmul.f32 %v3017, %v3019
  %v3021 = vadd.f32 %v3017, %v3020
  %vm3022 = vweird.f32 %v2561
  %vm3023 = vweird.f32 %v3017
  %vm3024 = vmor %vm3022, %vm3023
  %v3025 = vsel %vm3024, %v3017, %v3021
  %v3026 = vand.u32 2147483647, %v2561
  %vm3027 = vcmp.eq.f32.partialorder %v3026, 8.507059e+37
  %v3028 = vand.u32 %v2561, 2147483648
  %v3029 = vor.u32 1.1754944e-38, %v3028
  %v3030 = vsel %vm3027, %v3029, %v3025
  %v3031 = vmul.f32 1.0, %v3030
  %v3032 = vrcp.pop %v2562
  %v3033 = vmul.f32 %v2562, %v3032
  %v3034 = vsub.f32 1.0, %v3033
  %v3035 = vmul.f32 %v3032, %v3034
  %v3036 = vadd.f32 %v3032, %v3035
  %vm3037 = vweird.f32 %v2562
  %vm3038 = vweird.f32 %v3032
  %vm3039 = vmor %vm3037, %vm3038
  %v3040 = vsel %vm3039, %v3032, %v3036
  %v3041 = vand.u32 2147483647, %v2562
  %vm3042 = vcmp.eq.f32.partialorder %v3041, 8.507059e+37
  %v3043 = vand.u32 %v2562, 2147483648
  %v3044 = vor.u32 1.1754944e-38, %v3043
  %v3045 = vsel %vm3042, %v3044, %v3040
  %v3046 = vmul.f32 1.0, %v3045
  %v3047 = vrcp.pop %v2563
  %v3048 = vmul.f32 %v2563, %v3047
  %v3049 = vsub.f32 1.0, %v3048
  %v3050 = vmul.f32 %v3047, %v3049
  %v3051 = vadd.f32 %v3047, %v3050
  %vm3052 = vweird.f32 %v2563
  %vm3053 = vweird.f32 %v3047
  %vm3054 = vmor %vm3052, %vm3053
  %v3055 = vsel %vm3054, %v3047, %v3051
  %v3056 = vand.u32 2147483647, %v2563
  %vm3057 = vcmp.eq.f32.partialorder %v3056, 8.507059e+37
  %v3058 = vand.u32 %v2563, 2147483648
  %v3059 = vor.u32 1.1754944e-38, %v3058
  %v3060 = vsel %vm3057, %v3059, %v3055
  %v3061 = vmul.f32 1.0, %v3060
  %v3062 = vrcp.pop %v2564
  %v3063 = vmul.f32 %v2564, %v3062
  %v3064 = vsub.f32 1.0, %v3063
  %v3065 = vmul.f32 %v3062, %v3064
  %v3066 = vadd.f32 %v3062, %v3065
  %vm3067 = vweird.f32 %v2564
  %vm3068 = vweird.f32 %v3062
  %vm3069 = vmor %vm3067, %vm3068
  %v3070 = vsel %vm3069, %v3062, %v3066
  %v3071 = vand.u32 2147483647, %v2564
  %vm3072 = vcmp.eq.f32.partialorder %v3071, 8.507059e+37
  %v3073 = vand.u32 %v2564, 2147483648
  %v3074 = vor.u32 1.1754944e-38, %v3073
  %v3075 = vsel %vm3072, %v3074, %v3070
  %v3076 = vmul.f32 1.0, %v3075
  %v3077 = vrcp.pop %v2565
  %v3078 = vmul.f32 %v2565, %v3077
  %v3079 = vsub.f32 1.0, %v3078
  %v3080 = vmul.f32 %v3077, %v3079
  %v3081 = vadd.f32 %v3077, %v3080
  %vm3082 = vweird.f32 %v2565
  %vm3083 = vweird.f32 %v3077
  %vm3084 = vmor %vm3082, %vm3083
  %v3085 = vsel %vm3084, %v3077, %v3081
  %v3086 = vand.u32 2147483647, %v2565
  %vm3087 = vcmp.eq.f32.partialorder %v3086, 8.507059e+37
  %v3088 = vand.u32 %v2565, 2147483648
  %v3089 = vor.u32 1.1754944e-38, %v3088
  %v3090 = vsel %vm3087, %v3089, %v3085
  %v3091 = vmul.f32 1.0, %v3090
  %v3092 = vrcp.pop %v2566
  %v3093 = vmul.f32 %v2566, %v3092
  %v3094 = vsub.f32 1.0, %v3093
  %v3095 = vmul.f32 %v3092, %v3094
  %v3096 = vadd.f32 %v3092, %v3095
  %vm3097 = vweird.f32 %v2566
  %vm3098 = vweird.f32 %v3092
  %vm3099 = vmor %vm3097, %vm3098
  %v3100 = vsel %vm3099, %v3092, %v3096
  %v3101 = vand.u32 2147483647, %v2566
  %vm3102 = vcmp.eq.f32.partialorder %v3101, 8.507059e+37
  %v3103 = vand.u32 %v2566, 2147483648
  %v3104 = vor.u32 1.1754944e-38, %v3103
  %v3105 = vsel %vm3102, %v3104, %v3100
  %v3106 = vmul.f32 1.0, %v3105
  %v3107 = vrcp.pop %v2567
  %v3108 = vmul.f32 %v2567, %v3107
  %v3109 = vsub.f32 1.0, %v3108
  %v3110 = vmul.f32 %v3107, %v3109
  %v3111 = vadd.f32 %v3107, %v3110
  %vm3112 = vweird.f32 %v2567
  %vm3113 = vweird.f32 %v3107
  %vm3114 = vmor %vm3112, %vm3113
  %v3115 = vsel %vm3114, %v3107, %v3111
  %v3116 = vand.u32 2147483647, %v2567
  %vm3117 = vcmp.eq.f32.partialorder %v3116, 8.507059e+37
  %v3118 = vand.u32 %v2567, 2147483648
  %v3119 = vor.u32 1.1754944e-38, %v3118
  %v3120 = vsel %vm3117, %v3119, %v3115
  %v3121 = vmul.f32 1.0, %v3120
  %v3122 = vrcp.pop %v2568
  %v3123 = vmul.f32 %v2568, %v3122
  %v3124 = vsub.f32 1.0, %v3123
  %v3125 = vmul.f32 %v3122, %v3124
  %v3126 = vadd.f32 %v3122, %v3125
  %vm3127 = vweird.f32 %v2568
  %vm3128 = vweird.f32 %v3122
  %vm3129 = vmor %vm3127, %vm3128
  %v3130 = vsel %vm3129, %v3122, %v3126
  %v3131 = vand.u32 2147483647, %v2568
  %vm3132 = vcmp.eq.f32.partialorder %v3131, 8.507059e+37
  %v3133 = vand.u32 %v2568, 2147483648
  %v3134 = vor.u32 1.1754944e-38, %v3133
  %v3135 = vsel %vm3132, %v3134, %v3130
  %v3136 = vmul.f32 1.0, %v3135
  %v3137 = vrcp.pop %v2569
  %v3138 = vmul.f32 %v2569, %v3137
  %v3139 = vsub.f32 1.0, %v3138
  %v3140 = vmul.f32 %v3137, %v3139
  %v3141 = vadd.f32 %v3137, %v3140
  %vm3142 = vweird.f32 %v2569
  %vm3143 = vweird.f32 %v3137
  %vm3144 = vmor %vm3142, %vm3143
  %v3145 = vsel %vm3144, %v3137, %v3141
  %v3146 = vand.u32 2147483647, %v2569
  %vm3147 = vcmp.eq.f32.partialorder %v3146, 8.507059e+37
  %v3148 = vand.u32 %v2569, 2147483648
  %v3149 = vor.u32 1.1754944e-38, %v3148
  %v3150 = vsel %vm3147, %v3149, %v3145
  %v3151 = vmul.f32 1.0, %v3150
  %v3152 = vrcp.pop %v2570
  %v3153 = vmul.f32 %v2570, %v3152
  %v3154 = vsub.f32 1.0, %v3153
  %v3155 = vmul.f32 %v3152, %v3154
  %v3156 = vadd.f32 %v3152, %v3155
  %vm3157 = vweird.f32 %v2570
  %vm3158 = vweird.f32 %v3152
  %vm3159 = vmor %vm3157, %vm3158
  %v3160 = vsel %vm3159, %v3152, %v3156
  %v3161 = vand.u32 2147483647, %v2570
  %vm3162 = vcmp.eq.f32.partialorder %v3161, 8.507059e+37
  %v3163 = vand.u32 %v2570, 2147483648
  %v3164 = vor.u32 1.1754944e-38, %v3163
  %v3165 = vsel %vm3162, %v3164, %v3160
  %v3166 = vmul.f32 1.0, %v3165
  %v3167 = vrcp.pop %v2571
  %v3168 = vmul.f32 %v2571, %v3167
  %v3169 = vsub.f32 1.0, %v3168
  %v3170 = vmul.f32 %v3167, %v3169
  %v3171 = vadd.f32 %v3167, %v3170
  %vm3172 = vweird.f32 %v2571
  %vm3173 = vweird.f32 %v3167
  %vm3174 = vmor %vm3172, %vm3173
  %v3175 = vsel %vm3174, %v3167, %v3171
  %v3176 = vand.u32 2147483647, %v2571
  %vm3177 = vcmp.eq.f32.partialorder %v3176, 8.507059e+37
  %v3178 = vand.u32 %v2571, 2147483648
  %v3179 = vor.u32 1.1754944e-38, %v3178
  %v3180 = vsel %vm3177, %v3179, %v3175
  %v3181 = vmul.f32 1.0, %v3180
  %v3182 = vrcp.pop %v2572
  %v3183 = vmul.f32 %v2572, %v3182
  %v3184 = vsub.f32 1.0, %v3183
  %v3185 = vmul.f32 %v3182, %v3184
  %v3186 = vadd.f32 %v3182, %v3185
  %vm3187 = vweird.f32 %v2572
  %vm3188 = vweird.f32 %v3182
  %vm3189 = vmor %vm3187, %vm3188
  %v3190 = vsel %vm3189, %v3182, %v3186
  %v3191 = vand.u32 2147483647, %v2572
  %vm3192 = vcmp.eq.f32.partialorder %v3191, 8.507059e+37
  %v3193 = vand.u32 %v2572, 2147483648
  %v3194 = vor.u32 1.1754944e-38, %v3193
  %v3195 = vsel %vm3192, %v3194, %v3190
  %v3196 = vmul.f32 1.0, %v3195
  %v3197 = vrcp.pop %v2573
  %v3198 = vmul.f32 %v2573, %v3197
  %v3199 = vsub.f32 1.0, %v3198
  %v3200 = vmul.f32 %v3197, %v3199
  %v3201 = vadd.f32 %v3197, %v3200
  %vm3202 = vweird.f32 %v2573
  %vm3203 = vweird.f32 %v3197
  %vm3204 = vmor %vm3202, %vm3203
  %v3205 = vsel %vm3204, %v3197, %v3201
  %v3206 = vand.u32 2147483647, %v2573
  %vm3207 = vcmp.eq.f32.partialorder %v3206, 8.507059e+37
  %v3208 = vand.u32 %v2573, 2147483648
  %v3209 = vor.u32 1.1754944e-38, %v3208
  %v3210 = vsel %vm3207, %v3209, %v3205
  %v3211 = vmul.f32 1.0, %v3210
  %v3212 = vrcp.pop %v2574
  %v3213 = vmul.f32 %v2574, %v3212
  %v3214 = vsub.f32 1.0, %v3213
  %v3215 = vmul.f32 %v3212, %v3214
  %v3216 = vadd.f32 %v3212, %v3215
  %vm3217 = vweird.f32 %v2574
  %vm3218 = vweird.f32 %v3212
  %vm3219 = vmor %vm3217, %vm3218
  %v3220 = vsel %vm3219, %v3212, %v3216
  %v3221 = vand.u32 2147483647, %v2574
  %vm3222 = vcmp.eq.f32.partialorder %v3221, 8.507059e+37
  %v3223 = vand.u32 %v2574, 2147483648
  %v3224 = vor.u32 1.1754944e-38, %v3223
  %v3225 = vsel %vm3222, %v3224, %v3220
  %v3226 = vmul.f32 1.0, %v3225
  %v3227 = vrcp.pop %v2575
  %v3228 = vmul.f32 %v2575, %v3227
  %v3229 = vsub.f32 1.0, %v3228
  %v3230 = vmul.f32 %v3227, %v3229
  %v3231 = vadd.f32 %v3227, %v3230
  %vm3232 = vweird.f32 %v2575
  %vm3233 = vweird.f32 %v3227
  %vm3234 = vmor %vm3232, %vm3233
  %v3235 = vsel %vm3234, %v3227, %v3231
  %v3236 = vand.u32 2147483647, %v2575
  %vm3237 = vcmp.eq.f32.partialorder %v3236, 8.507059e+37
  %v3238 = vand.u32 %v2575, 2147483648
  %v3239 = vor.u32 1.1754944e-38, %v3238
  %v3240 = vsel %vm3237, %v3239, %v3235
  %v3241 = vmul.f32 1.0, %v3240
  %v3242 = vrcp.pop %v2576
  %v3243 = vmul.f32 %v2576, %v3242
  %v3244 = vsub.f32 1.0, %v3243
  %v3245 = vmul.f32 %v3242, %v3244
  %v3246 = vadd.f32 %v3242, %v3245
  %vm3247 = vweird.f32 %v2576
  %vm3248 = vweird.f32 %v3242
  %vm3249 = vmor %vm3247, %vm3248
  %v3250 = vsel %vm3249, %v3242, %v3246
  %v3251 = vand.u32 2147483647, %v2576
  %vm3252 = vcmp.eq.f32.partialorder %v3251, 8.507059e+37
  %v3253 = vand.u32 %v2576, 2147483648
  %v3254 = vor.u32 1.1754944e-38, %v3253
  %v3255 = vsel %vm3252, %v3254, %v3250
  %v3256 = vmul.f32 1.0, %v3255
  %v3257 = vrcp.pop %v2577
  %v3258 = vmul.f32 %v2577, %v3257
  %v3259 = vsub.f32 1.0, %v3258
  %v3260 = vmul.f32 %v3257, %v3259
  %v3261 = vadd.f32 %v3257, %v3260
  %vm3262 = vweird.f32 %v2577
  %vm3263 = vweird.f32 %v3257
  %vm3264 = vmor %vm3262, %vm3263
  %v3265 = vsel %vm3264, %v3257, %v3261
  %v3266 = vand.u32 2147483647, %v2577
  %vm3267 = vcmp.eq.f32.partialorder %v3266, 8.507059e+37
  %v3268 = vand.u32 %v2577, 2147483648
  %v3269 = vor.u32 1.1754944e-38, %v3268
  %v3270 = vsel %vm3267, %v3269, %v3265
  %v3271 = vmul.f32 1.0, %v3270
  %v3272 = vrcp.pop %v2578
  %v3273 = vmul.f32 %v2578, %v3272
  %v3274 = vsub.f32 1.0, %v3273
  %v3275 = vmul.f32 %v3272, %v3274
  %v3276 = vadd.f32 %v3272, %v3275
  %vm3277 = vweird.f32 %v2578
  %vm3278 = vweird.f32 %v3272
  %vm3279 = vmor %vm3277, %vm3278
  %v3280 = vsel %vm3279, %v3272, %v3276
  %v3281 = vand.u32 2147483647, %v2578
  %vm3282 = vcmp.eq.f32.partialorder %v3281, 8.507059e+37
  %v3283 = vand.u32 %v2578, 2147483648
  %v3284 = vor.u32 1.1754944e-38, %v3283
  %v3285 = vsel %vm3282, %v3284, %v3280
  %v3286 = vmul.f32 1.0, %v3285
  %v3287 = vrcp.pop %v2579
  %v3288 = vmul.f32 %v2579, %v3287
  %v3289 = vsub.f32 1.0, %v3288
  %v3290 = vmul.f32 %v3287, %v3289
  %v3291 = vadd.f32 %v3287, %v3290
  %vm3292 = vweird.f32 %v2579
  %vm3293 = vweird.f32 %v3287
  %vm3294 = vmor %vm3292, %vm3293
  %v3295 = vsel %vm3294, %v3287, %v3291
  %v3296 = vand.u32 2147483647, %v2579
  %vm3297 = vcmp.eq.f32.partialorder %v3296, 8.507059e+37
  %v3298 = vand.u32 %v2579, 2147483648
  %v3299 = vor.u32 1.1754944e-38, %v3298
  %v3300 = vsel %vm3297, %v3299, %v3295
  %v3301 = vmul.f32 1.0, %v3300
  %v3302 = vrcp.pop %v2580
  %v3303 = vmul.f32 %v2580, %v3302
  %v3304 = vsub.f32 1.0, %v3303
  %v3305 = vmul.f32 %v3302, %v3304
  %v3306 = vadd.f32 %v3302, %v3305
  %vm3307 = vweird.f32 %v2580
  %vm3308 = vweird.f32 %v3302
  %vm3309 = vmor %vm3307, %vm3308
  %v3310 = vsel %vm3309, %v3302, %v3306
  %v3311 = vand.u32 2147483647, %v2580
  %vm3312 = vcmp.eq.f32.partialorder %v3311, 8.507059e+37
  %v3313 = vand.u32 %v2580, 2147483648
  %v3314 = vor.u32 1.1754944e-38, %v3313
  %v3315 = vsel %vm3312, %v3314, %v3310
  %v3316 = vmul.f32 1.0, %v3315
  %v3317 = vrcp.pop %v2581
  %v3318 = vmul.f32 %v2581, %v3317
  %v3319 = vsub.f32 1.0, %v3318
  %v3320 = vmul.f32 %v3317, %v3319
  %v3321 = vadd.f32 %v3317, %v3320
  %vm3322 = vweird.f32 %v2581
  %vm3323 = vweird.f32 %v3317
  %vm3324 = vmor %vm3322, %vm3323
  %v3325 = vsel %vm3324, %v3317, %v3321
  %v3326 = vand.u32 2147483647, %v2581
  %vm3327 = vcmp.eq.f32.partialorder %v3326, 8.507059e+37
  %v3328 = vand.u32 %v2581, 2147483648
  %v3329 = vor.u32 1.1754944e-38, %v3328
  %v3330 = vsel %vm3327, %v3329, %v3325
  %v3331 = vmul.f32 1.0, %v3330
  %v3332 = vrcp.pop %v2582
  %v3333 = vmul.f32 %v2582, %v3332
  %v3334 = vsub.f32 1.0, %v3333
  %v3335 = vmul.f32 %v3332, %v3334
  %v3336 = vadd.f32 %v3332, %v3335
  %vm3337 = vweird.f32 %v2582
  %vm3338 = vweird.f32 %v3332
  %vm3339 = vmor %vm3337, %vm3338
  %v3340 = vsel %vm3339, %v3332, %v3336
  %v3341 = vand.u32 2147483647, %v2582
  %vm3342 = vcmp.eq.f32.partialorder %v3341, 8.507059e+37
  %v3343 = vand.u32 %v2582, 2147483648
  %v3344 = vor.u32 1.1754944e-38, %v3343
  %v3345 = vsel %vm3342, %v3344, %v3340
  %v3346 = vmul.f32 1.0, %v3345
  %v3347 = vrcp.pop %v2583
  %v3348 = vmul.f32 %v2583, %v3347
  %v3349 = vsub.f32 1.0, %v3348
  %v3350 = vmul.f32 %v3347, %v3349
  %v3351 = vadd.f32 %v3347, %v3350
  %vm3352 = vweird.f32 %v2583
  %vm3353 = vweird.f32 %v3347
  %vm3354 = vmor %vm3352, %vm3353
  %v3355 = vsel %vm3354, %v3347, %v3351
  %v3356 = vand.u32 2147483647, %v2583
  %vm3357 = vcmp.eq.f32.partialorder %v3356, 8.507059e+37
  %v3358 = vand.u32 %v2583, 2147483648
  %v3359 = vor.u32 1.1754944e-38, %v3358
  %v3360 = vsel %vm3357, %v3359, %v3355
  %v3361 = vmul.f32 1.0, %v3360
  %v3362 = vrcp.pop %v2584
  %v3363 = vmul.f32 %v2584, %v3362
  %v3364 = vsub.f32 1.0, %v3363
  %v3365 = vmul.f32 %v3362, %v3364
  %v3366 = vadd.f32 %v3362, %v3365
  %vm3367 = vweird.f32 %v2584
  %vm3368 = vweird.f32 %v3362
  %vm3369 = vmor %vm3367, %vm3368
  %v3370 = vsel %vm3369, %v3362, %v3366
  %v3371 = vand.u32 2147483647, %v2584
  %vm3372 = vcmp.eq.f32.partialorder %v3371, 8.507059e+37
  %v3373 = vand.u32 %v2584, 2147483648
  %v3374 = vor.u32 1.1754944e-38, %v3373
  %v3375 = vsel %vm3372, %v3374, %v3370
  %v3376 = vmul.f32 1.0, %v3375
  %v3377 = vrcp.pop %v2585
  %v3378 = vmul.f32 %v2585, %v3377
  %v3379 = vsub.f32 1.0, %v3378
  %v3380 = vmul.f32 %v3377, %v3379
  %v3381 = vadd.f32 %v3377, %v3380
  %vm3382 = vweird.f32 %v2585
  %vm3383 = vweird.f32 %v3377
  %vm3384 = vmor %vm3382, %vm3383
  %v3385 = vsel %vm3384, %v3377, %v3381
  %v3386 = vand.u32 2147483647, %v2585
  %vm3387 = vcmp.eq.f32.partialorder %v3386, 8.507059e+37
  %v3388 = vand.u32 %v2585, 2147483648
  %v3389 = vor.u32 1.1754944e-38, %v3388
  %v3390 = vsel %vm3387, %v3389, %v3385
  %v3391 = vmul.f32 1.0, %v3390
  %v3392 = vrcp.pop %v2586
  %v3393 = vmul.f32 %v2586, %v3392
  %v3394 = vsub.f32 1.0, %v3393
  %v3395 = vmul.f32 %v3392, %v3394
  %v3396 = vadd.f32 %v3392, %v3395
  %vm3397 = vweird.f32 %v2586
  %vm3398 = vweird.f32 %v3392
  %vm3399 = vmor %vm3397, %vm3398
  %v3400 = vsel %vm3399, %v3392, %v3396
  %v3401 = vand.u32 2147483647, %v2586
  %vm3402 = vcmp.eq.f32.partialorder %v3401, 8.507059e+37
  %v3403 = vand.u32 %v2586, 2147483648
  %v3404 = vor.u32 1.1754944e-38, %v3403
  %v3405 = vsel %vm3402, %v3404, %v3400
  %v3406 = vmul.f32 1.0, %v3405
  %v3407 = vrcp.pop %v2587
  %v3408 = vmul.f32 %v2587, %v3407
  %v3409 = vsub.f32 1.0, %v3408
  %v3410 = vmul.f32 %v3407, %v3409
  %v3411 = vadd.f32 %v3407, %v3410
  %vm3412 = vweird.f32 %v2587
  %vm3413 = vweird.f32 %v3407
  %vm3414 = vmor %vm3412, %vm3413
  %v3415 = vsel %vm3414, %v3407, %v3411
  %v3416 = vand.u32 2147483647, %v2587
  %vm3417 = vcmp.eq.f32.partialorder %v3416, 8.507059e+37
  %v3418 = vand.u32 %v2587, 2147483648
  %v3419 = vor.u32 1.1754944e-38, %v3418
  %v3420 = vsel %vm3417, %v3419, %v3415
  %v3421 = vmul.f32 1.0, %v3420
  %v3422 = vrcp.pop %v2588
  %v3423 = vmul.f32 %v2588, %v3422
  %v3424 = vsub.f32 1.0, %v3423
  %v3425 = vmul.f32 %v3422, %v3424
  %v3426 = vadd.f32 %v3422, %v3425
  %vm3427 = vweird.f32 %v2588
  %vm3428 = vweird.f32 %v3422
  %vm3429 = vmor %vm3427, %vm3428
  %v3430 = vsel %vm3429, %v3422, %v3426
  %v3431 = vand.u32 2147483647, %v2588
  %vm3432 = vcmp.eq.f32.partialorder %v3431, 8.507059e+37
  %v3433 = vand.u32 %v2588, 2147483648
  %v3434 = vor.u32 1.1754944e-38, %v3433
  %v3435 = vsel %vm3432, %v3434, %v3430
  %v3436 = vmul.f32 1.0, %v3435
  %v3437 = vrcp.pop %v2589
  %v3438 = vmul.f32 %v2589, %v3437
  %v3439 = vsub.f32 1.0, %v3438
  %v3440 = vmul.f32 %v3437, %v3439
  %v3441 = vadd.f32 %v3437, %v3440
  %vm3442 = vweird.f32 %v2589
  %vm3443 = vweird.f32 %v3437
  %vm3444 = vmor %vm3442, %vm3443
  %v3445 = vsel %vm3444, %v3437, %v3441
  %v3446 = vand.u32 2147483647, %v2589
  %vm3447 = vcmp.eq.f32.partialorder %v3446, 8.507059e+37
  %v3448 = vand.u32 %v2589, 2147483648
  %v3449 = vor.u32 1.1754944e-38, %v3448
  %v3450 = vsel %vm3447, %v3449, %v3445
  %v3451 = vmul.f32 1.0, %v3450
  %v3452 = vrcp.pop %v2590
  %v3453 = vmul.f32 %v2590, %v3452
  %v3454 = vsub.f32 1.0, %v3453
  %v3455 = vmul.f32 %v3452, %v3454
  %v3456 = vadd.f32 %v3452, %v3455
  %vm3457 = vweird.f32 %v2590
  %vm3458 = vweird.f32 %v3452
  %vm3459 = vmor %vm3457, %vm3458
  %v3460 = vsel %vm3459, %v3452, %v3456
  %v3461 = vand.u32 2147483647, %v2590
  %vm3462 = vcmp.eq.f32.partialorder %v3461, 8.507059e+37
  %v3463 = vand.u32 %v2590, 2147483648
  %v3464 = vor.u32 1.1754944e-38, %v3463
  %v3465 = vsel %vm3462, %v3464, %v3460
  %v3466 = vmul.f32 1.0, %v3465
  %v3467 = vrcp.pop %v2591
  %v3468 = vmul.f32 %v2591, %v3467
  %v3469 = vsub.f32 1.0, %v3468
  %v3470 = vmul.f32 %v3467, %v3469
  %v3471 = vadd.f32 %v3467, %v3470
  %vm3472 = vweird.f32 %v2591
  %vm3473 = vweird.f32 %v3467
  %vm3474 = vmor %vm3472, %vm3473
  %v3475 = vsel %vm3474, %v3467, %v3471
  %v3476 = vand.u32 2147483647, %v2591
  %vm3477 = vcmp.eq.f32.partialorder %v3476, 8.507059e+37
  %v3478 = vand.u32 %v2591, 2147483648
  %v3479 = vor.u32 1.1754944e-38, %v3478
  %v3480 = vsel %vm3477, %v3479, %v3475
  %v3481 = vmul.f32 1.0, %v3480
  %v3482 = vrcp.pop %v2592
  %v3483 = vmul.f32 %v2592, %v3482
  %v3484 = vsub.f32 1.0, %v3483
  %v3485 = vmul.f32 %v3482, %v3484
  %v3486 = vadd.f32 %v3482, %v3485
  %vm3487 = vweird.f32 %v2592
  %vm3488 = vweird.f32 %v3482
  %vm3489 = vmor %vm3487, %vm3488
  %v3490 = vsel %vm3489, %v3482, %v3486
  %v3491 = vand.u32 2147483647, %v2592
  %vm3492 = vcmp.eq.f32.partialorder %v3491, 8.507059e+37
  %v3493 = vand.u32 %v2592, 2147483648
  %v3494 = vor.u32 1.1754944e-38, %v3493
  %v3495 = vsel %vm3492, %v3494, %v3490
  %v3496 = vmul.f32 1.0, %v3495
  %v3497 = vrcp.pop %v2593
  %v3498 = vmul.f32 %v2593, %v3497
  %v3499 = vsub.f32 1.0, %v3498
  %v3500 = vmul.f32 %v3497, %v3499
  %v3501 = vadd.f32 %v3497, %v3500
  %vm3502 = vweird.f32 %v2593
  %vm3503 = vweird.f32 %v3497
  %vm3504 = vmor %vm3502, %vm3503
  %v3505 = vsel %vm3504, %v3497, %v3501
  %v3506 = vand.u32 2147483647, %v2593
  %vm3507 = vcmp.eq.f32.partialorder %v3506, 8.507059e+37
  %v3508 = vand.u32 %v2593, 2147483648
  %v3509 = vor.u32 1.1754944e-38, %v3508
  %v3510 = vsel %vm3507, %v3509, %v3505
  %v3511 = vmul.f32 1.0, %v3510
  %v3512 = vrcp.pop %v2594
  %v3513 = vmul.f32 %v2594, %v3512
  %v3514 = vsub.f32 1.0, %v3513
  %v3515 = vmul.f32 %v3512, %v3514
  %v3516 = vadd.f32 %v3512, %v3515
  %vm3517 = vweird.f32 %v2594
  %vm3518 = vweird.f32 %v3512
  %vm3519 = vmor %vm3517, %vm3518
  %v3520 = vsel %vm3519, %v3512, %v3516
  %v3521 = vand.u32 2147483647, %v2594
  %vm3522 = vcmp.eq.f32.partialorder %v3521, 8.507059e+37
  %v3523 = vand.u32 %v2594, 2147483648
  %v3524 = vor.u32 1.1754944e-38, %v3523
  %v3525 = vsel %vm3522, %v3524, %v3520
  %v3526 = vmul.f32 1.0, %v3525
  %v3527 = vrcp.pop %v2595
  %v3528 = vmul.f32 %v2595, %v3527
  %v3529 = vsub.f32 1.0, %v3528
  %v3530 = vmul.f32 %v3527, %v3529
  %v3531 = vadd.f32 %v3527, %v3530
  %vm3532 = vweird.f32 %v2595
  %vm3533 = vweird.f32 %v3527
  %vm3534 = vmor %vm3532, %vm3533
  %v3535 = vsel %vm3534, %v3527, %v3531
  %v3536 = vand.u32 2147483647, %v2595
  %vm3537 = vcmp.eq.f32.partialorder %v3536, 8.507059e+37
  %v3538 = vand.u32 %v2595, 2147483648
  %v3539 = vor.u32 1.1754944e-38, %v3538
  %v3540 = vsel %vm3537, %v3539, %v3535
  %v3541 = vmul.f32 1.0, %v3540
  %v3542 = vrcp.pop %v2596
  %v3543 = vmul.f32 %v2596, %v3542
  %v3544 = vsub.f32 1.0, %v3543
  %v3545 = vmul.f32 %v3542, %v3544
  %v3546 = vadd.f32 %v3542, %v3545
  %vm3547 = vweird.f32 %v2596
  %vm3548 = vweird.f32 %v3542
  %vm3549 = vmor %vm3547, %vm3548
  %v3550 = vsel %vm3549, %v3542, %v3546
  %v3551 = vand.u32 2147483647, %v2596
  %vm3552 = vcmp.eq.f32.partialorder %v3551, 8.507059e+37
  %v3553 = vand.u32 %v2596, 2147483648
  %v3554 = vor.u32 1.1754944e-38, %v3553
  %v3555 = vsel %vm3552, %v3554, %v3550
  %v3556 = vmul.f32 1.0, %v3555
  %v3557 = vrcp.pop %v2597
  %v3558 = vmul.f32 %v2597, %v3557
  %v3559 = vsub.f32 1.0, %v3558
  %v3560 = vmul.f32 %v3557, %v3559
  %v3561 = vadd.f32 %v3557, %v3560
  %vm3562 = vweird.f32 %v2597
  %vm3563 = vweird.f32 %v3557
  %vm3564 = vmor %vm3562, %vm3563
  %v3565 = vsel %vm3564, %v3557, %v3561
  %v3566 = vand.u32 2147483647, %v2597
  %vm3567 = vcmp.eq.f32.partialorder %v3566, 8.507059e+37
  %v3568 = vand.u32 %v2597, 2147483648
  %v3569 = vor.u32 1.1754944e-38, %v3568
  %v3570 = vsel %vm3567, %v3569, %v3565
  %v3571 = vmul.f32 1.0, %v3570
  %v3572 = vrcp.pop %v2598
  %v3573 = vmul.f32 %v2598, %v3572
  %v3574 = vsub.f32 1.0, %v3573
  %v3575 = vmul.f32 %v3572, %v3574
  %v3576 = vadd.f32 %v3572, %v3575
  %vm3577 = vweird.f32 %v2598
  %vm3578 = vweird.f32 %v3572
  %vm3579 = vmor %vm3577, %vm3578
  %v3580 = vsel %vm3579, %v3572, %v3576
  %v3581 = vand.u32 2147483647, %v2598
  %vm3582 = vcmp.eq.f32.partialorder %v3581, 8.507059e+37
  %v3583 = vand.u32 %v2598, 2147483648
  %v3584 = vor.u32 1.1754944e-38, %v3583
  %v3585 = vsel %vm3582, %v3584, %v3580
  %v3586 = vmul.f32 1.0, %v3585
  %v3587 = vrcp.pop %v2599
  %v3588 = vmul.f32 %v2599, %v3587
  %v3589 = vsub.f32 1.0, %v3588
  %v3590 = vmul.f32 %v3587, %v3589
  %v3591 = vadd.f32 %v3587, %v3590
  %vm3592 = vweird.f32 %v2599
  %vm3593 = vweird.f32 %v3587
  %vm3594 = vmor %vm3592, %vm3593
  %v3595 = vsel %vm3594, %v3587, %v3591
  %v3596 = vand.u32 2147483647, %v2599
  %vm3597 = vcmp.eq.f32.partialorder %v3596, 8.507059e+37
  %v3598 = vand.u32 %v2599, 2147483648
  %v3599 = vor.u32 1.1754944e-38, %v3598
  %v3600 = vsel %vm3597, %v3599, %v3595
  %v3601 = vmul.f32 1.0, %v3600
  %v3602 = vrcp.pop %v2600
  %v3603 = vmul.f32 %v2600, %v3602
  %v3604 = vsub.f32 1.0, %v3603
  %v3605 = vmul.f32 %v3602, %v3604
  %v3606 = vadd.f32 %v3602, %v3605
  %vm3607 = vweird.f32 %v2600
  %vm3608 = vweird.f32 %v3602
  %vm3609 = vmor %vm3607, %vm3608
  %v3610 = vsel %vm3609, %v3602, %v3606
  %v3611 = vand.u32 2147483647, %v2600
  %vm3612 = vcmp.eq.f32.partialorder %v3611, 8.507059e+37
  %v3613 = vand.u32 %v2600, 2147483648
  %v3614 = vor.u32 1.1754944e-38, %v3613
  %v3615 = vsel %vm3612, %v3614, %v3610
  %v3616 = vmul.f32 1.0, %v3615
  %v3617 = vrcp.pop %v2601
  %v3618 = vmul.f32 %v2601, %v3617
  %v3619 = vsub.f32 1.0, %v3618
  %v3620 = vmul.f32 %v3617, %v3619
  %v3621 = vadd.f32 %v3617, %v3620
  %vm3622 = vweird.f32 %v2601
  %vm3623 = vweird.f32 %v3617
  %vm3624 = vmor %vm3622, %vm3623
  %v3625 = vsel %vm3624, %v3617, %v3621
  %v3626 = vand.u32 2147483647, %v2601
  %vm3627 = vcmp.eq.f32.partialorder %v3626, 8.507059e+37
  %v3628 = vand.u32 %v2601, 2147483648
  %v3629 = vor.u32 1.1754944e-38, %v3628
  %v3630 = vsel %vm3627, %v3629, %v3625
  %v3631 = vmul.f32 1.0, %v3630
  %v3632 = vrcp.pop %v2602
  %v3633 = vmul.f32 %v2602, %v3632
  %v3634 = vsub.f32 1.0, %v3633
  %v3635 = vmul.f32 %v3632, %v3634
  %v3636 = vadd.f32 %v3632, %v3635
  %vm3637 = vweird.f32 %v2602
  %vm3638 = vweird.f32 %v3632
  %vm3639 = vmor %vm3637, %vm3638
  %v3640 = vsel %vm3639, %v3632, %v3636
  %v3641 = vand.u32 2147483647, %v2602
  %vm3642 = vcmp.eq.f32.partialorder %v3641, 8.507059e+37
  %v3643 = vand.u32 %v2602, 2147483648
  %v3644 = vor.u32 1.1754944e-38, %v3643
  %v3645 = vsel %vm3642, %v3644, %v3640
  %v3646 = vmul.f32 1.0, %v3645
  %v3647 = vrcp.pop %v2603
  %v3648 = vmul.f32 %v2603, %v3647
  %v3649 = vsub.f32 1.0, %v3648
  %v3650 = vmul.f32 %v3647, %v3649
  %v3651 = vadd.f32 %v3647, %v3650
  %vm3652 = vweird.f32 %v2603
  %vm3653 = vweird.f32 %v3647
  %vm3654 = vmor %vm3652, %vm3653
  %v3655 = vsel %vm3654, %v3647, %v3651
  %v3656 = vand.u32 2147483647, %v2603
  %vm3657 = vcmp.eq.f32.partialorder %v3656, 8.507059e+37
  %v3658 = vand.u32 %v2603, 2147483648
  %v3659 = vor.u32 1.1754944e-38, %v3658
  %v3660 = vsel %vm3657, %v3659, %v3655
  %v3661 = vmul.f32 1.0, %v3660
  %v3662 = vrcp.pop %v2604
  %v3663 = vmul.f32 %v2604, %v3662
  %v3664 = vsub.f32 1.0, %v3663
  %v3665 = vmul.f32 %v3662, %v3664
  %v3666 = vadd.f32 %v3662, %v3665
  %vm3667 = vweird.f32 %v2604
  %vm3668 = vweird.f32 %v3662
  %vm3669 = vmor %vm3667, %vm3668
  %v3670 = vsel %vm3669, %v3662, %v3666
  %v3671 = vand.u32 2147483647, %v2604
  %vm3672 = vcmp.eq.f32.partialorder %v3671, 8.507059e+37
  %v3673 = vand.u32 %v2604, 2147483648
  %v3674 = vor.u32 1.1754944e-38, %v3673
  %v3675 = vsel %vm3672, %v3674, %v3670
  %v3676 = vmul.f32 1.0, %v3675
  %v3677 = vrcp.pop %v2605
  %v3678 = vmul.f32 %v2605, %v3677
  %v3679 = vsub.f32 1.0, %v3678
  %v3680 = vmul.f32 %v3677, %v3679
  %v3681 = vadd.f32 %v3677, %v3680
  %vm3682 = vweird.f32 %v2605
  %vm3683 = vweird.f32 %v3677
  %vm3684 = vmor %vm3682, %vm3683
  %v3685 = vsel %vm3684, %v3677, %v3681
  %v3686 = vand.u32 2147483647, %v2605
  %vm3687 = vcmp.eq.f32.partialorder %v3686, 8.507059e+37
  %v3688 = vand.u32 %v2605, 2147483648
  %v3689 = vor.u32 1.1754944e-38, %v3688
  %v3690 = vsel %vm3687, %v3689, %v3685
  %v3691 = vmul.f32 1.0, %v3690
  %v3692 = vrcp.pop %v2606
  %v3693 = vmul.f32 %v2606, %v3692
  %v3694 = vsub.f32 1.0, %v3693
  %v3695 = vmul.f32 %v3692, %v3694
  %v3696 = vadd.f32 %v3692, %v3695
  %vm3697 = vweird.f32 %v2606
  %vm3698 = vweird.f32 %v3692
  %vm3699 = vmor %vm3697, %vm3698
  %v3700 = vsel %vm3699, %v3692, %v3696
  %v3701 = vand.u32 2147483647, %v2606
  %vm3702 = vcmp.eq.f32.partialorder %v3701, 8.507059e+37
  %v3703 = vand.u32 %v2606, 2147483648
  %v3704 = vor.u32 1.1754944e-38, %v3703
  %v3705 = vsel %vm3702, %v3704, %v3700
  %v3706 = vmul.f32 1.0, %v3705
  %v3707 = vrcp.pop %v2607
  %v3708 = vmul.f32 %v2607, %v3707
  %v3709 = vsub.f32 1.0, %v3708
  %v3710 = vmul.f32 %v3707, %v3709
  %v3711 = vadd.f32 %v3707, %v3710
  %vm3712 = vweird.f32 %v2607
  %vm3713 = vweird.f32 %v3707
  %vm3714 = vmor %vm3712, %vm3713
  %v3715 = vsel %vm3714, %v3707, %v3711
  %v3716 = vand.u32 2147483647, %v2607
  %vm3717 = vcmp.eq.f32.partialorder %v3716, 8.507059e+37
  %v3718 = vand.u32 %v2607, 2147483648
  %v3719 = vor.u32 1.1754944e-38, %v3718
  %v3720 = vsel %vm3717, %v3719, %v3715
  %v3721 = vmul.f32 1.0, %v3720
  %v3722 = vrcp.pop %v2608
  %v3723 = vmul.f32 %v2608, %v3722
  %v3724 = vsub.f32 1.0, %v3723
  %v3725 = vmul.f32 %v3722, %v3724
  %v3726 = vadd.f32 %v3722, %v3725
  %vm3727 = vweird.f32 %v2608
  %vm3728 = vweird.f32 %v3722
  %vm3729 = vmor %vm3727, %vm3728
  %v3730 = vsel %vm3729, %v3722, %v3726
  %v3731 = vand.u32 2147483647, %v2608
  %vm3732 = vcmp.eq.f32.partialorder %v3731, 8.507059e+37
  %v3733 = vand.u32 %v2608, 2147483648
  %v3734 = vor.u32 1.1754944e-38, %v3733
  %v3735 = vsel %vm3732, %v3734, %v3730
  %v3736 = vmul.f32 1.0, %v3735
  %v3737 = vrcp.pop %v2609
  %v3738 = vmul.f32 %v2609, %v3737
  %v3739 = vsub.f32 1.0, %v3738
  %v3740 = vmul.f32 %v3737, %v3739
  %v3741 = vadd.f32 %v3737, %v3740
  %vm3742 = vweird.f32 %v2609
  %vm3743 = vweird.f32 %v3737
  %vm3744 = vmor %vm3742, %vm3743
  %v3745 = vsel %vm3744, %v3737, %v3741
  %v3746 = vand.u32 2147483647, %v2609
  %vm3747 = vcmp.eq.f32.partialorder %v3746, 8.507059e+37
  %v3748 = vand.u32 %v2609, 2147483648
  %v3749 = vor.u32 1.1754944e-38, %v3748
  %v3750 = vsel %vm3747, %v3749, %v3745
  %v3751 = vmul.f32 1.0, %v3750
  %v3752 = vrcp.pop %v2610
  %v3753 = vmul.f32 %v2610, %v3752
  %v3754 = vsub.f32 1.0, %v3753
  %v3755 = vmul.f32 %v3752, %v3754
  %v3756 = vadd.f32 %v3752, %v3755
  %vm3757 = vweird.f32 %v2610
  %vm3758 = vweird.f32 %v3752
  %vm3759 = vmor %vm3757, %vm3758
  %v3760 = vsel %vm3759, %v3752, %v3756
  %v3761 = vand.u32 2147483647, %v2610
  %vm3762 = vcmp.eq.f32.partialorder %v3761, 8.507059e+37
  %v3763 = vand.u32 %v2610, 2147483648
  %v3764 = vor.u32 1.1754944e-38, %v3763
  %v3765 = vsel %vm3762, %v3764, %v3760
  %v3766 = vmul.f32 1.0, %v3765
  %v3767 = vrcp.pop %v2611
  %v3768 = vmul.f32 %v2611, %v3767
  %v3769 = vsub.f32 1.0, %v3768
  %v3770 = vmul.f32 %v3767, %v3769
  %v3771 = vadd.f32 %v3767, %v3770
  %vm3772 = vweird.f32 %v2611
  %vm3773 = vweird.f32 %v3767
  %vm3774 = vmor %vm3772, %vm3773
  %v3775 = vsel %vm3774, %v3767, %v3771
  %v3776 = vand.u32 2147483647, %v2611
  %vm3777 = vcmp.eq.f32.partialorder %v3776, 8.507059e+37
  %v3778 = vand.u32 %v2611, 2147483648
  %v3779 = vor.u32 1.1754944e-38, %v3778
  %v3780 = vsel %vm3777, %v3779, %v3775
  %v3781 = vmul.f32 1.0, %v3780
  %v3782 = vrcp.pop %v2612
  %v3783 = vmul.f32 %v2612, %v3782
  %v3784 = vsub.f32 1.0, %v3783
  %v3785 = vmul.f32 %v3782, %v3784
  %v3786 = vadd.f32 %v3782, %v3785
  %vm3787 = vweird.f32 %v2612
  %vm3788 = vweird.f32 %v3782
  %vm3789 = vmor %vm3787, %vm3788
  %v3790 = vsel %vm3789, %v3782, %v3786
  %v3791 = vand.u32 2147483647, %v2612
  %vm3792 = vcmp.eq.f32.partialorder %v3791, 8.507059e+37
  %v3793 = vand.u32 %v2612, 2147483648
  %v3794 = vor.u32 1.1754944e-38, %v3793
  %v3795 = vsel %vm3792, %v3794, %v3790
  %v3796 = vmul.f32 1.0, %v3795
  %v3797 = vrcp.pop %v2613
  %v3798 = vmul.f32 %v2613, %v3797
  %v3799 = vsub.f32 1.0, %v3798
  %v3800 = vmul.f32 %v3797, %v3799
  %v3801 = vadd.f32 %v3797, %v3800
  %vm3802 = vweird.f32 %v2613
  %vm3803 = vweird.f32 %v3797
  %vm3804 = vmor %vm3802, %vm3803
  %v3805 = vsel %vm3804, %v3797, %v3801
  %v3806 = vand.u32 2147483647, %v2613
  %vm3807 = vcmp.eq.f32.partialorder %v3806, 8.507059e+37
  %v3808 = vand.u32 %v2613, 2147483648
  %v3809 = vor.u32 1.1754944e-38, %v3808
  %v3810 = vsel %vm3807, %v3809, %v3805
  %v3811 = vmul.f32 1.0, %v3810
  %v3812 = vrcp.pop %v2614
  %v3813 = vmul.f32 %v2614, %v3812
  %v3814 = vsub.f32 1.0, %v3813
  %v3815 = vmul.f32 %v3812, %v3814
  %v3816 = vadd.f32 %v3812, %v3815
  %vm3817 = vweird.f32 %v2614
  %vm3818 = vweird.f32 %v3812
  %vm3819 = vmor %vm3817, %vm3818
  %v3820 = vsel %vm3819, %v3812, %v3816
  %v3821 = vand.u32 2147483647, %v2614
  %vm3822 = vcmp.eq.f32.partialorder %v3821, 8.507059e+37
  %v3823 = vand.u32 %v2614, 2147483648
  %v3824 = vor.u32 1.1754944e-38, %v3823
  %v3825 = vsel %vm3822, %v3824, %v3820
  %v3826 = vmul.f32 1.0, %v3825
  %v3827 = vrcp.pop %v2615
  %v3828 = vmul.f32 %v2615, %v3827
  %v3829 = vsub.f32 1.0, %v3828
  %v3830 = vmul.f32 %v3827, %v3829
  %v3831 = vadd.f32 %v3827, %v3830
  %vm3832 = vweird.f32 %v2615
  %vm3833 = vweird.f32 %v3827
  %vm3834 = vmor %vm3832, %vm3833
  %v3835 = vsel %vm3834, %v3827, %v3831
  %v3836 = vand.u32 2147483647, %v2615
  %vm3837 = vcmp.eq.f32.partialorder %v3836, 8.507059e+37
  %v3838 = vand.u32 %v2615, 2147483648
  %v3839 = vor.u32 1.1754944e-38, %v3838
  %v3840 = vsel %vm3837, %v3839, %v3835
  %v3841 = vmul.f32 1.0, %v3840
  %v3842 = vrcp.pop %v2616
  %v3843 = vmul.f32 %v2616, %v3842
  %v3844 = vsub.f32 1.0, %v3843
  %v3845 = vmul.f32 %v3842, %v3844
  %v3846 = vadd.f32 %v3842, %v3845
  %vm3847 = vweird.f32 %v2616
  %vm3848 = vweird.f32 %v3842
  %vm3849 = vmor %vm3847, %vm3848
  %v3850 = vsel %vm3849, %v3842, %v3846
  %v3851 = vand.u32 2147483647, %v2616
  %vm3852 = vcmp.eq.f32.partialorder %v3851, 8.507059e+37
  %v3853 = vand.u32 %v2616, 2147483648
  %v3854 = vor.u32 1.1754944e-38, %v3853
  %v3855 = vsel %vm3852, %v3854, %v3850
  %v3856 = vmul.f32 1.0, %v3855
  %v3857 = vrcp.pop %v2617
  %v3858 = vmul.f32 %v2617, %v3857
  %v3859 = vsub.f32 1.0, %v3858
  %v3860 = vmul.f32 %v3857, %v3859
  %v3861 = vadd.f32 %v3857, %v3860
  %vm3862 = vweird.f32 %v2617
  %vm3863 = vweird.f32 %v3857
  %vm3864 = vmor %vm3862, %vm3863
  %v3865 = vsel %vm3864, %v3857, %v3861
  %v3866 = vand.u32 2147483647, %v2617
  %vm3867 = vcmp.eq.f32.partialorder %v3866, 8.507059e+37
  %v3868 = vand.u32 %v2617, 2147483648
  %v3869 = vor.u32 1.1754944e-38, %v3868
  %v3870 = vsel %vm3867, %v3869, %v3865
  %v3871 = vmul.f32 1.0, %v3870
  %v3872 = vrcp.pop %v2618
  %v3873 = vmul.f32 %v2618, %v3872
  %v3874 = vsub.f32 1.0, %v3873
  %v3875 = vmul.f32 %v3872, %v3874
  %v3876 = vadd.f32 %v3872, %v3875
  %vm3877 = vweird.f32 %v2618
  %vm3878 = vweird.f32 %v3872
  %vm3879 = vmor %vm3877, %vm3878
  %v3880 = vsel %vm3879, %v3872, %v3876
  %v3881 = vand.u32 2147483647, %v2618
  %vm3882 = vcmp.eq.f32.partialorder %v3881, 8.507059e+37
  %v3883 = vand.u32 %v2618, 2147483648
  %v3884 = vor.u32 1.1754944e-38, %v3883
  %v3885 = vsel %vm3882, %v3884, %v3880
  %v3886 = vmul.f32 1.0, %v3885
  %v3887 = vrcp.pop %v2619
  %v3888 = vmul.f32 %v2619, %v3887
  %v3889 = vsub.f32 1.0, %v3888
  %v3890 = vmul.f32 %v3887, %v3889
  %v3891 = vadd.f32 %v3887, %v3890
  %vm3892 = vweird.f32 %v2619
  %vm3893 = vweird.f32 %v3887
  %vm3894 = vmor %vm3892, %vm3893
  %v3895 = vsel %vm3894, %v3887, %v3891
  %v3896 = vand.u32 2147483647, %v2619
  %vm3897 = vcmp.eq.f32.partialorder %v3896, 8.507059e+37
  %v3898 = vand.u32 %v2619, 2147483648
  %v3899 = vor.u32 1.1754944e-38, %v3898
  %v3900 = vsel %vm3897, %v3899, %v3895
  %v3901 = vmul.f32 1.0, %v3900
  %v3902 = vrcp.pop %v2620
  %v3903 = vmul.f32 %v2620, %v3902
  %v3904 = vsub.f32 1.0, %v3903
  %v3905 = vmul.f32 %v3902, %v3904
  %v3906 = vadd.f32 %v3902, %v3905
  %vm3907 = vweird.f32 %v2620
  %vm3908 = vweird.f32 %v3902
  %vm3909 = vmor %vm3907, %vm3908
  %v3910 = vsel %vm3909, %v3902, %v3906
  %v3911 = vand.u32 2147483647, %v2620
  %vm3912 = vcmp.eq.f32.partialorder %v3911, 8.507059e+37
  %v3913 = vand.u32 %v2620, 2147483648
  %v3914 = vor.u32 1.1754944e-38, %v3913
  %v3915 = vsel %vm3912, %v3914, %v3910
  %v3916 = vmul.f32 1.0, %v3915
  %v3917 = vrcp.pop %v2621
  %v3918 = vmul.f32 %v2621, %v3917
  %v3919 = vsub.f32 1.0, %v3918
  %v3920 = vmul.f32 %v3917, %v3919
  %v3921 = vadd.f32 %v3917, %v3920
  %vm3922 = vweird.f32 %v2621
  %vm3923 = vweird.f32 %v3917
  %vm3924 = vmor %vm3922, %vm3923
  %v3925 = vsel %vm3924, %v3917, %v3921
  %v3926 = vand.u32 2147483647, %v2621
  %vm3927 = vcmp.eq.f32.partialorder %v3926, 8.507059e+37
  %v3928 = vand.u32 %v2621, 2147483648
  %v3929 = vor.u32 1.1754944e-38, %v3928
  %v3930 = vsel %vm3927, %v3929, %v3925
  %v3931 = vmul.f32 1.0, %v3930
  %v3932 = vrcp.pop %v2622
  %v3933 = vmul.f32 %v2622, %v3932
  %v3934 = vsub.f32 1.0, %v3933
  %v3935 = vmul.f32 %v3932, %v3934
  %v3936 = vadd.f32 %v3932, %v3935
  %vm3937 = vweird.f32 %v2622
  %vm3938 = vweird.f32 %v3932
  %vm3939 = vmor %vm3937, %vm3938
  %v3940 = vsel %vm3939, %v3932, %v3936
  %v3941 = vand.u32 2147483647, %v2622
  %vm3942 = vcmp.eq.f32.partialorder %v3941, 8.507059e+37
  %v3943 = vand.u32 %v2622, 2147483648
  %v3944 = vor.u32 1.1754944e-38, %v3943
  %v3945 = vsel %vm3942, %v3944, %v3940
  %v3946 = vmul.f32 1.0, %v3945
  %v3947 = vrcp.pop %v2623
  %v3948 = vmul.f32 %v2623, %v3947
  %v3949 = vsub.f32 1.0, %v3948
  %v3950 = vmul.f32 %v3947, %v3949
  %v3951 = vadd.f32 %v3947, %v3950
  %vm3952 = vweird.f32 %v2623
  %vm3953 = vweird.f32 %v3947
  %vm3954 = vmor %vm3952, %vm3953
  %v3955 = vsel %vm3954, %v3947, %v3951
  %v3956 = vand.u32 2147483647, %v2623
  %vm3957 = vcmp.eq.f32.partialorder %v3956, 8.507059e+37
  %v3958 = vand.u32 %v2623, 2147483648
  %v3959 = vor.u32 1.1754944e-38, %v3958
  %v3960 = vsel %vm3957, %v3959, %v3955
  %v3961 = vmul.f32 1.0, %v3960
  %v3962 = vrcp.pop %v2624
  %v3963 = vmul.f32 %v2624, %v3962
  %v3964 = vsub.f32 1.0, %v3963
  %v3965 = vmul.f32 %v3962, %v3964
  %v3966 = vadd.f32 %v3962, %v3965
  %vm3967 = vweird.f32 %v2624
  %vm3968 = vweird.f32 %v3962
  %vm3969 = vmor %vm3967, %vm3968
  %v3970 = vsel %vm3969, %v3962, %v3966
  %v3971 = vand.u32 2147483647, %v2624
  %vm3972 = vcmp.eq.f32.partialorder %v3971, 8.507059e+37
  %v3973 = vand.u32 %v2624, 2147483648
  %v3974 = vor.u32 1.1754944e-38, %v3973
  %v3975 = vsel %vm3972, %v3974, %v3970
  %v3976 = vmul.f32 1.0, %v3975
  %v3977 = vrcp.pop %v2625
  %v3978 = vmul.f32 %v2625, %v3977
  %v3979 = vsub.f32 1.0, %v3978
  %v3980 = vmul.f32 %v3977, %v3979
  %v3981 = vadd.f32 %v3977, %v3980
  %vm3982 = vweird.f32 %v2625
  %vm3983 = vweird.f32 %v3977
  %vm3984 = vmor %vm3982, %vm3983
  %v3985 = vsel %vm3984, %v3977, %v3981
  %v3986 = vand.u32 2147483647, %v2625
  %vm3987 = vcmp.eq.f32.partialorder %v3986, 8.507059e+37
  %v3988 = vand.u32 %v2625, 2147483648
  %v3989 = vor.u32 1.1754944e-38, %v3988
  %v3990 = vsel %vm3987, %v3989, %v3985
  %v3991 = vmul.f32 1.0, %v3990
  %v3992 = vrcp.pop %v2626
  %v3993 = vmul.f32 %v2626, %v3992
  %v3994 = vsub.f32 1.0, %v3993
  %v3995 = vmul.f32 %v3992, %v3994
  %v3996 = vadd.f32 %v3992, %v3995
  %vm3997 = vweird.f32 %v2626
  %vm3998 = vweird.f32 %v3992
  %vm3999 = vmor %vm3997, %vm3998
  %v4000 = vsel %vm3999, %v3992, %v3996
  %v4001 = vand.u32 2147483647, %v2626
  %vm4002 = vcmp.eq.f32.partialorder %v4001, 8.507059e+37
  %v4003 = vand.u32 %v2626, 2147483648
  %v4004 = vor.u32 1.1754944e-38, %v4003
  %v4005 = vsel %vm4002, %v4004, %v4000
  %v4006 = vmul.f32 1.0, %v4005
  %v4007 = vrcp.pop %v2627
  %v4008 = vmul.f32 %v2627, %v4007
  %v4009 = vsub.f32 1.0, %v4008
  %v4010 = vmul.f32 %v4007, %v4009
  %v4011 = vadd.f32 %v4007, %v4010
  %vm4012 = vweird.f32 %v2627
  %vm4013 = vweird.f32 %v4007
  %vm4014 = vmor %vm4012, %vm4013
  %v4015 = vsel %vm4014, %v4007, %v4011
  %v4016 = vand.u32 2147483647, %v2627
  %vm4017 = vcmp.eq.f32.partialorder %v4016, 8.507059e+37
  %v4018 = vand.u32 %v2627, 2147483648
  %v4019 = vor.u32 1.1754944e-38, %v4018
  %v4020 = vsel %vm4017, %v4019, %v4015
  %v4021 = vmul.f32 1.0, %v4020
  %v4022 = vrcp.pop %v2628
  %v4023 = vmul.f32 %v2628, %v4022
  %v4024 = vsub.f32 1.0, %v4023
  %v4025 = vmul.f32 %v4022, %v4024
  %v4026 = vadd.f32 %v4022, %v4025
  %vm4027 = vweird.f32 %v2628
  %vm4028 = vweird.f32 %v4022
  %vm4029 = vmor %vm4027, %vm4028
  %v4030 = vsel %vm4029, %v4022, %v4026
  %v4031 = vand.u32 2147483647, %v2628
  %vm4032 = vcmp.eq.f32.partialorder %v4031, 8.507059e+37
  %v4033 = vand.u32 %v2628, 2147483648
  %v4034 = vor.u32 1.1754944e-38, %v4033
  %v4035 = vsel %vm4032, %v4034, %v4030
  %v4036 = vmul.f32 1.0, %v4035
  %v4037 = vrcp.pop %v2629
  %v4038 = vmul.f32 %v2629, %v4037
  %v4039 = vsub.f32 1.0, %v4038
  %v4040 = vmul.f32 %v4037, %v4039
  %v4041 = vadd.f32 %v4037, %v4040
  %vm4042 = vweird.f32 %v2629
  %vm4043 = vweird.f32 %v4037
  %vm4044 = vmor %vm4042, %vm4043
  %v4045 = vsel %vm4044, %v4037, %v4041
  %v4046 = vand.u32 2147483647, %v2629
  %vm4047 = vcmp.eq.f32.partialorder %v4046, 8.507059e+37
  %v4048 = vand.u32 %v2629, 2147483648
  %v4049 = vor.u32 1.1754944e-38, %v4048
  %v4050 = vsel %vm4047, %v4049, %v4045
  %v4051 = vmul.f32 1.0, %v4050
  %v4052 = vrcp.pop %v2630
  %v4053 = vmul.f32 %v2630, %v4052
  %v4054 = vsub.f32 1.0, %v4053
  %v4055 = vmul.f32 %v4052, %v4054
  %v4056 = vadd.f32 %v4052, %v4055
  %vm4057 = vweird.f32 %v2630
  %vm4058 = vweird.f32 %v4052
  %vm4059 = vmor %vm4057, %vm4058
  %v4060 = vsel %vm4059, %v4052, %v4056
  %v4061 = vand.u32 2147483647, %v2630
  %vm4062 = vcmp.eq.f32.partialorder %v4061, 8.507059e+37
  %v4063 = vand.u32 %v2630, 2147483648
  %v4064 = vor.u32 1.1754944e-38, %v4063
  %v4065 = vsel %vm4062, %v4064, %v4060
  %v4066 = vmul.f32 1.0, %v4065
  %v4067 = vrcp.pop %v2631
  %v4068 = vmul.f32 %v2631, %v4067
  %v4069 = vsub.f32 1.0, %v4068
  %v4070 = vmul.f32 %v4067, %v4069
  %v4071 = vadd.f32 %v4067, %v4070
  %vm4072 = vweird.f32 %v2631
  %vm4073 = vweird.f32 %v4067
  %vm4074 = vmor %vm4072, %vm4073
  %v4075 = vsel %vm4074, %v4067, %v4071
  %v4076 = vand.u32 2147483647, %v2631
  %vm4077 = vcmp.eq.f32.partialorder %v4076, 8.507059e+37
  %v4078 = vand.u32 %v2631, 2147483648
  %v4079 = vor.u32 1.1754944e-38, %v4078
  %v4080 = vsel %vm4077, %v4079, %v4075
  %v4081 = vmul.f32 1.0, %v4080
  %v4082 = vrcp.pop %v2632
  %v4083 = vmul.f32 %v2632, %v4082
  %v4084 = vsub.f32 1.0, %v4083
  %v4085 = vmul.f32 %v4082, %v4084
  %v4086 = vadd.f32 %v4082, %v4085
  %vm4087 = vweird.f32 %v2632
  %vm4088 = vweird.f32 %v4082
  %vm4089 = vmor %vm4087, %vm4088
  %v4090 = vsel %vm4089, %v4082, %v4086
  %v4091 = vand.u32 2147483647, %v2632
  %vm4092 = vcmp.eq.f32.partialorder %v4091, 8.507059e+37
  %v4093 = vand.u32 %v2632, 2147483648
  %v4094 = vor.u32 1.1754944e-38, %v4093
  %v4095 = vsel %vm4092, %v4094, %v4090
  %v4096 = vmul.f32 1.0, %v4095
  %v4097 = vrcp.pop %v2633
  %v4098 = vmul.f32 %v2633, %v4097
  %v4099 = vsub.f32 1.0, %v4098
  %v4100 = vmul.f32 %v4097, %v4099
  %v4101 = vadd.f32 %v4097, %v4100
  %vm4102 = vweird.f32 %v2633
  %vm4103 = vweird.f32 %v4097
  %vm4104 = vmor %vm4102, %vm4103
  %v4105 = vsel %vm4104, %v4097, %v4101
  %v4106 = vand.u32 2147483647, %v2633
  %vm4107 = vcmp.eq.f32.partialorder %v4106, 8.507059e+37
  %v4108 = vand.u32 %v2633, 2147483648
  %v4109 = vor.u32 1.1754944e-38, %v4108
  %v4110 = vsel %vm4107, %v4109, %v4105
  %v4111 = vmul.f32 1.0, %v4110
  %v4112 = vrcp.pop %v2634
  %v4113 = vmul.f32 %v2634, %v4112
  %v4114 = vsub.f32 1.0, %v4113
  %v4115 = vmul.f32 %v4112, %v4114
  %v4116 = vadd.f32 %v4112, %v4115
  %vm4117 = vweird.f32 %v2634
  %vm4118 = vweird.f32 %v4112
  %vm4119 = vmor %vm4117, %vm4118
  %v4120 = vsel %vm4119, %v4112, %v4116
  %v4121 = vand.u32 2147483647, %v2634
  %vm4122 = vcmp.eq.f32.partialorder %v4121, 8.507059e+37
  %v4123 = vand.u32 %v2634, 2147483648
  %v4124 = vor.u32 1.1754944e-38, %v4123
  %v4125 = vsel %vm4122, %v4124, %v4120
  %v4126 = vmul.f32 1.0, %v4125
  %v4127 = vrcp.pop %v2635
  %v4128 = vmul.f32 %v2635, %v4127
  %v4129 = vsub.f32 1.0, %v4128
  %v4130 = vmul.f32 %v4127, %v4129
  %v4131 = vadd.f32 %v4127, %v4130
  %vm4132 = vweird.f32 %v2635
  %vm4133 = vweird.f32 %v4127
  %vm4134 = vmor %vm4132, %vm4133
  %v4135 = vsel %vm4134, %v4127, %v4131
  %v4136 = vand.u32 2147483647, %v2635
  %vm4137 = vcmp.eq.f32.partialorder %v4136, 8.507059e+37
  %v4138 = vand.u32 %v2635, 2147483648
  %v4139 = vor.u32 1.1754944e-38, %v4138
  %v4140 = vsel %vm4137, %v4139, %v4135
  %v4141 = vmul.f32 1.0, %v4140
  %v4142 = vrcp.pop %v2636
  %v4143 = vmul.f32 %v2636, %v4142
  %v4144 = vsub.f32 1.0, %v4143
  %v4145 = vmul.f32 %v4142, %v4144
  %v4146 = vadd.f32 %v4142, %v4145
  %vm4147 = vweird.f32 %v2636
  %vm4148 = vweird.f32 %v4142
  %vm4149 = vmor %vm4147, %vm4148
  %v4150 = vsel %vm4149, %v4142, %v4146
  %v4151 = vand.u32 2147483647, %v2636
  %vm4152 = vcmp.eq.f32.partialorder %v4151, 8.507059e+37
  %v4153 = vand.u32 %v2636, 2147483648
  %v4154 = vor.u32 1.1754944e-38, %v4153
  %v4155 = vsel %vm4152, %v4154, %v4150
  %v4156 = vmul.f32 1.0, %v4155
  %v4157 = vrcp.pop %v2637
  %v4158 = vmul.f32 %v2637, %v4157
  %v4159 = vsub.f32 1.0, %v4158
  %v4160 = vmul.f32 %v4157, %v4159
  %v4161 = vadd.f32 %v4157, %v4160
  %vm4162 = vweird.f32 %v2637
  %vm4163 = vweird.f32 %v4157
  %vm4164 = vmor %vm4162, %vm4163
  %v4165 = vsel %vm4164, %v4157, %v4161
  %v4166 = vand.u32 2147483647, %v2637
  %vm4167 = vcmp.eq.f32.partialorder %v4166, 8.507059e+37
  %v4168 = vand.u32 %v2637, 2147483648
  %v4169 = vor.u32 1.1754944e-38, %v4168
  %v4170 = vsel %vm4167, %v4169, %v4165
  %v4171 = vmul.f32 1.0, %v4170
  %v4172 = vrcp.pop %v2638
  %v4173 = vmul.f32 %v2638, %v4172
  %v4174 = vsub.f32 1.0, %v4173
  %v4175 = vmul.f32 %v4172, %v4174
  %v4176 = vadd.f32 %v4172, %v4175
  %vm4177 = vweird.f32 %v2638
  %vm4178 = vweird.f32 %v4172
  %vm4179 = vmor %vm4177, %vm4178
  %v4180 = vsel %vm4179, %v4172, %v4176
  %v4181 = vand.u32 2147483647, %v2638
  %vm4182 = vcmp.eq.f32.partialorder %v4181, 8.507059e+37
  %v4183 = vand.u32 %v2638, 2147483648
  %v4184 = vor.u32 1.1754944e-38, %v4183
  %v4185 = vsel %vm4182, %v4184, %v4180
  %v4186 = vmul.f32 1.0, %v4185
  %v4187 = vrcp.pop %v2639
  %v4188 = vmul.f32 %v2639, %v4187
  %v4189 = vsub.f32 1.0, %v4188
  %v4190 = vmul.f32 %v4187, %v4189
  %v4191 = vadd.f32 %v4187, %v4190
  %vm4192 = vweird.f32 %v2639
  %vm4193 = vweird.f32 %v4187
  %vm4194 = vmor %vm4192, %vm4193
  %v4195 = vsel %vm4194, %v4187, %v4191
  %v4196 = vand.u32 2147483647, %v2639
  %vm4197 = vcmp.eq.f32.partialorder %v4196, 8.507059e+37
  %v4198 = vand.u32 %v2639, 2147483648
  %v4199 = vor.u32 1.1754944e-38, %v4198
  %v4200 = vsel %vm4197, %v4199, %v4195
  %v4201 = vmul.f32 1.0, %v4200
  %v4202 = vrcp.pop %v2640
  %v4203 = vmul.f32 %v2640, %v4202
  %v4204 = vsub.f32 1.0, %v4203
  %v4205 = vmul.f32 %v4202, %v4204
  %v4206 = vadd.f32 %v4202, %v4205
  %vm4207 = vweird.f32 %v2640
  %vm4208 = vweird.f32 %v4202
  %vm4209 = vmor %vm4207, %vm4208
  %v4210 = vsel %vm4209, %v4202, %v4206
  %v4211 = vand.u32 2147483647, %v2640
  %vm4212 = vcmp.eq.f32.partialorder %v4211, 8.507059e+37
  %v4213 = vand.u32 %v2640, 2147483648
  %v4214 = vor.u32 1.1754944e-38, %v4213
  %v4215 = vsel %vm4212, %v4214, %v4210
  %v4216 = vmul.f32 1.0, %v4215
  %v4217 = vrcp.pop %v2641
  %v4218 = vmul.f32 %v2641, %v4217
  %v4219 = vsub.f32 1.0, %v4218
  %v4220 = vmul.f32 %v4217, %v4219
  %v4221 = vadd.f32 %v4217, %v4220
  %vm4222 = vweird.f32 %v2641
  %vm4223 = vweird.f32 %v4217
  %vm4224 = vmor %vm4222, %vm4223
  %v4225 = vsel %vm4224, %v4217, %v4221
  %v4226 = vand.u32 2147483647, %v2641
  %vm4227 = vcmp.eq.f32.partialorder %v4226, 8.507059e+37
  %v4228 = vand.u32 %v2641, 2147483648
  %v4229 = vor.u32 1.1754944e-38, %v4228
  %v4230 = vsel %vm4227, %v4229, %v4225
  %v4231 = vmul.f32 1.0, %v4230
  %v4232 = vrcp.pop %v2642
  %v4233 = vmul.f32 %v2642, %v4232
  %v4234 = vsub.f32 1.0, %v4233
  %v4235 = vmul.f32 %v4232, %v4234
  %v4236 = vadd.f32 %v4232, %v4235
  %vm4237 = vweird.f32 %v2642
  %vm4238 = vweird.f32 %v4232
  %vm4239 = vmor %vm4237, %vm4238
  %v4240 = vsel %vm4239, %v4232, %v4236
  %v4241 = vand.u32 2147483647, %v2642
  %vm4242 = vcmp.eq.f32.partialorder %v4241, 8.507059e+37
  %v4243 = vand.u32 %v2642, 2147483648
  %v4244 = vor.u32 1.1754944e-38, %v4243
  %v4245 = vsel %vm4242, %v4244, %v4240
  %v4246 = vmul.f32 1.0, %v4245
  %v4247 = vrcp.pop %v2643
  %v4248 = vmul.f32 %v2643, %v4247
  %v4249 = vsub.f32 1.0, %v4248
  %v4250 = vmul.f32 %v4247, %v4249
  %v4251 = vadd.f32 %v4247, %v4250
  %vm4252 = vweird.f32 %v2643
  %vm4253 = vweird.f32 %v4247
  %vm4254 = vmor %vm4252, %vm4253
  %v4255 = vsel %vm4254, %v4247, %v4251
  %v4256 = vand.u32 2147483647, %v2643
  %vm4257 = vcmp.eq.f32.partialorder %v4256, 8.507059e+37
  %v4258 = vand.u32 %v2643, 2147483648
  %v4259 = vor.u32 1.1754944e-38, %v4258
  %v4260 = vsel %vm4257, %v4259, %v4255
  %v4261 = vmul.f32 1.0, %v4260
  %v4262 = vrcp.pop %v2644
  %v4263 = vmul.f32 %v2644, %v4262
  %v4264 = vsub.f32 1.0, %v4263
  %v4265 = vmul.f32 %v4262, %v4264
  %v4266 = vadd.f32 %v4262, %v4265
  %vm4267 = vweird.f32 %v2644
  %vm4268 = vweird.f32 %v4262
  %vm4269 = vmor %vm4267, %vm4268
  %v4270 = vsel %vm4269, %v4262, %v4266
  %v4271 = vand.u32 2147483647, %v2644
  %vm4272 = vcmp.eq.f32.partialorder %v4271, 8.507059e+37
  %v4273 = vand.u32 %v2644, 2147483648
  %v4274 = vor.u32 1.1754944e-38, %v4273
  %v4275 = vsel %vm4272, %v4274, %v4270
  %v4276 = vmul.f32 1.0, %v4275
  %v4277 = vrcp.pop %v2645
  %v4278 = vmul.f32 %v2645, %v4277
  %v4279 = vsub.f32 1.0, %v4278
  %v4280 = vmul.f32 %v4277, %v4279
  %v4281 = vadd.f32 %v4277, %v4280
  %vm4282 = vweird.f32 %v2645
  %vm4283 = vweird.f32 %v4277
  %vm4284 = vmor %vm4282, %vm4283
  %v4285 = vsel %vm4284, %v4277, %v4281
  %v4286 = vand.u32 2147483647, %v2645
  %vm4287 = vcmp.eq.f32.partialorder %v4286, 8.507059e+37
  %v4288 = vand.u32 %v2645, 2147483648
  %v4289 = vor.u32 1.1754944e-38, %v4288
  %v4290 = vsel %vm4287, %v4289, %v4285
  %v4291 = vmul.f32 1.0, %v4290
  %v4292 = vrcp.pop %v2646
  %v4293 = vmul.f32 %v2646, %v4292
  %v4294 = vsub.f32 1.0, %v4293
  %v4295 = vmul.f32 %v4292, %v4294
  %v4296 = vadd.f32 %v4292, %v4295
  %vm4297 = vweird.f32 %v2646
  %vm4298 = vweird.f32 %v4292
  %vm4299 = vmor %vm4297, %vm4298
  %v4300 = vsel %vm4299, %v4292, %v4296
  %v4301 = vand.u32 2147483647, %v2646
  %vm4302 = vcmp.eq.f32.partialorder %v4301, 8.507059e+37
  %v4303 = vand.u32 %v2646, 2147483648
  %v4304 = vor.u32 1.1754944e-38, %v4303
  %v4305 = vsel %vm4302, %v4304, %v4300
  %v4306 = vmul.f32 1.0, %v4305
  %v4307 = vrcp.pop %v2647
  %v4308 = vmul.f32 %v2647, %v4307
  %v4309 = vsub.f32 1.0, %v4308
  %v4310 = vmul.f32 %v4307, %v4309
  %v4311 = vadd.f32 %v4307, %v4310
  %vm4312 = vweird.f32 %v2647
  %vm4313 = vweird.f32 %v4307
  %vm4314 = vmor %vm4312, %vm4313
  %v4315 = vsel %vm4314, %v4307, %v4311
  %v4316 = vand.u32 2147483647, %v2647
  %vm4317 = vcmp.eq.f32.partialorder %v4316, 8.507059e+37
  %v4318 = vand.u32 %v2647, 2147483648
  %v4319 = vor.u32 1.1754944e-38, %v4318
  %v4320 = vsel %vm4317, %v4319, %v4315
  %v4321 = vmul.f32 1.0, %v4320
  %v4322 = vrcp.pop %v2648
  %v4323 = vmul.f32 %v2648, %v4322
  %v4324 = vsub.f32 1.0, %v4323
  %v4325 = vmul.f32 %v4322, %v4324
  %v4326 = vadd.f32 %v4322, %v4325
  %vm4327 = vweird.f32 %v2648
  %vm4328 = vweird.f32 %v4322
  %vm4329 = vmor %vm4327, %vm4328
  %v4330 = vsel %vm4329, %v4322, %v4326
  %v4331 = vand.u32 2147483647, %v2648
  %vm4332 = vcmp.eq.f32.partialorder %v4331, 8.507059e+37
  %v4333 = vand.u32 %v2648, 2147483648
  %v4334 = vor.u32 1.1754944e-38, %v4333
  %v4335 = vsel %vm4332, %v4334, %v4330
  %v4336 = vmul.f32 1.0, %v4335
  %v4337 = vrcp.pop %v2649
  %v4338 = vmul.f32 %v2649, %v4337
  %v4339 = vsub.f32 1.0, %v4338
  %v4340 = vmul.f32 %v4337, %v4339
  %v4341 = vadd.f32 %v4337, %v4340
  %vm4342 = vweird.f32 %v2649
  %vm4343 = vweird.f32 %v4337
  %vm4344 = vmor %vm4342, %vm4343
  %v4345 = vsel %vm4344, %v4337, %v4341
  %v4346 = vand.u32 2147483647, %v2649
  %vm4347 = vcmp.eq.f32.partialorder %v4346, 8.507059e+37
  %v4348 = vand.u32 %v2649, 2147483648
  %v4349 = vor.u32 1.1754944e-38, %v4348
  %v4350 = vsel %vm4347, %v4349, %v4345
  %v4351 = vmul.f32 1.0, %v4350
  %v4352 = vrcp.pop %v2650
  %v4353 = vmul.f32 %v2650, %v4352
  %v4354 = vsub.f32 1.0, %v4353
  %v4355 = vmul.f32 %v4352, %v4354
  %v4356 = vadd.f32 %v4352, %v4355
  %vm4357 = vweird.f32 %v2650
  %vm4358 = vweird.f32 %v4352
  %vm4359 = vmor %vm4357, %vm4358
  %v4360 = vsel %vm4359, %v4352, %v4356
  %v4361 = vand.u32 2147483647, %v2650
  %vm4362 = vcmp.eq.f32.partialorder %v4361, 8.507059e+37
  %v4363 = vand.u32 %v2650, 2147483648
  %v4364 = vor.u32 1.1754944e-38, %v4363
  %v4365 = vsel %vm4362, %v4364, %v4360
  %v4366 = vmul.f32 1.0, %v4365
  %v4367 = vrcp.pop %v2651
  %v4368 = vmul.f32 %v2651, %v4367
  %v4369 = vsub.f32 1.0, %v4368
  %v4370 = vmul.f32 %v4367, %v4369
  %v4371 = vadd.f32 %v4367, %v4370
  %vm4372 = vweird.f32 %v2651
  %vm4373 = vweird.f32 %v4367
  %vm4374 = vmor %vm4372, %vm4373
  %v4375 = vsel %vm4374, %v4367, %v4371
  %v4376 = vand.u32 2147483647, %v2651
  %vm4377 = vcmp.eq.f32.partialorder %v4376, 8.507059e+37
  %v4378 = vand.u32 %v2651, 2147483648
  %v4379 = vor.u32 1.1754944e-38, %v4378
  %v4380 = vsel %vm4377, %v4379, %v4375
  %v4381 = vmul.f32 1.0, %v4380
  %v4382 = vrcp.pop %v2652
  %v4383 = vmul.f32 %v2652, %v4382
  %v4384 = vsub.f32 1.0, %v4383
  %v4385 = vmul.f32 %v4382, %v4384
  %v4386 = vadd.f32 %v4382, %v4385
  %vm4387 = vweird.f32 %v2652
  %vm4388 = vweird.f32 %v4382
  %vm4389 = vmor %vm4387, %vm4388
  %v4390 = vsel %vm4389, %v4382, %v4386
  %v4391 = vand.u32 2147483647, %v2652
  %vm4392 = vcmp.eq.f32.partialorder %v4391, 8.507059e+37
  %v4393 = vand.u32 %v2652, 2147483648
  %v4394 = vor.u32 1.1754944e-38, %v4393
  %v4395 = vsel %vm4392, %v4394, %v4390
  %v4396 = vmul.f32 1.0, %v4395
  %v4397 = vrcp.pop %v2653
  %v4398 = vmul.f32 %v2653, %v4397
  %v4399 = vsub.f32 1.0, %v4398
  %v4400 = vmul.f32 %v4397, %v4399
  %v4401 = vadd.f32 %v4397, %v4400
  %vm4402 = vweird.f32 %v2653
  %vm4403 = vweird.f32 %v4397
  %vm4404 = vmor %vm4402, %vm4403
  %v4405 = vsel %vm4404, %v4397, %v4401
  %v4406 = vand.u32 2147483647, %v2653
  %vm4407 = vcmp.eq.f32.partialorder %v4406, 8.507059e+37
  %v4408 = vand.u32 %v2653, 2147483648
  %v4409 = vor.u32 1.1754944e-38, %v4408
  %v4410 = vsel %vm4407, %v4409, %v4405
  %v4411 = vmul.f32 1.0, %v4410
  %v4412 = vrcp.pop %v2654
  %v4413 = vmul.f32 %v2654, %v4412
  %v4414 = vsub.f32 1.0, %v4413
  %v4415 = vmul.f32 %v4412, %v4414
  %v4416 = vadd.f32 %v4412, %v4415
  %vm4417 = vweird.f32 %v2654
  %vm4418 = vweird.f32 %v4412
  %vm4419 = vmor %vm4417, %vm4418
  %v4420 = vsel %vm4419, %v4412, %v4416
  %v4421 = vand.u32 2147483647, %v2654
  %vm4422 = vcmp.eq.f32.partialorder %v4421, 8.507059e+37
  %v4423 = vand.u32 %v2654, 2147483648
  %v4424 = vor.u32 1.1754944e-38, %v4423
  %v4425 = vsel %vm4422, %v4424, %v4420
  %v4426 = vmul.f32 1.0, %v4425
  %v4427 = vrcp.pop %v2655
  %v4428 = vmul.f32 %v2655, %v4427
  %v4429 = vsub.f32 1.0, %v4428
  %v4430 = vmul.f32 %v4427, %v4429
  %v4431 = vadd.f32 %v4427, %v4430
  %vm4432 = vweird.f32 %v2655
  %vm4433 = vweird.f32 %v4427
  %vm4434 = vmor %vm4432, %vm4433
  %v4435 = vsel %vm4434, %v4427, %v4431
  %v4436 = vand.u32 2147483647, %v2655
  %vm4437 = vcmp.eq.f32.partialorder %v4436, 8.507059e+37
  %v4438 = vand.u32 %v2655, 2147483648
  %v4439 = vor.u32 1.1754944e-38, %v4438
  %v4440 = vsel %vm4437, %v4439, %v4435
  %v4441 = vmul.f32 1.0, %v4440
  %v4442 = vrcp.pop %v2656
  %v4443 = vmul.f32 %v2656, %v4442
  %v4444 = vsub.f32 1.0, %v4443
  %v4445 = vmul.f32 %v4442, %v4444
  %v4446 = vadd.f32 %v4442, %v4445
  %vm4447 = vweird.f32 %v2656
  %vm4448 = vweird.f32 %v4442
  %vm4449 = vmor %vm4447, %vm4448
  %v4450 = vsel %vm4449, %v4442, %v4446
  %v4451 = vand.u32 2147483647, %v2656
  %vm4452 = vcmp.eq.f32.partialorder %v4451, 8.507059e+37
  %v4453 = vand.u32 %v2656, 2147483648
  %v4454 = vor.u32 1.1754944e-38, %v4453
  %v4455 = vsel %vm4452, %v4454, %v4450
  %v4456 = vmul.f32 1.0, %v4455
  %v4457 = vrcp.pop %v2657
  %v4458 = vmul.f32 %v2657, %v4457
  %v4459 = vsub.f32 1.0, %v4458
  %v4460 = vmul.f32 %v4457, %v4459
  %v4461 = vadd.f32 %v4457, %v4460
  %vm4462 = vweird.f32 %v2657
  %vm4463 = vweird.f32 %v4457
  %vm4464 = vmor %vm4462, %vm4463
  %v4465 = vsel %vm4464, %v4457, %v4461
  %v4466 = vand.u32 2147483647, %v2657
  %vm4467 = vcmp.eq.f32.partialorder %v4466, 8.507059e+37
  %v4468 = vand.u32 %v2657, 2147483648
  %v4469 = vor.u32 1.1754944e-38, %v4468
  %v4470 = vsel %vm4467, %v4469, %v4465
  %v4471 = vmul.f32 1.0, %v4470
  %v4472 = vrcp.pop %v2658
  %v4473 = vmul.f32 %v2658, %v4472
  %v4474 = vsub.f32 1.0, %v4473
  %v4475 = vmul.f32 %v4472, %v4474
  %v4476 = vadd.f32 %v4472, %v4475
  %vm4477 = vweird.f32 %v2658
  %vm4478 = vweird.f32 %v4472
  %vm4479 = vmor %vm4477, %vm4478
  %v4480 = vsel %vm4479, %v4472, %v4476
  %v4481 = vand.u32 2147483647, %v2658
  %vm4482 = vcmp.eq.f32.partialorder %v4481, 8.507059e+37
  %v4483 = vand.u32 %v2658, 2147483648
  %v4484 = vor.u32 1.1754944e-38, %v4483
  %v4485 = vsel %vm4482, %v4484, %v4480
  %v4486 = vmul.f32 1.0, %v4485
  %v4487 = vrcp.pop %v2659
  %v4488 = vmul.f32 %v2659, %v4487
  %v4489 = vsub.f32 1.0, %v4488
  %v4490 = vmul.f32 %v4487, %v4489
  %v4491 = vadd.f32 %v4487, %v4490
  %vm4492 = vweird.f32 %v2659
  %vm4493 = vweird.f32 %v4487
  %vm4494 = vmor %vm4492, %vm4493
  %v4495 = vsel %vm4494, %v4487, %v4491
  %v4496 = vand.u32 2147483647, %v2659
  %vm4497 = vcmp.eq.f32.partialorder %v4496, 8.507059e+37
  %v4498 = vand.u32 %v2659, 2147483648
  %v4499 = vor.u32 1.1754944e-38, %v4498
  %v4500 = vsel %vm4497, %v4499, %v4495
  %v4501 = vmul.f32 1.0, %v4500
  %v4502 = vrcp.pop %v2660
  %v4503 = vmul.f32 %v2660, %v4502
  %v4504 = vsub.f32 1.0, %v4503
  %v4505 = vmul.f32 %v4502, %v4504
  %v4506 = vadd.f32 %v4502, %v4505
  %vm4507 = vweird.f32 %v2660
  %vm4508 = vweird.f32 %v4502
  %vm4509 = vmor %vm4507, %vm4508
  %v4510 = vsel %vm4509, %v4502, %v4506
  %v4511 = vand.u32 2147483647, %v2660
  %vm4512 = vcmp.eq.f32.partialorder %v4511, 8.507059e+37
  %v4513 = vand.u32 %v2660, 2147483648
  %v4514 = vor.u32 1.1754944e-38, %v4513
  %v4515 = vsel %vm4512, %v4514, %v4510
  %v4516 = vmul.f32 1.0, %v4515
  %v4517 = vrcp.pop %v2661
  %v4518 = vmul.f32 %v2661, %v4517
  %v4519 = vsub.f32 1.0, %v4518
  %v4520 = vmul.f32 %v4517, %v4519
  %v4521 = vadd.f32 %v4517, %v4520
  %vm4522 = vweird.f32 %v2661
  %vm4523 = vweird.f32 %v4517
  %vm4524 = vmor %vm4522, %vm4523
  %v4525 = vsel %vm4524, %v4517, %v4521
  %v4526 = vand.u32 2147483647, %v2661
  %vm4527 = vcmp.eq.f32.partialorder %v4526, 8.507059e+37
  %v4528 = vand.u32 %v2661, 2147483648
  %v4529 = vor.u32 1.1754944e-38, %v4528
  %v4530 = vsel %vm4527, %v4529, %v4525
  %v4531 = vmul.f32 1.0, %v4530
  %v4532 = vrcp.pop %v2662
  %v4533 = vmul.f32 %v2662, %v4532
  %v4534 = vsub.f32 1.0, %v4533
  %v4535 = vmul.f32 %v4532, %v4534
  %v4536 = vadd.f32 %v4532, %v4535
  %vm4537 = vweird.f32 %v2662
  %vm4538 = vweird.f32 %v4532
  %vm4539 = vmor %vm4537, %vm4538
  %v4540 = vsel %vm4539, %v4532, %v4536
  %v4541 = vand.u32 2147483647, %v2662
  %vm4542 = vcmp.eq.f32.partialorder %v4541, 8.507059e+37
  %v4543 = vand.u32 %v2662, 2147483648
  %v4544 = vor.u32 1.1754944e-38, %v4543
  %v4545 = vsel %vm4542, %v4544, %v4540
  %v4546 = vmul.f32 1.0, %v4545
  %v4547 = vrcp.pop %v2663
  %v4548 = vmul.f32 %v2663, %v4547
  %v4549 = vsub.f32 1.0, %v4548
  %v4550 = vmul.f32 %v4547, %v4549
  %v4551 = vadd.f32 %v4547, %v4550
  %vm4552 = vweird.f32 %v2663
  %vm4553 = vweird.f32 %v4547
  %vm4554 = vmor %vm4552, %vm4553
  %v4555 = vsel %vm4554, %v4547, %v4551
  %v4556 = vand.u32 2147483647, %v2663
  %vm4557 = vcmp.eq.f32.partialorder %v4556, 8.507059e+37
  %v4558 = vand.u32 %v2663, 2147483648
  %v4559 = vor.u32 1.1754944e-38, %v4558
  %v4560 = vsel %vm4557, %v4559, %v4555
  %v4561 = vmul.f32 1.0, %v4560
  %v4562 = vrcp.pop %v2664
  %v4563 = vmul.f32 %v2664, %v4562
  %v4564 = vsub.f32 1.0, %v4563
  %v4565 = vmul.f32 %v4562, %v4564
  %v4566 = vadd.f32 %v4562, %v4565
  %vm4567 = vweird.f32 %v2664
  %vm4568 = vweird.f32 %v4562
  %vm4569 = vmor %vm4567, %vm4568
  %v4570 = vsel %vm4569, %v4562, %v4566
  %v4571 = vand.u32 2147483647, %v2664
  %vm4572 = vcmp.eq.f32.partialorder %v4571, 8.507059e+37
  %v4573 = vand.u32 %v2664, 2147483648
  %v4574 = vor.u32 1.1754944e-38, %v4573
  %v4575 = vsel %vm4572, %v4574, %v4570
  %v4576 = vmul.f32 1.0, %v4575
  %v4577 = vrcp.pop %v2665
  %v4578 = vmul.f32 %v2665, %v4577
  %v4579 = vsub.f32 1.0, %v4578
  %v4580 = vmul.f32 %v4577, %v4579
  %v4581 = vadd.f32 %v4577, %v4580
  %vm4582 = vweird.f32 %v2665
  %vm4583 = vweird.f32 %v4577
  %vm4584 = vmor %vm4582, %vm4583
  %v4585 = vsel %vm4584, %v4577, %v4581
  %v4586 = vand.u32 2147483647, %v2665
  %vm4587 = vcmp.eq.f32.partialorder %v4586, 8.507059e+37
  %v4588 = vand.u32 %v2665, 2147483648
  %v4589 = vor.u32 1.1754944e-38, %v4588
  %v4590 = vsel %vm4587, %v4589, %v4585
  %v4591 = vmul.f32 1.0, %v4590
  %v4592 = vrcp.pop %v2666
  %v4593 = vmul.f32 %v2666, %v4592
  %v4594 = vsub.f32 1.0, %v4593
  %v4595 = vmul.f32 %v4592, %v4594
  %v4596 = vadd.f32 %v4592, %v4595
  %vm4597 = vweird.f32 %v2666
  %vm4598 = vweird.f32 %v4592
  %vm4599 = vmor %vm4597, %vm4598
  %v4600 = vsel %vm4599, %v4592, %v4596
  %v4601 = vand.u32 2147483647, %v2666
  %vm4602 = vcmp.eq.f32.partialorder %v4601, 8.507059e+37
  %v4603 = vand.u32 %v2666, 2147483648
  %v4604 = vor.u32 1.1754944e-38, %v4603
  %v4605 = vsel %vm4602, %v4604, %v4600
  %v4606 = vmul.f32 1.0, %v4605
  %v4607 = vrcp.pop %v2667
  %v4608 = vmul.f32 %v2667, %v4607
  %v4609 = vsub.f32 1.0, %v4608
  %v4610 = vmul.f32 %v4607, %v4609
  %v4611 = vadd.f32 %v4607, %v4610
  %vm4612 = vweird.f32 %v2667
  %vm4613 = vweird.f32 %v4607
  %vm4614 = vmor %vm4612, %vm4613
  %v4615 = vsel %vm4614, %v4607, %v4611
  %v4616 = vand.u32 2147483647, %v2667
  %vm4617 = vcmp.eq.f32.partialorder %v4616, 8.507059e+37
  %v4618 = vand.u32 %v2667, 2147483648
  %v4619 = vor.u32 1.1754944e-38, %v4618
  %v4620 = vsel %vm4617, %v4619, %v4615
  %v4621 = vmul.f32 1.0, %v4620
  %v4622 = vrcp.pop %v2668
  %v4623 = vmul.f32 %v2668, %v4622
  %v4624 = vsub.f32 1.0, %v4623
  %v4625 = vmul.f32 %v4622, %v4624
  %v4626 = vadd.f32 %v4622, %v4625
  %vm4627 = vweird.f32 %v2668
  %vm4628 = vweird.f32 %v4622
  %vm4629 = vmor %vm4627, %vm4628
  %v4630 = vsel %vm4629, %v4622, %v4626
  %v4631 = vand.u32 2147483647, %v2668
  %vm4632 = vcmp.eq.f32.partialorder %v4631, 8.507059e+37
  %v4633 = vand.u32 %v2668, 2147483648
  %v4634 = vor.u32 1.1754944e-38, %v4633
  %v4635 = vsel %vm4632, %v4634, %v4630
  %v4636 = vmul.f32 1.0, %v4635
  %v4637 = vrcp.pop %v2669
  %v4638 = vmul.f32 %v2669, %v4637
  %v4639 = vsub.f32 1.0, %v4638
  %v4640 = vmul.f32 %v4637, %v4639
  %v4641 = vadd.f32 %v4637, %v4640
  %vm4642 = vweird.f32 %v2669
  %vm4643 = vweird.f32 %v4637
  %vm4644 = vmor %vm4642, %vm4643
  %v4645 = vsel %vm4644, %v4637, %v4641
  %v4646 = vand.u32 2147483647, %v2669
  %vm4647 = vcmp.eq.f32.partialorder %v4646, 8.507059e+37
  %v4648 = vand.u32 %v2669, 2147483648
  %v4649 = vor.u32 1.1754944e-38, %v4648
  %v4650 = vsel %vm4647, %v4649, %v4645
  %v4651 = vmul.f32 1.0, %v4650
  %v4652 = vrcp.pop %v2670
  %v4653 = vmul.f32 %v2670, %v4652
  %v4654 = vsub.f32 1.0, %v4653
  %v4655 = vmul.f32 %v4652, %v4654
  %v4656 = vadd.f32 %v4652, %v4655
  %vm4657 = vweird.f32 %v2670
  %vm4658 = vweird.f32 %v4652
  %vm4659 = vmor %vm4657, %vm4658
  %v4660 = vsel %vm4659, %v4652, %v4656
  %v4661 = vand.u32 2147483647, %v2670
  %vm4662 = vcmp.eq.f32.partialorder %v4661, 8.507059e+37
  %v4663 = vand.u32 %v2670, 2147483648
  %v4664 = vor.u32 1.1754944e-38, %v4663
  %v4665 = vsel %vm4662, %v4664, %v4660
  %v4666 = vmul.f32 1.0, %v4665
  %v4667 = vrcp.pop %v2671
  %v4668 = vmul.f32 %v2671, %v4667
  %v4669 = vsub.f32 1.0, %v4668
  %v4670 = vmul.f32 %v4667, %v4669
  %v4671 = vadd.f32 %v4667, %v4670
  %vm4672 = vweird.f32 %v2671
  %vm4673 = vweird.f32 %v4667
  %vm4674 = vmor %vm4672, %vm4673
  %v4675 = vsel %vm4674, %v4667, %v4671
  %v4676 = vand.u32 2147483647, %v2671
  %vm4677 = vcmp.eq.f32.partialorder %v4676, 8.507059e+37
  %v4678 = vand.u32 %v2671, 2147483648
  %v4679 = vor.u32 1.1754944e-38, %v4678
  %v4680 = vsel %vm4677, %v4679, %v4675
  %v4681 = vmul.f32 1.0, %v4680
  %v4682 = vrcp.pop %v2672
  %v4683 = vmul.f32 %v2672, %v4682
  %v4684 = vsub.f32 1.0, %v4683
  %v4685 = vmul.f32 %v4682, %v4684
  %v4686 = vadd.f32 %v4682, %v4685
  %vm4687 = vweird.f32 %v2672
  %vm4688 = vweird.f32 %v4682
  %vm4689 = vmor %vm4687, %vm4688
  %v4690 = vsel %vm4689, %v4682, %v4686
  %v4691 = vand.u32 2147483647, %v2672
  %vm4692 = vcmp.eq.f32.partialorder %v4691, 8.507059e+37
  %v4693 = vand.u32 %v2672, 2147483648
  %v4694 = vor.u32 1.1754944e-38, %v4693
  %v4695 = vsel %vm4692, %v4694, %v4690
  %v4696 = vmul.f32 1.0, %v4695
  %v4697 = vrcp.pop %v2673
  %v4698 = vmul.f32 %v2673, %v4697
  %v4699 = vsub.f32 1.0, %v4698
  %v4700 = vmul.f32 %v4697, %v4699
  %v4701 = vadd.f32 %v4697, %v4700
  %vm4702 = vweird.f32 %v2673
  %vm4703 = vweird.f32 %v4697
  %vm4704 = vmor %vm4702, %vm4703
  %v4705 = vsel %vm4704, %v4697, %v4701
  %v4706 = vand.u32 2147483647, %v2673
  %vm4707 = vcmp.eq.f32.partialorder %v4706, 8.507059e+37
  %v4708 = vand.u32 %v2673, 2147483648
  %v4709 = vor.u32 1.1754944e-38, %v4708
  %v4710 = vsel %vm4707, %v4709, %v4705
  %v4711 = vmul.f32 1.0, %v4710
  %v4712 = vrcp.pop %v2674
  %v4713 = vmul.f32 %v2674, %v4712
  %v4714 = vsub.f32 1.0, %v4713
  %v4715 = vmul.f32 %v4712, %v4714
  %v4716 = vadd.f32 %v4712, %v4715
  %vm4717 = vweird.f32 %v2674
  %vm4718 = vweird.f32 %v4712
  %vm4719 = vmor %vm4717, %vm4718
  %v4720 = vsel %vm4719, %v4712, %v4716
  %v4721 = vand.u32 2147483647, %v2674
  %vm4722 = vcmp.eq.f32.partialorder %v4721, 8.507059e+37
  %v4723 = vand.u32 %v2674, 2147483648
  %v4724 = vor.u32 1.1754944e-38, %v4723
  %v4725 = vsel %vm4722, %v4724, %v4720
  %v4726 = vmul.f32 1.0, %v4725
  %v4727 = vrcp.pop %v2675
  %v4728 = vmul.f32 %v2675, %v4727
  %v4729 = vsub.f32 1.0, %v4728
  %v4730 = vmul.f32 %v4727, %v4729
  %v4731 = vadd.f32 %v4727, %v4730
  %vm4732 = vweird.f32 %v2675
  %vm4733 = vweird.f32 %v4727
  %vm4734 = vmor %vm4732, %vm4733
  %v4735 = vsel %vm4734, %v4727, %v4731
  %v4736 = vand.u32 2147483647, %v2675
  %vm4737 = vcmp.eq.f32.partialorder %v4736, 8.507059e+37
  %v4738 = vand.u32 %v2675, 2147483648
  %v4739 = vor.u32 1.1754944e-38, %v4738
  %v4740 = vsel %vm4737, %v4739, %v4735
  %v4741 = vmul.f32 1.0, %v4740
  %v4742 = vrcp.pop %v2676
  %v4743 = vmul.f32 %v2676, %v4742
  %v4744 = vsub.f32 1.0, %v4743
  %v4745 = vmul.f32 %v4742, %v4744
  %v4746 = vadd.f32 %v4742, %v4745
  %vm4747 = vweird.f32 %v2676
  %vm4748 = vweird.f32 %v4742
  %vm4749 = vmor %vm4747, %vm4748
  %v4750 = vsel %vm4749, %v4742, %v4746
  %v4751 = vand.u32 2147483647, %v2676
  %vm4752 = vcmp.eq.f32.partialorder %v4751, 8.507059e+37
  %v4753 = vand.u32 %v2676, 2147483648
  %v4754 = vor.u32 1.1754944e-38, %v4753
  %v4755 = vsel %vm4752, %v4754, %v4750
  %v4756 = vmul.f32 1.0, %v4755
  %v4757 = vrcp.pop %v2677
  %v4758 = vmul.f32 %v2677, %v4757
  %v4759 = vsub.f32 1.0, %v4758
  %v4760 = vmul.f32 %v4757, %v4759
  %v4761 = vadd.f32 %v4757, %v4760
  %vm4762 = vweird.f32 %v2677
  %vm4763 = vweird.f32 %v4757
  %vm4764 = vmor %vm4762, %vm4763
  %v4765 = vsel %vm4764, %v4757, %v4761
  %v4766 = vand.u32 2147483647, %v2677
  %vm4767 = vcmp.eq.f32.partialorder %v4766, 8.507059e+37
  %v4768 = vand.u32 %v2677, 2147483648
  %v4769 = vor.u32 1.1754944e-38, %v4768
  %v4770 = vsel %vm4767, %v4769, %v4765
  %v4771 = vmul.f32 1.0, %v4770
  %v4772 = vrcp.pop %v2678
  %v4773 = vmul.f32 %v2678, %v4772
  %v4774 = vsub.f32 1.0, %v4773
  %v4775 = vmul.f32 %v4772, %v4774
  %v4776 = vadd.f32 %v4772, %v4775
  %vm4777 = vweird.f32 %v2678
  %vm4778 = vweird.f32 %v4772
  %vm4779 = vmor %vm4777, %vm4778
  %v4780 = vsel %vm4779, %v4772, %v4776
  %v4781 = vand.u32 2147483647, %v2678
  %vm4782 = vcmp.eq.f32.partialorder %v4781, 8.507059e+37
  %v4783 = vand.u32 %v2678, 2147483648
  %v4784 = vor.u32 1.1754944e-38, %v4783
  %v4785 = vsel %vm4782, %v4784, %v4780
  %v4786 = vmul.f32 1.0, %v4785
  %v4787 = vrcp.pop %v2679
  %v4788 = vmul.f32 %v2679, %v4787
  %v4789 = vsub.f32 1.0, %v4788
  %v4790 = vmul.f32 %v4787, %v4789
  %v4791 = vadd.f32 %v4787, %v4790
  %vm4792 = vweird.f32 %v2679
  %vm4793 = vweird.f32 %v4787
  %vm4794 = vmor %vm4792, %vm4793
  %v4795 = vsel %vm4794, %v4787, %v4791
  %v4796 = vand.u32 2147483647, %v2679
  %vm4797 = vcmp.eq.f32.partialorder %v4796, 8.507059e+37
  %v4798 = vand.u32 %v2679, 2147483648
  %v4799 = vor.u32 1.1754944e-38, %v4798
  %v4800 = vsel %vm4797, %v4799, %v4795
  %v4801 = vmul.f32 1.0, %v4800
  %v4802 = vrcp.pop %v2680
  %v4803 = vmul.f32 %v2680, %v4802
  %v4804 = vsub.f32 1.0, %v4803
  %v4805 = vmul.f32 %v4802, %v4804
  %v4806 = vadd.f32 %v4802, %v4805
  %vm4807 = vweird.f32 %v2680
  %vm4808 = vweird.f32 %v4802
  %vm4809 = vmor %vm4807, %vm4808
  %v4810 = vsel %vm4809, %v4802, %v4806
  %v4811 = vand.u32 2147483647, %v2680
  %vm4812 = vcmp.eq.f32.partialorder %v4811, 8.507059e+37
  %v4813 = vand.u32 %v2680, 2147483648
  %v4814 = vor.u32 1.1754944e-38, %v4813
  %v4815 = vsel %vm4812, %v4814, %v4810
  %v4816 = vmul.f32 1.0, %v4815
  %v4817 = vrcp.pop %v2681
  %v4818 = vmul.f32 %v2681, %v4817
  %v4819 = vsub.f32 1.0, %v4818
  %v4820 = vmul.f32 %v4817, %v4819
  %v4821 = vadd.f32 %v4817, %v4820
  %vm4822 = vweird.f32 %v2681
  %vm4823 = vweird.f32 %v4817
  %vm4824 = vmor %vm4822, %vm4823
  %v4825 = vsel %vm4824, %v4817, %v4821
  %v4826 = vand.u32 2147483647, %v2681
  %vm4827 = vcmp.eq.f32.partialorder %v4826, 8.507059e+37
  %v4828 = vand.u32 %v2681, 2147483648
  %v4829 = vor.u32 1.1754944e-38, %v4828
  %v4830 = vsel %vm4827, %v4829, %v4825
  %v4831 = vmul.f32 1.0, %v4830
  %v4832 = vrcp.pop %v2682
  %v4833 = vmul.f32 %v2682, %v4832
  %v4834 = vsub.f32 1.0, %v4833
  %v4835 = vmul.f32 %v4832, %v4834
  %v4836 = vadd.f32 %v4832, %v4835
  %vm4837 = vweird.f32 %v2682
  %vm4838 = vweird.f32 %v4832
  %vm4839 = vmor %vm4837, %vm4838
  %v4840 = vsel %vm4839, %v4832, %v4836
  %v4841 = vand.u32 2147483647, %v2682
  %vm4842 = vcmp.eq.f32.partialorder %v4841, 8.507059e+37
  %v4843 = vand.u32 %v2682, 2147483648
  %v4844 = vor.u32 1.1754944e-38, %v4843
  %v4845 = vsel %vm4842, %v4844, %v4840
  %v4846 = vmul.f32 1.0, %v4845
  %v4847 = vrcp.pop %v2683
  %v4848 = vmul.f32 %v2683, %v4847
  %v4849 = vsub.f32 1.0, %v4848
  %v4850 = vmul.f32 %v4847, %v4849
  %v4851 = vadd.f32 %v4847, %v4850
  %vm4852 = vweird.f32 %v2683
  %vm4853 = vweird.f32 %v4847
  %vm4854 = vmor %vm4852, %vm4853
  %v4855 = vsel %vm4854, %v4847, %v4851
  %v4856 = vand.u32 2147483647, %v2683
  %vm4857 = vcmp.eq.f32.partialorder %v4856, 8.507059e+37
  %v4858 = vand.u32 %v2683, 2147483648
  %v4859 = vor.u32 1.1754944e-38, %v4858
  %v4860 = vsel %vm4857, %v4859, %v4855
  %v4861 = vmul.f32 1.0, %v4860
  %v4862 = vrcp.pop %v2684
  %v4863 = vmul.f32 %v2684, %v4862
  %v4864 = vsub.f32 1.0, %v4863
  %v4865 = vmul.f32 %v4862, %v4864
  %v4866 = vadd.f32 %v4862, %v4865
  %vm4867 = vweird.f32 %v2684
  %vm4868 = vweird.f32 %v4862
  %vm4869 = vmor %vm4867, %vm4868
  %v4870 = vsel %vm4869, %v4862, %v4866
  %v4871 = vand.u32 2147483647, %v2684
  %vm4872 = vcmp.eq.f32.partialorder %v4871, 8.507059e+37
  %v4873 = vand.u32 %v2684, 2147483648
  %v4874 = vor.u32 1.1754944e-38, %v4873
  %v4875 = vsel %vm4872, %v4874, %v4870
  %v4876 = vmul.f32 1.0, %v4875
  %v4877 = vrcp.pop %v2685
  %v4878 = vmul.f32 %v2685, %v4877
  %v4879 = vsub.f32 1.0, %v4878
  %v4880 = vmul.f32 %v4877, %v4879
  %v4881 = vadd.f32 %v4877, %v4880
  %vm4882 = vweird.f32 %v2685
  %vm4883 = vweird.f32 %v4877
  %vm4884 = vmor %vm4882, %vm4883
  %v4885 = vsel %vm4884, %v4877, %v4881
  %v4886 = vand.u32 2147483647, %v2685
  %vm4887 = vcmp.eq.f32.partialorder %v4886, 8.507059e+37
  %v4888 = vand.u32 %v2685, 2147483648
  %v4889 = vor.u32 1.1754944e-38, %v4888
  %v4890 = vsel %vm4887, %v4889, %v4885
  %v4891 = vmul.f32 1.0, %v4890
  %v4892 = vrcp.pop %v2686
  %v4893 = vmul.f32 %v2686, %v4892
  %v4894 = vsub.f32 1.0, %v4893
  %v4895 = vmul.f32 %v4892, %v4894
  %v4896 = vadd.f32 %v4892, %v4895
  %vm4897 = vweird.f32 %v2686
  %vm4898 = vweird.f32 %v4892
  %vm4899 = vmor %vm4897, %vm4898
  %v4900 = vsel %vm4899, %v4892, %v4896
  %v4901 = vand.u32 2147483647, %v2686
  %vm4902 = vcmp.eq.f32.partialorder %v4901, 8.507059e+37
  %v4903 = vand.u32 %v2686, 2147483648
  %v4904 = vor.u32 1.1754944e-38, %v4903
  %v4905 = vsel %vm4902, %v4904, %v4900
  %v4906 = vmul.f32 1.0, %v4905
  %v4907 = vrcp.pop %v2687
  %v4908 = vmul.f32 %v2687, %v4907
  %v4909 = vsub.f32 1.0, %v4908
  %v4910 = vmul.f32 %v4907, %v4909
  %v4911 = vadd.f32 %v4907, %v4910
  %vm4912 = vweird.f32 %v2687
  %vm4913 = vweird.f32 %v4907
  %vm4914 = vmor %vm4912, %vm4913
  %v4915 = vsel %vm4914, %v4907, %v4911
  %v4916 = vand.u32 2147483647, %v2687
  %vm4917 = vcmp.eq.f32.partialorder %v4916, 8.507059e+37
  %v4918 = vand.u32 %v2687, 2147483648
  %v4919 = vor.u32 1.1754944e-38, %v4918
  %v4920 = vsel %vm4917, %v4919, %v4915
  %v4921 = vmul.f32 1.0, %v4920
  %v4922 = vrcp.pop %v2688
  %v4923 = vmul.f32 %v2688, %v4922
  %v4924 = vsub.f32 1.0, %v4923
  %v4925 = vmul.f32 %v4922, %v4924
  %v4926 = vadd.f32 %v4922, %v4925
  %vm4927 = vweird.f32 %v2688
  %vm4928 = vweird.f32 %v4922
  %vm4929 = vmor %vm4927, %vm4928
  %v4930 = vsel %vm4929, %v4922, %v4926
  %v4931 = vand.u32 2147483647, %v2688
  %vm4932 = vcmp.eq.f32.partialorder %v4931, 8.507059e+37
  %v4933 = vand.u32 %v2688, 2147483648
  %v4934 = vor.u32 1.1754944e-38, %v4933
  %v4935 = vsel %vm4932, %v4934, %v4930
  %v4936 = vmul.f32 1.0, %v4935
  %v4937 = vrcp.pop %v2689
  %v4938 = vmul.f32 %v2689, %v4937
  %v4939 = vsub.f32 1.0, %v4938
  %v4940 = vmul.f32 %v4937, %v4939
  %v4941 = vadd.f32 %v4937, %v4940
  %vm4942 = vweird.f32 %v2689
  %vm4943 = vweird.f32 %v4937
  %vm4944 = vmor %vm4942, %vm4943
  %v4945 = vsel %vm4944, %v4937, %v4941
  %v4946 = vand.u32 2147483647, %v2689
  %vm4947 = vcmp.eq.f32.partialorder %v4946, 8.507059e+37
  %v4948 = vand.u32 %v2689, 2147483648
  %v4949 = vor.u32 1.1754944e-38, %v4948
  %v4950 = vsel %vm4947, %v4949, %v4945
  %v4951 = vmul.f32 1.0, %v4950
  %v4952 = vrcp.pop %v2690
  %v4953 = vmul.f32 %v2690, %v4952
  %v4954 = vsub.f32 1.0, %v4953
  %v4955 = vmul.f32 %v4952, %v4954
  %v4956 = vadd.f32 %v4952, %v4955
  %vm4957 = vweird.f32 %v2690
  %vm4958 = vweird.f32 %v4952
  %vm4959 = vmor %vm4957, %vm4958
  %v4960 = vsel %vm4959, %v4952, %v4956
  %v4961 = vand.u32 2147483647, %v2690
  %vm4962 = vcmp.eq.f32.partialorder %v4961, 8.507059e+37
  %v4963 = vand.u32 %v2690, 2147483648
  %v4964 = vor.u32 1.1754944e-38, %v4963
  %v4965 = vsel %vm4962, %v4964, %v4960
  %v4966 = vmul.f32 1.0, %v4965
  %v4967 = vrcp.pop %v2691
  %v4968 = vmul.f32 %v2691, %v4967
  %v4969 = vsub.f32 1.0, %v4968
  %v4970 = vmul.f32 %v4967, %v4969
  %v4971 = vadd.f32 %v4967, %v4970
  %vm4972 = vweird.f32 %v2691
  %vm4973 = vweird.f32 %v4967
  %vm4974 = vmor %vm4972, %vm4973
  %v4975 = vsel %vm4974, %v4967, %v4971
  %v4976 = vand.u32 2147483647, %v2691
  %vm4977 = vcmp.eq.f32.partialorder %v4976, 8.507059e+37
  %v4978 = vand.u32 %v2691, 2147483648
  %v4979 = vor.u32 1.1754944e-38, %v4978
  %v4980 = vsel %vm4977, %v4979, %v4975
  %v4981 = vmul.f32 1.0, %v4980
  %v4982 = vrcp.pop %v2692
  %v4983 = vmul.f32 %v2692, %v4982
  %v4984 = vsub.f32 1.0, %v4983
  %v4985 = vmul.f32 %v4982, %v4984
  %v4986 = vadd.f32 %v4982, %v4985
  %vm4987 = vweird.f32 %v2692
  %vm4988 = vweird.f32 %v4982
  %vm4989 = vmor %vm4987, %vm4988
  %v4990 = vsel %vm4989, %v4982, %v4986
  %v4991 = vand.u32 2147483647, %v2692
  %vm4992 = vcmp.eq.f32.partialorder %v4991, 8.507059e+37
  %v4993 = vand.u32 %v2692, 2147483648
  %v4994 = vor.u32 1.1754944e-38, %v4993
  %v4995 = vsel %vm4992, %v4994, %v4990
  %v4996 = vmul.f32 1.0, %v4995
  %v4997 = vrcp.pop %v2693
  %v4998 = vmul.f32 %v2693, %v4997
  %v4999 = vsub.f32 1.0, %v4998
  %v5000 = vmul.f32 %v4997, %v4999
  %v5001 = vadd.f32 %v4997, %v5000
  %vm5002 = vweird.f32 %v2693
  %vm5003 = vweird.f32 %v4997
  %vm5004 = vmor %vm5002, %vm5003
  %v5005 = vsel %vm5004, %v4997, %v5001
  %v5006 = vand.u32 2147483647, %v2693
  %vm5007 = vcmp.eq.f32.partialorder %v5006, 8.507059e+37
  %v5008 = vand.u32 %v2693, 2147483648
  %v5009 = vor.u32 1.1754944e-38, %v5008
  %v5010 = vsel %vm5007, %v5009, %v5005
  %v5011 = vmul.f32 1.0, %v5010
  %v5012 = vrcp.pop %v2694
  %v5013 = vmul.f32 %v2694, %v5012
  %v5014 = vsub.f32 1.0, %v5013
  %v5015 = vmul.f32 %v5012, %v5014
  %v5016 = vadd.f32 %v5012, %v5015
  %vm5017 = vweird.f32 %v2694
  %vm5018 = vweird.f32 %v5012
  %vm5019 = vmor %vm5017, %vm5018
  %v5020 = vsel %vm5019, %v5012, %v5016
  %v5021 = vand.u32 2147483647, %v2694
  %vm5022 = vcmp.eq.f32.partialorder %v5021, 8.507059e+37
  %v5023 = vand.u32 %v2694, 2147483648
  %v5024 = vor.u32 1.1754944e-38, %v5023
  %v5025 = vsel %vm5022, %v5024, %v5020
  %v5026 = vmul.f32 1.0, %v5025
  %v5027 = vrcp.pop %v2695
  %v5028 = vmul.f32 %v2695, %v5027
  %v5029 = vsub.f32 1.0, %v5028
  %v5030 = vmul.f32 %v5027, %v5029
  %v5031 = vadd.f32 %v5027, %v5030
  %vm5032 = vweird.f32 %v2695
  %vm5033 = vweird.f32 %v5027
  %vm5034 = vmor %vm5032, %vm5033
  %v5035 = vsel %vm5034, %v5027, %v5031
  %v5036 = vand.u32 2147483647, %v2695
  %vm5037 = vcmp.eq.f32.partialorder %v5036, 8.507059e+37
  %v5038 = vand.u32 %v2695, 2147483648
  %v5039 = vor.u32 1.1754944e-38, %v5038
  %v5040 = vsel %vm5037, %v5039, %v5035
  %v5041 = vmul.f32 1.0, %v5040
  %v5042 = vrcp.pop %v2696
  %v5043 = vmul.f32 %v2696, %v5042
  %v5044 = vsub.f32 1.0, %v5043
  %v5045 = vmul.f32 %v5042, %v5044
  %v5046 = vadd.f32 %v5042, %v5045
  %vm5047 = vweird.f32 %v2696
  %vm5048 = vweird.f32 %v5042
  %vm5049 = vmor %vm5047, %vm5048
  %v5050 = vsel %vm5049, %v5042, %v5046
  %v5051 = vand.u32 2147483647, %v2696
  %vm5052 = vcmp.eq.f32.partialorder %v5051, 8.507059e+37
  %v5053 = vand.u32 %v2696, 2147483648
  %v5054 = vor.u32 1.1754944e-38, %v5053
  %v5055 = vsel %vm5052, %v5054, %v5050
  %v5056 = vmul.f32 1.0, %v5055
  %v5057 = vrcp.pop %v2697
  %v5058 = vmul.f32 %v2697, %v5057
  %v5059 = vsub.f32 1.0, %v5058
  %v5060 = vmul.f32 %v5057, %v5059
  %v5061 = vadd.f32 %v5057, %v5060
  %vm5062 = vweird.f32 %v2697
  %vm5063 = vweird.f32 %v5057
  %vm5064 = vmor %vm5062, %vm5063
  %v5065 = vsel %vm5064, %v5057, %v5061
  %v5066 = vand.u32 2147483647, %v2697
  %vm5067 = vcmp.eq.f32.partialorder %v5066, 8.507059e+37
  %v5068 = vand.u32 %v2697, 2147483648
  %v5069 = vor.u32 1.1754944e-38, %v5068
  %v5070 = vsel %vm5067, %v5069, %v5065
  %v5071 = vmul.f32 1.0, %v5070
  %v5072 = vrcp.pop %v2698
  %v5073 = vmul.f32 %v2698, %v5072
  %v5074 = vsub.f32 1.0, %v5073
  %v5075 = vmul.f32 %v5072, %v5074
  %v5076 = vadd.f32 %v5072, %v5075
  %vm5077 = vweird.f32 %v2698
  %vm5078 = vweird.f32 %v5072
  %vm5079 = vmor %vm5077, %vm5078
  %v5080 = vsel %vm5079, %v5072, %v5076
  %v5081 = vand.u32 2147483647, %v2698
  %vm5082 = vcmp.eq.f32.partialorder %v5081, 8.507059e+37
  %v5083 = vand.u32 %v2698, 2147483648
  %v5084 = vor.u32 1.1754944e-38, %v5083
  %v5085 = vsel %vm5082, %v5084, %v5080
  %v5086 = vmul.f32 1.0, %v5085
  %v5087 = vrcp.pop %v2699
  %v5088 = vmul.f32 %v2699, %v5087
  %v5089 = vsub.f32 1.0, %v5088
  %v5090 = vmul.f32 %v5087, %v5089
  %v5091 = vadd.f32 %v5087, %v5090
  %vm5092 = vweird.f32 %v2699
  %vm5093 = vweird.f32 %v5087
  %vm5094 = vmor %vm5092, %vm5093
  %v5095 = vsel %vm5094, %v5087, %v5091
  %v5096 = vand.u32 2147483647, %v2699
  %vm5097 = vcmp.eq.f32.partialorder %v5096, 8.507059e+37
  %v5098 = vand.u32 %v2699, 2147483648
  %v5099 = vor.u32 1.1754944e-38, %v5098
  %v5100 = vsel %vm5097, %v5099, %v5095
  %v5101 = vmul.f32 1.0, %v5100
  %v5102 = vrcp.pop %v2700
  %v5103 = vmul.f32 %v2700, %v5102
  %v5104 = vsub.f32 1.0, %v5103
  %v5105 = vmul.f32 %v5102, %v5104
  %v5106 = vadd.f32 %v5102, %v5105
  %vm5107 = vweird.f32 %v2700
  %vm5108 = vweird.f32 %v5102
  %vm5109 = vmor %vm5107, %vm5108
  %v5110 = vsel %vm5109, %v5102, %v5106
  %v5111 = vand.u32 2147483647, %v2700
  %vm5112 = vcmp.eq.f32.partialorder %v5111, 8.507059e+37
  %v5113 = vand.u32 %v2700, 2147483648
  %v5114 = vor.u32 1.1754944e-38, %v5113
  %v5115 = vsel %vm5112, %v5114, %v5110
  %v5116 = vmul.f32 1.0, %v5115
  %v5117 = vrcp.pop %v2701
  %v5118 = vmul.f32 %v2701, %v5117
  %v5119 = vsub.f32 1.0, %v5118
  %v5120 = vmul.f32 %v5117, %v5119
  %v5121 = vadd.f32 %v5117, %v5120
  %vm5122 = vweird.f32 %v2701
  %vm5123 = vweird.f32 %v5117
  %vm5124 = vmor %vm5122, %vm5123
  %v5125 = vsel %vm5124, %v5117, %v5121
  %v5126 = vand.u32 2147483647, %v2701
  %vm5127 = vcmp.eq.f32.partialorder %v5126, 8.507059e+37
  %v5128 = vand.u32 %v2701, 2147483648
  %v5129 = vor.u32 1.1754944e-38, %v5128
  %v5130 = vsel %vm5127, %v5129, %v5125
  %v5131 = vmul.f32 1.0, %v5130
  %v5132 = vadd.f32 %v2716, -0.5
  %v5133 = vadd.f32 %v2731, -0.5
  %v5134 = vadd.f32 %v2746, -0.5
  %v5135 = vadd.f32 %v2761, -0.5
  %v5136 = vadd.f32 %v2776, -0.5
  %v5137 = vadd.f32 %v2791, -0.5
  %v5138 = vadd.f32 %v2806, -0.5
  %v5139 = vadd.f32 %v2821, -0.5
  %v5140 = vadd.f32 %v2836, -0.5
  %v5141 = vadd.f32 %v2851, -0.5
  %v5142 = vadd.f32 %v2866, -0.5
  %v5143 = vadd.f32 %v2881, -0.5
  %v5144 = vadd.f32 %v2896, -0.5
  %v5145 = vadd.f32 %v2911, -0.5
  %v5146 = vadd.f32 %v2926, -0.5
  %v5147 = vadd.f32 %v2941, -0.5
  %v5148 = vadd.f32 %v2956, -0.5
  %v5149 = vadd.f32 %v2971, -0.5
  %v5150 = vadd.f32 %v2986, -0.5
  %v5151 = vadd.f32 %v3001, -0.5
  %v5152 = vadd.f32 %v3016, -0.5
  %v5153 = vadd.f32 %v3031, -0.5
  %v5154 = vadd.f32 %v3046, -0.5
  %v5155 = vadd.f32 %v3061, -0.5
  %v5156 = vadd.f32 %v3076, -0.5
  %v5157 = vadd.f32 %v3091, -0.5
  %v5158 = vadd.f32 %v3106, -0.5
  %v5159 = vadd.f32 %v3121, -0.5
  %v5160 = vadd.f32 %v3136, -0.5
  %v5161 = vadd.f32 %v3151, -0.5
  %v5162 = vadd.f32 %v3166, -0.5
  %v5163 = vadd.f32 %v3181, -0.5
  %v5164 = vadd.f32 %v3196, -0.5
  %v5165 = vadd.f32 %v3211, -0.5
  %v5166 = vadd.f32 %v3226, -0.5
  %v5167 = vadd.f32 %v3241, -0.5
  %v5168 = vadd.f32 %v3256, -0.5
  %v5169 = vadd.f32 %v3271, -0.5
  %v5170 = vadd.f32 %v3286, -0.5
  %v5171 = vadd.f32 %v3301, -0.5
  %v5172 = vadd.f32 %v3316, -0.5
  %v5173 = vadd.f32 %v3331, -0.5
  %v5174 = vadd.f32 %v3346, -0.5
  %v5175 = vadd.f32 %v3361, -0.5
  %v5176 = vadd.f32 %v3376, -0.5
  %v5177 = vadd.f32 %v3391, -0.5
  %v5178 = vadd.f32 %v3406, -0.5
  %v5179 = vadd.f32 %v3421, -0.5
  %v5180 = vadd.f32 %v3436, -0.5
  %v5181 = vadd.f32 %v3451, -0.5
  %v5182 = vadd.f32 %v3466, -0.5
  %v5183 = vadd.f32 %v3481, -0.5
  %v5184 = vadd.f32 %v3496, -0.5
  %v5185 = vadd.f32 %v3511, -0.5
  %v5186 = vadd.f32 %v3526, -0.5
  %v5187 = vadd.f32 %v3541, -0.5
  %v5188 = vadd.f32 %v3556, -0.5
  %v5189 = vadd.f32 %v3571, -0.5
  %v5190 = vadd.f32 %v3586, -0.5
  %v5191 = vadd.f32 %v3601, -0.5
  %v5192 = vadd.f32 %v3616, -0.5
  %v5193 = vadd.f32 %v3631, -0.5
  %v5194 = vadd.f32 %v3646, -0.5
  %v5195 = vadd.f32 %v3661, -0.5
  %v5196 = vadd.f32 %v3676, -0.5
  %v5197 = vadd.f32 %v3691, -0.5
  %v5198 = vadd.f32 %v3706, -0.5
  %v5199 = vadd.f32 %v3721, -0.5
  %v5200 = vadd.f32 %v3736, -0.5
  %v5201 = vadd.f32 %v3751, -0.5
  %v5202 = vadd.f32 %v3766, -0.5
  %v5203 = vadd.f32 %v3781, -0.5
  %v5204 = vadd.f32 %v3796, -0.5
  %v5205 = vadd.f32 %v3811, -0.5
  %v5206 = vadd.f32 %v3826, -0.5
  %v5207 = vadd.f32 %v3841, -0.5
  %v5208 = vadd.f32 %v3856, -0.5
  %v5209 = vadd.f32 %v3871, -0.5
  %v5210 = vadd.f32 %v3886, -0.5
  %v5211 = vadd.f32 %v3901, -0.5
  %v5212 = vadd.f32 %v3916, -0.5
  %v5213 = vadd.f32 %v3931, -0.5
  %v5214 = vadd.f32 %v3946, -0.5
  %v5215 = vadd.f32 %v3961, -0.5
  %v5216 = vadd.f32 %v3976, -0.5
  %v5217 = vadd.f32 %v3991, -0.5
  %v5218 = vadd.f32 %v4006, -0.5
  %v5219 = vadd.f32 %v4021, -0.5
  %v5220 = vadd.f32 %v4036, -0.5
  %v5221 = vadd.f32 %v4051, -0.5
  %v5222 = vadd.f32 %v4066, -0.5
  %v5223 = vadd.f32 %v4081, -0.5
  %v5224 = vadd.f32 %v4096, -0.5
  %v5225 = vadd.f32 %v4111, -0.5
  %v5226 = vadd.f32 %v4126, -0.5
  %v5227 = vadd.f32 %v4141, -0.5
  %v5228 = vadd.f32 %v4156, -0.5
  %v5229 = vadd.f32 %v4171, -0.5
  %v5230 = vadd.f32 %v4186, -0.5
  %v5231 = vadd.f32 %v4201, -0.5
  %v5232 = vadd.f32 %v4216, -0.5
  %v5233 = vadd.f32 %v4231, -0.5
  %v5234 = vadd.f32 %v4246, -0.5
  %v5235 = vadd.f32 %v4261, -0.5
  %v5236 = vadd.f32 %v4276, -0.5
  %v5237 = vadd.f32 %v4291, -0.5
  %v5238 = vadd.f32 %v4306, -0.5
  %v5239 = vadd.f32 %v4321, -0.5
  %v5240 = vadd.f32 %v4336, -0.5
  %v5241 = vadd.f32 %v4351, -0.5
  %v5242 = vadd.f32 %v4366, -0.5
  %v5243 = vadd.f32 %v4381, -0.5
  %v5244 = vadd.f32 %v4396, -0.5
  %v5245 = vadd.f32 %v4411, -0.5
  %v5246 = vadd.f32 %v4426, -0.5
  %v5247 = vadd.f32 %v4441, -0.5
  %v5248 = vadd.f32 %v4456, -0.5
  %v5249 = vadd.f32 %v4471, -0.5
  %v5250 = vadd.f32 %v4486, -0.5
  %v5251 = vadd.f32 %v4501, -0.5
  %v5252 = vadd.f32 %v4516, -0.5
  %v5253 = vadd.f32 %v4531, -0.5
  %v5254 = vadd.f32 %v4546, -0.5
  %v5255 = vadd.f32 %v4561, -0.5
  %v5256 = vadd.f32 %v4576, -0.5
  %v5257 = vadd.f32 %v4591, -0.5
  %v5258 = vadd.f32 %v4606, -0.5
  %v5259 = vadd.f32 %v4621, -0.5
  %v5260 = vadd.f32 %v4636, -0.5
  %v5261 = vadd.f32 %v4651, -0.5
  %v5262 = vadd.f32 %v4666, -0.5
  %v5263 = vadd.f32 %v4681, -0.5
  %v5264 = vadd.f32 %v4696, -0.5
  %v5265 = vadd.f32 %v4711, -0.5
  %v5266 = vadd.f32 %v4726, -0.5
  %v5267 = vadd.f32 %v4741, -0.5
  %v5268 = vadd.f32 %v4756, -0.5
  %v5269 = vadd.f32 %v4771, -0.5
  %v5270 = vadd.f32 %v4786, -0.5
  %v5271 = vadd.f32 %v4801, -0.5
  %v5272 = vadd.f32 %v4816, -0.5
  %v5273 = vadd.f32 %v4831, -0.5
  %v5274 = vadd.f32 %v4846, -0.5
  %v5275 = vadd.f32 %v4861, -0.5
  %v5276 = vadd.f32 %v4876, -0.5
  %v5277 = vadd.f32 %v4891, -0.5
  %v5278 = vadd.f32 %v4906, -0.5
  %v5279 = vadd.f32 %v4921, -0.5
  %v5280 = vadd.f32 %v4936, -0.5
  %v5281 = vadd.f32 %v4951, -0.5
  %v5282 = vadd.f32 %v4966, -0.5
  %v5283 = vadd.f32 %v4981, -0.5
  %v5284 = vadd.f32 %v4996, -0.5
  %v5285 = vadd.f32 %v5011, -0.5
  %v5286 = vadd.f32 %v5026, -0.5
  %v5287 = vadd.f32 %v5041, -0.5
  %v5288 = vadd.f32 %v5056, -0.5
  %v5289 = vadd.f32 %v5071, -0.5
  %v5290 = vadd.f32 %v5086, -0.5
  %v5291 = vadd.f32 %v5101, -0.5
  %v5292 = vadd.f32 %v5116, -0.5
  %v5293 = vadd.f32 %v5131, -0.5
  %5294 = vst [vmem:[%s3] sm:$0xff] %v5132
  %5295 = vst [vmem:[%s3 + $0x8] sm:$0xff] %v5133
  %5296 = vst [vmem:[%s3 + $0x10] sm:$0xff] %v5134
  %5297 = vst [vmem:[%s3 + $0x18] sm:$0xff] %v5135
  %5298 = vst [vmem:[%s3 + $0x20] sm:$0xff] %v5136
  %5299 = vst [vmem:[%s3 + $0x28] sm:$0xff] %v5137
  %5300 = vst [vmem:[%s3 + $0x30] sm:$0xff] %v5138
  %5301 = vst [vmem:[%s3 + $0x38] sm:$0xff] %v5139
  %5302 = vst [vmem:[%s3 + $0x40] sm:$0xff] %v5140
  %5303 = vst [vmem:[%s3 + $0x48] sm:$0xff] %v5141
  %5304 = vst [vmem:[%s3 + $0x50] sm:$0xff] %v5142
  %5305 = vst [vmem:[%s3 + $0x58] sm:$0xff] %v5143
  %5306 = vst [vmem:[%s3 + $0x60] sm:$0xff] %v5144
  %5307 = vst [vmem:[%s3 + $0x68] sm:$0xff] %v5145
  %5308 = vst [vmem:[%s3 + $0x70] sm:$0xff] %v5146
  %5309 = vst [vmem:[%s3 + $0x78] sm:$0xff] %v5147
  %5310 = vst [vmem:[%s3 + $0x80] sm:$0xff] %v5148
  %5311 = vst [vmem:[%s3 + $0x88] sm:$0xff] %v5149
  %5312 = vst [vmem:[%s3 + $0x90] sm:$0xff] %v5150
  %5313 = vst [vmem:[%s3 + $0x98] sm:$0xff] %v5151
  %5314 = vst [vmem:[%s3 + $0xa0] sm:$0xff] %v5152
  %5315 = vst [vmem:[%s3 + $0xa8] sm:$0xff] %v5153
  %5316 = vst [vmem:[%s3 + $0xb0] sm:$0xff] %v5154
  %5317 = vst [vmem:[%s3 + $0xb8] sm:$0xff] %v5155
  %5318 = vst [vmem:[%s3 + $0xc0] sm:$0xff] %v5156
  %5319 = vst [vmem:[%s3 + $0xc8] sm:$0xff] %v5157
  %5320 = vst [vmem:[%s3 + $0xd0] sm:$0xff] %v5158
  %5321 = vst [vmem:[%s3 + $0xd8] sm:$0xff] %v5159
  %5322 = vst [vmem:[%s3 + $0xe0] sm:$0xff] %v5160
  %5323 = vst [vmem:[%s3 + $0xe8] sm:$0xff] %v5161
  %5324 = vst [vmem:[%s3 + $0xf0] sm:$0xff] %v5162
  %5325 = vst [vmem:[%s3 + $0xf8] sm:$0xff] %v5163
  %5326 = vst [vmem:[%s3 + $0x100] sm:$0xff] %v5164
  %5327 = vst [vmem:[%s3 + $0x108] sm:$0xff] %v5165
  %5328 = vst [vmem:[%s3 + $0x110] sm:$0xff] %v5166
  %5329 = vst [vmem:[%s3 + $0x118] sm:$0xff] %v5167
  %5330 = vst [vmem:[%s3 + $0x120] sm:$0xff] %v5168
  %5331 = vst [vmem:[%s3 + $0x128] sm:$0xff] %v5169
  %5332 = vst [vmem:[%s3 + $0x130] sm:$0xff] %v5170
  %5333 = vst [vmem:[%s3 + $0x138] sm:$0xff] %v5171
  %5334 = vst [vmem:[%s3 + $0x140] sm:$0xff] %v5172
  %5335 = vst [vmem:[%s3 + $0x148] sm:$0xff] %v5173
  %5336 = vst [vmem:[%s3 + $0x150] sm:$0xff] %v5174
  %5337 = vst [vmem:[%s3 + $0x158] sm:$0xff] %v5175
  %5338 = vst [vmem:[%s3 + $0x160] sm:$0xff] %v5176
  %5339 = vst [vmem:[%s3 + $0x168] sm:$0xff] %v5177
  %5340 = vst [vmem:[%s3 + $0x170] sm:$0xff] %v5178
  %5341 = vst [vmem:[%s3 + $0x178] sm:$0xff] %v5179
  %5342 = vst [vmem:[%s3 + $0x180] sm:$0xff] %v5180
  %5343 = vst [vmem:[%s3 + $0x188] sm:$0xff] %v5181
  %5344 = vst [vmem:[%s3 + $0x190] sm:$0xff] %v5182
  %5345 = vst [vmem:[%s3 + $0x198] sm:$0xff] %v5183
  %5346 = vst [vmem:[%s3 + $0x1a0] sm:$0xff] %v5184
  %5347 = vst [vmem:[%s3 + $0x1a8] sm:$0xff] %v5185
  %5348 = vst [vmem:[%s3 + $0x1b0] sm:$0xff] %v5186
  %5349 = vst [vmem:[%s3 + $0x1b8] sm:$0xff] %v5187
  %5350 = vst [vmem:[%s3 + $0x1c0] sm:$0xff] %v5188
  %5351 = vst [vmem:[%s3 + $0x1c8] sm:$0xff] %v5189
  %5352 = vst [vmem:[%s3 + $0x1d0] sm:$0xff] %v5190
  %5353 = vst [vmem:[%s3 + $0x1d8] sm:$0xff] %v5191
  %5354 = vst [vmem:[%s3 + $0x1e0] sm:$0xff] %v5192
  %5355 = vst [vmem:[%s3 + $0x1e8] sm:$0xff] %v5193
  %5356 = vst [vmem:[%s3 + $0x1f0] sm:$0xff] %v5194
  %5357 = vst [vmem:[%s3 + $0x1f8] sm:$0xff] %v5195
  %5358 = vst [vmem:[%s3 + $0x200] sm:$0xff] %v5196
  %5359 = vst [vmem:[%s3 + $0x208] sm:$0xff] %v5197
  %5360 = vst [vmem:[%s3 + $0x210] sm:$0xff] %v5198
  %5361 = vst [vmem:[%s3 + $0x218] sm:$0xff] %v5199
  %5362 = vst [vmem:[%s3 + $0x220] sm:$0xff] %v5200
  %5363 = vst [vmem:[%s3 + $0x228] sm:$0xff] %v5201
  %5364 = vst [vmem:[%s3 + $0x230] sm:$0xff] %v5202
  %5365 = vst [vmem:[%s3 + $0x238] sm:$0xff] %v5203
  %5366 = vst [vmem:[%s3 + $0x240] sm:$0xff] %v5204
  %5367 = vst [vmem:[%s3 + $0x248] sm:$0xff] %v5205
  %5368 = vst [vmem:[%s3 + $0x250] sm:$0xff] %v5206
  %5369 = vst [vmem:[%s3 + $0x258] sm:$0xff] %v5207
  %5370 = vst [vmem:[%s3 + $0x260] sm:$0xff] %v5208
  %5371 = vst [vmem:[%s3 + $0x268] sm:$0xff] %v5209
  %5372 = vst [vmem:[%s3 + $0x270] sm:$0xff] %v5210
  %5373 = vst [vmem:[%s3 + $0x278] sm:$0xff] %v5211
  %5374 = vst [vmem:[%s3 + $0x280] sm:$0xff] %v5212
  %5375 = vst [vmem:[%s3 + $0x288] sm:$0xff] %v5213
  %5376 = vst [vmem:[%s3 + $0x290] sm:$0xff] %v5214
  %5377 = vst [vmem:[%s3 + $0x298] sm:$0xff] %v5215
  %5378 = vst [vmem:[%s3 + $0x2a0] sm:$0xff] %v5216
  %5379 = vst [vmem:[%s3 + $0x2a8] sm:$0xff] %v5217
  %5380 = vst [vmem:[%s3 + $0x2b0] sm:$0xff] %v5218
  %5381 = vst [vmem:[%s3 + $0x2b8] sm:$0xff] %v5219
  %5382 = vst [vmem:[%s3 + $0x2c0] sm:$0xff] %v5220
  %5383 = vst [vmem:[%s3 + $0x2c8] sm:$0xff] %v5221
  %5384 = vst [vmem:[%s3 + $0x2d0] sm:$0xff] %v5222
  %5385 = vst [vmem:[%s3 + $0x2d8] sm:$0xff] %v5223
  %5386 = vst [vmem:[%s3 + $0x2e0] sm:$0xff] %v5224
  %5387 = vst [vmem:[%s3 + $0x2e8] sm:$0xff] %v5225
  %5388 = vst [vmem:[%s3 + $0x2f0] sm:$0xff] %v5226
  %5389 = vst [vmem:[%s3 + $0x2f8] sm:$0xff] %v5227
  %5390 = vst [vmem:[%s3 + $0x300] sm:$0xff] %v5228
  %5391 = vst [vmem:[%s3 + $0x308] sm:$0xff] %v5229
  %5392 = vst [vmem:[%s3 + $0x310] sm:$0xff] %v5230
  %5393 = vst [vmem:[%s3 + $0x318] sm:$0xff] %v5231
  %5394 = vst [vmem:[%s3 + $0x320] sm:$0xff] %v5232
  %5395 = vst [vmem:[%s3 + $0x328] sm:$0xff] %v5233
  %5396 = vst [vmem:[%s3 + $0x330] sm:$0xff] %v5234
  %5397 = vst [vmem:[%s3 + $0x338] sm:$0xff] %v5235
  %5398 = vst [vmem:[%s3 + $0x340] sm:$0xff] %v5236
  %5399 = vst [vmem:[%s3 + $0x348] sm:$0xff] %v5237
  %5400 = vst [vmem:[%s3 + $0x350] sm:$0xff] %v5238
  %5401 = vst [vmem:[%s3 + $0x358] sm:$0xff] %v5239
  %5402 = vst [vmem:[%s3 + $0x360] sm:$0xff] %v5240
  %5403 = vst [vmem:[%s3 + $0x368] sm:$0xff] %v5241
  %5404 = vst [vmem:[%s3 + $0x370] sm:$0xff] %v5242
  %5405 = vst [vmem:[%s3 + $0x378] sm:$0xff] %v5243
  %5406 = vst [vmem:[%s3 + $0x380] sm:$0xff] %v5244
  %5407 = vst [vmem:[%s3 + $0x388] sm:$0xff] %v5245
  %5408 = vst [vmem:[%s3 + $0x390] sm:$0xff] %v5246
  %5409 = vst [vmem:[%s3 + $0x398] sm:$0xff] %v5247
  %5410 = vst [vmem:[%s3 + $0x3a0] sm:$0xff] %v5248
  %5411 = vst [vmem:[%s3 + $0x3a8] sm:$0xff] %v5249
  %5412 = vst [vmem:[%s3 + $0x3b0] sm:$0xff] %v5250
  %5413 = vst [vmem:[%s3 + $0x3b8] sm:$0xff] %v5251
  %5414 = vst [vmem:[%s3 + $0x3c0] sm:$0xff] %v5252
  %5415 = vst [vmem:[%s3 + $0x3c8] sm:$0xff] %v5253
  %5416 = vst [vmem:[%s3 + $0x3d0] sm:$0xff] %v5254
  %5417 = vst [vmem:[%s3 + $0x3d8] sm:$0xff] %v5255
  %5418 = vst [vmem:[%s3 + $0x3e0] sm:$0xff] %v5256
  %5419 = vst [vmem:[%s3 + $0x3e8] sm:$0xff] %v5257
  %5420 = vst [vmem:[%s3 + $0x3f0] sm:$0xff] %v5258
  %5421 = vst [vmem:[%s3 + $0x3f8] sm:$0xff] %v5259
  %5422 = vst [vmem:[%s3 + $0x400] sm:$0xff] %v5260
  %5423 = vst [vmem:[%s3 + $0x408] sm:$0xff] %v5261
  %5424 = vst [vmem:[%s3 + $0x410] sm:$0xff] %v5262
  %5425 = vst [vmem:[%s3 + $0x418] sm:$0xff] %v5263
  %5426 = vst [vmem:[%s3 + $0x420] sm:$0xff] %v5264
  %5427 = vst [vmem:[%s3 + $0x428] sm:$0xff] %v5265
  %5428 = vst [vmem:[%s3 + $0x430] sm:$0xff] %v5266
  %5429 = vst [vmem:[%s3 + $0x438] sm:$0xff] %v5267
  %5430 = vst [vmem:[%s3 + $0x440] sm:$0xff] %v5268
  %5431 = vst [vmem:[%s3 + $0x448] sm:$0xff] %v5269
  %5432 = vst [vmem:[%s3 + $0x450] sm:$0xff] %v5270
  %5433 = vst [vmem:[%s3 + $0x458] sm:$0xff] %v5271
  %5434 = vst [vmem:[%s3 + $0x460] sm:$0xff] %v5272
  %5435 = vst [vmem:[%s3 + $0x468] sm:$0xff] %v5273
  %5436 = vst [vmem:[%s3 + $0x470] sm:$0xff] %v5274
  %5437 = vst [vmem:[%s3 + $0x478] sm:$0xff] %v5275
  %5438 = vst [vmem:[%s3 + $0x480] sm:$0xff] %v5276
  %5439 = vst [vmem:[%s3 + $0x488] sm:$0xff] %v5277
  %5440 = vst [vmem:[%s3 + $0x490] sm:$0xff] %v5278
  %5441 = vst [vmem:[%s3 + $0x498] sm:$0xff] %v5279
  %5442 = vst [vmem:[%s3 + $0x4a0] sm:$0xff] %v5280
  %5443 = vst [vmem:[%s3 + $0x4a8] sm:$0xff] %v5281
  %5444 = vst [vmem:[%s3 + $0x4b0] sm:$0xff] %v5282
  %5445 = vst [vmem:[%s3 + $0x4b8] sm:$0xff] %v5283
  %5446 = vst [vmem:[%s3 + $0x4c0] sm:$0xff] %v5284
  %5447 = vst [vmem:[%s3 + $0x4c8] sm:$0xff] %v5285
  %5448 = vst [vmem:[%s3 + $0x4d0] sm:$0xff] %v5286
  %5449 = vst [vmem:[%s3 + $0x4d8] sm:$0xff] %v5287
  %5450 = vst [vmem:[%s3 + $0x4e0] sm:$0xff] %v5288
  %5451 = vst [vmem:[%s3 + $0x4e8] sm:$0xff] %v5289
  %5452 = vst [vmem:[%s3 + $0x4f0] sm:$0xff] %v5290
  %5453 = vst [vmem:[%s3 + $0x4f8] sm:$0xff] %v5291
  %5454 = vst [vmem:[%s3 + $0x500] sm:$0xff] %v5292
  %5455 = vst [vmem:[%s3 + $0x508] sm:$0xff] %v5293
  // Predicated region
  $region14: #{acoustic_simulation_nn_forward.6} parent=0 // pred_check
    _
  $region15: #{acoustic_simulation_nn_forward.6} parent=0 // pred_check_branch
    %5457 = sbr.rel (0) target = $region17
  $region16: #{acoustic_simulation_nn_forward.6} parent=0 // pred_region
    _
  $region17: #{acoustic_simulation_nn_forward.6} parent=0 // pred_fallthru
    _
  // Predicated region
  $region18: #{acoustic_simulation_nn_forward.6} parent=0 // pred_check
    _
  $region19: #{acoustic_simulation_nn_forward.6} parent=0 // pred_check_branch
    %5459 = sbr.rel (0) target = $region21
  $region20: #{acoustic_simulation_nn_forward.6} parent=0 // pred_region
    _
  $region21: #{acoustic_simulation_nn_forward.6} parent=0 // pred_fallthru
    _

// kernel: acoustic_simulation_nn_forward.7
$region0: #{acoustic_simulation_nn_forward.7}
  #allocation0 [shape = 'u32[]', space=smem, size = 0x4, offset = 0x4, fixed_abs, tag = 'smem constant byte address 0x4 - core index']
  #allocation1 [shape = 'u32[72,128]{1,0:T(1,128)}', space=vmem, size = 0x9000, scoped, tag = 'internal scratch']
  #allocation2 [shape = 'f32[48,48]{1,0:T(8,128)}', space=vmem, size = 0x6000, scoped, tag = 'scratch operand']
  #allocation3 [shape = 'f32[48,48]{1,0:T(8,128)}', space=vmem, size = 0x6000, scoped, tag = 'scratch operand']
  #allocation4 [shape = 'f32[48,48]{1,0:T(8,128)}', space=vmem, size = 0x6000, scoped, tag = 'scratch operand']
  #allocation5 [shape = 'f32[48,48]{1,0:T(8,128)}', space=vmem, size = 0x6000, scoped, tag = 'scratch operand']
  #allocation6 [shape = 'f32[48,48]{1,0:T(8,128)}', space=vmem, size = 0x6000, scoped, tag = 'scratch operand']
  #allocation7 [shape = 'f32[48,48]{1,0:T(8,128)}', space=vmem, size = 0x6000, scoped, tag = 'scratch operand']
  %s0 = inlined_call_operand.vmem [shape: f32[64], index: 0, kind: input, shape index: {}]
  %s1 = inlined_call_operand.vmem [shape: f32[48,48], index: 1, kind: input, shape index: {}]
  %s2 = inlined_call_operand.vmem [shape: f32[48,48], index: 2, kind: input, shape index: {}]
  %s3 = inlined_call_operand.vmem [shape: f32[48,48], index: 3, kind: input, shape index: {}]
  %s4 = inlined_call_operand.vmem [shape: f32[2,48,48], index: 4, kind: input, shape index: {}]
  %s5 = inlined_call_operand.vmem [shape: f32[48,16], index: 5, kind: input, shape index: {}]
  %s6 = inlined_call_operand.vmem [shape: f32[48,16], index: 6, kind: input, shape index: {}]
  %s7 = inlined_call_operand.vmem [shape: f32[2,32,16], index: 7, kind: output, shape index: {0}]
  %s8 = inlined_call_operand.hbm [shape: f32[2,32,48,48], index: 8, kind: output, shape index: {1}]
  %9 = xla_tuple %s7, %s8
  %s10 = sld [smem:[#allocation0]]
  $region80: #{acoustic_simulation_nn_forward.7} parent=0
    _
  %s12 = ssub.s32 1, %s10
  %s13 = scalar_select 0, %s12, %s10
  $region1: #{acoustic_simulation_nn_forward.7} parent=0
    #allocation8 [shape = 'u8[512]{0}', space=smem, size = 0x200, scoped, tag = 'input window, operand 0, single buffered']
    #allocation9 [shape = 's32[2]{0}', space=sflag, size = 0x8, scoped, tag = 'scoped memory for acoustic_simulation_nn_forward.7']
    #allocation10 [shape = 's32[2]{0}', space=sflag, size = 0x8, scoped, tag = 'scoped memory for acoustic_simulation_nn_forward.7']
    #allocation11 [shape = 'u8[1572864]{0}', space=vmem, size = 0x180000, scoped, tag = 'output window, operand 1']
    %14 = vsyncpa [#allocation10], 0
    %15 = vsyncpa [#allocation9], 0
    %s16 = scalar_lea.sflag [#allocation9], 1
    %17 = vsyncpa %s16, 0
    loop: start=0, step=1, limit=4
    $region2: #{acoustic_simulation_nn_forward.7} parent=1 // loop_pre_header
      _
    $region3: #{acoustic_simulation_nn_forward.7} parent=1 // loop_header
      %s19 = sphi 0, %s23
      %p20 = scmp.ge.s32.totalorder %s19, 4
      %s27 = sphi 0, %s27
      %s29 = sphi 0, %s27
      %s30 = sphi 0, %s29
      %s44 = sphi 0, %s30
      %s48 = sphi 0, %s48
      %s50 = sphi 0, %s48
      %s51 = sphi 0, %s50
      %s65 = sphi 0, %s51
      %s69 = sphi 0, %s69
      %s71 = sphi 0, %s69
      %s72 = sphi 0, %s71
      %s86 = sphi 0, %s72
      %s90 = sphi 0, %s90
      %s92 = sphi 0, %s90
      %s93 = sphi 0, %s92
      %s107 = sphi 0, %s93
      %s113 = sphi 0, %s115
      %s116 = sphi 0, %s113
      %s117 = sphi 0, %s116
      %s133 = sphi 0, %s117
      %s137 = sphi 0, %s137
      %s139 = sphi 0, %s137
      %s140 = sphi 0, %s139
      %s154 = sphi 0, %s140
      %s158 = sphi 0, %s158
      %s160 = sphi 0, %s158
      %s161 = sphi 0, %s160
      %s175 = sphi 0, %s161
      %s181 = sphi 0, %s183
      %s184 = sphi 0, %s181
      %s185 = sphi 0, %s184
      %s201 = sphi 0, %s185
      %s207 = sphi 0, %s209
      %s210 = sphi 0, %s207
      %s211 = sphi 0, %s210
      %s227 = sphi 0, %s211
    $region4: #{acoustic_simulation_nn_forward.7} parent=1 // loop_header_branch
      %22 = sbr.rel (%p20) target = $region8
    $region5: #{acoustic_simulation_nn_forward.7} parent=1 // loop_body
      %s24 = ssub.s32 %s19, 1
      %s25 = ssub.s32 %s19, 2
      %s26 = sadd.s32 %s19, 1
      %s28 = sadd.s32 %s27, 1
      %p31 = scmp.eq.s32.totalorder %s19, 1
      %p32 = scmp.ne.s32.totalorder %s27, %s29
      %p33 = scmp.eq.s32.totalorder %s19, 0
      %p34 = por %p32, %p33
      %p35 = scmp.ne.s32.totalorder %s27, %s29
      %p36 = scmp.eq.s32.totalorder %s24, 1
      %p37 = por %p35, %p36
      %p38 = scmp.ne.s32.totalorder %s29, %s30
      %p39 = scmp.eq.s32.totalorder %s24, 0
      %p40 = por %p38, %p39
      %p41 = scmp.ne.s32.totalorder %s29, %s30
      %p42 = scmp.eq.s32.totalorder %s25, 1
      %p43 = por %p41, %p42
      %p45 = scmp.ne.s32.totalorder %s30, %s44
      %p46 = scmp.eq.s32.totalorder %s25, 0
      %p47 = por %p45, %p46
      %s49 = sadd.s32 %s48, 1
      %p52 = scmp.eq.s32.totalorder %s19, 1
      %p53 = scmp.ne.s32.totalorder %s48, %s50
      %p54 = scmp.eq.s32.totalorder %s19, 0
      %p55 = por %p53, %p54
      %p56 = scmp.ne.s32.totalorder %s48, %s50
      %p57 = scmp.eq.s32.totalorder %s24, 1
      %p58 = por %p56, %p57
      %p59 = scmp.ne.s32.totalorder %s50, %s51
      %p60 = scmp.eq.s32.totalorder %s24, 0
      %p61 = por %p59, %p60
      %p62 = scmp.ne.s32.totalorder %s50, %s51
      %p63 = scmp.eq.s32.totalorder %s25, 1
      %p64 = por %p62, %p63
      %p66 = scmp.ne.s32.totalorder %s51, %s65
      %p67 = scmp.eq.s32.totalorder %s25, 0
      %p68 = por %p66, %p67
      %s70 = sadd.s32 %s69, 1
      %p73 = scmp.eq.s32.totalorder %s19, 1
      %p74 = scmp.ne.s32.totalorder %s69, %s71
      %p75 = scmp.eq.s32.totalorder %s19, 0
      %p76 = por %p74, %p75
      %p77 = scmp.ne.s32.totalorder %s69, %s71
      %p78 = scmp.eq.s32.totalorder %s24, 1
      %p79 = por %p77, %p78
      %p80 = scmp.ne.s32.totalorder %s71, %s72
      %p81 = scmp.eq.s32.totalorder %s24, 0
      %p82 = por %p80, %p81
      %p83 = scmp.ne.s32.totalorder %s71, %s72
      %p84 = scmp.eq.s32.totalorder %s25, 1
      %p85 = por %p83, %p84
      %p87 = scmp.ne.s32.totalorder %s72, %s86
      %p88 = scmp.eq.s32.totalorder %s25, 0
      %p89 = por %p87, %p88
      %s91 = sadd.s32 %s90, 1
      %p94 = scmp.eq.s32.totalorder %s19, 1
      %p95 = scmp.ne.s32.totalorder %s90, %s92
      %p96 = scmp.eq.s32.totalorder %s19, 0
      %p97 = por %p95, %p96
      %p98 = scmp.ne.s32.totalorder %s90, %s92
      %p99 = scmp.eq.s32.totalorder %s24, 1
      %p100 = por %p98, %p99
      %p101 = scmp.ne.s32.totalorder %s92, %s93
      %p102 = scmp.eq.s32.totalorder %s24, 0
      %p103 = por %p101, %p102
      %p104 = scmp.ne.s32.totalorder %s92, %s93
      %p105 = scmp.eq.s32.totalorder %s25, 1
      %p106 = por %p104, %p105
      %p108 = scmp.ne.s32.totalorder %s93, %s107
      %p109 = scmp.eq.s32.totalorder %s25, 0
      %p110 = por %p108, %p109
      %s111 = ssub.s32 %s19, %s26
      %p112 = scmp.eq.s32.totalorder %s111, 0
      %s114 = sadd.s32 %s113, 1
      %s115 = scalar_select %p112, %s113, %s114
      %p118 = pneg %p112
      %p119 = scmp.eq.s32.totalorder %s19, 1
      %p120 = por %p118, %p119
      %p121 = scmp.ne.s32.totalorder %s113, %s116
      %p122 = scmp.eq.s32.totalorder %s19, 0
      %p123 = por %p121, %p122
      %p124 = scmp.ne.s32.totalorder %s113, %s116
      %p125 = scmp.eq.s32.totalorder %s24, 1
      %p126 = por %p124, %p125
      %p127 = scmp.ne.s32.totalorder %s116, %s117
      %p128 = scmp.eq.s32.totalorder %s24, 0
      %p129 = por %p127, %p128
      %p130 = scmp.ne.s32.totalorder %s116, %s117
      %p131 = scmp.eq.s32.totalorder %s25, 1
      %p132 = por %p130, %p131
      %p134 = scmp.ne.s32.totalorder %s117, %s133
      %p135 = scmp.eq.s32.totalorder %s25, 0
      %p136 = por %p134, %p135
      %s138 = sadd.s32 %s137, 1
      %p141 = scmp.eq.s32.totalorder %s19, 1
      %p142 = scmp.ne.s32.totalorder %s137, %s139
      %p143 = scmp.eq.s32.totalorder %s19, 0
      %p144 = por %p142, %p143
      %p145 = scmp.ne.s32.totalorder %s137, %s139
      %p146 = scmp.eq.s32.totalorder %s24, 1
      %p147 = por %p145, %p146
      %p148 = scmp.ne.s32.totalorder %s139, %s140
      %p149 = scmp.eq.s32.totalorder %s24, 0
      %p150 = por %p148, %p149
      %p151 = scmp.ne.s32.totalorder %s139, %s140
      %p152 = scmp.eq.s32.totalorder %s25, 1
      %p153 = por %p151, %p152
      %p155 = scmp.ne.s32.totalorder %s140, %s154
      %p156 = scmp.eq.s32.totalorder %s25, 0
      %p157 = por %p155, %p156
      %s159 = sadd.s32 %s158, 1
      %p162 = scmp.eq.s32.totalorder %s19, 1
      %p163 = scmp.ne.s32.totalorder %s158, %s160
      %p164 = scmp.eq.s32.totalorder %s19, 0
      %p165 = por %p163, %p164
      %p166 = scmp.ne.s32.totalorder %s158, %s160
      %p167 = scmp.eq.s32.totalorder %s24, 1
      %p168 = por %p166, %p167
      %p169 = scmp.ne.s32.totalorder %s160, %s161
      %p170 = scmp.eq.s32.totalorder %s24, 0
      %p171 = por %p169, %p170
      %p172 = scmp.ne.s32.totalorder %s160, %s161
      %p173 = scmp.eq.s32.totalorder %s25, 1
      %p174 = por %p172, %p173
      %p176 = scmp.ne.s32.totalorder %s161, %s175
      %p177 = scmp.eq.s32.totalorder %s25, 0
      %p178 = por %p176, %p177
      %s179 = ssub.s32 %s19, %s26
      %p180 = scmp.eq.s32.totalorder %s179, 0
      %s182 = sadd.s32 %s181, 1
      %s183 = scalar_select %p180, %s181, %s182
      %p186 = pneg %p180
      %p187 = scmp.eq.s32.totalorder %s19, 1
      %p188 = por %p186, %p187
      %p189 = scmp.ne.s32.totalorder %s181, %s184
      %p190 = scmp.eq.s32.totalorder %s19, 0
      %p191 = por %p189, %p190
      %p192 = scmp.ne.s32.totalorder %s181, %s184
      %p193 = scmp.eq.s32.totalorder %s24, 1
      %p194 = por %p192, %p193
      %p195 = scmp.ne.s32.totalorder %s184, %s185
      %p196 = scmp.eq.s32.totalorder %s24, 0
      %p197 = por %p195, %p196
      %p198 = scmp.ne.s32.totalorder %s184, %s185
      %p199 = scmp.eq.s32.totalorder %s25, 1
      %p200 = por %p198, %p199
      %p202 = scmp.ne.s32.totalorder %s185, %s201
      %p203 = scmp.eq.s32.totalorder %s25, 0
      %p204 = por %p202, %p203
      %s205 = ssub.s32 %s19, %s26
      %p206 = scmp.eq.s32.totalorder %s205, 0
      %s208 = sadd.s32 %s207, 1
      %s209 = scalar_select %p206, %s207, %s208
      %p212 = pneg %p206
      %p213 = scmp.eq.s32.totalorder %s19, 1
      %p214 = por %p212, %p213
      %p215 = scmp.ne.s32.totalorder %s207, %s210
      %p216 = scmp.eq.s32.totalorder %s19, 0
      %p217 = por %p215, %p216
      %p218 = scmp.ne.s32.totalorder %s207, %s210
      %p219 = scmp.eq.s32.totalorder %s24, 1
      %p220 = por %p218, %p219
      %p221 = scmp.ne.s32.totalorder %s210, %s211
      %p222 = scmp.eq.s32.totalorder %s24, 0
      %p223 = por %p221, %p222
      %p224 = scmp.ne.s32.totalorder %s210, %s211
      %p225 = scmp.eq.s32.totalorder %s25, 1
      %p226 = por %p224, %p225
      %p228 = scmp.ne.s32.totalorder %s211, %s227
      %p229 = scmp.eq.s32.totalorder %s25, 0
      %p230 = por %p228, %p229
      %p231 = scmp.le.s32.totalorder 1, %s19
      %p232 = scmp.lt.s32.totalorder %s19, 3
      %p233 = pnand %p231, %p232
      %p234 = pneg %p233
      // Predicated region
      $region9: #{acoustic_simulation_nn_forward.7} parent=5 // pred_check
        _
      $region10: #{acoustic_simulation_nn_forward.7} parent=5 // pred_check_branch
        %236 = sbr.rel (%p233) target = $region12
      $region11: #{acoustic_simulation_nn_forward.7} parent=5 // pred_region
        %s237 = ssub.s32 %s19, 1
        // Predicated region
        $region13: #{acoustic_simulation_nn_forward.7} parent=11 // pred_check
          %p238 = pneg %p40
        $region14: #{acoustic_simulation_nn_forward.7} parent=11 // pred_check_branch
          %240 = sbr.rel (%p238) target = $region16
        $region15: #{acoustic_simulation_nn_forward.7} parent=11 // pred_region
          %242 = vsyncadd [#allocation10], 0
          %s244 = sshll.u32 %s0, 4
          %s245 = int_to_ptr.vmem [resolvable:$true] %s244
          %247 = dma.vmem_to_smem %s245, 16, [#allocation8], [#allocation10]
        $region16: #{acoustic_simulation_nn_forward.7} parent=11 // pred_fallthru
          _
        // Predicated region
        $region17: #{acoustic_simulation_nn_forward.7} parent=11 // pred_check
          %p248 = pneg %p61
        $region18: #{acoustic_simulation_nn_forward.7} parent=11 // pred_check_branch
          %250 = sbr.rel (%p248) target = $region20
        $region19: #{acoustic_simulation_nn_forward.7} parent=11 // pred_region
          _
        $region20: #{acoustic_simulation_nn_forward.7} parent=11 // pred_fallthru
          _
        // Predicated region
        $region21: #{acoustic_simulation_nn_forward.7} parent=11 // pred_check
          %p251 = pneg %p82
        $region22: #{acoustic_simulation_nn_forward.7} parent=11 // pred_check_branch
          %253 = sbr.rel (%p251) target = $region24
        $region23: #{acoustic_simulation_nn_forward.7} parent=11 // pred_region
          _
        $region24: #{acoustic_simulation_nn_forward.7} parent=11 // pred_fallthru
          _
        // Predicated region
        $region25: #{acoustic_simulation_nn_forward.7} parent=11 // pred_check
          %p254 = pneg %p103
        $region26: #{acoustic_simulation_nn_forward.7} parent=11 // pred_check_branch
          %256 = sbr.rel (%p254) target = $region28
        $region27: #{acoustic_simulation_nn_forward.7} parent=11 // pred_region
          _
        $region28: #{acoustic_simulation_nn_forward.7} parent=11 // pred_fallthru
          _
        // Predicated region
        $region29: #{acoustic_simulation_nn_forward.7} parent=11 // pred_check
          %p257 = pneg %p150
        $region30: #{acoustic_simulation_nn_forward.7} parent=11 // pred_check_branch
          %259 = sbr.rel (%p257) target = $region32
        $region31: #{acoustic_simulation_nn_forward.7} parent=11 // pred_region
          _
        $region32: #{acoustic_simulation_nn_forward.7} parent=11 // pred_fallthru
          _
        // Predicated region
        $region33: #{acoustic_simulation_nn_forward.7} parent=11 // pred_check
          %p260 = pneg %p171
        $region34: #{acoustic_simulation_nn_forward.7} parent=11 // pred_check_branch
          %262 = sbr.rel (%p260) target = $region36
        $region35: #{acoustic_simulation_nn_forward.7} parent=11 // pred_region
          _
        $region36: #{acoustic_simulation_nn_forward.7} parent=11 // pred_fallthru
          _
      $region12: #{acoustic_simulation_nn_forward.7} parent=5 // pred_fallthru
        _
      %p263 = scmp.lt.s32.totalorder %s19, 2
      // Predicated region
      $region37: #{acoustic_simulation_nn_forward.7} parent=5 // pred_check
        %p264 = pneg %p263
      $region38: #{acoustic_simulation_nn_forward.7} parent=5 // pred_check_branch
        %266 = sbr.rel (%p264) target = $region40
      $region39: #{acoustic_simulation_nn_forward.7} parent=5 // pred_region
        // Predicated region
        $region41: #{acoustic_simulation_nn_forward.7} parent=39 // pred_check
          %p267 = pneg %p123
        $region42: #{acoustic_simulation_nn_forward.7} parent=39 // pred_check_branch
          %269 = sbr.rel (%p267) target = $region44
        $region43: #{acoustic_simulation_nn_forward.7} parent=39 // pred_region
          %p270 = scmp.lt.s32.totalorder %s19, 1
          %s271 = scalar_select %p270, %s19, 1
          %s272 = smul.addr %s271, 6
          %s273 = smul.addr %s272, 8
          %s274 = scalar_lea.vmem %s4, %s273
        $region44: #{acoustic_simulation_nn_forward.7} parent=39 // pred_fallthru
          _
      $region40: #{acoustic_simulation_nn_forward.7} parent=5 // pred_fallthru
        _
      %p275 = scmp.le.s32.totalorder 1, %s19
      %p276 = scmp.lt.s32.totalorder %s19, 3
      %p277 = pnand %p275, %p276
      %p278 = pneg %p277
      // Predicated region
      $region45: #{acoustic_simulation_nn_forward.7} parent=5 // pred_check
        _
      $region46: #{acoustic_simulation_nn_forward.7} parent=5 // pred_check_branch
        %280 = sbr.rel (%p277) target = $region48
      $region47: #{acoustic_simulation_nn_forward.7} parent=5 // pred_region
        %s281 = ssub.s32 %s19, 1
        // Predicated region
        $region49: #{acoustic_simulation_nn_forward.7} parent=47 // pred_check
          %p282 = pneg %p40
        $region50: #{acoustic_simulation_nn_forward.7} parent=47 // pred_check_branch
          %284 = sbr.rel (%p282) target = $region52
        $region51: #{acoustic_simulation_nn_forward.7} parent=47 // pred_region
          %286 = dma.done [#allocation10], 16
        $region52: #{acoustic_simulation_nn_forward.7} parent=47 // pred_fallthru
          _
        %287 = sfence
        %p288 = pneg %p40
        %p289 = pneg %p37
        %p290 = pneg %p61
        %p291 = pneg %p58
        %p292 = pneg %p82
        %p293 = pneg %p79
        %p294 = pneg %p103
        %p295 = pneg %p100
        %p296 = scmp.lt.s32.totalorder %s24, 1
        %s297 = scalar_select %p296, %s24, 1
        %s298 = smul.addr %s297, 6
        %s299 = smul.addr %s298, 8
        %s300 = scalar_lea.vmem %s4, %s299
        %p301 = pneg %p129
        %p302 = pneg %p126
        %p303 = pneg %p150
        %p304 = pneg %p147
        %p305 = pneg %p171
        %p306 = pneg %p168
        %p307 = pneg %p197
        %p308 = pneg %p194
        %p309 = scmp.lt.s32.totalorder %s24, 1
        %s310 = scalar_select %p309, %s24, 1
        %s311 = smul.addr %s310, 4
        %s312 = smul.addr %s311, 8
        %s313 = scalar_lea.vmem %s7, %s312
        %p314 = pneg %p223
        %p315 = pneg %p220
        %s316 = sand.u32 %s210, 1
        %s317 = scalar_lea.sflag [#allocation9], %s316
        %s318 = sand.u32 %s210, 1
        %s319 = smul.addr %s318, 1536
        %s320 = scalar_lea.vmem [#allocation11], %s319
        %p321 = scmp.lt.s32.totalorder %s24, 1
        %s322 = scalar_select %p321, %s24, 1
        %s323 = smul.addr %s322, 6
        %s324 = smul.addr %s323, 8
        %s325 = scalar_lea.vmem %s4, %s324
        %p326 = scmp.lt.s32.totalorder %s24, 1
        %s327 = scalar_select %p326, %s24, 1
        %s328 = smul.addr %s327, 4
        %s329 = smul.addr %s328, 8
        %s330 = scalar_lea.vmem %s7, %s329
        %v331 = vlaneseq
        %v332 = vshrl.u32 %v331, 7
        %v333 = vadd.s32 %v332, 8
        %v334 = vadd.s32 %v332, 16
        %v335 = vadd.s32 %v332, 24
        %v336 = vadd.s32 %v332, 32
        %v337 = vadd.s32 %v332, 40
        %vm338 = vcmp.lt.s32.totalorder %v332, 20
        %vm339 = vcmp.lt.s32.totalorder %v333, 20
        %vm340 = vcmp.lt.s32.totalorder %v334, 20
        %vm341 = vcmp.lt.s32.totalorder %v335, 20
        %vm342 = vcmp.lt.s32.totalorder %v336, 20
        %vm343 = vcmp.lt.s32.totalorder %v337, 20
        %v344 = vld [vmem:[%s1] sm:$0xff]
        %v345 = vld [vmem:[%s1 + $0x8] sm:$0xff]
        %v346 = vld [vmem:[%s1 + $0x10] sm:$0xff]
        %v347 = vld [vmem:[%s1 + $0x18] sm:$0xff]
        %v348 = vld [vmem:[%s1 + $0x20] sm:$0xff]
        %v349 = vld [vmem:[%s1 + $0x28] sm:$0xff]
        %v350 = vsel %vm338, 0.0, %v344
        %v351 = vsel %vm339, 0.0, %v345
        %v352 = vsel %vm340, 0.0, %v346
        %v353 = vsel %vm341, 0.0, %v347
        %v354 = vsel %vm342, 0.0, %v348
        %v355 = vsel %vm343, 0.0, %v349
        %v356 = vld [vmem:[%s2] sm:$0xff]
        %v357 = vld [vmem:[%s2 + $0x8] sm:$0xff]
        %v358 = vld [vmem:[%s2 + $0x10] sm:$0xff]
        %v359 = vld [vmem:[%s2 + $0x18] sm:$0xff]
        %v360 = vld [vmem:[%s2 + $0x20] sm:$0xff]
        %v361 = vld [vmem:[%s2 + $0x28] sm:$0xff]
        %v362 = vadd.f32 %v356, %v350
        %v363 = vadd.f32 %v357, %v351
        %v364 = vadd.f32 %v358, %v352
        %v365 = vadd.f32 %v359, %v353
        %v366 = vadd.f32 %v360, %v354
        %v367 = vadd.f32 %v361, %v355
        %v368 = vmax.f32 %v362, 1500.0
        %v369 = vmax.f32 %v363, 1500.0
        %v370 = vmax.f32 %v364, 1500.0
        %v371 = vmax.f32 %v365, 1500.0
        %v372 = vmax.f32 %v366, 1500.0
        %v373 = vmax.f32 %v367, 1500.0
        %v374 = vmin.f32 %v368, 4500.0
        %v375 = vmin.f32 %v369, 4500.0
        %v376 = vmin.f32 %v370, 4500.0
        %v377 = vmin.f32 %v371, 4500.0
        %v378 = vmin.f32 %v372, 4500.0
        %v379 = vmin.f32 %v373, 4500.0
        %v380 = vld [vmem:[%s3] sm:$0xff]
        %v381 = vld [vmem:[%s3 + $0x8] sm:$0xff]
        %v382 = vld [vmem:[%s3 + $0x10] sm:$0xff]
        %v383 = vld [vmem:[%s3 + $0x18] sm:$0xff]
        %v384 = vld [vmem:[%s3 + $0x20] sm:$0xff]
        %v385 = vld [vmem:[%s3 + $0x28] sm:$0xff]
        %v386 = vmul.f32 %v380, 0.001
        %v387 = vmul.f32 %v381, 0.001
        %v388 = vmul.f32 %v382, 0.001
        %v389 = vmul.f32 %v383, 0.001
        %v390 = vmul.f32 %v384, 0.001
        %v391 = vmul.f32 %v385, 0.001
        %v392 = vadd.f32 %v386, 1.0
        %v393 = vadd.f32 %v387, 1.0
        %v394 = vadd.f32 %v388, 1.0
        %v395 = vadd.f32 %v389, 1.0
        %v396 = vadd.f32 %v390, 1.0
        %v397 = vadd.f32 %v391, 1.0
        %v398 = vrcp.pop %v392
        %v399 = vmul.f32 %v392, %v398
        %v400 = vsub.f32 1.0, %v399
        %v401 = vmul.f32 %v398, %v400
        %v402 = vadd.f32 %v398, %v401
        %vm403 = vweird.f32 %v392
        %vm404 = vweird.f32 %v398
        %vm405 = vmor %vm403, %vm404
        %v406 = vsel %vm405, %v398, %v402
        %v407 = vand.u32 2147483647, %v392
        %vm408 = vcmp.eq.f32.partialorder %v407, 8.507059e+37
        %v409 = vand.u32 %v392, 2147483648
        %v410 = vor.u32 1.1754944e-38, %v409
        %v411 = vsel %vm408, %v410, %v406
        %v412 = vmul.f32 1.0, %v411
        %v413 = vrcp.pop %v393
        %v414 = vmul.f32 %v393, %v413
        %v415 = vsub.f32 1.0, %v414
        %v416 = vmul.f32 %v413, %v415
        %v417 = vadd.f32 %v413, %v416
        %vm418 = vweird.f32 %v393
        %vm419 = vweird.f32 %v413
        %vm420 = vmor %vm418, %vm419
        %v421 = vsel %vm420, %v413, %v417
        %v422 = vand.u32 2147483647, %v393
        %vm423 = vcmp.eq.f32.partialorder %v422, 8.507059e+37
        %v424 = vand.u32 %v393, 2147483648
        %v425 = vor.u32 1.1754944e-38, %v424
        %v426 = vsel %vm423, %v425, %v421
        %v427 = vmul.f32 1.0, %v426
        %v428 = vrcp.pop %v394
        %v429 = vmul.f32 %v394, %v428
        %v430 = vsub.f32 1.0, %v429
        %v431 = vmul.f32 %v428, %v430
        %v432 = vadd.f32 %v428, %v431
        %vm433 = vweird.f32 %v394
        %vm434 = vweird.f32 %v428
        %vm435 = vmor %vm433, %vm434
        %v436 = vsel %vm435, %v428, %v432
        %v437 = vand.u32 2147483647, %v394
        %vm438 = vcmp.eq.f32.partialorder %v437, 8.507059e+37
        %v439 = vand.u32 %v394, 2147483648
        %v440 = vor.u32 1.1754944e-38, %v439
        %v441 = vsel %vm438, %v440, %v436
        %v442 = vmul.f32 1.0, %v441
        %v443 = vrcp.pop %v395
        %v444 = vmul.f32 %v395, %v443
        %v445 = vsub.f32 1.0, %v444
        %v446 = vmul.f32 %v443, %v445
        %v447 = vadd.f32 %v443, %v446
        %vm448 = vweird.f32 %v395
        %vm449 = vweird.f32 %v443
        %vm450 = vmor %vm448, %vm449
        %v451 = vsel %vm450, %v443, %v447
        %v452 = vand.u32 2147483647, %v395
        %vm453 = vcmp.eq.f32.partialorder %v452, 8.507059e+37
        %v454 = vand.u32 %v395, 2147483648
        %v455 = vor.u32 1.1754944e-38, %v454
        %v456 = vsel %vm453, %v455, %v451
        %v457 = vmul.f32 1.0, %v456
        %v458 = vrcp.pop %v396
        %v459 = vmul.f32 %v396, %v458
        %v460 = vsub.f32 1.0, %v459
        %v461 = vmul.f32 %v458, %v460
        %v462 = vadd.f32 %v458, %v461
        %vm463 = vweird.f32 %v396
        %vm464 = vweird.f32 %v458
        %vm465 = vmor %vm463, %vm464
        %v466 = vsel %vm465, %v458, %v462
        %v467 = vand.u32 2147483647, %v396
        %vm468 = vcmp.eq.f32.partialorder %v467, 8.507059e+37
        %v469 = vand.u32 %v396, 2147483648
        %v470 = vor.u32 1.1754944e-38, %v469
        %v471 = vsel %vm468, %v470, %v466
        %v472 = vmul.f32 1.0, %v471
        %v473 = vrcp.pop %v397
        %v474 = vmul.f32 %v397, %v473
        %v475 = vsub.f32 1.0, %v474
        %v476 = vmul.f32 %v473, %v475
        %v477 = vadd.f32 %v473, %v476
        %vm478 = vweird.f32 %v397
        %vm479 = vweird.f32 %v473
        %vm480 = vmor %vm478, %vm479
        %v481 = vsel %vm480, %v473, %v477
        %v482 = vand.u32 2147483647, %v397
        %vm483 = vcmp.eq.f32.partialorder %v482, 8.507059e+37
        %v484 = vand.u32 %v397, 2147483648
        %v485 = vor.u32 1.1754944e-38, %v484
        %v486 = vsel %vm483, %v485, %v481
        %v487 = vmul.f32 1.0, %v486
        %v488 = vmul.f32 %v374, %v374
        %v489 = vmul.f32 %v375, %v375
        %v490 = vmul.f32 %v376, %v376
        %v491 = vmul.f32 %v377, %v377
        %v492 = vmul.f32 %v378, %v378
        %v493 = vmul.f32 %v379, %v379
        %v494 = vmul.f32 %v488, 1e-06
        %v495 = vmul.f32 %v489, 1e-06
        %v496 = vmul.f32 %v490, 1e-06
        %v497 = vmul.f32 %v491, 1e-06
        %v498 = vmul.f32 %v492, 1e-06
        %v499 = vmul.f32 %v493, 1e-06
        %v500 = vmul.f32 %v494, %v412
        %v501 = vmul.f32 %v495, %v427
        %v502 = vmul.f32 %v496, %v442
        %v503 = vmul.f32 %v497, %v457
        %v504 = vmul.f32 %v498, %v472
        %v505 = vmul.f32 %v499, %v487
        %v506 = vmul.f32 %v386, %v386
        %v507 = vmul.f32 %v387, %v387
        %v508 = vmul.f32 %v388, %v388
        %v509 = vmul.f32 %v389, %v389
        %v510 = vmul.f32 %v390, %v390
        %v511 = vmul.f32 %v391, %v391
        %v512 = vsub.f32 2.0, %v506
        %v513 = vsub.f32 2.0, %v507
        %v514 = vsub.f32 2.0, %v508
        %v515 = vsub.f32 2.0, %v509
        %v516 = vsub.f32 2.0, %v510
        %v517 = vsub.f32 2.0, %v511
        %v518 = vmul.f32 %v512, %v412
        %v519 = vmul.f32 %v513, %v427
        %v520 = vmul.f32 %v514, %v442
        %v521 = vmul.f32 %v515, %v457
        %v522 = vmul.f32 %v516, %v472
        %v523 = vmul.f32 %v517, %v487
        %vm524 = vcmask 392192
        %525 = vst.msk [vmem:[#allocation2] sm:$0xff] %vm524, %v518
        %526 = vst.msk [vmem:[#allocation2 + $0x8] sm:$0xff] %vm524, %v519
        %527 = vst.msk [vmem:[#allocation2 + $0x10] sm:$0xff] %vm524, %v520
        %528 = vst.msk [vmem:[#allocation2 + $0x18] sm:$0xff] %vm524, %v521
        %529 = vst.msk [vmem:[#allocation2 + $0x20] sm:$0xff] %vm524, %v522
        %530 = vst.msk [vmem:[#allocation2 + $0x28] sm:$0xff] %vm524, %v523
        %v531 = vsub.f32 1.0, %v386
        %v532 = vsub.f32 1.0, %v387
        %v533 = vsub.f32 1.0, %v388
        %v534 = vsub.f32 1.0, %v389
        %v535 = vsub.f32 1.0, %v390
        %v536 = vsub.f32 1.0, %v391
        %v537 = vmul.f32 %v531, %v412
        %v538 = vmul.f32 %v532, %v427
        %v539 = vmul.f32 %v533, %v442
        %v540 = vmul.f32 %v534, %v457
        %v541 = vmul.f32 %v535, %v472
        %v542 = vmul.f32 %v536, %v487
        %543 = vst.msk [vmem:[#allocation3] sm:$0xff] %vm524, %v537
        %544 = vst.msk [vmem:[#allocation3 + $0x8] sm:$0xff] %vm524, %v538
        %545 = vst.msk [vmem:[#allocation3 + $0x10] sm:$0xff] %vm524, %v539
        %546 = vst.msk [vmem:[#allocation3 + $0x18] sm:$0xff] %vm524, %v540
        %547 = vst.msk [vmem:[#allocation3 + $0x20] sm:$0xff] %vm524, %v541
        %548 = vst.msk [vmem:[#allocation3 + $0x28] sm:$0xff] %vm524, %v542
        %549 = vst.msk [vmem:[#allocation4] sm:$0xff] %vm524, %v500
        %550 = vst.msk [vmem:[#allocation4 + $0x8] sm:$0xff] %vm524, %v501
        %551 = vst.msk [vmem:[#allocation4 + $0x10] sm:$0xff] %vm524, %v502
        %552 = vst.msk [vmem:[#allocation4 + $0x18] sm:$0xff] %vm524, %v503
        %553 = vst.msk [vmem:[#allocation4 + $0x20] sm:$0xff] %vm524, %v504
        %554 = vst.msk [vmem:[#allocation4 + $0x28] sm:$0xff] %vm524, %v505
        %v555 = vld [vmem:[%s325] sm:$0xff]
        %v556 = vld [vmem:[%s325 + $0x8] sm:$0xff]
        %v557 = vld [vmem:[%s325 + $0x10] sm:$0xff]
        %v558 = vld [vmem:[%s325 + $0x18] sm:$0xff]
        %v559 = vld [vmem:[%s325 + $0x20] sm:$0xff]
        %v560 = vld [vmem:[%s325 + $0x28] sm:$0xff]
        %v561 = vmul.f32 %v500, %v555
        %v562 = vmul.f32 %v501, %v556
        %v563 = vmul.f32 %v502, %v557
        %v564 = vmul.f32 %v503, %v558
        %v565 = vmul.f32 %v504, %v559
        %v566 = vmul.f32 %v505, %v560
        %567 = vst.msk [vmem:[#allocation5] sm:$0xff] %vm524, %v561
        %568 = vst.msk [vmem:[#allocation5 + $0x8] sm:$0xff] %vm524, %v562
        %569 = vst.msk [vmem:[#allocation5 + $0x10] sm:$0xff] %vm524, %v563
        %570 = vst.msk [vmem:[#allocation5 + $0x18] sm:$0xff] %vm524, %v564
        %571 = vst.msk [vmem:[#allocation5 + $0x20] sm:$0xff] %vm524, %v565
        %572 = vst.msk [vmem:[#allocation5 + $0x28] sm:$0xff] %vm524, %v566
        %573 = vst.msk [vmem:[#allocation6] sm:$0xff] %vm524, 0.0
        %574 = vst.msk [vmem:[#allocation6 + $0x8] sm:$0xff] %vm524, 0.0
        %575 = vst.msk [vmem:[#allocation6 + $0x10] sm:$0xff] %vm524, 0.0
        %576 = vst.msk [vmem:[#allocation6 + $0x18] sm:$0xff] %vm524, 0.0
        %577 = vst.msk [vmem:[#allocation6 + $0x20] sm:$0xff] %vm524, 0.0
        %578 = vst.msk [vmem:[#allocation6 + $0x28] sm:$0xff] %vm524, 0.0
        %579 = vst.msk [vmem:[#allocation7] sm:$0xff] %vm524, 0.0
        %580 = vst.msk [vmem:[#allocation7 + $0x8] sm:$0xff] %vm524, 0.0
        %581 = vst.msk [vmem:[#allocation7 + $0x10] sm:$0xff] %vm524, 0.0
        %582 = vst.msk [vmem:[#allocation7 + $0x18] sm:$0xff] %vm524, 0.0
        %583 = vst.msk [vmem:[#allocation7 + $0x20] sm:$0xff] %vm524, 0.0
        %584 = vst.msk [vmem:[#allocation7 + $0x28] sm:$0xff] %vm524, 0.0
        loop: start=0, step=1, limit=32
        $region53: #{acoustic_simulation_nn_forward.7} parent=47 // loop_pre_header
          _
        $region54: #{acoustic_simulation_nn_forward.7} parent=47 // loop_header
          %s586 = sphi 0, %s590
          %p587 = scmp.ge.s32.totalorder %s586, 32
        $region55: #{acoustic_simulation_nn_forward.7} parent=47 // loop_header_branch
          %589 = sbr.rel (%p587) target = $region59
        $region56: #{acoustic_simulation_nn_forward.7} parent=47 // loop_body
          %v591 = vld [vmem:[#allocation6] sm:$0xff]
          %v592 = vld [vmem:[#allocation6 + $0x8] sm:$0xff]
          %v593 = vld [vmem:[#allocation6 + $0x10] sm:$0xff]
          %v594 = vld [vmem:[#allocation6 + $0x18] sm:$0xff]
          %v595 = vld [vmem:[#allocation6 + $0x20] sm:$0xff]
          %v596 = vld [vmem:[#allocation6 + $0x28] sm:$0xff]
          %v597 = vld [vmem:[#allocation7] sm:$0xff]
          %v598 = vld [vmem:[#allocation7 + $0x8] sm:$0xff]
          %v599 = vld [vmem:[#allocation7 + $0x10] sm:$0xff]
          %v600 = vld [vmem:[#allocation7 + $0x18] sm:$0xff]
          %v601 = vld [vmem:[#allocation7 + $0x20] sm:$0xff]
          %v602 = vld [vmem:[#allocation7 + $0x28] sm:$0xff]
          %v603 = vmul.f32 %v597, 2.0
          %v604 = vmul.f32 %v598, 2.0
          %v605 = vmul.f32 %v599, 2.0
          %v606 = vmul.f32 %v600, 2.0
          %v607 = vmul.f32 %v601, 2.0
          %v608 = vmul.f32 %v602, 2.0
          %vm615 = vcmask 1040384
          %v616 = vrot.slane %v603, 7
          %v617 = vrot.slane %v604, 7
          %v618 = vsel %vm615, %v616, %v617
          %v619 = vrot.slane %v605, 7
          %v620 = vsel %vm615, %v617, %v619
          %v621 = vrot.slane %v606, 7
          %v622 = vsel %vm615, %v619, %v621
          %v623 = vrot.slane %v607, 7
          %v624 = vsel %vm615, %v621, %v623
          %v625 = vrot.slane %v608, 7
          %v626 = vsel %vm615, %v623, %v625
          %v633 = vsub.f32 %v597, %v616
          %v634 = vsub.f32 %v598, %v618
          %v635 = vsub.f32 %v599, %v620
          %v636 = vsub.f32 %v600, %v622
          %v637 = vsub.f32 %v601, %v624
          %v638 = vsub.f32 %v602, %v626
          %vm645 = vcmask 1041408
          %v646 = vrot.slane %v597, 6
          %v647 = vrot.slane %v598, 6
          %v648 = vsel %vm645, %v646, %v647
          %v649 = vrot.slane %v599, 6
          %v650 = vsel %vm645, %v647, %v649
          %v651 = vrot.slane %v600, 6
          %v652 = vsel %vm645, %v649, %v651
          %v653 = vrot.slane %v601, 6
          %v654 = vsel %vm645, %v651, %v653
          %v655 = vrot.slane %v602, 6
          %v656 = vsel %vm645, %v653, %v655
          %v663 = vadd.f32 %v633, %v646
          %v664 = vadd.f32 %v634, %v648
          %v665 = vadd.f32 %v635, %v650
          %v666 = vadd.f32 %v636, %v652
          %v667 = vadd.f32 %v637, %v654
          %v668 = vadd.f32 %v638, %v656
          %v669 = vmul.f32 %v663, 0.01
          %v670 = vmul.f32 %v664, 0.01
          %v671 = vmul.f32 %v665, 0.01
          %v672 = vmul.f32 %v666, 0.01
          %v673 = vmul.f32 %v667, 0.01
          %v674 = vmul.f32 %v668, 0.01
          %675 = vrot.lane.b32.xlu0 %v603, 1
          %v676 = vpop.permute.xlu0 %675
          %677 = vrot.lane.b32.xlu0 %v604, 1
          %v678 = vpop.permute.xlu0 %677
          %679 = vrot.lane.b32.xlu0 %v605, 1
          %v680 = vpop.permute.xlu0 %679
          %681 = vrot.lane.b32.xlu0 %v606, 1
          %v682 = vpop.permute.xlu0 %681
          %683 = vrot.lane.b32.xlu0 %v607, 1
          %v684 = vpop.permute.xlu0 %683
          %685 = vrot.lane.b32.xlu0 %v608, 1
          %v686 = vpop.permute.xlu0 %685
          %v693 = vsub.f32 %v597, %v676
          %v694 = vsub.f32 %v598, %v678
          %v695 = vsub.f32 %v599, %v680
          %v696 = vsub.f32 %v600, %v682
          %v697 = vsub.f32 %v601, %v684
          %v698 = vsub.f32 %v602, %v686
          %699 = vrot.lane.b32.xlu0 %v597, 2
          %v700 = vpop.permute.xlu0 %699
          %701 = vrot.lane.b32.xlu0 %v598, 2
          %v702 = vpop.permute.xlu0 %701
          %703 = vrot.lane.b32.xlu0 %v599, 2
          %v704 = vpop.permute.xlu0 %703
          %705 = vrot.lane.b32.xlu0 %v600, 2
          %v706 = vpop.permute.xlu0 %705
          %707 = vrot.lane.b32.xlu0 %v601, 2
          %v708 = vpop.permute.xlu0 %707
          %709 = vrot.lane.b32.xlu0 %v602, 2
          %v710 = vpop.permute.xlu0 %709
          %v717 = vadd.f32 %v693, %v700
          %v718 = vadd.f32 %v694, %v702
          %v719 = vadd.f32 %v695, %v704
          %v720 = vadd.f32 %v696, %v706
          %v721 = vadd.f32 %v697, %v708
          %v722 = vadd.f32 %v698, %v710
          %v723 = vmul.f32 %v717, 0.01
          %v724 = vmul.f32 %v718, 0.01
          %v725 = vmul.f32 %v719, 0.01
          %v726 = vmul.f32 %v720, 0.01
          %v727 = vmul.f32 %v721, 0.01
          %v728 = vmul.f32 %v722, 0.01
          %vm735 = vcmask 1046528
          %v736 = vrot.slane %v669, 1
          %v737 = vrot.slane %v670, 1
          %v738 = vsel %vm735, %v736, %v737
          %v739 = vrot.slane %v671, 1
          %v740 = vsel %vm735, %v737, %v739
          %v741 = vrot.slane %v672, 1
          %v742 = vsel %vm735, %v739, %v741
          %v743 = vrot.slane %v673, 1
          %v744 = vsel %vm735, %v741, %v743
          %v745 = vrot.slane %v674, 1
          %v746 = vsel %vm735, %v743, %v745
          %v753 = vsel %vm615, 0.0, %v738
          %v754 = vsel %vm735, %v745, 0.0
          %761 = vrot.lane.b32.xlu0 %v723, 127
          %v762 = vpop.permute.xlu0 %761
          %763 = vrot.lane.b32.xlu0 %v724, 127
          %v764 = vpop.permute.xlu0 %763
          %765 = vrot.lane.b32.xlu0 %v725, 127
          %v766 = vpop.permute.xlu0 %765
          %767 = vrot.lane.b32.xlu0 %v726, 127
          %v768 = vpop.permute.xlu0 %767
          %769 = vrot.lane.b32.xlu0 %v727, 127
          %v770 = vpop.permute.xlu0 %769
          %771 = vrot.lane.b32.xlu0 %v728, 127
          %v772 = vpop.permute.xlu0 %771
          %vm779 = vcmask 7168
          %v780 = vsel %vm779, 0.0, %v762
          %v781 = vsel %vm779, 0.0, %v764
          %v782 = vsel %vm779, 0.0, %v766
          %v783 = vsel %vm779, 0.0, %v768
          %v784 = vsel %vm779, 0.0, %v770
          %v785 = vsel %vm779, 0.0, %v772
          %vm786 = vcmask 384000
          %v787 = vsel %vm786, %v780, 0.0
          %v788 = vsel %vm786, %v781, 0.0
          %v789 = vsel %vm786, %v782, 0.0
          %v790 = vsel %vm786, %v783, 0.0
          %v791 = vsel %vm786, %v784, 0.0
          %v792 = vsel %vm786, %v785, 0.0
          %v793 = vadd.f32 %v753, %v787
          %v794 = vadd.f32 %v740, %v788
          %v795 = vadd.f32 %v742, %v789
          %v796 = vadd.f32 %v744, %v790
          %v797 = vadd.f32 %v746, %v791
          %v798 = vadd.f32 %v754, %v792
          %s799 = smul.u32 %s24, 32
          %s800 = sadd.s32 %s799, %s586
          %s801 = sld [smem:[#allocation8 + %s800]]
          %v802 = vld [vmem:[#allocation2] sm:$0xff]
          %v803 = vld [vmem:[#allocation2 + $0x8] sm:$0xff]
          %v804 = vld [vmem:[#allocation2 + $0x10] sm:$0xff]
          %v805 = vld [vmem:[#allocation2 + $0x18] sm:$0xff]
          %v806 = vld [vmem:[#allocation2 + $0x20] sm:$0xff]
          %v807 = vld [vmem:[#allocation2 + $0x28] sm:$0xff]
          %v808 = vmul.f32 %v802, %v597
          %v809 = vmul.f32 %v803, %v598
          %v810 = vmul.f32 %v804, %v599
          %v811 = vmul.f32 %v805, %v600
          %v812 = vmul.f32 %v806, %v601
          %v813 = vmul.f32 %v807, %v602
          %v814 = vld [vmem:[#allocation3] sm:$0xff]
          %v815 = vld [vmem:[#allocation3 + $0x8] sm:$0xff]
          %v816 = vld [vmem:[#allocation3 + $0x10] sm:$0xff]
          %v817 = vld [vmem:[#allocation3 + $0x18] sm:$0xff]
          %v818 = vld [vmem:[#allocation3 + $0x20] sm:$0xff]
          %v819 = vld [vmem:[#allocation3 + $0x28] sm:$0xff]
          %v820 = vmul.f32 %v814, %v591
          %v821 = vmul.f32 %v815, %v592
          %v822 = vmul.f32 %v816, %v593
          %v823 = vmul.f32 %v817, %v594
          %v824 = vmul.f32 %v818, %v595
          %v825 = vmul.f32 %v819, %v596
          %v826 = vsub.f32 %v808, %v820
          %v827 = vsub.f32 %v809, %v821
          %v828 = vsub.f32 %v810, %v822
          %v829 = vsub.f32 %v811, %v823
          %v830 = vsub.f32 %v812, %v824
          %v831 = vsub.f32 %v813, %v825
          %v832 = vld [vmem:[#allocation4] sm:$0xff]
          %v833 = vld [vmem:[#allocation4 + $0x8] sm:$0xff]
          %v834 = vld [vmem:[#allocation4 + $0x10] sm:$0xff]
          %v835 = vld [vmem:[#allocation4 + $0x18] sm:$0xff]
          %v836 = vld [vmem:[#allocation4 + $0x20] sm:$0xff]
          %v837 = vld [vmem:[#allocation4 + $0x28] sm:$0xff]
          %v838 = vmul.f32 %v832, %v793
          %v839 = vmul.f32 %v833, %v794
          %v840 = vmul.f32 %v834, %v795
          %v841 = vmul.f32 %v835, %v796
          %v842 = vmul.f32 %v836, %v797
          %v843 = vmul.f32 %v837, %v798
          %v844 = vadd.f32 %v826, %v838
          %v845 = vadd.f32 %v827, %v839
          %v846 = vadd.f32 %v828, %v840
          %v847 = vadd.f32 %v829, %v841
          %v848 = vadd.f32 %v830, %v842
          %v849 = vadd.f32 %v831, %v843
          %v850 = vld [vmem:[#allocation5] sm:$0xff]
          %v851 = vld [vmem:[#allocation5 + $0x8] sm:$0xff]
          %v852 = vld [vmem:[#allocation5 + $0x10] sm:$0xff]
          %v853 = vld [vmem:[#allocation5 + $0x18] sm:$0xff]
          %v854 = vld [vmem:[#allocation5 + $0x20] sm:$0xff]
          %v855 = vld [vmem:[#allocation5 + $0x28] sm:$0xff]
          %v856 = vstv %s801
          %v857 = vmul.f32 %v850, %v856
          %v858 = vmul.f32 %v851, %v856
          %v859 = vmul.f32 %v852, %v856
          %v860 = vmul.f32 %v853, %v856
          %v861 = vmul.f32 %v854, %v856
          %v862 = vmul.f32 %v855, %v856
          %v863 = vadd.f32 %v844, %v857
          %v864 = vadd.f32 %v845, %v858
          %v865 = vadd.f32 %v846, %v859
          %v866 = vadd.f32 %v847, %v860
          %v867 = vadd.f32 %v848, %v861
          %v868 = vadd.f32 %v849, %v862
          %v869 = vld [vmem:[%s5] sm:$0xff]
          %v870 = vld [vmem:[%s5 + $0x8] sm:$0xff]
          %v871 = vld [vmem:[%s5 + $0x10] sm:$0xff]
          %v872 = vld [vmem:[%s5 + $0x18] sm:$0xff]
          %v873 = vld [vmem:[%s5 + $0x20] sm:$0xff]
          %v874 = vld [vmem:[%s5 + $0x28] sm:$0xff]
          %v876 = vsel %vm524, %v863, 0
          %v879 = vsel %vm524, %v864, 0
          %v882 = vsel %vm524, %v865, 0
          %v885 = vsel %vm524, %v866, 0
          %v888 = vsel %vm524, %v867, 0
          %v891 = vsel %vm524, %v868, 0
          %893 = vmatpush.msra.mxu0 0.0
          %894 = vmatpush.msra.mxu0 0.0
          %895 = vmatpush.msra.mxu0 0.0
          %896 = vmatpush.msra.mxu0 0.0
          %897 = vmatpush.msra.mxu0 0.0
          %898 = vmatpush.msra.mxu0 0.0
          %899 = vmatpush.msra.mxu0 0.0
          %900 = vmatpush.msra.mxu0 0.0
          %901 = vmatpush.msra.mxu0 0.0
          %902 = vmatpush.msra.mxu0 0.0
          %903 = vmatpush.msra.mxu0 %v874
          %904 = vmatpush.msra.mxu0 %v873
          %905 = vmatpush.msra.mxu0 %v872
          %906 = vmatpush.msra.mxu0 %v871
          %907 = vmatpush.msra.mxu0 %v870
          %908 = vmatpush.msra.mxu0 %v869
          %909 = vmatmul.f32.gmra.mxu0 %v876
          %v910 = vpop.f32.mrf.mxu0
          %v911 = vadd.f32 0.0, %v910
          %912 = vmatmul.f32.gmra.mxu0 %v879
          %v913 = vpop.f32.mrf.mxu0
          %v914 = vadd.f32 0.0, %v913
          %915 = vmatmul.f32.gmra.mxu0 %v882
          %v916 = vpop.f32.mrf.mxu0
          %v917 = vadd.f32 0.0, %v916
          %918 = vmatmul.f32.gmra.mxu0 %v885
          %v919 = vpop.f32.mrf.mxu0
          %v920 = vadd.f32 0.0, %v919
          %921 = vmatmul.f32.gmra.mxu0 %v888
          %v922 = vpop.f32.mrf.mxu0
          %v923 = vadd.f32 0.0, %v922
          %924 = vmatmul.f32.gmra.mxu0 %v891
          %v925 = vpop.f32.mrf.mxu0
          %v926 = vadd.f32 0.0, %v925
          %927 = vdwg.mxu0
          %v928 = vld [vmem:[%s6] sm:$0xff]
          %v929 = vld [vmem:[%s6 + $0x8] sm:$0xff]
          %v930 = vld [vmem:[%s6 + $0x10] sm:$0xff]
          %v931 = vld [vmem:[%s6 + $0x18] sm:$0xff]
          %v932 = vld [vmem:[%s6 + $0x20] sm:$0xff]
          %v933 = vld [vmem:[%s6 + $0x28] sm:$0xff]
          %v934 = vmul.f32 %v911, %v928
          %v935 = vmul.f32 %v914, %v929
          %v936 = vmul.f32 %v917, %v930
          %v937 = vmul.f32 %v920, %v931
          %v938 = vmul.f32 %v923, %v932
          %v939 = vmul.f32 %v926, %v933
          %vm940 = vcmask 130048
          %v941 = vsel %vm940, %v934, 0.0
          %v942 = vsel %vm940, %v935, 0.0
          %v943 = vadd.f32 %v941, %v942
          %v944 = vsel %vm940, %v936, 0.0
          %v945 = vadd.f32 %v943, %v944
          %v946 = vsel %vm940, %v937, 0.0
          %v947 = vadd.f32 %v945, %v946
          %v948 = vsel %vm940, %v938, 0.0
          %v949 = vadd.f32 %v947, %v948
          %v950 = vsel %vm940, %v939, 0.0
          %v951 = vadd.f32 %v949, %v950
          %v952 = vrot.slane %v951, 4
          %v953 = vadd.f32 %v951, %v952
          %v954 = vrot.slane %v953, 2
          %v955 = vadd.f32 %v953, %v954
          %v956 = vrot.slane %v955, 1
          %v957 = vadd.f32 %v955, %v956
          %s958 = scalar_lea.vmem %s330, %s586
          %vm959 = vcmask 122880
          %960 = vst.msk [vmem:[%s958] sm:$0x1] %vm959, %v957
          %s961 = smul.u32 %s586, 48
          %s962 = scalar_lea.vmem %s320, %s961 [#allocation11]
          %963 = vst.msk [vmem:[%s962] sm:$0xff] %vm524, %v863
          %964 = vst.msk [vmem:[%s962 + $0x8] sm:$0xff] %vm524, %v864
          %965 = vst.msk [vmem:[%s962 + $0x10] sm:$0xff] %vm524, %v865
          %966 = vst.msk [vmem:[%s962 + $0x18] sm:$0xff] %vm524, %v866
          %967 = vst.msk [vmem:[%s962 + $0x20] sm:$0xff] %vm524, %v867
          %968 = vst.msk [vmem:[%s962 + $0x28] sm:$0xff] %vm524, %v868
          %969 = vst.msk [vmem:[#allocation6] sm:$0xff] %vm524, %v597
          %970 = vst.msk [vmem:[#allocation6 + $0x8] sm:$0xff] %vm524, %v598
          %971 = vst.msk [vmem:[#allocation6 + $0x10] sm:$0xff] %vm524, %v599
          %972 = vst.msk [vmem:[#allocation6 + $0x18] sm:$0xff] %vm524, %v600
          %973 = vst.msk [vmem:[#allocation6 + $0x20] sm:$0xff] %vm524, %v601
          %974 = vst.msk [vmem:[#allocation6 + $0x28] sm:$0xff] %vm524, %v602
          %975 = vst.msk [vmem:[#allocation7] sm:$0xff] %vm524, %v863
          %976 = vst.msk [vmem:[#allocation7 + $0x8] sm:$0xff] %vm524, %v864
          %977 = vst.msk [vmem:[#allocation7 + $0x10] sm:$0xff] %vm524, %v865
          %978 = vst.msk [vmem:[#allocation7 + $0x18] sm:$0xff] %vm524, %v866
          %979 = vst.msk [vmem:[#allocation7 + $0x20] sm:$0xff] %vm524, %v867
          %980 = vst.msk [vmem:[#allocation7 + $0x28] sm:$0xff] %vm524, %v868
        $region57: #{acoustic_simulation_nn_forward.7} parent=47 // loop_footer
          %s590 = sadd.s32 1, %s586
        $region58: #{acoustic_simulation_nn_forward.7} parent=47 // loop_footer_branch
          %585 = sbr.rel target = $region54
        $region59: #{acoustic_simulation_nn_forward.7} parent=47 // loop_exit
          _
        %p981 = scmp.lt.s32.totalorder %s24, 1
        %s982 = scalar_select %p981, %s24, 1
        %s983 = smul.addr %s982, 4
        %s984 = smul.addr %s983, 8
        %s985 = scalar_lea.vmem %s7, %s984
        %s986 = sand.u32 %s210, 1
        %s987 = scalar_lea.sflag [#allocation9], %s986
        %s988 = sand.u32 %s210, 1
        %s989 = smul.addr %s988, 1536
        %s990 = scalar_lea.vmem [#allocation11], %s989
        // Predicated region
        $region60: #{acoustic_simulation_nn_forward.7} parent=47 // pred_check
          %p991 = pneg %p194
        $region61: #{acoustic_simulation_nn_forward.7} parent=47 // pred_check_branch
          %993 = sbr.rel (%p991) target = $region63
        $region62: #{acoustic_simulation_nn_forward.7} parent=47 // pred_region
          _
        $region63: #{acoustic_simulation_nn_forward.7} parent=47 // pred_fallthru
          _
        // Predicated region
        $region64: #{acoustic_simulation_nn_forward.7} parent=47 // pred_check
          %p994 = pneg %p220
        $region65: #{acoustic_simulation_nn_forward.7} parent=47 // pred_check_branch
          %996 = sbr.rel (%p994) target = $region67
        $region66: #{acoustic_simulation_nn_forward.7} parent=47 // pred_region
          %998 = vsyncadd %s987, 0
          %s999 = smul.addr %s24, 192
          %s1000 = smul.addr %s999, 8
          %s1001 = scalar_lea.hbm %s8, %s1000
          %s1002 = sshll.u32 %s990, 4
          %s1003 = int_to_ptr.vmem [resolvable:$true] %s1002
          %s1004 = sshll.u32 %s1001, 4
          %s1005 = int_to_ptr.hbm [resolvable:$true] %s1004
          %1010 = dma.vmem_to_hbm [thread:$0]  %s1003, 24576, %s1005, %s987, 128, 128, 8
        $region67: #{acoustic_simulation_nn_forward.7} parent=47 // pred_fallthru
          _
      $region48: #{acoustic_simulation_nn_forward.7} parent=5 // pred_fallthru
        _
      %p1011 = scmp.le.s32.totalorder 2, %s19
      // Predicated region
      $region68: #{acoustic_simulation_nn_forward.7} parent=5 // pred_check
        %p1012 = pneg %p1011
      $region69: #{acoustic_simulation_nn_forward.7} parent=5 // pred_check_branch
        %1014 = sbr.rel (%p1012) target = $region71
      $region70: #{acoustic_simulation_nn_forward.7} parent=5 // pred_region
        %s1015 = ssub.s32 %s19, 2
        // Predicated region
        $region72: #{acoustic_simulation_nn_forward.7} parent=70 // pred_check
          %p1016 = pneg %p200
        $region73: #{acoustic_simulation_nn_forward.7} parent=70 // pred_check_branch
          %1018 = sbr.rel (%p1016) target = $region75
        $region74: #{acoustic_simulation_nn_forward.7} parent=70 // pred_region
          %p1019 = scmp.lt.s32.totalorder %s25, 1
          %s1020 = scalar_select %p1019, %s25, 1
          %s1021 = smul.addr %s1020, 4
          %s1022 = smul.addr %s1021, 8
          %s1023 = scalar_lea.vmem %s7, %s1022
        $region75: #{acoustic_simulation_nn_forward.7} parent=70 // pred_fallthru
          _
        // Predicated region
        $region76: #{acoustic_simulation_nn_forward.7} parent=70 // pred_check
          %p1024 = pneg %p226
        $region77: #{acoustic_simulation_nn_forward.7} parent=70 // pred_check_branch
          %1026 = sbr.rel (%p1024) target = $region79
        $region78: #{acoustic_simulation_nn_forward.7} parent=70 // pred_region
          %s1027 = sand.u32 %s211, 1
          %s1028 = scalar_lea.sflag [#allocation9], %s1027
          %s1029 = sand.u32 %s211, 1
          %s1030 = smul.addr %s1029, 1536
          %s1031 = scalar_lea.vmem [#allocation11], %s1030
          %1033 = dma.done %s1028, 24576
        $region79: #{acoustic_simulation_nn_forward.7} parent=70 // pred_fallthru
          _
      $region71: #{acoustic_simulation_nn_forward.7} parent=5 // pred_fallthru
        _
    $region6: #{acoustic_simulation_nn_forward.7} parent=1 // loop_footer
      %s23 = sadd.s32 1, %s19
    $region7: #{acoustic_simulation_nn_forward.7} parent=1 // loop_footer_branch
      %18 = sbr.rel target = $region3
    $region8: #{acoustic_simulation_nn_forward.7} parent=1 // loop_exit
      _
    %1034 = vsyncpa [#allocation9], 1
    %s1035 = scalar_lea.sflag [#allocation9], 1
    %1036 = vsyncpa %s1035, 1
    %1037 = vsyncpa [#allocation10], 1
    %s1038 = scalar_lea.sflag [#allocation10], 1
    %1039 = vsyncpa %s1038, 1

</llo_original>
